<compile_context>
chip_gen: v6e
topology: v6e:2x2x1
jax: 0.10.0
libtpu: 0.0.40
codegen_flags: <defaults>
</compile_context>

<pallas_src>
import jax
import jax.numpy as jnp
from jax.experimental import pallas as pl
from jax.experimental.pallas import tpu as pltpu

# --- module hyperparameters (scaled down; shape semantics / axis conventions preserved) ---
HIDDEN = 32       # hidden_size
EMBED = 64        # embed_size
LAYERS = 2        # layer_size
SRC_VOCAB = 256   # src_vocab_size
TGT_VOCAB = 256   # tgt_vocab_size
PAD = 0
SOS = 2

_VMEM = pl.BlockSpec(memory_space=pltpu.MemorySpace.VMEM)


# ----------------------------- in-kernel helpers -----------------------------

def _lstm_gates(gates, c_prev):
    """PyTorch LSTM gate order [i, f, g, o] on a (B, 4H) pre-activation; returns (h, c)."""
    H = c_prev.shape[-1]
    i = jax.nn.sigmoid(gates[:, 0 * H:1 * H])
    f = jax.nn.sigmoid(gates[:, 1 * H:2 * H])
    g = jnp.tanh(gates[:, 2 * H:3 * H])
    o = jax.nn.sigmoid(gates[:, 3 * H:4 * H])
    c_new = f * c_prev + i * g
    h_new = o * jnp.tanh(c_new)
    return h_new, c_new


def _bmm(x, w):
    """(B, T, D) @ (D, G) -> (B, T, G) as one MXU matmul: reshape to (B*T, D), dot, reshape back."""
    B, T, D = x.shape
    y = jnp.dot(x.reshape(B * T, D).astype(w.dtype), w,
                preferred_element_type=jnp.float32)
    return y.reshape(B, T, -1)


# ----------------------------- fully fused seq2seq kernel -----------------------------

def _seq2seq_kernel(enc_emb_ref, dec_emb_ref,
                    e_wih0_ref, e_whh0_ref, e_b0_ref,
                    e_wih1_ref, e_whh1_ref, e_b1_ref,
                    d_wih0_ref, d_rec_ref, d_bias_ref,
                    attn_w_ref, attn_b_ref, aw_ref, awb_ref,
                    out_w_ref, out_b_ref,
                    logits_ref):
    B, S, _ = enc_emb_ref.shape
    _, T, _ = dec_emb_ref.shape
    H = HIDDEN

    # ---------------- encoder: 2 bidirectional LSTM layers ----------------
    def run_enc_layer(x_all, wih_fb, whh_blk, bias_fb):
        # hoisted input->hidden matmul for BOTH directions: (B,S,D) @ (D,8H)
        gx = _bmm(x_all, wih_fb)                     # [..., :4H] = fwd, [..., 4H:] = bwd
        h_f = jnp.zeros((B, H), jnp.float32)
        c_f = jnp.zeros((B, H), jnp.float32)
        h_b = jnp.zeros((B, H), jnp.float32)
        c_b = jnp.zeros((B, H), jnp.float32)
        hs_f, hs_b = [], []
        for t in range(S):
            tb = S - 1 - t
            # one recurrent matmul drives both directions (block-diagonal W_hh)
            h_cat = jnp.concatenate([h_f, h_b], axis=-1).astype(whh_blk.dtype)   # (B, 2H)
            rec = jnp.dot(h_cat, whh_blk,
                          preferred_element_type=jnp.float32) + bias_fb          # (B, 8H)
            h_f, c_f = _lstm_gates(gx[:, t, :4 * H] + rec[:, :4 * H], c_f)
            h_b, c_b = _lstm_gates(gx[:, tb, 4 * H:] + rec[:, 4 * H:], c_b)
            hs_f.append(h_f)
            hs_b.append(h_b)
        out_f = jnp.stack(hs_f, axis=1)              # (B, S, H), time order
        out_b = jnp.stack(hs_b[::-1], axis=1)        # hs_b[t] belongs to position S-1-t
        layer_out = jnp.concatenate([out_f, out_b], axis=-1)                     # (B, S, 2H)
        return layer_out, (h_f, c_f, h_b, c_b)

    # layer 0 (input = embeddings), layer 1 (input = layer-0 output; inter-layer dropout = identity)
    x1, (h0f, c0f, h0b, c0b) = run_enc_layer(enc_emb_ref[...], e_wih0_ref[...],
                                             e_whh0_ref[...], e_b0_ref[...])
    enc_out, (h1f, c1f, h1b, c1b) = run_enc_layer(x1, e_wih1_ref[...],
                                                  e_whh1_ref[...], e_b1_ref[...])

    # reference: h_n.view(2, layer_size, B, H); dec_init = view[0] + view[1]
    # flat order [l0f, l0b, l1f, l1b] -> dec layer0 init = l0f + l1f, layer1 init = l0b + l1b
    h0 = h0f + h1f
    c0 = c0f + c1f
    h1 = h0b + h1b
    c1 = c0b + c1b

    # ---------------- decoder recurrence (only thing left in the time loop) ----------------
    # layer-0 input matmul hoisted over all T teacher-forced steps
    gx0 = _bmm(dec_emb_ref[...], d_wih0_ref[...])    # (B, T, 4H)
    d_rec = d_rec_ref[...]                           # (2H, 8H) = [[Whh0, Wih1], [0, Whh1]]
    d_bias = d_bias_ref[...]                         # (1, 8H)  = [b0 | b1]

    # one-step skew: tick k computes layer-0 step k (k<T) and layer-1 step k-1 (k>=1)
    # with a single (B,2H)@(2H,8H) matmul on [h0_{k-1} | h1_{k-2}].
    h1_steps = []
    for k in range(T + 1):
        h_cat = jnp.concatenate([h0, h1], axis=-1).astype(d_rec.dtype)           # (B, 2H)
        rec = jnp.dot(h_cat, d_rec, preferred_element_type=jnp.float32) + d_bias  # (B, 8H)
        if k < T:
            h0n, c0n = _lstm_gates(gx0[:, k, :] + rec[:, :4 * H], c0)
        if k >= 1:
            h1, c1 = _lstm_gates(rec[:, 4 * H:], c1)
            h1_steps.append(h1)
        if k < T:
            h0, c0 = h0n, c0n

    H1 = jnp.stack(h1_steps, axis=1)                 # (B, T, H): top-layer hidden per step

    # ---------------- attention + head + vocab projection, batched over all T steps ----------------
    q = _bmm(H1, attn_w_ref[...]) + attn_b_ref[...]                               # (B, T, 2H)
    scores = jnp.einsum('btd,bsd->bts', q, enc_out,
                        preferred_element_type=jnp.float32)                       # (B, T, S)
    scores = scores - jnp.max(scores, axis=-1, keepdims=True)
    e = jnp.exp(scores)
    p = e * pl.reciprocal(jnp.sum(e, axis=-1, keepdims=True), approx=True)
    ctx = jnp.einsum('bts,bsd->btd', p, enc_out,
                     preferred_element_type=jnp.float32)                          # (B, T, 2H)

    cat = jnp.concatenate([H1, ctx], axis=-1)                                     # (B, T, 3H)
    feat = jnp.tanh(_bmm(cat, aw_ref[...]) + awb_ref[...])                        # (B, T, 3H)
    logits = _bmm(feat, out_w_ref[...]) + out_b_ref[...]                          # (B, T, V)
    logits_ref[...] = logits                                                      # one lane-dense store


# ----------------------------- wrapper -----------------------------

def seq2seq_forward(params, input_words, output_words):
    enc_emb = params["enc_embed"][input_words]       # (B, S, E), gathered once on host
    source = output_words[:, :-1]                    # teacher forcing (ratio == 1)
    dec_emb = params["dec_embed"][source]            # (B, T, E)
    B, S, _ = enc_emb.shape
    T = dec_emb.shape[1]

    logits = pl.pallas_call(
        _seq2seq_kernel,
        out_shape=jax.ShapeDtypeStruct((B, T, TGT_VOCAB), jnp.float32),
        in_specs=[_VMEM] * 17,
        out_specs=_VMEM,
    )(enc_emb, dec_emb,
      *params["enc_lstm"][0], *params["enc_lstm"][1],
      params["dec_wih0"], params["dec_rec_blk"], params["dec_bias"],
      params["attn_w_t"], params["attn_b"],
      params["aw_t"], params["aw_b"],
      params["out_w_t"], params["out_b"])

    attention_result = jnp.zeros((T, S), jnp.float32)  # never updated in reference loop
    return logits, attention_result


# ----------------------------- parameter init -----------------------------

def init_params(key):
    keys = iter(jax.random.split(key, 64))

    def rnd(shape, scale=0.1):
        return (scale * jax.random.normal(next(keys), shape)).astype(jnp.float32)

    H = HIDDEN
    params = {}
    # embeddings (padding_idx = PAD row zeroed, as nn.Embedding(padding_idx=PAD))
    params["enc_embed"] = rnd((SRC_VOCAB, EMBED)).at[PAD].set(0.0)
    params["dec_embed"] = rnd((TGT_VOCAB, EMBED)).at[PAD].set(0.0)

    # encoder: bidirectional LSTM, LAYERS layers; fwd/bwd packed so one matmul drives both:
    #   W_ih_fb (D_in, 8H) = [W_ih_f | W_ih_b], W_hh_blk (2H, 8H) block-diagonal,
    #   bias_fb (1, 8H) = [b_f | b_b]   (b_ih + b_hh combined).  Weights bf16 (MXU-native).
    enc_lstm = []
    for layer in range(LAYERS):
        in_dim = EMBED if layer == 0 else 2 * H
        wih_f, wih_b = rnd((in_dim, 4 * H)), rnd((in_dim, 4 * H))
        whh_f, whh_b = rnd((H, 4 * H)), rnd((H, 4 * H))
        b_f, b_b = rnd((1, 4 * H)), rnd((1, 4 * H))
        wih_fb = jnp.concatenate([wih_f, wih_b], axis=1).astype(jnp.bfloat16)
        whh_blk = (jnp.zeros((2 * H, 8 * H), jnp.float32)
                   .at[:H, :4 * H].set(whh_f)
                   .at[H:, 4 * H:].set(whh_b)).astype(jnp.bfloat16)
        bias_fb = jnp.concatenate([b_f, b_b], axis=1)          # f32
        enc_lstm.append((wih_fb, whh_blk, bias_fb))
    params["enc_lstm"] = enc_lstm

    # decoder: layer-0 input W kept separate (hoisted over T); layer-0/layer-1 recurrences
    # fused via one-step skew with block weights [[Whh0, Wih1], [0, Whh1]] (2H, 8H).
    d_wih0, d_whh0, d_b0 = rnd((EMBED, 4 * H)), rnd((H, 4 * H)), rnd((1, 4 * H))
    d_wih1, d_whh1, d_b1 = rnd((H, 4 * H)), rnd((H, 4 * H)), rnd((1, 4 * H))
    params["dec_wih0"] = d_wih0.astype(jnp.bfloat16)
    rec_blk = (jnp.zeros((2 * H, 8 * H), jnp.float32)
               .at[:H, :4 * H].set(d_whh0)
               .at[:H, 4 * H:].set(d_wih1)
               .at[H:, 4 * H:].set(d_whh1))
    params["dec_rec_blk"] = rec_blk.astype(jnp.bfloat16)
    params["dec_bias"] = jnp.concatenate([d_b0, d_b1], axis=1)  # f32

    # Attention.W : Linear(H -> 2H)
    params["attn_w_t"] = rnd((H, 2 * H)).astype(jnp.bfloat16)
    params["attn_b"] = rnd((1, 2 * H))
    # Decoder.attention_wight : Linear(3H -> 3H)
    params["aw_t"] = rnd((3 * H, 3 * H)).astype(jnp.bfloat16)
    params["aw_b"] = rnd((1, 3 * H))
    # Decoder.out : Linear(3H -> V)
    params["out_w_t"] = rnd((3 * H, TGT_VOCAB)).astype(jnp.bfloat16)
    params["out_b"] = rnd((1, TGT_VOCAB))
    return params


# ----------------------------- main -----------------------------

if __name__ == "__main__":
    key = jax.random.PRNGKey(0)
    kp, ki, ko = jax.random.split(key, 3)
    params = init_params(kp)

    B, S_SRC, T_PLUS1 = 2, 8, 9
    input_words = jax.random.randint(ki, (B, S_SRC), 1, SRC_VOCAB, dtype=jnp.int32)
    output_words = jax.random.randint(ko, (B, T_PLUS1), 1, TGT_VOCAB, dtype=jnp.int32)

    fwd = jax.jit(seq2seq_forward)
    outputs, attention_result = fwd(params, input_words, output_words)
    jax.block_until_ready((outputs, attention_result))

    assert outputs.shape == (B, T_PLUS1 - 1, TGT_VOCAB), outputs.shape
    assert attention_result.shape == (T_PLUS1 - 1, S_SRC), attention_result.shape
    assert bool(jnp.all(jnp.isfinite(outputs)))
    print("KERNEL_OK")
</pallas_src>

<mosaic_0001>
module attributes {stable_mosaic.version = 11 : i64} {
  func.func @_seq2seq_kernel(%arg0: memref<2x8x64xf32, #tpu.memory_space<vmem>>, %arg1: memref<2x8x64xf32, #tpu.memory_space<vmem>>, %arg2: memref<64x256xbf16, #tpu.memory_space<vmem>>, %arg3: memref<64x256xbf16, #tpu.memory_space<vmem>>, %arg4: memref<1x256xf32, #tpu.memory_space<vmem>>, %arg5: memref<64x256xbf16, #tpu.memory_space<vmem>>, %arg6: memref<64x256xbf16, #tpu.memory_space<vmem>>, %arg7: memref<1x256xf32, #tpu.memory_space<vmem>>, %arg8: memref<64x128xbf16, #tpu.memory_space<vmem>>, %arg9: memref<64x256xbf16, #tpu.memory_space<vmem>>, %arg10: memref<1x256xf32, #tpu.memory_space<vmem>>, %arg11: memref<32x64xbf16, #tpu.memory_space<vmem>>, %arg12: memref<1x64xf32, #tpu.memory_space<vmem>>, %arg13: memref<96x96xbf16, #tpu.memory_space<vmem>>, %arg14: memref<1x96xf32, #tpu.memory_space<vmem>>, %arg15: memref<96x256xbf16, #tpu.memory_space<vmem>>, %arg16: memref<1x256xf32, #tpu.memory_space<vmem>>, %arg17: memref<2x8x256xf32, #tpu.memory_space<vmem>>) attributes {dimension_semantics = [], scalar_prefetch = 0 : i64, scratch_operands = 0 : i64, tpu.core_type = #tpu.core_type<tc>} {
    %c0 = arith.constant 0 : index
    %c0_0 = arith.constant 0 : index
    %c0_1 = arith.constant 0 : index
    %0 = vector.load %arg0[%c0, %c0_0, %c0_1] : memref<2x8x64xf32, #tpu.memory_space<vmem>>, vector<2x8x64xf32>
    %c0_2 = arith.constant 0 : index
    %c0_3 = arith.constant 0 : index
    %1 = vector.load %arg2[%c0_2, %c0_3] : memref<64x256xbf16, #tpu.memory_space<vmem>>, vector<64x256xbf16>
    %c0_4 = arith.constant 0 : index
    %c0_5 = arith.constant 0 : index
    %2 = vector.load %arg3[%c0_4, %c0_5] : memref<64x256xbf16, #tpu.memory_space<vmem>>, vector<64x256xbf16>
    %c0_6 = arith.constant 0 : index
    %c0_7 = arith.constant 0 : index
    %3 = vector.load %arg4[%c0_6, %c0_7] : memref<1x256xf32, #tpu.memory_space<vmem>>, vector<1x256xf32>
    %4 = vector.shape_cast %0 : vector<2x8x64xf32> to vector<16x64xf32>
    %5 = arith.truncf %4 : vector<16x64xf32> to vector<16x64xbf16>
    %cst = arith.constant dense<0.000000e+00> : vector<16x256xf32>
    %6 = tpu.matmul %5, %1, %cst {dimension_numbers = #tpu.dot_dimension_numbers<[1], [0], [0], [1], [0, 0, 1, 1], [], []>} : vector<16x64xbf16>, vector<64x256xbf16>, vector<16x256xf32> -> vector<16x256xf32>
    %7 = vector.shape_cast %6 : vector<16x256xf32> to vector<2x8x256xf32>
    %cst_8 = arith.constant 0.000000e+00 : f32
    %8 = vector.broadcast %cst_8 : f32 to vector<2x32xf32>
    %cst_9 = arith.constant 0.000000e+00 : f32
    %9 = vector.broadcast %cst_9 : f32 to vector<2x32xf32>
    %cst_10 = arith.constant 0.000000e+00 : f32
    %10 = vector.broadcast %cst_10 : f32 to vector<2x32xf32>
    %cst_11 = arith.constant 0.000000e+00 : f32
    %11 = vector.broadcast %cst_11 : f32 to vector<2x32xf32>
    %12 = tpu.concatenate %8, %10 in 1 : vector<2x32xf32>, vector<2x32xf32> -> vector<2x64xf32>
    %13 = arith.truncf %12 : vector<2x64xf32> to vector<2x64xbf16>
    %cst_12 = arith.constant dense<0.000000e+00> : vector<2x256xf32>
    %14 = tpu.matmul %13, %2, %cst_12 {dimension_numbers = #tpu.dot_dimension_numbers<[1], [0], [0], [1], [0, 0, 1, 1], [], []>} : vector<2x64xbf16>, vector<64x256xbf16>, vector<2x256xf32> -> vector<2x256xf32>
    %15 = vector.broadcast %3 : vector<1x256xf32> to vector<2x256xf32>
    %16 = arith.addf %14, %15 : vector<2x256xf32>
    %17 = vector.extract_strided_slice %7 {offsets = [0, 0, 0], sizes = [2, 1, 128], strides = [1, 1, 1]} : vector<2x8x256xf32> to vector<2x1x128xf32>
    %18 = vector.shape_cast %17 : vector<2x1x128xf32> to vector<2x128xf32>
    %19 = vector.extract_strided_slice %16 {offsets = [0, 0], sizes = [2, 128], strides = [1, 1]} : vector<2x256xf32> to vector<2x128xf32>
    %20 = arith.addf %18, %19 : vector<2x128xf32>
    %21 = vector.extract_strided_slice %20 {offsets = [0, 0], sizes = [2, 32], strides = [1, 1]} : vector<2x128xf32> to vector<2x32xf32>
    %22 = arith.negf %21 : vector<2x32xf32>
    %23 = math.exp %22 : vector<2x32xf32>
    %cst_13 = arith.constant 1.000000e+00 : f32
    %24 = vector.broadcast %cst_13 : f32 to vector<2x32xf32>
    %25 = arith.addf %24, %23 : vector<2x32xf32>
    %26 = arith.divf %24, %25 : vector<2x32xf32>
    %27 = vector.extract_strided_slice %20 {offsets = [0, 32], sizes = [2, 32], strides = [1, 1]} : vector<2x128xf32> to vector<2x32xf32>
    %28 = arith.negf %27 : vector<2x32xf32>
    %29 = math.exp %28 : vector<2x32xf32>
    %cst_14 = arith.constant 1.000000e+00 : f32
    %30 = vector.broadcast %cst_14 : f32 to vector<2x32xf32>
    %31 = arith.addf %30, %29 : vector<2x32xf32>
    %32 = arith.divf %30, %31 : vector<2x32xf32>
    %33 = vector.extract_strided_slice %20 {offsets = [0, 64], sizes = [2, 32], strides = [1, 1]} : vector<2x128xf32> to vector<2x32xf32>
    %34 = math.tanh %33 : vector<2x32xf32>
    %35 = vector.extract_strided_slice %20 {offsets = [0, 96], sizes = [2, 32], strides = [1, 1]} : vector<2x128xf32> to vector<2x32xf32>
    %36 = arith.negf %35 : vector<2x32xf32>
    %37 = math.exp %36 : vector<2x32xf32>
    %cst_15 = arith.constant 1.000000e+00 : f32
    %38 = vector.broadcast %cst_15 : f32 to vector<2x32xf32>
    %39 = arith.addf %38, %37 : vector<2x32xf32>
    %40 = arith.divf %38, %39 : vector<2x32xf32>
    %41 = arith.mulf %32, %9 : vector<2x32xf32>
    %42 = arith.mulf %26, %34 : vector<2x32xf32>
    %43 = arith.addf %41, %42 : vector<2x32xf32>
    %44 = math.tanh %43 : vector<2x32xf32>
    %45 = arith.mulf %40, %44 : vector<2x32xf32>
    %46 = vector.extract_strided_slice %7 {offsets = [0, 7, 128], sizes = [2, 1, 128], strides = [1, 1, 1]} : vector<2x8x256xf32> to vector<2x1x128xf32>
    %47 = vector.shape_cast %46 : vector<2x1x128xf32> to vector<2x128xf32>
    %48 = vector.extract_strided_slice %16 {offsets = [0, 128], sizes = [2, 128], strides = [1, 1]} : vector<2x256xf32> to vector<2x128xf32>
    %49 = arith.addf %47, %48 : vector<2x128xf32>
    %50 = vector.extract_strided_slice %49 {offsets = [0, 0], sizes = [2, 32], strides = [1, 1]} : vector<2x128xf32> to vector<2x32xf32>
    %51 = arith.negf %50 : vector<2x32xf32>
    %52 = math.exp %51 : vector<2x32xf32>
    %cst_16 = arith.constant 1.000000e+00 : f32
    %53 = vector.broadcast %cst_16 : f32 to vector<2x32xf32>
    %54 = arith.addf %53, %52 : vector<2x32xf32>
    %55 = arith.divf %53, %54 : vector<2x32xf32>
    %56 = vector.extract_strided_slice %49 {offsets = [0, 32], sizes = [2, 32], strides = [1, 1]} : vector<2x128xf32> to vector<2x32xf32>
    %57 = arith.negf %56 : vector<2x32xf32>
    %58 = math.exp %57 : vector<2x32xf32>
    %cst_17 = arith.constant 1.000000e+00 : f32
    %59 = vector.broadcast %cst_17 : f32 to vector<2x32xf32>
    %60 = arith.addf %59, %58 : vector<2x32xf32>
    %61 = arith.divf %59, %60 : vector<2x32xf32>
    %62 = vector.extract_strided_slice %49 {offsets = [0, 64], sizes = [2, 32], strides = [1, 1]} : vector<2x128xf32> to vector<2x32xf32>
    %63 = math.tanh %62 : vector<2x32xf32>
    %64 = vector.extract_strided_slice %49 {offsets = [0, 96], sizes = [2, 32], strides = [1, 1]} : vector<2x128xf32> to vector<2x32xf32>
    %65 = arith.negf %64 : vector<2x32xf32>
    %66 = math.exp %65 : vector<2x32xf32>
    %cst_18 = arith.constant 1.000000e+00 : f32
    %67 = vector.broadcast %cst_18 : f32 to vector<2x32xf32>
    %68 = arith.addf %67, %66 : vector<2x32xf32>
    %69 = arith.divf %67, %68 : vector<2x32xf32>
    %70 = arith.mulf %61, %11 : vector<2x32xf32>
    %71 = arith.mulf %55, %63 : vector<2x32xf32>
    %72 = arith.addf %70, %71 : vector<2x32xf32>
    %73 = math.tanh %72 : vector<2x32xf32>
    %74 = arith.mulf %69, %73 : vector<2x32xf32>
    %75 = tpu.concatenate %45, %74 in 1 : vector<2x32xf32>, vector<2x32xf32> -> vector<2x64xf32>
    %76 = arith.truncf %75 : vector<2x64xf32> to vector<2x64xbf16>
    %cst_19 = arith.constant dense<0.000000e+00> : vector<2x256xf32>
    %77 = tpu.matmul %76, %2, %cst_19 {dimension_numbers = #tpu.dot_dimension_numbers<[1], [0], [0], [1], [0, 0, 1, 1], [], []>} : vector<2x64xbf16>, vector<64x256xbf16>, vector<2x256xf32> -> vector<2x256xf32>
    %78 = vector.broadcast %3 : vector<1x256xf32> to vector<2x256xf32>
    %79 = arith.addf %77, %78 : vector<2x256xf32>
    %80 = vector.extract_strided_slice %7 {offsets = [0, 1, 0], sizes = [2, 1, 128], strides = [1, 1, 1]} : vector<2x8x256xf32> to vector<2x1x128xf32>
    %81 = vector.shape_cast %80 : vector<2x1x128xf32> to vector<2x128xf32>
    %82 = vector.extract_strided_slice %79 {offsets = [0, 0], sizes = [2, 128], strides = [1, 1]} : vector<2x256xf32> to vector<2x128xf32>
    %83 = arith.addf %81, %82 : vector<2x128xf32>
    %84 = vector.extract_strided_slice %83 {offsets = [0, 0], sizes = [2, 32], strides = [1, 1]} : vector<2x128xf32> to vector<2x32xf32>
    %85 = arith.negf %84 : vector<2x32xf32>
    %86 = math.exp %85 : vector<2x32xf32>
    %cst_20 = arith.constant 1.000000e+00 : f32
    %87 = vector.broadcast %cst_20 : f32 to vector<2x32xf32>
    %88 = arith.addf %87, %86 : vector<2x32xf32>
    %89 = arith.divf %87, %88 : vector<2x32xf32>
    %90 = vector.extract_strided_slice %83 {offsets = [0, 32], sizes = [2, 32], strides = [1, 1]} : vector<2x128xf32> to vector<2x32xf32>
    %91 = arith.negf %90 : vector<2x32xf32>
    %92 = math.exp %91 : vector<2x32xf32>
    %cst_21 = arith.constant 1.000000e+00 : f32
    %93 = vector.broadcast %cst_21 : f32 to vector<2x32xf32>
    %94 = arith.addf %93, %92 : vector<2x32xf32>
    %95 = arith.divf %93, %94 : vector<2x32xf32>
    %96 = vector.extract_strided_slice %83 {offsets = [0, 64], sizes = [2, 32], strides = [1, 1]} : vector<2x128xf32> to vector<2x32xf32>
    %97 = math.tanh %96 : vector<2x32xf32>
    %98 = vector.extract_strided_slice %83 {offsets = [0, 96], sizes = [2, 32], strides = [1, 1]} : vector<2x128xf32> to vector<2x32xf32>
    %99 = arith.negf %98 : vector<2x32xf32>
    %100 = math.exp %99 : vector<2x32xf32>
    %cst_22 = arith.constant 1.000000e+00 : f32
    %101 = vector.broadcast %cst_22 : f32 to vector<2x32xf32>
    %102 = arith.addf %101, %100 : vector<2x32xf32>
    %103 = arith.divf %101, %102 : vector<2x32xf32>
    %104 = arith.mulf %95, %43 : vector<2x32xf32>
    %105 = arith.mulf %89, %97 : vector<2x32xf32>
    %106 = arith.addf %104, %105 : vector<2x32xf32>
    %107 = math.tanh %106 : vector<2x32xf32>
    %108 = arith.mulf %103, %107 : vector<2x32xf32>
    %109 = vector.extract_strided_slice %7 {offsets = [0, 6, 128], sizes = [2, 1, 128], strides = [1, 1, 1]} : vector<2x8x256xf32> to vector<2x1x128xf32>
    %110 = vector.shape_cast %109 : vector<2x1x128xf32> to vector<2x128xf32>
    %111 = vector.extract_strided_slice %79 {offsets = [0, 128], sizes = [2, 128], strides = [1, 1]} : vector<2x256xf32> to vector<2x128xf32>
    %112 = arith.addf %110, %111 : vector<2x128xf32>
    %113 = vector.extract_strided_slice %112 {offsets = [0, 0], sizes = [2, 32], strides = [1, 1]} : vector<2x128xf32> to vector<2x32xf32>
    %114 = arith.negf %113 : vector<2x32xf32>
    %115 = math.exp %114 : vector<2x32xf32>
    %cst_23 = arith.constant 1.000000e+00 : f32
    %116 = vector.broadcast %cst_23 : f32 to vector<2x32xf32>
    %117 = arith.addf %116, %115 : vector<2x32xf32>
    %118 = arith.divf %116, %117 : vector<2x32xf32>
    %119 = vector.extract_strided_slice %112 {offsets = [0, 32], sizes = [2, 32], strides = [1, 1]} : vector<2x128xf32> to vector<2x32xf32>
    %120 = arith.negf %119 : vector<2x32xf32>
    %121 = math.exp %120 : vector<2x32xf32>
    %cst_24 = arith.constant 1.000000e+00 : f32
    %122 = vector.broadcast %cst_24 : f32 to vector<2x32xf32>
    %123 = arith.addf %122, %121 : vector<2x32xf32>
    %124 = arith.divf %122, %123 : vector<2x32xf32>
    %125 = vector.extract_strided_slice %112 {offsets = [0, 64], sizes = [2, 32], strides = [1, 1]} : vector<2x128xf32> to vector<2x32xf32>
    %126 = math.tanh %125 : vector<2x32xf32>
    %127 = vector.extract_strided_slice %112 {offsets = [0, 96], sizes = [2, 32], strides = [1, 1]} : vector<2x128xf32> to vector<2x32xf32>
    %128 = arith.negf %127 : vector<2x32xf32>
    %129 = math.exp %128 : vector<2x32xf32>
    %cst_25 = arith.constant 1.000000e+00 : f32
    %130 = vector.broadcast %cst_25 : f32 to vector<2x32xf32>
    %131 = arith.addf %130, %129 : vector<2x32xf32>
    %132 = arith.divf %130, %131 : vector<2x32xf32>
    %133 = arith.mulf %124, %72 : vector<2x32xf32>
    %134 = arith.mulf %118, %126 : vector<2x32xf32>
    %135 = arith.addf %133, %134 : vector<2x32xf32>
    %136 = math.tanh %135 : vector<2x32xf32>
    %137 = arith.mulf %132, %136 : vector<2x32xf32>
    %138 = tpu.concatenate %108, %137 in 1 : vector<2x32xf32>, vector<2x32xf32> -> vector<2x64xf32>
    %139 = arith.truncf %138 : vector<2x64xf32> to vector<2x64xbf16>
    %cst_26 = arith.constant dense<0.000000e+00> : vector<2x256xf32>
    %140 = tpu.matmul %139, %2, %cst_26 {dimension_numbers = #tpu.dot_dimension_numbers<[1], [0], [0], [1], [0, 0, 1, 1], [], []>} : vector<2x64xbf16>, vector<64x256xbf16>, vector<2x256xf32> -> vector<2x256xf32>
    %141 = vector.broadcast %3 : vector<1x256xf32> to vector<2x256xf32>
    %142 = arith.addf %140, %141 : vector<2x256xf32>
    %143 = vector.extract_strided_slice %7 {offsets = [0, 2, 0], sizes = [2, 1, 128], strides = [1, 1, 1]} : vector<2x8x256xf32> to vector<2x1x128xf32>
    %144 = vector.shape_cast %143 : vector<2x1x128xf32> to vector<2x128xf32>
    %145 = vector.extract_strided_slice %142 {offsets = [0, 0], sizes = [2, 128], strides = [1, 1]} : vector<2x256xf32> to vector<2x128xf32>
    %146 = arith.addf %144, %145 : vector<2x128xf32>
    %147 = vector.extract_strided_slice %146 {offsets = [0, 0], sizes = [2, 32], strides = [1, 1]} : vector<2x128xf32> to vector<2x32xf32>
    %148 = arith.negf %147 : vector<2x32xf32>
    %149 = math.exp %148 : vector<2x32xf32>
    %cst_27 = arith.constant 1.000000e+00 : f32
    %150 = vector.broadcast %cst_27 : f32 to vector<2x32xf32>
    %151 = arith.addf %150, %149 : vector<2x32xf32>
    %152 = arith.divf %150, %151 : vector<2x32xf32>
    %153 = vector.extract_strided_slice %146 {offsets = [0, 32], sizes = [2, 32], strides = [1, 1]} : vector<2x128xf32> to vector<2x32xf32>
    %154 = arith.negf %153 : vector<2x32xf32>
    %155 = math.exp %154 : vector<2x32xf32>
    %cst_28 = arith.constant 1.000000e+00 : f32
    %156 = vector.broadcast %cst_28 : f32 to vector<2x32xf32>
    %157 = arith.addf %156, %155 : vector<2x32xf32>
    %158 = arith.divf %156, %157 : vector<2x32xf32>
    %159 = vector.extract_strided_slice %146 {offsets = [0, 64], sizes = [2, 32], strides = [1, 1]} : vector<2x128xf32> to vector<2x32xf32>
    %160 = math.tanh %159 : vector<2x32xf32>
    %161 = vector.extract_strided_slice %146 {offsets = [0, 96], sizes = [2, 32], strides = [1, 1]} : vector<2x128xf32> to vector<2x32xf32>
    %162 = arith.negf %161 : vector<2x32xf32>
    %163 = math.exp %162 : vector<2x32xf32>
    %cst_29 = arith.constant 1.000000e+00 : f32
    %164 = vector.broadcast %cst_29 : f32 to vector<2x32xf32>
    %165 = arith.addf %164, %163 : vector<2x32xf32>
    %166 = arith.divf %164, %165 : vector<2x32xf32>
    %167 = arith.mulf %158, %106 : vector<2x32xf32>
    %168 = arith.mulf %152, %160 : vector<2x32xf32>
    %169 = arith.addf %167, %168 : vector<2x32xf32>
    %170 = math.tanh %169 : vector<2x32xf32>
    %171 = arith.mulf %166, %170 : vector<2x32xf32>
    %172 = vector.extract_strided_slice %7 {offsets = [0, 5, 128], sizes = [2, 1, 128], strides = [1, 1, 1]} : vector<2x8x256xf32> to vector<2x1x128xf32>
    %173 = vector.shape_cast %172 : vector<2x1x128xf32> to vector<2x128xf32>
    %174 = vector.extract_strided_slice %142 {offsets = [0, 128], sizes = [2, 128], strides = [1, 1]} : vector<2x256xf32> to vector<2x128xf32>
    %175 = arith.addf %173, %174 : vector<2x128xf32>
    %176 = vector.extract_strided_slice %175 {offsets = [0, 0], sizes = [2, 32], strides = [1, 1]} : vector<2x128xf32> to vector<2x32xf32>
    %177 = arith.negf %176 : vector<2x32xf32>
    %178 = math.exp %177 : vector<2x32xf32>
    %cst_30 = arith.constant 1.000000e+00 : f32
    %179 = vector.broadcast %cst_30 : f32 to vector<2x32xf32>
    %180 = arith.addf %179, %178 : vector<2x32xf32>
    %181 = arith.divf %179, %180 : vector<2x32xf32>
    %182 = vector.extract_strided_slice %175 {offsets = [0, 32], sizes = [2, 32], strides = [1, 1]} : vector<2x128xf32> to vector<2x32xf32>
    %183 = arith.negf %182 : vector<2x32xf32>
    %184 = math.exp %183 : vector<2x32xf32>
    %cst_31 = arith.constant 1.000000e+00 : f32
    %185 = vector.broadcast %cst_31 : f32 to vector<2x32xf32>
    %186 = arith.addf %185, %184 : vector<2x32xf32>
    %187 = arith.divf %185, %186 : vector<2x32xf32>
    %188 = vector.extract_strided_slice %175 {offsets = [0, 64], sizes = [2, 32], strides = [1, 1]} : vector<2x128xf32> to vector<2x32xf32>
    %189 = math.tanh %188 : vector<2x32xf32>
    %190 = vector.extract_strided_slice %175 {offsets = [0, 96], sizes = [2, 32], strides = [1, 1]} : vector<2x128xf32> to vector<2x32xf32>
    %191 = arith.negf %190 : vector<2x32xf32>
    %192 = math.exp %191 : vector<2x32xf32>
    %cst_32 = arith.constant 1.000000e+00 : f32
    %193 = vector.broadcast %cst_32 : f32 to vector<2x32xf32>
    %194 = arith.addf %193, %192 : vector<2x32xf32>
    %195 = arith.divf %193, %194 : vector<2x32xf32>
    %196 = arith.mulf %187, %135 : vector<2x32xf32>
    %197 = arith.mulf %181, %189 : vector<2x32xf32>
    %198 = arith.addf %196, %197 : vector<2x32xf32>
    %199 = math.tanh %198 : vector<2x32xf32>
    %200 = arith.mulf %195, %199 : vector<2x32xf32>
    %201 = tpu.concatenate %171, %200 in 1 : vector<2x32xf32>, vector<2x32xf32> -> vector<2x64xf32>
    %202 = arith.truncf %201 : vector<2x64xf32> to vector<2x64xbf16>
    %cst_33 = arith.constant dense<0.000000e+00> : vector<2x256xf32>
    %203 = tpu.matmul %202, %2, %cst_33 {dimension_numbers = #tpu.dot_dimension_numbers<[1], [0], [0], [1], [0, 0, 1, 1], [], []>} : vector<2x64xbf16>, vector<64x256xbf16>, vector<2x256xf32> -> vector<2x256xf32>
    %204 = vector.broadcast %3 : vector<1x256xf32> to vector<2x256xf32>
    %205 = arith.addf %203, %204 : vector<2x256xf32>
    %206 = vector.extract_strided_slice %7 {offsets = [0, 3, 0], sizes = [2, 1, 128], strides = [1, 1, 1]} : vector<2x8x256xf32> to vector<2x1x128xf32>
    %207 = vector.shape_cast %206 : vector<2x1x128xf32> to vector<2x128xf32>
    %208 = vector.extract_strided_slice %205 {offsets = [0, 0], sizes = [2, 128], strides = [1, 1]} : vector<2x256xf32> to vector<2x128xf32>
    %209 = arith.addf %207, %208 : vector<2x128xf32>
    %210 = vector.extract_strided_slice %209 {offsets = [0, 0], sizes = [2, 32], strides = [1, 1]} : vector<2x128xf32> to vector<2x32xf32>
    %211 = arith.negf %210 : vector<2x32xf32>
    %212 = math.exp %211 : vector<2x32xf32>
    %cst_34 = arith.constant 1.000000e+00 : f32
    %213 = vector.broadcast %cst_34 : f32 to vector<2x32xf32>
    %214 = arith.addf %213, %212 : vector<2x32xf32>
    %215 = arith.divf %213, %214 : vector<2x32xf32>
    %216 = vector.extract_strided_slice %209 {offsets = [0, 32], sizes = [2, 32], strides = [1, 1]} : vector<2x128xf32> to vector<2x32xf32>
    %217 = arith.negf %216 : vector<2x32xf32>
    %218 = math.exp %217 : vector<2x32xf32>
    %cst_35 = arith.constant 1.000000e+00 : f32
    %219 = vector.broadcast %cst_35 : f32 to vector<2x32xf32>
    %220 = arith.addf %219, %218 : vector<2x32xf32>
    %221 = arith.divf %219, %220 : vector<2x32xf32>
    %222 = vector.extract_strided_slice %209 {offsets = [0, 64], sizes = [2, 32], strides = [1, 1]} : vector<2x128xf32> to vector<2x32xf32>
    %223 = math.tanh %222 : vector<2x32xf32>
    %224 = vector.extract_strided_slice %209 {offsets = [0, 96], sizes = [2, 32], strides = [1, 1]} : vector<2x128xf32> to vector<2x32xf32>
    %225 = arith.negf %224 : vector<2x32xf32>
    %226 = math.exp %225 : vector<2x32xf32>
    %cst_36 = arith.constant 1.000000e+00 : f32
    %227 = vector.broadcast %cst_36 : f32 to vector<2x32xf32>
    %228 = arith.addf %227, %226 : vector<2x32xf32>
    %229 = arith.divf %227, %228 : vector<2x32xf32>
    %230 = arith.mulf %221, %169 : vector<2x32xf32>
    %231 = arith.mulf %215, %223 : vector<2x32xf32>
    %232 = arith.addf %230, %231 : vector<2x32xf32>
    %233 = math.tanh %232 : vector<2x32xf32>
    %234 = arith.mulf %229, %233 : vector<2x32xf32>
    %235 = vector.extract_strided_slice %7 {offsets = [0, 4, 128], sizes = [2, 1, 128], strides = [1, 1, 1]} : vector<2x8x256xf32> to vector<2x1x128xf32>
    %236 = vector.shape_cast %235 : vector<2x1x128xf32> to vector<2x128xf32>
    %237 = vector.extract_strided_slice %205 {offsets = [0, 128], sizes = [2, 128], strides = [1, 1]} : vector<2x256xf32> to vector<2x128xf32>
    %238 = arith.addf %236, %237 : vector<2x128xf32>
    %239 = vector.extract_strided_slice %238 {offsets = [0, 0], sizes = [2, 32], strides = [1, 1]} : vector<2x128xf32> to vector<2x32xf32>
    %240 = arith.negf %239 : vector<2x32xf32>
    %241 = math.exp %240 : vector<2x32xf32>
    %cst_37 = arith.constant 1.000000e+00 : f32
    %242 = vector.broadcast %cst_37 : f32 to vector<2x32xf32>
    %243 = arith.addf %242, %241 : vector<2x32xf32>
    %244 = arith.divf %242, %243 : vector<2x32xf32>
    %245 = vector.extract_strided_slice %238 {offsets = [0, 32], sizes = [2, 32], strides = [1, 1]} : vector<2x128xf32> to vector<2x32xf32>
    %246 = arith.negf %245 : vector<2x32xf32>
    %247 = math.exp %246 : vector<2x32xf32>
    %cst_38 = arith.constant 1.000000e+00 : f32
    %248 = vector.broadcast %cst_38 : f32 to vector<2x32xf32>
    %249 = arith.addf %248, %247 : vector<2x32xf32>
    %250 = arith.divf %248, %249 : vector<2x32xf32>
    %251 = vector.extract_strided_slice %238 {offsets = [0, 64], sizes = [2, 32], strides = [1, 1]} : vector<2x128xf32> to vector<2x32xf32>
    %252 = math.tanh %251 : vector<2x32xf32>
    %253 = vector.extract_strided_slice %238 {offsets = [0, 96], sizes = [2, 32], strides = [1, 1]} : vector<2x128xf32> to vector<2x32xf32>
    %254 = arith.negf %253 : vector<2x32xf32>
    %255 = math.exp %254 : vector<2x32xf32>
    %cst_39 = arith.constant 1.000000e+00 : f32
    %256 = vector.broadcast %cst_39 : f32 to vector<2x32xf32>
    %257 = arith.addf %256, %255 : vector<2x32xf32>
    %258 = arith.divf %256, %257 : vector<2x32xf32>
    %259 = arith.mulf %250, %198 : vector<2x32xf32>
    %260 = arith.mulf %244, %252 : vector<2x32xf32>
    %261 = arith.addf %259, %260 : vector<2x32xf32>
    %262 = math.tanh %261 : vector<2x32xf32>
    %263 = arith.mulf %258, %262 : vector<2x32xf32>
    %264 = tpu.concatenate %234, %263 in 1 : vector<2x32xf32>, vector<2x32xf32> -> vector<2x64xf32>
    %265 = arith.truncf %264 : vector<2x64xf32> to vector<2x64xbf16>
    %cst_40 = arith.constant dense<0.000000e+00> : vector<2x256xf32>
    %266 = tpu.matmul %265, %2, %cst_40 {dimension_numbers = #tpu.dot_dimension_numbers<[1], [0], [0], [1], [0, 0, 1, 1], [], []>} : vector<2x64xbf16>, vector<64x256xbf16>, vector<2x256xf32> -> vector<2x256xf32>
    %267 = vector.broadcast %3 : vector<1x256xf32> to vector<2x256xf32>
    %268 = arith.addf %266, %267 : vector<2x256xf32>
    %269 = vector.extract_strided_slice %7 {offsets = [0, 4, 0], sizes = [2, 1, 128], strides = [1, 1, 1]} : vector<2x8x256xf32> to vector<2x1x128xf32>
    %270 = vector.shape_cast %269 : vector<2x1x128xf32> to vector<2x128xf32>
    %271 = vector.extract_strided_slice %268 {offsets = [0, 0], sizes = [2, 128], strides = [1, 1]} : vector<2x256xf32> to vector<2x128xf32>
    %272 = arith.addf %270, %271 : vector<2x128xf32>
    %273 = vector.extract_strided_slice %272 {offsets = [0, 0], sizes = [2, 32], strides = [1, 1]} : vector<2x128xf32> to vector<2x32xf32>
    %274 = arith.negf %273 : vector<2x32xf32>
    %275 = math.exp %274 : vector<2x32xf32>
    %cst_41 = arith.constant 1.000000e+00 : f32
    %276 = vector.broadcast %cst_41 : f32 to vector<2x32xf32>
    %277 = arith.addf %276, %275 : vector<2x32xf32>
    %278 = arith.divf %276, %277 : vector<2x32xf32>
    %279 = vector.extract_strided_slice %272 {offsets = [0, 32], sizes = [2, 32], strides = [1, 1]} : vector<2x128xf32> to vector<2x32xf32>
    %280 = arith.negf %279 : vector<2x32xf32>
    %281 = math.exp %280 : vector<2x32xf32>
    %cst_42 = arith.constant 1.000000e+00 : f32
    %282 = vector.broadcast %cst_42 : f32 to vector<2x32xf32>
    %283 = arith.addf %282, %281 : vector<2x32xf32>
    %284 = arith.divf %282, %283 : vector<2x32xf32>
    %285 = vector.extract_strided_slice %272 {offsets = [0, 64], sizes = [2, 32], strides = [1, 1]} : vector<2x128xf32> to vector<2x32xf32>
    %286 = math.tanh %285 : vector<2x32xf32>
    %287 = vector.extract_strided_slice %272 {offsets = [0, 96], sizes = [2, 32], strides = [1, 1]} : vector<2x128xf32> to vector<2x32xf32>
    %288 = arith.negf %287 : vector<2x32xf32>
    %289 = math.exp %288 : vector<2x32xf32>
    %cst_43 = arith.constant 1.000000e+00 : f32
    %290 = vector.broadcast %cst_43 : f32 to vector<2x32xf32>
    %291 = arith.addf %290, %289 : vector<2x32xf32>
    %292 = arith.divf %290, %291 : vector<2x32xf32>
    %293 = arith.mulf %284, %232 : vector<2x32xf32>
    %294 = arith.mulf %278, %286 : vector<2x32xf32>
    %295 = arith.addf %293, %294 : vector<2x32xf32>
    %296 = math.tanh %295 : vector<2x32xf32>
    %297 = arith.mulf %292, %296 : vector<2x32xf32>
    %298 = vector.extract_strided_slice %7 {offsets = [0, 3, 128], sizes = [2, 1, 128], strides = [1, 1, 1]} : vector<2x8x256xf32> to vector<2x1x128xf32>
    %299 = vector.shape_cast %298 : vector<2x1x128xf32> to vector<2x128xf32>
    %300 = vector.extract_strided_slice %268 {offsets = [0, 128], sizes = [2, 128], strides = [1, 1]} : vector<2x256xf32> to vector<2x128xf32>
    %301 = arith.addf %299, %300 : vector<2x128xf32>
    %302 = vector.extract_strided_slice %301 {offsets = [0, 0], sizes = [2, 32], strides = [1, 1]} : vector<2x128xf32> to vector<2x32xf32>
    %303 = arith.negf %302 : vector<2x32xf32>
    %304 = math.exp %303 : vector<2x32xf32>
    %cst_44 = arith.constant 1.000000e+00 : f32
    %305 = vector.broadcast %cst_44 : f32 to vector<2x32xf32>
    %306 = arith.addf %305, %304 : vector<2x32xf32>
    %307 = arith.divf %305, %306 : vector<2x32xf32>
    %308 = vector.extract_strided_slice %301 {offsets = [0, 32], sizes = [2, 32], strides = [1, 1]} : vector<2x128xf32> to vector<2x32xf32>
    %309 = arith.negf %308 : vector<2x32xf32>
    %310 = math.exp %309 : vector<2x32xf32>
    %cst_45 = arith.constant 1.000000e+00 : f32
    %311 = vector.broadcast %cst_45 : f32 to vector<2x32xf32>
    %312 = arith.addf %311, %310 : vector<2x32xf32>
    %313 = arith.divf %311, %312 : vector<2x32xf32>
    %314 = vector.extract_strided_slice %301 {offsets = [0, 64], sizes = [2, 32], strides = [1, 1]} : vector<2x128xf32> to vector<2x32xf32>
    %315 = math.tanh %314 : vector<2x32xf32>
    %316 = vector.extract_strided_slice %301 {offsets = [0, 96], sizes = [2, 32], strides = [1, 1]} : vector<2x128xf32> to vector<2x32xf32>
    %317 = arith.negf %316 : vector<2x32xf32>
    %318 = math.exp %317 : vector<2x32xf32>
    %cst_46 = arith.constant 1.000000e+00 : f32
    %319 = vector.broadcast %cst_46 : f32 to vector<2x32xf32>
    %320 = arith.addf %319, %318 : vector<2x32xf32>
    %321 = arith.divf %319, %320 : vector<2x32xf32>
    %322 = arith.mulf %313, %261 : vector<2x32xf32>
    %323 = arith.mulf %307, %315 : vector<2x32xf32>
    %324 = arith.addf %322, %323 : vector<2x32xf32>
    %325 = math.tanh %324 : vector<2x32xf32>
    %326 = arith.mulf %321, %325 : vector<2x32xf32>
    %327 = tpu.concatenate %297, %326 in 1 : vector<2x32xf32>, vector<2x32xf32> -> vector<2x64xf32>
    %328 = arith.truncf %327 : vector<2x64xf32> to vector<2x64xbf16>
    %cst_47 = arith.constant dense<0.000000e+00> : vector<2x256xf32>
    %329 = tpu.matmul %328, %2, %cst_47 {dimension_numbers = #tpu.dot_dimension_numbers<[1], [0], [0], [1], [0, 0, 1, 1], [], []>} : vector<2x64xbf16>, vector<64x256xbf16>, vector<2x256xf32> -> vector<2x256xf32>
    %330 = vector.broadcast %3 : vector<1x256xf32> to vector<2x256xf32>
    %331 = arith.addf %329, %330 : vector<2x256xf32>
    %332 = vector.extract_strided_slice %7 {offsets = [0, 5, 0], sizes = [2, 1, 128], strides = [1, 1, 1]} : vector<2x8x256xf32> to vector<2x1x128xf32>
    %333 = vector.shape_cast %332 : vector<2x1x128xf32> to vector<2x128xf32>
    %334 = vector.extract_strided_slice %331 {offsets = [0, 0], sizes = [2, 128], strides = [1, 1]} : vector<2x256xf32> to vector<2x128xf32>
    %335 = arith.addf %333, %334 : vector<2x128xf32>
    %336 = vector.extract_strided_slice %335 {offsets = [0, 0], sizes = [2, 32], strides = [1, 1]} : vector<2x128xf32> to vector<2x32xf32>
    %337 = arith.negf %336 : vector<2x32xf32>
    %338 = math.exp %337 : vector<2x32xf32>
    %cst_48 = arith.constant 1.000000e+00 : f32
    %339 = vector.broadcast %cst_48 : f32 to vector<2x32xf32>
    %340 = arith.addf %339, %338 : vector<2x32xf32>
    %341 = arith.divf %339, %340 : vector<2x32xf32>
    %342 = vector.extract_strided_slice %335 {offsets = [0, 32], sizes = [2, 32], strides = [1, 1]} : vector<2x128xf32> to vector<2x32xf32>
    %343 = arith.negf %342 : vector<2x32xf32>
    %344 = math.exp %343 : vector<2x32xf32>
    %cst_49 = arith.constant 1.000000e+00 : f32
    %345 = vector.broadcast %cst_49 : f32 to vector<2x32xf32>
    %346 = arith.addf %345, %344 : vector<2x32xf32>
    %347 = arith.divf %345, %346 : vector<2x32xf32>
    %348 = vector.extract_strided_slice %335 {offsets = [0, 64], sizes = [2, 32], strides = [1, 1]} : vector<2x128xf32> to vector<2x32xf32>
    %349 = math.tanh %348 : vector<2x32xf32>
    %350 = vector.extract_strided_slice %335 {offsets = [0, 96], sizes = [2, 32], strides = [1, 1]} : vector<2x128xf32> to vector<2x32xf32>
    %351 = arith.negf %350 : vector<2x32xf32>
    %352 = math.exp %351 : vector<2x32xf32>
    %cst_50 = arith.constant 1.000000e+00 : f32
    %353 = vector.broadcast %cst_50 : f32 to vector<2x32xf32>
    %354 = arith.addf %353, %352 : vector<2x32xf32>
    %355 = arith.divf %353, %354 : vector<2x32xf32>
    %356 = arith.mulf %347, %295 : vector<2x32xf32>
    %357 = arith.mulf %341, %349 : vector<2x32xf32>
    %358 = arith.addf %356, %357 : vector<2x32xf32>
    %359 = math.tanh %358 : vector<2x32xf32>
    %360 = arith.mulf %355, %359 : vector<2x32xf32>
    %361 = vector.extract_strided_slice %7 {offsets = [0, 2, 128], sizes = [2, 1, 128], strides = [1, 1, 1]} : vector<2x8x256xf32> to vector<2x1x128xf32>
    %362 = vector.shape_cast %361 : vector<2x1x128xf32> to vector<2x128xf32>
    %363 = vector.extract_strided_slice %331 {offsets = [0, 128], sizes = [2, 128], strides = [1, 1]} : vector<2x256xf32> to vector<2x128xf32>
    %364 = arith.addf %362, %363 : vector<2x128xf32>
    %365 = vector.extract_strided_slice %364 {offsets = [0, 0], sizes = [2, 32], strides = [1, 1]} : vector<2x128xf32> to vector<2x32xf32>
    %366 = arith.negf %365 : vector<2x32xf32>
    %367 = math.exp %366 : vector<2x32xf32>
    %cst_51 = arith.constant 1.000000e+00 : f32
    %368 = vector.broadcast %cst_51 : f32 to vector<2x32xf32>
    %369 = arith.addf %368, %367 : vector<2x32xf32>
    %370 = arith.divf %368, %369 : vector<2x32xf32>
    %371 = vector.extract_strided_slice %364 {offsets = [0, 32], sizes = [2, 32], strides = [1, 1]} : vector<2x128xf32> to vector<2x32xf32>
    %372 = arith.negf %371 : vector<2x32xf32>
    %373 = math.exp %372 : vector<2x32xf32>
    %cst_52 = arith.constant 1.000000e+00 : f32
    %374 = vector.broadcast %cst_52 : f32 to vector<2x32xf32>
    %375 = arith.addf %374, %373 : vector<2x32xf32>
    %376 = arith.divf %374, %375 : vector<2x32xf32>
    %377 = vector.extract_strided_slice %364 {offsets = [0, 64], sizes = [2, 32], strides = [1, 1]} : vector<2x128xf32> to vector<2x32xf32>
    %378 = math.tanh %377 : vector<2x32xf32>
    %379 = vector.extract_strided_slice %364 {offsets = [0, 96], sizes = [2, 32], strides = [1, 1]} : vector<2x128xf32> to vector<2x32xf32>
    %380 = arith.negf %379 : vector<2x32xf32>
    %381 = math.exp %380 : vector<2x32xf32>
    %cst_53 = arith.constant 1.000000e+00 : f32
    %382 = vector.broadcast %cst_53 : f32 to vector<2x32xf32>
    %383 = arith.addf %382, %381 : vector<2x32xf32>
    %384 = arith.divf %382, %383 : vector<2x32xf32>
    %385 = arith.mulf %376, %324 : vector<2x32xf32>
    %386 = arith.mulf %370, %378 : vector<2x32xf32>
    %387 = arith.addf %385, %386 : vector<2x32xf32>
    %388 = math.tanh %387 : vector<2x32xf32>
    %389 = arith.mulf %384, %388 : vector<2x32xf32>
    %390 = tpu.concatenate %360, %389 in 1 : vector<2x32xf32>, vector<2x32xf32> -> vector<2x64xf32>
    %391 = arith.truncf %390 : vector<2x64xf32> to vector<2x64xbf16>
    %cst_54 = arith.constant dense<0.000000e+00> : vector<2x256xf32>
    %392 = tpu.matmul %391, %2, %cst_54 {dimension_numbers = #tpu.dot_dimension_numbers<[1], [0], [0], [1], [0, 0, 1, 1], [], []>} : vector<2x64xbf16>, vector<64x256xbf16>, vector<2x256xf32> -> vector<2x256xf32>
    %393 = vector.broadcast %3 : vector<1x256xf32> to vector<2x256xf32>
    %394 = arith.addf %392, %393 : vector<2x256xf32>
    %395 = vector.extract_strided_slice %7 {offsets = [0, 6, 0], sizes = [2, 1, 128], strides = [1, 1, 1]} : vector<2x8x256xf32> to vector<2x1x128xf32>
    %396 = vector.shape_cast %395 : vector<2x1x128xf32> to vector<2x128xf32>
    %397 = vector.extract_strided_slice %394 {offsets = [0, 0], sizes = [2, 128], strides = [1, 1]} : vector<2x256xf32> to vector<2x128xf32>
    %398 = arith.addf %396, %397 : vector<2x128xf32>
    %399 = vector.extract_strided_slice %398 {offsets = [0, 0], sizes = [2, 32], strides = [1, 1]} : vector<2x128xf32> to vector<2x32xf32>
    %400 = arith.negf %399 : vector<2x32xf32>
    %401 = math.exp %400 : vector<2x32xf32>
    %cst_55 = arith.constant 1.000000e+00 : f32
    %402 = vector.broadcast %cst_55 : f32 to vector<2x32xf32>
    %403 = arith.addf %402, %401 : vector<2x32xf32>
    %404 = arith.divf %402, %403 : vector<2x32xf32>
    %405 = vector.extract_strided_slice %398 {offsets = [0, 32], sizes = [2, 32], strides = [1, 1]} : vector<2x128xf32> to vector<2x32xf32>
    %406 = arith.negf %405 : vector<2x32xf32>
    %407 = math.exp %406 : vector<2x32xf32>
    %cst_56 = arith.constant 1.000000e+00 : f32
    %408 = vector.broadcast %cst_56 : f32 to vector<2x32xf32>
    %409 = arith.addf %408, %407 : vector<2x32xf32>
    %410 = arith.divf %408, %409 : vector<2x32xf32>
    %411 = vector.extract_strided_slice %398 {offsets = [0, 64], sizes = [2, 32], strides = [1, 1]} : vector<2x128xf32> to vector<2x32xf32>
    %412 = math.tanh %411 : vector<2x32xf32>
    %413 = vector.extract_strided_slice %398 {offsets = [0, 96], sizes = [2, 32], strides = [1, 1]} : vector<2x128xf32> to vector<2x32xf32>
    %414 = arith.negf %413 : vector<2x32xf32>
    %415 = math.exp %414 : vector<2x32xf32>
    %cst_57 = arith.constant 1.000000e+00 : f32
    %416 = vector.broadcast %cst_57 : f32 to vector<2x32xf32>
    %417 = arith.addf %416, %415 : vector<2x32xf32>
    %418 = arith.divf %416, %417 : vector<2x32xf32>
    %419 = arith.mulf %410, %358 : vector<2x32xf32>
    %420 = arith.mulf %404, %412 : vector<2x32xf32>
    %421 = arith.addf %419, %420 : vector<2x32xf32>
    %422 = math.tanh %421 : vector<2x32xf32>
    %423 = arith.mulf %418, %422 : vector<2x32xf32>
    %424 = vector.extract_strided_slice %7 {offsets = [0, 1, 128], sizes = [2, 1, 128], strides = [1, 1, 1]} : vector<2x8x256xf32> to vector<2x1x128xf32>
    %425 = vector.shape_cast %424 : vector<2x1x128xf32> to vector<2x128xf32>
    %426 = vector.extract_strided_slice %394 {offsets = [0, 128], sizes = [2, 128], strides = [1, 1]} : vector<2x256xf32> to vector<2x128xf32>
    %427 = arith.addf %425, %426 : vector<2x128xf32>
    %428 = vector.extract_strided_slice %427 {offsets = [0, 0], sizes = [2, 32], strides = [1, 1]} : vector<2x128xf32> to vector<2x32xf32>
    %429 = arith.negf %428 : vector<2x32xf32>
    %430 = math.exp %429 : vector<2x32xf32>
    %cst_58 = arith.constant 1.000000e+00 : f32
    %431 = vector.broadcast %cst_58 : f32 to vector<2x32xf32>
    %432 = arith.addf %431, %430 : vector<2x32xf32>
    %433 = arith.divf %431, %432 : vector<2x32xf32>
    %434 = vector.extract_strided_slice %427 {offsets = [0, 32], sizes = [2, 32], strides = [1, 1]} : vector<2x128xf32> to vector<2x32xf32>
    %435 = arith.negf %434 : vector<2x32xf32>
    %436 = math.exp %435 : vector<2x32xf32>
    %cst_59 = arith.constant 1.000000e+00 : f32
    %437 = vector.broadcast %cst_59 : f32 to vector<2x32xf32>
    %438 = arith.addf %437, %436 : vector<2x32xf32>
    %439 = arith.divf %437, %438 : vector<2x32xf32>
    %440 = vector.extract_strided_slice %427 {offsets = [0, 64], sizes = [2, 32], strides = [1, 1]} : vector<2x128xf32> to vector<2x32xf32>
    %441 = math.tanh %440 : vector<2x32xf32>
    %442 = vector.extract_strided_slice %427 {offsets = [0, 96], sizes = [2, 32], strides = [1, 1]} : vector<2x128xf32> to vector<2x32xf32>
    %443 = arith.negf %442 : vector<2x32xf32>
    %444 = math.exp %443 : vector<2x32xf32>
    %cst_60 = arith.constant 1.000000e+00 : f32
    %445 = vector.broadcast %cst_60 : f32 to vector<2x32xf32>
    %446 = arith.addf %445, %444 : vector<2x32xf32>
    %447 = arith.divf %445, %446 : vector<2x32xf32>
    %448 = arith.mulf %439, %387 : vector<2x32xf32>
    %449 = arith.mulf %433, %441 : vector<2x32xf32>
    %450 = arith.addf %448, %449 : vector<2x32xf32>
    %451 = math.tanh %450 : vector<2x32xf32>
    %452 = arith.mulf %447, %451 : vector<2x32xf32>
    %453 = tpu.concatenate %423, %452 in 1 : vector<2x32xf32>, vector<2x32xf32> -> vector<2x64xf32>
    %454 = arith.truncf %453 : vector<2x64xf32> to vector<2x64xbf16>
    %cst_61 = arith.constant dense<0.000000e+00> : vector<2x256xf32>
    %455 = tpu.matmul %454, %2, %cst_61 {dimension_numbers = #tpu.dot_dimension_numbers<[1], [0], [0], [1], [0, 0, 1, 1], [], []>} : vector<2x64xbf16>, vector<64x256xbf16>, vector<2x256xf32> -> vector<2x256xf32>
    %456 = vector.broadcast %3 : vector<1x256xf32> to vector<2x256xf32>
    %457 = arith.addf %455, %456 : vector<2x256xf32>
    %458 = vector.extract_strided_slice %7 {offsets = [0, 7, 0], sizes = [2, 1, 128], strides = [1, 1, 1]} : vector<2x8x256xf32> to vector<2x1x128xf32>
    %459 = vector.shape_cast %458 : vector<2x1x128xf32> to vector<2x128xf32>
    %460 = vector.extract_strided_slice %457 {offsets = [0, 0], sizes = [2, 128], strides = [1, 1]} : vector<2x256xf32> to vector<2x128xf32>
    %461 = arith.addf %459, %460 : vector<2x128xf32>
    %462 = vector.extract_strided_slice %461 {offsets = [0, 0], sizes = [2, 32], strides = [1, 1]} : vector<2x128xf32> to vector<2x32xf32>
    %463 = arith.negf %462 : vector<2x32xf32>
    %464 = math.exp %463 : vector<2x32xf32>
    %cst_62 = arith.constant 1.000000e+00 : f32
    %465 = vector.broadcast %cst_62 : f32 to vector<2x32xf32>
    %466 = arith.addf %465, %464 : vector<2x32xf32>
    %467 = arith.divf %465, %466 : vector<2x32xf32>
    %468 = vector.extract_strided_slice %461 {offsets = [0, 32], sizes = [2, 32], strides = [1, 1]} : vector<2x128xf32> to vector<2x32xf32>
    %469 = arith.negf %468 : vector<2x32xf32>
    %470 = math.exp %469 : vector<2x32xf32>
    %cst_63 = arith.constant 1.000000e+00 : f32
    %471 = vector.broadcast %cst_63 : f32 to vector<2x32xf32>
    %472 = arith.addf %471, %470 : vector<2x32xf32>
    %473 = arith.divf %471, %472 : vector<2x32xf32>
    %474 = vector.extract_strided_slice %461 {offsets = [0, 64], sizes = [2, 32], strides = [1, 1]} : vector<2x128xf32> to vector<2x32xf32>
    %475 = math.tanh %474 : vector<2x32xf32>
    %476 = vector.extract_strided_slice %461 {offsets = [0, 96], sizes = [2, 32], strides = [1, 1]} : vector<2x128xf32> to vector<2x32xf32>
    %477 = arith.negf %476 : vector<2x32xf32>
    %478 = math.exp %477 : vector<2x32xf32>
    %cst_64 = arith.constant 1.000000e+00 : f32
    %479 = vector.broadcast %cst_64 : f32 to vector<2x32xf32>
    %480 = arith.addf %479, %478 : vector<2x32xf32>
    %481 = arith.divf %479, %480 : vector<2x32xf32>
    %482 = arith.mulf %473, %421 : vector<2x32xf32>
    %483 = arith.mulf %467, %475 : vector<2x32xf32>
    %484 = arith.addf %482, %483 : vector<2x32xf32>
    %485 = math.tanh %484 : vector<2x32xf32>
    %486 = arith.mulf %481, %485 : vector<2x32xf32>
    %487 = vector.extract_strided_slice %7 {offsets = [0, 0, 128], sizes = [2, 1, 128], strides = [1, 1, 1]} : vector<2x8x256xf32> to vector<2x1x128xf32>
    %488 = vector.shape_cast %487 : vector<2x1x128xf32> to vector<2x128xf32>
    %489 = vector.extract_strided_slice %457 {offsets = [0, 128], sizes = [2, 128], strides = [1, 1]} : vector<2x256xf32> to vector<2x128xf32>
    %490 = arith.addf %488, %489 : vector<2x128xf32>
    %491 = vector.extract_strided_slice %490 {offsets = [0, 0], sizes = [2, 32], strides = [1, 1]} : vector<2x128xf32> to vector<2x32xf32>
    %492 = arith.negf %491 : vector<2x32xf32>
    %493 = math.exp %492 : vector<2x32xf32>
    %cst_65 = arith.constant 1.000000e+00 : f32
    %494 = vector.broadcast %cst_65 : f32 to vector<2x32xf32>
    %495 = arith.addf %494, %493 : vector<2x32xf32>
    %496 = arith.divf %494, %495 : vector<2x32xf32>
    %497 = vector.extract_strided_slice %490 {offsets = [0, 32], sizes = [2, 32], strides = [1, 1]} : vector<2x128xf32> to vector<2x32xf32>
    %498 = arith.negf %497 : vector<2x32xf32>
    %499 = math.exp %498 : vector<2x32xf32>
    %cst_66 = arith.constant 1.000000e+00 : f32
    %500 = vector.broadcast %cst_66 : f32 to vector<2x32xf32>
    %501 = arith.addf %500, %499 : vector<2x32xf32>
    %502 = arith.divf %500, %501 : vector<2x32xf32>
    %503 = vector.extract_strided_slice %490 {offsets = [0, 64], sizes = [2, 32], strides = [1, 1]} : vector<2x128xf32> to vector<2x32xf32>
    %504 = math.tanh %503 : vector<2x32xf32>
    %505 = vector.extract_strided_slice %490 {offsets = [0, 96], sizes = [2, 32], strides = [1, 1]} : vector<2x128xf32> to vector<2x32xf32>
    %506 = arith.negf %505 : vector<2x32xf32>
    %507 = math.exp %506 : vector<2x32xf32>
    %cst_67 = arith.constant 1.000000e+00 : f32
    %508 = vector.broadcast %cst_67 : f32 to vector<2x32xf32>
    %509 = arith.addf %508, %507 : vector<2x32xf32>
    %510 = arith.divf %508, %509 : vector<2x32xf32>
    %511 = arith.mulf %502, %450 : vector<2x32xf32>
    %512 = arith.mulf %496, %504 : vector<2x32xf32>
    %513 = arith.addf %511, %512 : vector<2x32xf32>
    %514 = math.tanh %513 : vector<2x32xf32>
    %515 = arith.mulf %510, %514 : vector<2x32xf32>
    %516 = vector.shape_cast %45 : vector<2x32xf32> to vector<2x1x32xf32>
    %517 = vector.shape_cast %108 : vector<2x32xf32> to vector<2x1x32xf32>
    %518 = vector.shape_cast %171 : vector<2x32xf32> to vector<2x1x32xf32>
    %519 = vector.shape_cast %234 : vector<2x32xf32> to vector<2x1x32xf32>
    %520 = vector.shape_cast %297 : vector<2x32xf32> to vector<2x1x32xf32>
    %521 = vector.shape_cast %360 : vector<2x32xf32> to vector<2x1x32xf32>
    %522 = vector.shape_cast %423 : vector<2x32xf32> to vector<2x1x32xf32>
    %523 = vector.shape_cast %486 : vector<2x32xf32> to vector<2x1x32xf32>
    %524 = tpu.concatenate %516, %517, %518, %519, %520, %521, %522, %523 in 1 : vector<2x1x32xf32>, vector<2x1x32xf32>, vector<2x1x32xf32>, vector<2x1x32xf32>, vector<2x1x32xf32>, vector<2x1x32xf32>, vector<2x1x32xf32>, vector<2x1x32xf32> -> vector<2x8x32xf32>
    %525 = vector.shape_cast %515 : vector<2x32xf32> to vector<2x1x32xf32>
    %526 = vector.shape_cast %452 : vector<2x32xf32> to vector<2x1x32xf32>
    %527 = vector.shape_cast %389 : vector<2x32xf32> to vector<2x1x32xf32>
    %528 = vector.shape_cast %326 : vector<2x32xf32> to vector<2x1x32xf32>
    %529 = vector.shape_cast %263 : vector<2x32xf32> to vector<2x1x32xf32>
    %530 = vector.shape_cast %200 : vector<2x32xf32> to vector<2x1x32xf32>
    %531 = vector.shape_cast %137 : vector<2x32xf32> to vector<2x1x32xf32>
    %532 = vector.shape_cast %74 : vector<2x32xf32> to vector<2x1x32xf32>
    %533 = tpu.concatenate %525, %526, %527, %528, %529, %530, %531, %532 in 1 : vector<2x1x32xf32>, vector<2x1x32xf32>, vector<2x1x32xf32>, vector<2x1x32xf32>, vector<2x1x32xf32>, vector<2x1x32xf32>, vector<2x1x32xf32>, vector<2x1x32xf32> -> vector<2x8x32xf32>
    %534 = tpu.concatenate %524, %533 in 2 : vector<2x8x32xf32>, vector<2x8x32xf32> -> vector<2x8x64xf32>
    %c0_68 = arith.constant 0 : index
    %c0_69 = arith.constant 0 : index
    %535 = vector.load %arg5[%c0_68, %c0_69] : memref<64x256xbf16, #tpu.memory_space<vmem>>, vector<64x256xbf16>
    %c0_70 = arith.constant 0 : index
    %c0_71 = arith.constant 0 : index
    %536 = vector.load %arg6[%c0_70, %c0_71] : memref<64x256xbf16, #tpu.memory_space<vmem>>, vector<64x256xbf16>
    %c0_72 = arith.constant 0 : index
    %c0_73 = arith.constant 0 : index
    %537 = vector.load %arg7[%c0_72, %c0_73] : memref<1x256xf32, #tpu.memory_space<vmem>>, vector<1x256xf32>
    %538 = vector.shape_cast %534 : vector<2x8x64xf32> to vector<16x64xf32>
    %539 = arith.truncf %538 : vector<16x64xf32> to vector<16x64xbf16>
    %cst_74 = arith.constant dense<0.000000e+00> : vector<16x256xf32>
    %540 = tpu.matmul %539, %535, %cst_74 {dimension_numbers = #tpu.dot_dimension_numbers<[1], [0], [0], [1], [0, 0, 1, 1], [], []>} : vector<16x64xbf16>, vector<64x256xbf16>, vector<16x256xf32> -> vector<16x256xf32>
    %541 = vector.shape_cast %540 : vector<16x256xf32> to vector<2x8x256xf32>
    %cst_75 = arith.constant 0.000000e+00 : f32
    %542 = vector.broadcast %cst_75 : f32 to vector<2x32xf32>
    %cst_76 = arith.constant 0.000000e+00 : f32
    %543 = vector.broadcast %cst_76 : f32 to vector<2x32xf32>
    %cst_77 = arith.constant 0.000000e+00 : f32
    %544 = vector.broadcast %cst_77 : f32 to vector<2x32xf32>
    %cst_78 = arith.constant 0.000000e+00 : f32
    %545 = vector.broadcast %cst_78 : f32 to vector<2x32xf32>
    %546 = tpu.concatenate %542, %544 in 1 : vector<2x32xf32>, vector<2x32xf32> -> vector<2x64xf32>
    %547 = arith.truncf %546 : vector<2x64xf32> to vector<2x64xbf16>
    %cst_79 = arith.constant dense<0.000000e+00> : vector<2x256xf32>
    %548 = tpu.matmul %547, %536, %cst_79 {dimension_numbers = #tpu.dot_dimension_numbers<[1], [0], [0], [1], [0, 0, 1, 1], [], []>} : vector<2x64xbf16>, vector<64x256xbf16>, vector<2x256xf32> -> vector<2x256xf32>
    %549 = vector.broadcast %537 : vector<1x256xf32> to vector<2x256xf32>
    %550 = arith.addf %548, %549 : vector<2x256xf32>
    %551 = vector.extract_strided_slice %541 {offsets = [0, 0, 0], sizes = [2, 1, 128], strides = [1, 1, 1]} : vector<2x8x256xf32> to vector<2x1x128xf32>
    %552 = vector.shape_cast %551 : vector<2x1x128xf32> to vector<2x128xf32>
    %553 = vector.extract_strided_slice %550 {offsets = [0, 0], sizes = [2, 128], strides = [1, 1]} : vector<2x256xf32> to vector<2x128xf32>
    %554 = arith.addf %552, %553 : vector<2x128xf32>
    %555 = vector.extract_strided_slice %554 {offsets = [0, 0], sizes = [2, 32], strides = [1, 1]} : vector<2x128xf32> to vector<2x32xf32>
    %556 = arith.negf %555 : vector<2x32xf32>
    %557 = math.exp %556 : vector<2x32xf32>
    %cst_80 = arith.constant 1.000000e+00 : f32
    %558 = vector.broadcast %cst_80 : f32 to vector<2x32xf32>
    %559 = arith.addf %558, %557 : vector<2x32xf32>
    %560 = arith.divf %558, %559 : vector<2x32xf32>
    %561 = vector.extract_strided_slice %554 {offsets = [0, 32], sizes = [2, 32], strides = [1, 1]} : vector<2x128xf32> to vector<2x32xf32>
    %562 = arith.negf %561 : vector<2x32xf32>
    %563 = math.exp %562 : vector<2x32xf32>
    %cst_81 = arith.constant 1.000000e+00 : f32
    %564 = vector.broadcast %cst_81 : f32 to vector<2x32xf32>
    %565 = arith.addf %564, %563 : vector<2x32xf32>
    %566 = arith.divf %564, %565 : vector<2x32xf32>
    %567 = vector.extract_strided_slice %554 {offsets = [0, 64], sizes = [2, 32], strides = [1, 1]} : vector<2x128xf32> to vector<2x32xf32>
    %568 = math.tanh %567 : vector<2x32xf32>
    %569 = vector.extract_strided_slice %554 {offsets = [0, 96], sizes = [2, 32], strides = [1, 1]} : vector<2x128xf32> to vector<2x32xf32>
    %570 = arith.negf %569 : vector<2x32xf32>
    %571 = math.exp %570 : vector<2x32xf32>
    %cst_82 = arith.constant 1.000000e+00 : f32
    %572 = vector.broadcast %cst_82 : f32 to vector<2x32xf32>
    %573 = arith.addf %572, %571 : vector<2x32xf32>
    %574 = arith.divf %572, %573 : vector<2x32xf32>
    %575 = arith.mulf %566, %543 : vector<2x32xf32>
    %576 = arith.mulf %560, %568 : vector<2x32xf32>
    %577 = arith.addf %575, %576 : vector<2x32xf32>
    %578 = math.tanh %577 : vector<2x32xf32>
    %579 = arith.mulf %574, %578 : vector<2x32xf32>
    %580 = vector.extract_strided_slice %541 {offsets = [0, 7, 128], sizes = [2, 1, 128], strides = [1, 1, 1]} : vector<2x8x256xf32> to vector<2x1x128xf32>
    %581 = vector.shape_cast %580 : vector<2x1x128xf32> to vector<2x128xf32>
    %582 = vector.extract_strided_slice %550 {offsets = [0, 128], sizes = [2, 128], strides = [1, 1]} : vector<2x256xf32> to vector<2x128xf32>
    %583 = arith.addf %581, %582 : vector<2x128xf32>
    %584 = vector.extract_strided_slice %583 {offsets = [0, 0], sizes = [2, 32], strides = [1, 1]} : vector<2x128xf32> to vector<2x32xf32>
    %585 = arith.negf %584 : vector<2x32xf32>
    %586 = math.exp %585 : vector<2x32xf32>
    %cst_83 = arith.constant 1.000000e+00 : f32
    %587 = vector.broadcast %cst_83 : f32 to vector<2x32xf32>
    %588 = arith.addf %587, %586 : vector<2x32xf32>
    %589 = arith.divf %587, %588 : vector<2x32xf32>
    %590 = vector.extract_strided_slice %583 {offsets = [0, 32], sizes = [2, 32], strides = [1, 1]} : vector<2x128xf32> to vector<2x32xf32>
    %591 = arith.negf %590 : vector<2x32xf32>
    %592 = math.exp %591 : vector<2x32xf32>
    %cst_84 = arith.constant 1.000000e+00 : f32
    %593 = vector.broadcast %cst_84 : f32 to vector<2x32xf32>
    %594 = arith.addf %593, %592 : vector<2x32xf32>
    %595 = arith.divf %593, %594 : vector<2x32xf32>
    %596 = vector.extract_strided_slice %583 {offsets = [0, 64], sizes = [2, 32], strides = [1, 1]} : vector<2x128xf32> to vector<2x32xf32>
    %597 = math.tanh %596 : vector<2x32xf32>
    %598 = vector.extract_strided_slice %583 {offsets = [0, 96], sizes = [2, 32], strides = [1, 1]} : vector<2x128xf32> to vector<2x32xf32>
    %599 = arith.negf %598 : vector<2x32xf32>
    %600 = math.exp %599 : vector<2x32xf32>
    %cst_85 = arith.constant 1.000000e+00 : f32
    %601 = vector.broadcast %cst_85 : f32 to vector<2x32xf32>
    %602 = arith.addf %601, %600 : vector<2x32xf32>
    %603 = arith.divf %601, %602 : vector<2x32xf32>
    %604 = arith.mulf %595, %545 : vector<2x32xf32>
    %605 = arith.mulf %589, %597 : vector<2x32xf32>
    %606 = arith.addf %604, %605 : vector<2x32xf32>
    %607 = math.tanh %606 : vector<2x32xf32>
    %608 = arith.mulf %603, %607 : vector<2x32xf32>
    %609 = tpu.concatenate %579, %608 in 1 : vector<2x32xf32>, vector<2x32xf32> -> vector<2x64xf32>
    %610 = arith.truncf %609 : vector<2x64xf32> to vector<2x64xbf16>
    %cst_86 = arith.constant dense<0.000000e+00> : vector<2x256xf32>
    %611 = tpu.matmul %610, %536, %cst_86 {dimension_numbers = #tpu.dot_dimension_numbers<[1], [0], [0], [1], [0, 0, 1, 1], [], []>} : vector<2x64xbf16>, vector<64x256xbf16>, vector<2x256xf32> -> vector<2x256xf32>
    %612 = vector.broadcast %537 : vector<1x256xf32> to vector<2x256xf32>
    %613 = arith.addf %611, %612 : vector<2x256xf32>
    %614 = vector.extract_strided_slice %541 {offsets = [0, 1, 0], sizes = [2, 1, 128], strides = [1, 1, 1]} : vector<2x8x256xf32> to vector<2x1x128xf32>
    %615 = vector.shape_cast %614 : vector<2x1x128xf32> to vector<2x128xf32>
    %616 = vector.extract_strided_slice %613 {offsets = [0, 0], sizes = [2, 128], strides = [1, 1]} : vector<2x256xf32> to vector<2x128xf32>
    %617 = arith.addf %615, %616 : vector<2x128xf32>
    %618 = vector.extract_strided_slice %617 {offsets = [0, 0], sizes = [2, 32], strides = [1, 1]} : vector<2x128xf32> to vector<2x32xf32>
    %619 = arith.negf %618 : vector<2x32xf32>
    %620 = math.exp %619 : vector<2x32xf32>
    %cst_87 = arith.constant 1.000000e+00 : f32
    %621 = vector.broadcast %cst_87 : f32 to vector<2x32xf32>
    %622 = arith.addf %621, %620 : vector<2x32xf32>
    %623 = arith.divf %621, %622 : vector<2x32xf32>
    %624 = vector.extract_strided_slice %617 {offsets = [0, 32], sizes = [2, 32], strides = [1, 1]} : vector<2x128xf32> to vector<2x32xf32>
    %625 = arith.negf %624 : vector<2x32xf32>
    %626 = math.exp %625 : vector<2x32xf32>
    %cst_88 = arith.constant 1.000000e+00 : f32
    %627 = vector.broadcast %cst_88 : f32 to vector<2x32xf32>
    %628 = arith.addf %627, %626 : vector<2x32xf32>
    %629 = arith.divf %627, %628 : vector<2x32xf32>
    %630 = vector.extract_strided_slice %617 {offsets = [0, 64], sizes = [2, 32], strides = [1, 1]} : vector<2x128xf32> to vector<2x32xf32>
    %631 = math.tanh %630 : vector<2x32xf32>
    %632 = vector.extract_strided_slice %617 {offsets = [0, 96], sizes = [2, 32], strides = [1, 1]} : vector<2x128xf32> to vector<2x32xf32>
    %633 = arith.negf %632 : vector<2x32xf32>
    %634 = math.exp %633 : vector<2x32xf32>
    %cst_89 = arith.constant 1.000000e+00 : f32
    %635 = vector.broadcast %cst_89 : f32 to vector<2x32xf32>
    %636 = arith.addf %635, %634 : vector<2x32xf32>
    %637 = arith.divf %635, %636 : vector<2x32xf32>
    %638 = arith.mulf %629, %577 : vector<2x32xf32>
    %639 = arith.mulf %623, %631 : vector<2x32xf32>
    %640 = arith.addf %638, %639 : vector<2x32xf32>
    %641 = math.tanh %640 : vector<2x32xf32>
    %642 = arith.mulf %637, %641 : vector<2x32xf32>
    %643 = vector.extract_strided_slice %541 {offsets = [0, 6, 128], sizes = [2, 1, 128], strides = [1, 1, 1]} : vector<2x8x256xf32> to vector<2x1x128xf32>
    %644 = vector.shape_cast %643 : vector<2x1x128xf32> to vector<2x128xf32>
    %645 = vector.extract_strided_slice %613 {offsets = [0, 128], sizes = [2, 128], strides = [1, 1]} : vector<2x256xf32> to vector<2x128xf32>
    %646 = arith.addf %644, %645 : vector<2x128xf32>
    %647 = vector.extract_strided_slice %646 {offsets = [0, 0], sizes = [2, 32], strides = [1, 1]} : vector<2x128xf32> to vector<2x32xf32>
    %648 = arith.negf %647 : vector<2x32xf32>
    %649 = math.exp %648 : vector<2x32xf32>
    %cst_90 = arith.constant 1.000000e+00 : f32
    %650 = vector.broadcast %cst_90 : f32 to vector<2x32xf32>
    %651 = arith.addf %650, %649 : vector<2x32xf32>
    %652 = arith.divf %650, %651 : vector<2x32xf32>
    %653 = vector.extract_strided_slice %646 {offsets = [0, 32], sizes = [2, 32], strides = [1, 1]} : vector<2x128xf32> to vector<2x32xf32>
    %654 = arith.negf %653 : vector<2x32xf32>
    %655 = math.exp %654 : vector<2x32xf32>
    %cst_91 = arith.constant 1.000000e+00 : f32
    %656 = vector.broadcast %cst_91 : f32 to vector<2x32xf32>
    %657 = arith.addf %656, %655 : vector<2x32xf32>
    %658 = arith.divf %656, %657 : vector<2x32xf32>
    %659 = vector.extract_strided_slice %646 {offsets = [0, 64], sizes = [2, 32], strides = [1, 1]} : vector<2x128xf32> to vector<2x32xf32>
    %660 = math.tanh %659 : vector<2x32xf32>
    %661 = vector.extract_strided_slice %646 {offsets = [0, 96], sizes = [2, 32], strides = [1, 1]} : vector<2x128xf32> to vector<2x32xf32>
    %662 = arith.negf %661 : vector<2x32xf32>
    %663 = math.exp %662 : vector<2x32xf32>
    %cst_92 = arith.constant 1.000000e+00 : f32
    %664 = vector.broadcast %cst_92 : f32 to vector<2x32xf32>
    %665 = arith.addf %664, %663 : vector<2x32xf32>
    %666 = arith.divf %664, %665 : vector<2x32xf32>
    %667 = arith.mulf %658, %606 : vector<2x32xf32>
    %668 = arith.mulf %652, %660 : vector<2x32xf32>
    %669 = arith.addf %667, %668 : vector<2x32xf32>
    %670 = math.tanh %669 : vector<2x32xf32>
    %671 = arith.mulf %666, %670 : vector<2x32xf32>
    %672 = tpu.concatenate %642, %671 in 1 : vector<2x32xf32>, vector<2x32xf32> -> vector<2x64xf32>
    %673 = arith.truncf %672 : vector<2x64xf32> to vector<2x64xbf16>
    %cst_93 = arith.constant dense<0.000000e+00> : vector<2x256xf32>
    %674 = tpu.matmul %673, %536, %cst_93 {dimension_numbers = #tpu.dot_dimension_numbers<[1], [0], [0], [1], [0, 0, 1, 1], [], []>} : vector<2x64xbf16>, vector<64x256xbf16>, vector<2x256xf32> -> vector<2x256xf32>
    %675 = vector.broadcast %537 : vector<1x256xf32> to vector<2x256xf32>
    %676 = arith.addf %674, %675 : vector<2x256xf32>
    %677 = vector.extract_strided_slice %541 {offsets = [0, 2, 0], sizes = [2, 1, 128], strides = [1, 1, 1]} : vector<2x8x256xf32> to vector<2x1x128xf32>
    %678 = vector.shape_cast %677 : vector<2x1x128xf32> to vector<2x128xf32>
    %679 = vector.extract_strided_slice %676 {offsets = [0, 0], sizes = [2, 128], strides = [1, 1]} : vector<2x256xf32> to vector<2x128xf32>
    %680 = arith.addf %678, %679 : vector<2x128xf32>
    %681 = vector.extract_strided_slice %680 {offsets = [0, 0], sizes = [2, 32], strides = [1, 1]} : vector<2x128xf32> to vector<2x32xf32>
    %682 = arith.negf %681 : vector<2x32xf32>
    %683 = math.exp %682 : vector<2x32xf32>
    %cst_94 = arith.constant 1.000000e+00 : f32
    %684 = vector.broadcast %cst_94 : f32 to vector<2x32xf32>
    %685 = arith.addf %684, %683 : vector<2x32xf32>
    %686 = arith.divf %684, %685 : vector<2x32xf32>
    %687 = vector.extract_strided_slice %680 {offsets = [0, 32], sizes = [2, 32], strides = [1, 1]} : vector<2x128xf32> to vector<2x32xf32>
    %688 = arith.negf %687 : vector<2x32xf32>
    %689 = math.exp %688 : vector<2x32xf32>
    %cst_95 = arith.constant 1.000000e+00 : f32
    %690 = vector.broadcast %cst_95 : f32 to vector<2x32xf32>
    %691 = arith.addf %690, %689 : vector<2x32xf32>
    %692 = arith.divf %690, %691 : vector<2x32xf32>
    %693 = vector.extract_strided_slice %680 {offsets = [0, 64], sizes = [2, 32], strides = [1, 1]} : vector<2x128xf32> to vector<2x32xf32>
    %694 = math.tanh %693 : vector<2x32xf32>
    %695 = vector.extract_strided_slice %680 {offsets = [0, 96], sizes = [2, 32], strides = [1, 1]} : vector<2x128xf32> to vector<2x32xf32>
    %696 = arith.negf %695 : vector<2x32xf32>
    %697 = math.exp %696 : vector<2x32xf32>
    %cst_96 = arith.constant 1.000000e+00 : f32
    %698 = vector.broadcast %cst_96 : f32 to vector<2x32xf32>
    %699 = arith.addf %698, %697 : vector<2x32xf32>
    %700 = arith.divf %698, %699 : vector<2x32xf32>
    %701 = arith.mulf %692, %640 : vector<2x32xf32>
    %702 = arith.mulf %686, %694 : vector<2x32xf32>
    %703 = arith.addf %701, %702 : vector<2x32xf32>
    %704 = math.tanh %703 : vector<2x32xf32>
    %705 = arith.mulf %700, %704 : vector<2x32xf32>
    %706 = vector.extract_strided_slice %541 {offsets = [0, 5, 128], sizes = [2, 1, 128], strides = [1, 1, 1]} : vector<2x8x256xf32> to vector<2x1x128xf32>
    %707 = vector.shape_cast %706 : vector<2x1x128xf32> to vector<2x128xf32>
    %708 = vector.extract_strided_slice %676 {offsets = [0, 128], sizes = [2, 128], strides = [1, 1]} : vector<2x256xf32> to vector<2x128xf32>
    %709 = arith.addf %707, %708 : vector<2x128xf32>
    %710 = vector.extract_strided_slice %709 {offsets = [0, 0], sizes = [2, 32], strides = [1, 1]} : vector<2x128xf32> to vector<2x32xf32>
    %711 = arith.negf %710 : vector<2x32xf32>
    %712 = math.exp %711 : vector<2x32xf32>
    %cst_97 = arith.constant 1.000000e+00 : f32
    %713 = vector.broadcast %cst_97 : f32 to vector<2x32xf32>
    %714 = arith.addf %713, %712 : vector<2x32xf32>
    %715 = arith.divf %713, %714 : vector<2x32xf32>
    %716 = vector.extract_strided_slice %709 {offsets = [0, 32], sizes = [2, 32], strides = [1, 1]} : vector<2x128xf32> to vector<2x32xf32>
    %717 = arith.negf %716 : vector<2x32xf32>
    %718 = math.exp %717 : vector<2x32xf32>
    %cst_98 = arith.constant 1.000000e+00 : f32
    %719 = vector.broadcast %cst_98 : f32 to vector<2x32xf32>
    %720 = arith.addf %719, %718 : vector<2x32xf32>
    %721 = arith.divf %719, %720 : vector<2x32xf32>
    %722 = vector.extract_strided_slice %709 {offsets = [0, 64], sizes = [2, 32], strides = [1, 1]} : vector<2x128xf32> to vector<2x32xf32>
    %723 = math.tanh %722 : vector<2x32xf32>
    %724 = vector.extract_strided_slice %709 {offsets = [0, 96], sizes = [2, 32], strides = [1, 1]} : vector<2x128xf32> to vector<2x32xf32>
    %725 = arith.negf %724 : vector<2x32xf32>
    %726 = math.exp %725 : vector<2x32xf32>
    %cst_99 = arith.constant 1.000000e+00 : f32
    %727 = vector.broadcast %cst_99 : f32 to vector<2x32xf32>
    %728 = arith.addf %727, %726 : vector<2x32xf32>
    %729 = arith.divf %727, %728 : vector<2x32xf32>
    %730 = arith.mulf %721, %669 : vector<2x32xf32>
    %731 = arith.mulf %715, %723 : vector<2x32xf32>
    %732 = arith.addf %730, %731 : vector<2x32xf32>
    %733 = math.tanh %732 : vector<2x32xf32>
    %734 = arith.mulf %729, %733 : vector<2x32xf32>
    %735 = tpu.concatenate %705, %734 in 1 : vector<2x32xf32>, vector<2x32xf32> -> vector<2x64xf32>
    %736 = arith.truncf %735 : vector<2x64xf32> to vector<2x64xbf16>
    %cst_100 = arith.constant dense<0.000000e+00> : vector<2x256xf32>
    %737 = tpu.matmul %736, %536, %cst_100 {dimension_numbers = #tpu.dot_dimension_numbers<[1], [0], [0], [1], [0, 0, 1, 1], [], []>} : vector<2x64xbf16>, vector<64x256xbf16>, vector<2x256xf32> -> vector<2x256xf32>
    %738 = vector.broadcast %537 : vector<1x256xf32> to vector<2x256xf32>
    %739 = arith.addf %737, %738 : vector<2x256xf32>
    %740 = vector.extract_strided_slice %541 {offsets = [0, 3, 0], sizes = [2, 1, 128], strides = [1, 1, 1]} : vector<2x8x256xf32> to vector<2x1x128xf32>
    %741 = vector.shape_cast %740 : vector<2x1x128xf32> to vector<2x128xf32>
    %742 = vector.extract_strided_slice %739 {offsets = [0, 0], sizes = [2, 128], strides = [1, 1]} : vector<2x256xf32> to vector<2x128xf32>
    %743 = arith.addf %741, %742 : vector<2x128xf32>
    %744 = vector.extract_strided_slice %743 {offsets = [0, 0], sizes = [2, 32], strides = [1, 1]} : vector<2x128xf32> to vector<2x32xf32>
    %745 = arith.negf %744 : vector<2x32xf32>
    %746 = math.exp %745 : vector<2x32xf32>
    %cst_101 = arith.constant 1.000000e+00 : f32
    %747 = vector.broadcast %cst_101 : f32 to vector<2x32xf32>
    %748 = arith.addf %747, %746 : vector<2x32xf32>
    %749 = arith.divf %747, %748 : vector<2x32xf32>
    %750 = vector.extract_strided_slice %743 {offsets = [0, 32], sizes = [2, 32], strides = [1, 1]} : vector<2x128xf32> to vector<2x32xf32>
    %751 = arith.negf %750 : vector<2x32xf32>
    %752 = math.exp %751 : vector<2x32xf32>
    %cst_102 = arith.constant 1.000000e+00 : f32
    %753 = vector.broadcast %cst_102 : f32 to vector<2x32xf32>
    %754 = arith.addf %753, %752 : vector<2x32xf32>
    %755 = arith.divf %753, %754 : vector<2x32xf32>
    %756 = vector.extract_strided_slice %743 {offsets = [0, 64], sizes = [2, 32], strides = [1, 1]} : vector<2x128xf32> to vector<2x32xf32>
    %757 = math.tanh %756 : vector<2x32xf32>
    %758 = vector.extract_strided_slice %743 {offsets = [0, 96], sizes = [2, 32], strides = [1, 1]} : vector<2x128xf32> to vector<2x32xf32>
    %759 = arith.negf %758 : vector<2x32xf32>
    %760 = math.exp %759 : vector<2x32xf32>
    %cst_103 = arith.constant 1.000000e+00 : f32
    %761 = vector.broadcast %cst_103 : f32 to vector<2x32xf32>
    %762 = arith.addf %761, %760 : vector<2x32xf32>
    %763 = arith.divf %761, %762 : vector<2x32xf32>
    %764 = arith.mulf %755, %703 : vector<2x32xf32>
    %765 = arith.mulf %749, %757 : vector<2x32xf32>
    %766 = arith.addf %764, %765 : vector<2x32xf32>
    %767 = math.tanh %766 : vector<2x32xf32>
    %768 = arith.mulf %763, %767 : vector<2x32xf32>
    %769 = vector.extract_strided_slice %541 {offsets = [0, 4, 128], sizes = [2, 1, 128], strides = [1, 1, 1]} : vector<2x8x256xf32> to vector<2x1x128xf32>
    %770 = vector.shape_cast %769 : vector<2x1x128xf32> to vector<2x128xf32>
    %771 = vector.extract_strided_slice %739 {offsets = [0, 128], sizes = [2, 128], strides = [1, 1]} : vector<2x256xf32> to vector<2x128xf32>
    %772 = arith.addf %770, %771 : vector<2x128xf32>
    %773 = vector.extract_strided_slice %772 {offsets = [0, 0], sizes = [2, 32], strides = [1, 1]} : vector<2x128xf32> to vector<2x32xf32>
    %774 = arith.negf %773 : vector<2x32xf32>
    %775 = math.exp %774 : vector<2x32xf32>
    %cst_104 = arith.constant 1.000000e+00 : f32
    %776 = vector.broadcast %cst_104 : f32 to vector<2x32xf32>
    %777 = arith.addf %776, %775 : vector<2x32xf32>
    %778 = arith.divf %776, %777 : vector<2x32xf32>
    %779 = vector.extract_strided_slice %772 {offsets = [0, 32], sizes = [2, 32], strides = [1, 1]} : vector<2x128xf32> to vector<2x32xf32>
    %780 = arith.negf %779 : vector<2x32xf32>
    %781 = math.exp %780 : vector<2x32xf32>
    %cst_105 = arith.constant 1.000000e+00 : f32
    %782 = vector.broadcast %cst_105 : f32 to vector<2x32xf32>
    %783 = arith.addf %782, %781 : vector<2x32xf32>
    %784 = arith.divf %782, %783 : vector<2x32xf32>
    %785 = vector.extract_strided_slice %772 {offsets = [0, 64], sizes = [2, 32], strides = [1, 1]} : vector<2x128xf32> to vector<2x32xf32>
    %786 = math.tanh %785 : vector<2x32xf32>
    %787 = vector.extract_strided_slice %772 {offsets = [0, 96], sizes = [2, 32], strides = [1, 1]} : vector<2x128xf32> to vector<2x32xf32>
    %788 = arith.negf %787 : vector<2x32xf32>
    %789 = math.exp %788 : vector<2x32xf32>
    %cst_106 = arith.constant 1.000000e+00 : f32
    %790 = vector.broadcast %cst_106 : f32 to vector<2x32xf32>
    %791 = arith.addf %790, %789 : vector<2x32xf32>
    %792 = arith.divf %790, %791 : vector<2x32xf32>
    %793 = arith.mulf %784, %732 : vector<2x32xf32>
    %794 = arith.mulf %778, %786 : vector<2x32xf32>
    %795 = arith.addf %793, %794 : vector<2x32xf32>
    %796 = math.tanh %795 : vector<2x32xf32>
    %797 = arith.mulf %792, %796 : vector<2x32xf32>
    %798 = tpu.concatenate %768, %797 in 1 : vector<2x32xf32>, vector<2x32xf32> -> vector<2x64xf32>
    %799 = arith.truncf %798 : vector<2x64xf32> to vector<2x64xbf16>
    %cst_107 = arith.constant dense<0.000000e+00> : vector<2x256xf32>
    %800 = tpu.matmul %799, %536, %cst_107 {dimension_numbers = #tpu.dot_dimension_numbers<[1], [0], [0], [1], [0, 0, 1, 1], [], []>} : vector<2x64xbf16>, vector<64x256xbf16>, vector<2x256xf32> -> vector<2x256xf32>
    %801 = vector.broadcast %537 : vector<1x256xf32> to vector<2x256xf32>
    %802 = arith.addf %800, %801 : vector<2x256xf32>
    %803 = vector.extract_strided_slice %541 {offsets = [0, 4, 0], sizes = [2, 1, 128], strides = [1, 1, 1]} : vector<2x8x256xf32> to vector<2x1x128xf32>
    %804 = vector.shape_cast %803 : vector<2x1x128xf32> to vector<2x128xf32>
    %805 = vector.extract_strided_slice %802 {offsets = [0, 0], sizes = [2, 128], strides = [1, 1]} : vector<2x256xf32> to vector<2x128xf32>
    %806 = arith.addf %804, %805 : vector<2x128xf32>
    %807 = vector.extract_strided_slice %806 {offsets = [0, 0], sizes = [2, 32], strides = [1, 1]} : vector<2x128xf32> to vector<2x32xf32>
    %808 = arith.negf %807 : vector<2x32xf32>
    %809 = math.exp %808 : vector<2x32xf32>
    %cst_108 = arith.constant 1.000000e+00 : f32
    %810 = vector.broadcast %cst_108 : f32 to vector<2x32xf32>
    %811 = arith.addf %810, %809 : vector<2x32xf32>
    %812 = arith.divf %810, %811 : vector<2x32xf32>
    %813 = vector.extract_strided_slice %806 {offsets = [0, 32], sizes = [2, 32], strides = [1, 1]} : vector<2x128xf32> to vector<2x32xf32>
    %814 = arith.negf %813 : vector<2x32xf32>
    %815 = math.exp %814 : vector<2x32xf32>
    %cst_109 = arith.constant 1.000000e+00 : f32
    %816 = vector.broadcast %cst_109 : f32 to vector<2x32xf32>
    %817 = arith.addf %816, %815 : vector<2x32xf32>
    %818 = arith.divf %816, %817 : vector<2x32xf32>
    %819 = vector.extract_strided_slice %806 {offsets = [0, 64], sizes = [2, 32], strides = [1, 1]} : vector<2x128xf32> to vector<2x32xf32>
    %820 = math.tanh %819 : vector<2x32xf32>
    %821 = vector.extract_strided_slice %806 {offsets = [0, 96], sizes = [2, 32], strides = [1, 1]} : vector<2x128xf32> to vector<2x32xf32>
    %822 = arith.negf %821 : vector<2x32xf32>
    %823 = math.exp %822 : vector<2x32xf32>
    %cst_110 = arith.constant 1.000000e+00 : f32
    %824 = vector.broadcast %cst_110 : f32 to vector<2x32xf32>
    %825 = arith.addf %824, %823 : vector<2x32xf32>
    %826 = arith.divf %824, %825 : vector<2x32xf32>
    %827 = arith.mulf %818, %766 : vector<2x32xf32>
    %828 = arith.mulf %812, %820 : vector<2x32xf32>
    %829 = arith.addf %827, %828 : vector<2x32xf32>
    %830 = math.tanh %829 : vector<2x32xf32>
    %831 = arith.mulf %826, %830 : vector<2x32xf32>
    %832 = vector.extract_strided_slice %541 {offsets = [0, 3, 128], sizes = [2, 1, 128], strides = [1, 1, 1]} : vector<2x8x256xf32> to vector<2x1x128xf32>
    %833 = vector.shape_cast %832 : vector<2x1x128xf32> to vector<2x128xf32>
    %834 = vector.extract_strided_slice %802 {offsets = [0, 128], sizes = [2, 128], strides = [1, 1]} : vector<2x256xf32> to vector<2x128xf32>
    %835 = arith.addf %833, %834 : vector<2x128xf32>
    %836 = vector.extract_strided_slice %835 {offsets = [0, 0], sizes = [2, 32], strides = [1, 1]} : vector<2x128xf32> to vector<2x32xf32>
    %837 = arith.negf %836 : vector<2x32xf32>
    %838 = math.exp %837 : vector<2x32xf32>
    %cst_111 = arith.constant 1.000000e+00 : f32
    %839 = vector.broadcast %cst_111 : f32 to vector<2x32xf32>
    %840 = arith.addf %839, %838 : vector<2x32xf32>
    %841 = arith.divf %839, %840 : vector<2x32xf32>
    %842 = vector.extract_strided_slice %835 {offsets = [0, 32], sizes = [2, 32], strides = [1, 1]} : vector<2x128xf32> to vector<2x32xf32>
    %843 = arith.negf %842 : vector<2x32xf32>
    %844 = math.exp %843 : vector<2x32xf32>
    %cst_112 = arith.constant 1.000000e+00 : f32
    %845 = vector.broadcast %cst_112 : f32 to vector<2x32xf32>
    %846 = arith.addf %845, %844 : vector<2x32xf32>
    %847 = arith.divf %845, %846 : vector<2x32xf32>
    %848 = vector.extract_strided_slice %835 {offsets = [0, 64], sizes = [2, 32], strides = [1, 1]} : vector<2x128xf32> to vector<2x32xf32>
    %849 = math.tanh %848 : vector<2x32xf32>
    %850 = vector.extract_strided_slice %835 {offsets = [0, 96], sizes = [2, 32], strides = [1, 1]} : vector<2x128xf32> to vector<2x32xf32>
    %851 = arith.negf %850 : vector<2x32xf32>
    %852 = math.exp %851 : vector<2x32xf32>
    %cst_113 = arith.constant 1.000000e+00 : f32
    %853 = vector.broadcast %cst_113 : f32 to vector<2x32xf32>
    %854 = arith.addf %853, %852 : vector<2x32xf32>
    %855 = arith.divf %853, %854 : vector<2x32xf32>
    %856 = arith.mulf %847, %795 : vector<2x32xf32>
    %857 = arith.mulf %841, %849 : vector<2x32xf32>
    %858 = arith.addf %856, %857 : vector<2x32xf32>
    %859 = math.tanh %858 : vector<2x32xf32>
    %860 = arith.mulf %855, %859 : vector<2x32xf32>
    %861 = tpu.concatenate %831, %860 in 1 : vector<2x32xf32>, vector<2x32xf32> -> vector<2x64xf32>
    %862 = arith.truncf %861 : vector<2x64xf32> to vector<2x64xbf16>
    %cst_114 = arith.constant dense<0.000000e+00> : vector<2x256xf32>
    %863 = tpu.matmul %862, %536, %cst_114 {dimension_numbers = #tpu.dot_dimension_numbers<[1], [0], [0], [1], [0, 0, 1, 1], [], []>} : vector<2x64xbf16>, vector<64x256xbf16>, vector<2x256xf32> -> vector<2x256xf32>
    %864 = vector.broadcast %537 : vector<1x256xf32> to vector<2x256xf32>
    %865 = arith.addf %863, %864 : vector<2x256xf32>
    %866 = vector.extract_strided_slice %541 {offsets = [0, 5, 0], sizes = [2, 1, 128], strides = [1, 1, 1]} : vector<2x8x256xf32> to vector<2x1x128xf32>
    %867 = vector.shape_cast %866 : vector<2x1x128xf32> to vector<2x128xf32>
    %868 = vector.extract_strided_slice %865 {offsets = [0, 0], sizes = [2, 128], strides = [1, 1]} : vector<2x256xf32> to vector<2x128xf32>
    %869 = arith.addf %867, %868 : vector<2x128xf32>
    %870 = vector.extract_strided_slice %869 {offsets = [0, 0], sizes = [2, 32], strides = [1, 1]} : vector<2x128xf32> to vector<2x32xf32>
    %871 = arith.negf %870 : vector<2x32xf32>
    %872 = math.exp %871 : vector<2x32xf32>
    %cst_115 = arith.constant 1.000000e+00 : f32
    %873 = vector.broadcast %cst_115 : f32 to vector<2x32xf32>
    %874 = arith.addf %873, %872 : vector<2x32xf32>
    %875 = arith.divf %873, %874 : vector<2x32xf32>
    %876 = vector.extract_strided_slice %869 {offsets = [0, 32], sizes = [2, 32], strides = [1, 1]} : vector<2x128xf32> to vector<2x32xf32>
    %877 = arith.negf %876 : vector<2x32xf32>
    %878 = math.exp %877 : vector<2x32xf32>
    %cst_116 = arith.constant 1.000000e+00 : f32
    %879 = vector.broadcast %cst_116 : f32 to vector<2x32xf32>
    %880 = arith.addf %879, %878 : vector<2x32xf32>
    %881 = arith.divf %879, %880 : vector<2x32xf32>
    %882 = vector.extract_strided_slice %869 {offsets = [0, 64], sizes = [2, 32], strides = [1, 1]} : vector<2x128xf32> to vector<2x32xf32>
    %883 = math.tanh %882 : vector<2x32xf32>
    %884 = vector.extract_strided_slice %869 {offsets = [0, 96], sizes = [2, 32], strides = [1, 1]} : vector<2x128xf32> to vector<2x32xf32>
    %885 = arith.negf %884 : vector<2x32xf32>
    %886 = math.exp %885 : vector<2x32xf32>
    %cst_117 = arith.constant 1.000000e+00 : f32
    %887 = vector.broadcast %cst_117 : f32 to vector<2x32xf32>
    %888 = arith.addf %887, %886 : vector<2x32xf32>
    %889 = arith.divf %887, %888 : vector<2x32xf32>
    %890 = arith.mulf %881, %829 : vector<2x32xf32>
    %891 = arith.mulf %875, %883 : vector<2x32xf32>
    %892 = arith.addf %890, %891 : vector<2x32xf32>
    %893 = math.tanh %892 : vector<2x32xf32>
    %894 = arith.mulf %889, %893 : vector<2x32xf32>
    %895 = vector.extract_strided_slice %541 {offsets = [0, 2, 128], sizes = [2, 1, 128], strides = [1, 1, 1]} : vector<2x8x256xf32> to vector<2x1x128xf32>
    %896 = vector.shape_cast %895 : vector<2x1x128xf32> to vector<2x128xf32>
    %897 = vector.extract_strided_slice %865 {offsets = [0, 128], sizes = [2, 128], strides = [1, 1]} : vector<2x256xf32> to vector<2x128xf32>
    %898 = arith.addf %896, %897 : vector<2x128xf32>
    %899 = vector.extract_strided_slice %898 {offsets = [0, 0], sizes = [2, 32], strides = [1, 1]} : vector<2x128xf32> to vector<2x32xf32>
    %900 = arith.negf %899 : vector<2x32xf32>
    %901 = math.exp %900 : vector<2x32xf32>
    %cst_118 = arith.constant 1.000000e+00 : f32
    %902 = vector.broadcast %cst_118 : f32 to vector<2x32xf32>
    %903 = arith.addf %902, %901 : vector<2x32xf32>
    %904 = arith.divf %902, %903 : vector<2x32xf32>
    %905 = vector.extract_strided_slice %898 {offsets = [0, 32], sizes = [2, 32], strides = [1, 1]} : vector<2x128xf32> to vector<2x32xf32>
    %906 = arith.negf %905 : vector<2x32xf32>
    %907 = math.exp %906 : vector<2x32xf32>
    %cst_119 = arith.constant 1.000000e+00 : f32
    %908 = vector.broadcast %cst_119 : f32 to vector<2x32xf32>
    %909 = arith.addf %908, %907 : vector<2x32xf32>
    %910 = arith.divf %908, %909 : vector<2x32xf32>
    %911 = vector.extract_strided_slice %898 {offsets = [0, 64], sizes = [2, 32], strides = [1, 1]} : vector<2x128xf32> to vector<2x32xf32>
    %912 = math.tanh %911 : vector<2x32xf32>
    %913 = vector.extract_strided_slice %898 {offsets = [0, 96], sizes = [2, 32], strides = [1, 1]} : vector<2x128xf32> to vector<2x32xf32>
    %914 = arith.negf %913 : vector<2x32xf32>
    %915 = math.exp %914 : vector<2x32xf32>
    %cst_120 = arith.constant 1.000000e+00 : f32
    %916 = vector.broadcast %cst_120 : f32 to vector<2x32xf32>
    %917 = arith.addf %916, %915 : vector<2x32xf32>
    %918 = arith.divf %916, %917 : vector<2x32xf32>
    %919 = arith.mulf %910, %858 : vector<2x32xf32>
    %920 = arith.mulf %904, %912 : vector<2x32xf32>
    %921 = arith.addf %919, %920 : vector<2x32xf32>
    %922 = math.tanh %921 : vector<2x32xf32>
    %923 = arith.mulf %918, %922 : vector<2x32xf32>
    %924 = tpu.concatenate %894, %923 in 1 : vector<2x32xf32>, vector<2x32xf32> -> vector<2x64xf32>
    %925 = arith.truncf %924 : vector<2x64xf32> to vector<2x64xbf16>
    %cst_121 = arith.constant dense<0.000000e+00> : vector<2x256xf32>
    %926 = tpu.matmul %925, %536, %cst_121 {dimension_numbers = #tpu.dot_dimension_numbers<[1], [0], [0], [1], [0, 0, 1, 1], [], []>} : vector<2x64xbf16>, vector<64x256xbf16>, vector<2x256xf32> -> vector<2x256xf32>
    %927 = vector.broadcast %537 : vector<1x256xf32> to vector<2x256xf32>
    %928 = arith.addf %926, %927 : vector<2x256xf32>
    %929 = vector.extract_strided_slice %541 {offsets = [0, 6, 0], sizes = [2, 1, 128], strides = [1, 1, 1]} : vector<2x8x256xf32> to vector<2x1x128xf32>
    %930 = vector.shape_cast %929 : vector<2x1x128xf32> to vector<2x128xf32>
    %931 = vector.extract_strided_slice %928 {offsets = [0, 0], sizes = [2, 128], strides = [1, 1]} : vector<2x256xf32> to vector<2x128xf32>
    %932 = arith.addf %930, %931 : vector<2x128xf32>
    %933 = vector.extract_strided_slice %932 {offsets = [0, 0], sizes = [2, 32], strides = [1, 1]} : vector<2x128xf32> to vector<2x32xf32>
    %934 = arith.negf %933 : vector<2x32xf32>
    %935 = math.exp %934 : vector<2x32xf32>
    %cst_122 = arith.constant 1.000000e+00 : f32
    %936 = vector.broadcast %cst_122 : f32 to vector<2x32xf32>
    %937 = arith.addf %936, %935 : vector<2x32xf32>
    %938 = arith.divf %936, %937 : vector<2x32xf32>
    %939 = vector.extract_strided_slice %932 {offsets = [0, 32], sizes = [2, 32], strides = [1, 1]} : vector<2x128xf32> to vector<2x32xf32>
    %940 = arith.negf %939 : vector<2x32xf32>
    %941 = math.exp %940 : vector<2x32xf32>
    %cst_123 = arith.constant 1.000000e+00 : f32
    %942 = vector.broadcast %cst_123 : f32 to vector<2x32xf32>
    %943 = arith.addf %942, %941 : vector<2x32xf32>
    %944 = arith.divf %942, %943 : vector<2x32xf32>
    %945 = vector.extract_strided_slice %932 {offsets = [0, 64], sizes = [2, 32], strides = [1, 1]} : vector<2x128xf32> to vector<2x32xf32>
    %946 = math.tanh %945 : vector<2x32xf32>
    %947 = vector.extract_strided_slice %932 {offsets = [0, 96], sizes = [2, 32], strides = [1, 1]} : vector<2x128xf32> to vector<2x32xf32>
    %948 = arith.negf %947 : vector<2x32xf32>
    %949 = math.exp %948 : vector<2x32xf32>
    %cst_124 = arith.constant 1.000000e+00 : f32
    %950 = vector.broadcast %cst_124 : f32 to vector<2x32xf32>
    %951 = arith.addf %950, %949 : vector<2x32xf32>
    %952 = arith.divf %950, %951 : vector<2x32xf32>
    %953 = arith.mulf %944, %892 : vector<2x32xf32>
    %954 = arith.mulf %938, %946 : vector<2x32xf32>
    %955 = arith.addf %953, %954 : vector<2x32xf32>
    %956 = math.tanh %955 : vector<2x32xf32>
    %957 = arith.mulf %952, %956 : vector<2x32xf32>
    %958 = vector.extract_strided_slice %541 {offsets = [0, 1, 128], sizes = [2, 1, 128], strides = [1, 1, 1]} : vector<2x8x256xf32> to vector<2x1x128xf32>
    %959 = vector.shape_cast %958 : vector<2x1x128xf32> to vector<2x128xf32>
    %960 = vector.extract_strided_slice %928 {offsets = [0, 128], sizes = [2, 128], strides = [1, 1]} : vector<2x256xf32> to vector<2x128xf32>
    %961 = arith.addf %959, %960 : vector<2x128xf32>
    %962 = vector.extract_strided_slice %961 {offsets = [0, 0], sizes = [2, 32], strides = [1, 1]} : vector<2x128xf32> to vector<2x32xf32>
    %963 = arith.negf %962 : vector<2x32xf32>
    %964 = math.exp %963 : vector<2x32xf32>
    %cst_125 = arith.constant 1.000000e+00 : f32
    %965 = vector.broadcast %cst_125 : f32 to vector<2x32xf32>
    %966 = arith.addf %965, %964 : vector<2x32xf32>
    %967 = arith.divf %965, %966 : vector<2x32xf32>
    %968 = vector.extract_strided_slice %961 {offsets = [0, 32], sizes = [2, 32], strides = [1, 1]} : vector<2x128xf32> to vector<2x32xf32>
    %969 = arith.negf %968 : vector<2x32xf32>
    %970 = math.exp %969 : vector<2x32xf32>
    %cst_126 = arith.constant 1.000000e+00 : f32
    %971 = vector.broadcast %cst_126 : f32 to vector<2x32xf32>
    %972 = arith.addf %971, %970 : vector<2x32xf32>
    %973 = arith.divf %971, %972 : vector<2x32xf32>
    %974 = vector.extract_strided_slice %961 {offsets = [0, 64], sizes = [2, 32], strides = [1, 1]} : vector<2x128xf32> to vector<2x32xf32>
    %975 = math.tanh %974 : vector<2x32xf32>
    %976 = vector.extract_strided_slice %961 {offsets = [0, 96], sizes = [2, 32], strides = [1, 1]} : vector<2x128xf32> to vector<2x32xf32>
    %977 = arith.negf %976 : vector<2x32xf32>
    %978 = math.exp %977 : vector<2x32xf32>
    %cst_127 = arith.constant 1.000000e+00 : f32
    %979 = vector.broadcast %cst_127 : f32 to vector<2x32xf32>
    %980 = arith.addf %979, %978 : vector<2x32xf32>
    %981 = arith.divf %979, %980 : vector<2x32xf32>
    %982 = arith.mulf %973, %921 : vector<2x32xf32>
    %983 = arith.mulf %967, %975 : vector<2x32xf32>
    %984 = arith.addf %982, %983 : vector<2x32xf32>
    %985 = math.tanh %984 : vector<2x32xf32>
    %986 = arith.mulf %981, %985 : vector<2x32xf32>
    %987 = tpu.concatenate %957, %986 in 1 : vector<2x32xf32>, vector<2x32xf32> -> vector<2x64xf32>
    %988 = arith.truncf %987 : vector<2x64xf32> to vector<2x64xbf16>
    %cst_128 = arith.constant dense<0.000000e+00> : vector<2x256xf32>
    %989 = tpu.matmul %988, %536, %cst_128 {dimension_numbers = #tpu.dot_dimension_numbers<[1], [0], [0], [1], [0, 0, 1, 1], [], []>} : vector<2x64xbf16>, vector<64x256xbf16>, vector<2x256xf32> -> vector<2x256xf32>
    %990 = vector.broadcast %537 : vector<1x256xf32> to vector<2x256xf32>
    %991 = arith.addf %989, %990 : vector<2x256xf32>
    %992 = vector.extract_strided_slice %541 {offsets = [0, 7, 0], sizes = [2, 1, 128], strides = [1, 1, 1]} : vector<2x8x256xf32> to vector<2x1x128xf32>
    %993 = vector.shape_cast %992 : vector<2x1x128xf32> to vector<2x128xf32>
    %994 = vector.extract_strided_slice %991 {offsets = [0, 0], sizes = [2, 128], strides = [1, 1]} : vector<2x256xf32> to vector<2x128xf32>
    %995 = arith.addf %993, %994 : vector<2x128xf32>
    %996 = vector.extract_strided_slice %995 {offsets = [0, 0], sizes = [2, 32], strides = [1, 1]} : vector<2x128xf32> to vector<2x32xf32>
    %997 = arith.negf %996 : vector<2x32xf32>
    %998 = math.exp %997 : vector<2x32xf32>
    %cst_129 = arith.constant 1.000000e+00 : f32
    %999 = vector.broadcast %cst_129 : f32 to vector<2x32xf32>
    %1000 = arith.addf %999, %998 : vector<2x32xf32>
    %1001 = arith.divf %999, %1000 : vector<2x32xf32>
    %1002 = vector.extract_strided_slice %995 {offsets = [0, 32], sizes = [2, 32], strides = [1, 1]} : vector<2x128xf32> to vector<2x32xf32>
    %1003 = arith.negf %1002 : vector<2x32xf32>
    %1004 = math.exp %1003 : vector<2x32xf32>
    %cst_130 = arith.constant 1.000000e+00 : f32
    %1005 = vector.broadcast %cst_130 : f32 to vector<2x32xf32>
    %1006 = arith.addf %1005, %1004 : vector<2x32xf32>
    %1007 = arith.divf %1005, %1006 : vector<2x32xf32>
    %1008 = vector.extract_strided_slice %995 {offsets = [0, 64], sizes = [2, 32], strides = [1, 1]} : vector<2x128xf32> to vector<2x32xf32>
    %1009 = math.tanh %1008 : vector<2x32xf32>
    %1010 = vector.extract_strided_slice %995 {offsets = [0, 96], sizes = [2, 32], strides = [1, 1]} : vector<2x128xf32> to vector<2x32xf32>
    %1011 = arith.negf %1010 : vector<2x32xf32>
    %1012 = math.exp %1011 : vector<2x32xf32>
    %cst_131 = arith.constant 1.000000e+00 : f32
    %1013 = vector.broadcast %cst_131 : f32 to vector<2x32xf32>
    %1014 = arith.addf %1013, %1012 : vector<2x32xf32>
    %1015 = arith.divf %1013, %1014 : vector<2x32xf32>
    %1016 = arith.mulf %1007, %955 : vector<2x32xf32>
    %1017 = arith.mulf %1001, %1009 : vector<2x32xf32>
    %1018 = arith.addf %1016, %1017 : vector<2x32xf32>
    %1019 = math.tanh %1018 : vector<2x32xf32>
    %1020 = arith.mulf %1015, %1019 : vector<2x32xf32>
    %1021 = vector.extract_strided_slice %541 {offsets = [0, 0, 128], sizes = [2, 1, 128], strides = [1, 1, 1]} : vector<2x8x256xf32> to vector<2x1x128xf32>
    %1022 = vector.shape_cast %1021 : vector<2x1x128xf32> to vector<2x128xf32>
    %1023 = vector.extract_strided_slice %991 {offsets = [0, 128], sizes = [2, 128], strides = [1, 1]} : vector<2x256xf32> to vector<2x128xf32>
    %1024 = arith.addf %1022, %1023 : vector<2x128xf32>
    %1025 = vector.extract_strided_slice %1024 {offsets = [0, 0], sizes = [2, 32], strides = [1, 1]} : vector<2x128xf32> to vector<2x32xf32>
    %1026 = arith.negf %1025 : vector<2x32xf32>
    %1027 = math.exp %1026 : vector<2x32xf32>
    %cst_132 = arith.constant 1.000000e+00 : f32
    %1028 = vector.broadcast %cst_132 : f32 to vector<2x32xf32>
    %1029 = arith.addf %1028, %1027 : vector<2x32xf32>
    %1030 = arith.divf %1028, %1029 : vector<2x32xf32>
    %1031 = vector.extract_strided_slice %1024 {offsets = [0, 32], sizes = [2, 32], strides = [1, 1]} : vector<2x128xf32> to vector<2x32xf32>
    %1032 = arith.negf %1031 : vector<2x32xf32>
    %1033 = math.exp %1032 : vector<2x32xf32>
    %cst_133 = arith.constant 1.000000e+00 : f32
    %1034 = vector.broadcast %cst_133 : f32 to vector<2x32xf32>
    %1035 = arith.addf %1034, %1033 : vector<2x32xf32>
    %1036 = arith.divf %1034, %1035 : vector<2x32xf32>
    %1037 = vector.extract_strided_slice %1024 {offsets = [0, 64], sizes = [2, 32], strides = [1, 1]} : vector<2x128xf32> to vector<2x32xf32>
    %1038 = math.tanh %1037 : vector<2x32xf32>
    %1039 = vector.extract_strided_slice %1024 {offsets = [0, 96], sizes = [2, 32], strides = [1, 1]} : vector<2x128xf32> to vector<2x32xf32>
    %1040 = arith.negf %1039 : vector<2x32xf32>
    %1041 = math.exp %1040 : vector<2x32xf32>
    %cst_134 = arith.constant 1.000000e+00 : f32
    %1042 = vector.broadcast %cst_134 : f32 to vector<2x32xf32>
    %1043 = arith.addf %1042, %1041 : vector<2x32xf32>
    %1044 = arith.divf %1042, %1043 : vector<2x32xf32>
    %1045 = arith.mulf %1036, %984 : vector<2x32xf32>
    %1046 = arith.mulf %1030, %1038 : vector<2x32xf32>
    %1047 = arith.addf %1045, %1046 : vector<2x32xf32>
    %1048 = math.tanh %1047 : vector<2x32xf32>
    %1049 = arith.mulf %1044, %1048 : vector<2x32xf32>
    %1050 = vector.shape_cast %579 : vector<2x32xf32> to vector<2x1x32xf32>
    %1051 = vector.shape_cast %642 : vector<2x32xf32> to vector<2x1x32xf32>
    %1052 = vector.shape_cast %705 : vector<2x32xf32> to vector<2x1x32xf32>
    %1053 = vector.shape_cast %768 : vector<2x32xf32> to vector<2x1x32xf32>
    %1054 = vector.shape_cast %831 : vector<2x32xf32> to vector<2x1x32xf32>
    %1055 = vector.shape_cast %894 : vector<2x32xf32> to vector<2x1x32xf32>
    %1056 = vector.shape_cast %957 : vector<2x32xf32> to vector<2x1x32xf32>
    %1057 = vector.shape_cast %1020 : vector<2x32xf32> to vector<2x1x32xf32>
    %1058 = tpu.concatenate %1050, %1051, %1052, %1053, %1054, %1055, %1056, %1057 in 1 : vector<2x1x32xf32>, vector<2x1x32xf32>, vector<2x1x32xf32>, vector<2x1x32xf32>, vector<2x1x32xf32>, vector<2x1x32xf32>, vector<2x1x32xf32>, vector<2x1x32xf32> -> vector<2x8x32xf32>
    %1059 = vector.shape_cast %1049 : vector<2x32xf32> to vector<2x1x32xf32>
    %1060 = vector.shape_cast %986 : vector<2x32xf32> to vector<2x1x32xf32>
    %1061 = vector.shape_cast %923 : vector<2x32xf32> to vector<2x1x32xf32>
    %1062 = vector.shape_cast %860 : vector<2x32xf32> to vector<2x1x32xf32>
    %1063 = vector.shape_cast %797 : vector<2x32xf32> to vector<2x1x32xf32>
    %1064 = vector.shape_cast %734 : vector<2x32xf32> to vector<2x1x32xf32>
    %1065 = vector.shape_cast %671 : vector<2x32xf32> to vector<2x1x32xf32>
    %1066 = vector.shape_cast %608 : vector<2x32xf32> to vector<2x1x32xf32>
    %1067 = tpu.concatenate %1059, %1060, %1061, %1062, %1063, %1064, %1065, %1066 in 1 : vector<2x1x32xf32>, vector<2x1x32xf32>, vector<2x1x32xf32>, vector<2x1x32xf32>, vector<2x1x32xf32>, vector<2x1x32xf32>, vector<2x1x32xf32>, vector<2x1x32xf32> -> vector<2x8x32xf32>
    %1068 = tpu.concatenate %1058, %1067 in 2 : vector<2x8x32xf32>, vector<2x8x32xf32> -> vector<2x8x64xf32>
    %1069 = arith.addf %486, %1020 : vector<2x32xf32>
    %1070 = arith.addf %484, %1018 : vector<2x32xf32>
    %1071 = arith.addf %515, %1049 : vector<2x32xf32>
    %1072 = arith.addf %513, %1047 : vector<2x32xf32>
    %c0_135 = arith.constant 0 : index
    %c0_136 = arith.constant 0 : index
    %c0_137 = arith.constant 0 : index
    %1073 = vector.load %arg1[%c0_135, %c0_136, %c0_137] : memref<2x8x64xf32, #tpu.memory_space<vmem>>, vector<2x8x64xf32>
    %c0_138 = arith.constant 0 : index
    %c0_139 = arith.constant 0 : index
    %1074 = vector.load %arg8[%c0_138, %c0_139] : memref<64x128xbf16, #tpu.memory_space<vmem>>, vector<64x128xbf16>
    %1075 = vector.shape_cast %1073 : vector<2x8x64xf32> to vector<16x64xf32>
    %1076 = arith.truncf %1075 : vector<16x64xf32> to vector<16x64xbf16>
    %cst_140 = arith.constant dense<0.000000e+00> : vector<16x128xf32>
    %1077 = tpu.matmul %1076, %1074, %cst_140 {dimension_numbers = #tpu.dot_dimension_numbers<[1], [0], [0], [1], [0, 0, 1, 1], [], []>} : vector<16x64xbf16>, vector<64x128xbf16>, vector<16x128xf32> -> vector<16x128xf32>
    %1078 = vector.shape_cast %1077 : vector<16x128xf32> to vector<2x8x128xf32>
    %c0_141 = arith.constant 0 : index
    %c0_142 = arith.constant 0 : index
    %1079 = vector.load %arg9[%c0_141, %c0_142] : memref<64x256xbf16, #tpu.memory_space<vmem>>, vector<64x256xbf16>
    %c0_143 = arith.constant 0 : index
    %c0_144 = arith.constant 0 : index
    %1080 = vector.load %arg10[%c0_143, %c0_144] : memref<1x256xf32, #tpu.memory_space<vmem>>, vector<1x256xf32>
    %1081 = tpu.concatenate %1069, %1071 in 1 : vector<2x32xf32>, vector<2x32xf32> -> vector<2x64xf32>
    %1082 = arith.truncf %1081 : vector<2x64xf32> to vector<2x64xbf16>
    %cst_145 = arith.constant dense<0.000000e+00> : vector<2x256xf32>
    %1083 = tpu.matmul %1082, %1079, %cst_145 {dimension_numbers = #tpu.dot_dimension_numbers<[1], [0], [0], [1], [0, 0, 1, 1], [], []>} : vector<2x64xbf16>, vector<64x256xbf16>, vector<2x256xf32> -> vector<2x256xf32>
    %1084 = vector.broadcast %1080 : vector<1x256xf32> to vector<2x256xf32>
    %1085 = arith.addf %1083, %1084 : vector<2x256xf32>
    %1086 = vector.extract_strided_slice %1078 {offsets = [0, 0, 0], sizes = [2, 1, 128], strides = [1, 1, 1]} : vector<2x8x128xf32> to vector<2x1x128xf32>
    %1087 = vector.shape_cast %1086 : vector<2x1x128xf32> to vector<2x128xf32>
    %1088 = vector.extract_strided_slice %1085 {offsets = [0, 0], sizes = [2, 128], strides = [1, 1]} : vector<2x256xf32> to vector<2x128xf32>
    %1089 = arith.addf %1087, %1088 : vector<2x128xf32>
    %1090 = vector.extract_strided_slice %1089 {offsets = [0, 0], sizes = [2, 32], strides = [1, 1]} : vector<2x128xf32> to vector<2x32xf32>
    %1091 = arith.negf %1090 : vector<2x32xf32>
    %1092 = math.exp %1091 : vector<2x32xf32>
    %cst_146 = arith.constant 1.000000e+00 : f32
    %1093 = vector.broadcast %cst_146 : f32 to vector<2x32xf32>
    %1094 = arith.addf %1093, %1092 : vector<2x32xf32>
    %1095 = arith.divf %1093, %1094 : vector<2x32xf32>
    %1096 = vector.extract_strided_slice %1089 {offsets = [0, 32], sizes = [2, 32], strides = [1, 1]} : vector<2x128xf32> to vector<2x32xf32>
    %1097 = arith.negf %1096 : vector<2x32xf32>
    %1098 = math.exp %1097 : vector<2x32xf32>
    %cst_147 = arith.constant 1.000000e+00 : f32
    %1099 = vector.broadcast %cst_147 : f32 to vector<2x32xf32>
    %1100 = arith.addf %1099, %1098 : vector<2x32xf32>
    %1101 = arith.divf %1099, %1100 : vector<2x32xf32>
    %1102 = vector.extract_strided_slice %1089 {offsets = [0, 64], sizes = [2, 32], strides = [1, 1]} : vector<2x128xf32> to vector<2x32xf32>
    %1103 = math.tanh %1102 : vector<2x32xf32>
    %1104 = vector.extract_strided_slice %1089 {offsets = [0, 96], sizes = [2, 32], strides = [1, 1]} : vector<2x128xf32> to vector<2x32xf32>
    %1105 = arith.negf %1104 : vector<2x32xf32>
    %1106 = math.exp %1105 : vector<2x32xf32>
    %cst_148 = arith.constant 1.000000e+00 : f32
    %1107 = vector.broadcast %cst_148 : f32 to vector<2x32xf32>
    %1108 = arith.addf %1107, %1106 : vector<2x32xf32>
    %1109 = arith.divf %1107, %1108 : vector<2x32xf32>
    %1110 = arith.mulf %1101, %1070 : vector<2x32xf32>
    %1111 = arith.mulf %1095, %1103 : vector<2x32xf32>
    %1112 = arith.addf %1110, %1111 : vector<2x32xf32>
    %1113 = math.tanh %1112 : vector<2x32xf32>
    %1114 = arith.mulf %1109, %1113 : vector<2x32xf32>
    %1115 = tpu.concatenate %1114, %1071 in 1 : vector<2x32xf32>, vector<2x32xf32> -> vector<2x64xf32>
    %1116 = arith.truncf %1115 : vector<2x64xf32> to vector<2x64xbf16>
    %cst_149 = arith.constant dense<0.000000e+00> : vector<2x256xf32>
    %1117 = tpu.matmul %1116, %1079, %cst_149 {dimension_numbers = #tpu.dot_dimension_numbers<[1], [0], [0], [1], [0, 0, 1, 1], [], []>} : vector<2x64xbf16>, vector<64x256xbf16>, vector<2x256xf32> -> vector<2x256xf32>
    %1118 = vector.broadcast %1080 : vector<1x256xf32> to vector<2x256xf32>
    %1119 = arith.addf %1117, %1118 : vector<2x256xf32>
    %1120 = vector.extract_strided_slice %1078 {offsets = [0, 1, 0], sizes = [2, 1, 128], strides = [1, 1, 1]} : vector<2x8x128xf32> to vector<2x1x128xf32>
    %1121 = vector.shape_cast %1120 : vector<2x1x128xf32> to vector<2x128xf32>
    %1122 = vector.extract_strided_slice %1119 {offsets = [0, 0], sizes = [2, 128], strides = [1, 1]} : vector<2x256xf32> to vector<2x128xf32>
    %1123 = arith.addf %1121, %1122 : vector<2x128xf32>
    %1124 = vector.extract_strided_slice %1123 {offsets = [0, 0], sizes = [2, 32], strides = [1, 1]} : vector<2x128xf32> to vector<2x32xf32>
    %1125 = arith.negf %1124 : vector<2x32xf32>
    %1126 = math.exp %1125 : vector<2x32xf32>
    %cst_150 = arith.constant 1.000000e+00 : f32
    %1127 = vector.broadcast %cst_150 : f32 to vector<2x32xf32>
    %1128 = arith.addf %1127, %1126 : vector<2x32xf32>
    %1129 = arith.divf %1127, %1128 : vector<2x32xf32>
    %1130 = vector.extract_strided_slice %1123 {offsets = [0, 32], sizes = [2, 32], strides = [1, 1]} : vector<2x128xf32> to vector<2x32xf32>
    %1131 = arith.negf %1130 : vector<2x32xf32>
    %1132 = math.exp %1131 : vector<2x32xf32>
    %cst_151 = arith.constant 1.000000e+00 : f32
    %1133 = vector.broadcast %cst_151 : f32 to vector<2x32xf32>
    %1134 = arith.addf %1133, %1132 : vector<2x32xf32>
    %1135 = arith.divf %1133, %1134 : vector<2x32xf32>
    %1136 = vector.extract_strided_slice %1123 {offsets = [0, 64], sizes = [2, 32], strides = [1, 1]} : vector<2x128xf32> to vector<2x32xf32>
    %1137 = math.tanh %1136 : vector<2x32xf32>
    %1138 = vector.extract_strided_slice %1123 {offsets = [0, 96], sizes = [2, 32], strides = [1, 1]} : vector<2x128xf32> to vector<2x32xf32>
    %1139 = arith.negf %1138 : vector<2x32xf32>
    %1140 = math.exp %1139 : vector<2x32xf32>
    %cst_152 = arith.constant 1.000000e+00 : f32
    %1141 = vector.broadcast %cst_152 : f32 to vector<2x32xf32>
    %1142 = arith.addf %1141, %1140 : vector<2x32xf32>
    %1143 = arith.divf %1141, %1142 : vector<2x32xf32>
    %1144 = arith.mulf %1135, %1112 : vector<2x32xf32>
    %1145 = arith.mulf %1129, %1137 : vector<2x32xf32>
    %1146 = arith.addf %1144, %1145 : vector<2x32xf32>
    %1147 = math.tanh %1146 : vector<2x32xf32>
    %1148 = arith.mulf %1143, %1147 : vector<2x32xf32>
    %1149 = vector.extract_strided_slice %1119 {offsets = [0, 128], sizes = [2, 128], strides = [1, 1]} : vector<2x256xf32> to vector<2x128xf32>
    %1150 = vector.extract_strided_slice %1149 {offsets = [0, 0], sizes = [2, 32], strides = [1, 1]} : vector<2x128xf32> to vector<2x32xf32>
    %1151 = arith.negf %1150 : vector<2x32xf32>
    %1152 = math.exp %1151 : vector<2x32xf32>
    %cst_153 = arith.constant 1.000000e+00 : f32
    %1153 = vector.broadcast %cst_153 : f32 to vector<2x32xf32>
    %1154 = arith.addf %1153, %1152 : vector<2x32xf32>
    %1155 = arith.divf %1153, %1154 : vector<2x32xf32>
    %1156 = vector.extract_strided_slice %1149 {offsets = [0, 32], sizes = [2, 32], strides = [1, 1]} : vector<2x128xf32> to vector<2x32xf32>
    %1157 = arith.negf %1156 : vector<2x32xf32>
    %1158 = math.exp %1157 : vector<2x32xf32>
    %cst_154 = arith.constant 1.000000e+00 : f32
    %1159 = vector.broadcast %cst_154 : f32 to vector<2x32xf32>
    %1160 = arith.addf %1159, %1158 : vector<2x32xf32>
    %1161 = arith.divf %1159, %1160 : vector<2x32xf32>
    %1162 = vector.extract_strided_slice %1149 {offsets = [0, 64], sizes = [2, 32], strides = [1, 1]} : vector<2x128xf32> to vector<2x32xf32>
    %1163 = math.tanh %1162 : vector<2x32xf32>
    %1164 = vector.extract_strided_slice %1149 {offsets = [0, 96], sizes = [2, 32], strides = [1, 1]} : vector<2x128xf32> to vector<2x32xf32>
    %1165 = arith.negf %1164 : vector<2x32xf32>
    %1166 = math.exp %1165 : vector<2x32xf32>
    %cst_155 = arith.constant 1.000000e+00 : f32
    %1167 = vector.broadcast %cst_155 : f32 to vector<2x32xf32>
    %1168 = arith.addf %1167, %1166 : vector<2x32xf32>
    %1169 = arith.divf %1167, %1168 : vector<2x32xf32>
    %1170 = arith.mulf %1161, %1072 : vector<2x32xf32>
    %1171 = arith.mulf %1155, %1163 : vector<2x32xf32>
    %1172 = arith.addf %1170, %1171 : vector<2x32xf32>
    %1173 = math.tanh %1172 : vector<2x32xf32>
    %1174 = arith.mulf %1169, %1173 : vector<2x32xf32>
    %1175 = tpu.concatenate %1148, %1174 in 1 : vector<2x32xf32>, vector<2x32xf32> -> vector<2x64xf32>
    %1176 = arith.truncf %1175 : vector<2x64xf32> to vector<2x64xbf16>
    %cst_156 = arith.constant dense<0.000000e+00> : vector<2x256xf32>
    %1177 = tpu.matmul %1176, %1079, %cst_156 {dimension_numbers = #tpu.dot_dimension_numbers<[1], [0], [0], [1], [0, 0, 1, 1], [], []>} : vector<2x64xbf16>, vector<64x256xbf16>, vector<2x256xf32> -> vector<2x256xf32>
    %1178 = vector.broadcast %1080 : vector<1x256xf32> to vector<2x256xf32>
    %1179 = arith.addf %1177, %1178 : vector<2x256xf32>
    %1180 = vector.extract_strided_slice %1078 {offsets = [0, 2, 0], sizes = [2, 1, 128], strides = [1, 1, 1]} : vector<2x8x128xf32> to vector<2x1x128xf32>
    %1181 = vector.shape_cast %1180 : vector<2x1x128xf32> to vector<2x128xf32>
    %1182 = vector.extract_strided_slice %1179 {offsets = [0, 0], sizes = [2, 128], strides = [1, 1]} : vector<2x256xf32> to vector<2x128xf32>
    %1183 = arith.addf %1181, %1182 : vector<2x128xf32>
    %1184 = vector.extract_strided_slice %1183 {offsets = [0, 0], sizes = [2, 32], strides = [1, 1]} : vector<2x128xf32> to vector<2x32xf32>
    %1185 = arith.negf %1184 : vector<2x32xf32>
    %1186 = math.exp %1185 : vector<2x32xf32>
    %cst_157 = arith.constant 1.000000e+00 : f32
    %1187 = vector.broadcast %cst_157 : f32 to vector<2x32xf32>
    %1188 = arith.addf %1187, %1186 : vector<2x32xf32>
    %1189 = arith.divf %1187, %1188 : vector<2x32xf32>
    %1190 = vector.extract_strided_slice %1183 {offsets = [0, 32], sizes = [2, 32], strides = [1, 1]} : vector<2x128xf32> to vector<2x32xf32>
    %1191 = arith.negf %1190 : vector<2x32xf32>
    %1192 = math.exp %1191 : vector<2x32xf32>
    %cst_158 = arith.constant 1.000000e+00 : f32
    %1193 = vector.broadcast %cst_158 : f32 to vector<2x32xf32>
    %1194 = arith.addf %1193, %1192 : vector<2x32xf32>
    %1195 = arith.divf %1193, %1194 : vector<2x32xf32>
    %1196 = vector.extract_strided_slice %1183 {offsets = [0, 64], sizes = [2, 32], strides = [1, 1]} : vector<2x128xf32> to vector<2x32xf32>
    %1197 = math.tanh %1196 : vector<2x32xf32>
    %1198 = vector.extract_strided_slice %1183 {offsets = [0, 96], sizes = [2, 32], strides = [1, 1]} : vector<2x128xf32> to vector<2x32xf32>
    %1199 = arith.negf %1198 : vector<2x32xf32>
    %1200 = math.exp %1199 : vector<2x32xf32>
    %cst_159 = arith.constant 1.000000e+00 : f32
    %1201 = vector.broadcast %cst_159 : f32 to vector<2x32xf32>
    %1202 = arith.addf %1201, %1200 : vector<2x32xf32>
    %1203 = arith.divf %1201, %1202 : vector<2x32xf32>
    %1204 = arith.mulf %1195, %1146 : vector<2x32xf32>
    %1205 = arith.mulf %1189, %1197 : vector<2x32xf32>
    %1206 = arith.addf %1204, %1205 : vector<2x32xf32>
    %1207 = math.tanh %1206 : vector<2x32xf32>
    %1208 = arith.mulf %1203, %1207 : vector<2x32xf32>
    %1209 = vector.extract_strided_slice %1179 {offsets = [0, 128], sizes = [2, 128], strides = [1, 1]} : vector<2x256xf32> to vector<2x128xf32>
    %1210 = vector.extract_strided_slice %1209 {offsets = [0, 0], sizes = [2, 32], strides = [1, 1]} : vector<2x128xf32> to vector<2x32xf32>
    %1211 = arith.negf %1210 : vector<2x32xf32>
    %1212 = math.exp %1211 : vector<2x32xf32>
    %cst_160 = arith.constant 1.000000e+00 : f32
    %1213 = vector.broadcast %cst_160 : f32 to vector<2x32xf32>
    %1214 = arith.addf %1213, %1212 : vector<2x32xf32>
    %1215 = arith.divf %1213, %1214 : vector<2x32xf32>
    %1216 = vector.extract_strided_slice %1209 {offsets = [0, 32], sizes = [2, 32], strides = [1, 1]} : vector<2x128xf32> to vector<2x32xf32>
    %1217 = arith.negf %1216 : vector<2x32xf32>
    %1218 = math.exp %1217 : vector<2x32xf32>
    %cst_161 = arith.constant 1.000000e+00 : f32
    %1219 = vector.broadcast %cst_161 : f32 to vector<2x32xf32>
    %1220 = arith.addf %1219, %1218 : vector<2x32xf32>
    %1221 = arith.divf %1219, %1220 : vector<2x32xf32>
    %1222 = vector.extract_strided_slice %1209 {offsets = [0, 64], sizes = [2, 32], strides = [1, 1]} : vector<2x128xf32> to vector<2x32xf32>
    %1223 = math.tanh %1222 : vector<2x32xf32>
    %1224 = vector.extract_strided_slice %1209 {offsets = [0, 96], sizes = [2, 32], strides = [1, 1]} : vector<2x128xf32> to vector<2x32xf32>
    %1225 = arith.negf %1224 : vector<2x32xf32>
    %1226 = math.exp %1225 : vector<2x32xf32>
    %cst_162 = arith.constant 1.000000e+00 : f32
    %1227 = vector.broadcast %cst_162 : f32 to vector<2x32xf32>
    %1228 = arith.addf %1227, %1226 : vector<2x32xf32>
    %1229 = arith.divf %1227, %1228 : vector<2x32xf32>
    %1230 = arith.mulf %1221, %1172 : vector<2x32xf32>
    %1231 = arith.mulf %1215, %1223 : vector<2x32xf32>
    %1232 = arith.addf %1230, %1231 : vector<2x32xf32>
    %1233 = math.tanh %1232 : vector<2x32xf32>
    %1234 = arith.mulf %1229, %1233 : vector<2x32xf32>
    %1235 = tpu.concatenate %1208, %1234 in 1 : vector<2x32xf32>, vector<2x32xf32> -> vector<2x64xf32>
    %1236 = arith.truncf %1235 : vector<2x64xf32> to vector<2x64xbf16>
    %cst_163 = arith.constant dense<0.000000e+00> : vector<2x256xf32>
    %1237 = tpu.matmul %1236, %1079, %cst_163 {dimension_numbers = #tpu.dot_dimension_numbers<[1], [0], [0], [1], [0, 0, 1, 1], [], []>} : vector<2x64xbf16>, vector<64x256xbf16>, vector<2x256xf32> -> vector<2x256xf32>
    %1238 = vector.broadcast %1080 : vector<1x256xf32> to vector<2x256xf32>
    %1239 = arith.addf %1237, %1238 : vector<2x256xf32>
    %1240 = vector.extract_strided_slice %1078 {offsets = [0, 3, 0], sizes = [2, 1, 128], strides = [1, 1, 1]} : vector<2x8x128xf32> to vector<2x1x128xf32>
    %1241 = vector.shape_cast %1240 : vector<2x1x128xf32> to vector<2x128xf32>
    %1242 = vector.extract_strided_slice %1239 {offsets = [0, 0], sizes = [2, 128], strides = [1, 1]} : vector<2x256xf32> to vector<2x128xf32>
    %1243 = arith.addf %1241, %1242 : vector<2x128xf32>
    %1244 = vector.extract_strided_slice %1243 {offsets = [0, 0], sizes = [2, 32], strides = [1, 1]} : vector<2x128xf32> to vector<2x32xf32>
    %1245 = arith.negf %1244 : vector<2x32xf32>
    %1246 = math.exp %1245 : vector<2x32xf32>
    %cst_164 = arith.constant 1.000000e+00 : f32
    %1247 = vector.broadcast %cst_164 : f32 to vector<2x32xf32>
    %1248 = arith.addf %1247, %1246 : vector<2x32xf32>
    %1249 = arith.divf %1247, %1248 : vector<2x32xf32>
    %1250 = vector.extract_strided_slice %1243 {offsets = [0, 32], sizes = [2, 32], strides = [1, 1]} : vector<2x128xf32> to vector<2x32xf32>
    %1251 = arith.negf %1250 : vector<2x32xf32>
    %1252 = math.exp %1251 : vector<2x32xf32>
    %cst_165 = arith.constant 1.000000e+00 : f32
    %1253 = vector.broadcast %cst_165 : f32 to vector<2x32xf32>
    %1254 = arith.addf %1253, %1252 : vector<2x32xf32>
    %1255 = arith.divf %1253, %1254 : vector<2x32xf32>
    %1256 = vector.extract_strided_slice %1243 {offsets = [0, 64], sizes = [2, 32], strides = [1, 1]} : vector<2x128xf32> to vector<2x32xf32>
    %1257 = math.tanh %1256 : vector<2x32xf32>
    %1258 = vector.extract_strided_slice %1243 {offsets = [0, 96], sizes = [2, 32], strides = [1, 1]} : vector<2x128xf32> to vector<2x32xf32>
    %1259 = arith.negf %1258 : vector<2x32xf32>
    %1260 = math.exp %1259 : vector<2x32xf32>
    %cst_166 = arith.constant 1.000000e+00 : f32
    %1261 = vector.broadcast %cst_166 : f32 to vector<2x32xf32>
    %1262 = arith.addf %1261, %1260 : vector<2x32xf32>
    %1263 = arith.divf %1261, %1262 : vector<2x32xf32>
    %1264 = arith.mulf %1255, %1206 : vector<2x32xf32>
    %1265 = arith.mulf %1249, %1257 : vector<2x32xf32>
    %1266 = arith.addf %1264, %1265 : vector<2x32xf32>
    %1267 = math.tanh %1266 : vector<2x32xf32>
    %1268 = arith.mulf %1263, %1267 : vector<2x32xf32>
    %1269 = vector.extract_strided_slice %1239 {offsets = [0, 128], sizes = [2, 128], strides = [1, 1]} : vector<2x256xf32> to vector<2x128xf32>
    %1270 = vector.extract_strided_slice %1269 {offsets = [0, 0], sizes = [2, 32], strides = [1, 1]} : vector<2x128xf32> to vector<2x32xf32>
    %1271 = arith.negf %1270 : vector<2x32xf32>
    %1272 = math.exp %1271 : vector<2x32xf32>
    %cst_167 = arith.constant 1.000000e+00 : f32
    %1273 = vector.broadcast %cst_167 : f32 to vector<2x32xf32>
    %1274 = arith.addf %1273, %1272 : vector<2x32xf32>
    %1275 = arith.divf %1273, %1274 : vector<2x32xf32>
    %1276 = vector.extract_strided_slice %1269 {offsets = [0, 32], sizes = [2, 32], strides = [1, 1]} : vector<2x128xf32> to vector<2x32xf32>
    %1277 = arith.negf %1276 : vector<2x32xf32>
    %1278 = math.exp %1277 : vector<2x32xf32>
    %cst_168 = arith.constant 1.000000e+00 : f32
    %1279 = vector.broadcast %cst_168 : f32 to vector<2x32xf32>
    %1280 = arith.addf %1279, %1278 : vector<2x32xf32>
    %1281 = arith.divf %1279, %1280 : vector<2x32xf32>
    %1282 = vector.extract_strided_slice %1269 {offsets = [0, 64], sizes = [2, 32], strides = [1, 1]} : vector<2x128xf32> to vector<2x32xf32>
    %1283 = math.tanh %1282 : vector<2x32xf32>
    %1284 = vector.extract_strided_slice %1269 {offsets = [0, 96], sizes = [2, 32], strides = [1, 1]} : vector<2x128xf32> to vector<2x32xf32>
    %1285 = arith.negf %1284 : vector<2x32xf32>
    %1286 = math.exp %1285 : vector<2x32xf32>
    %cst_169 = arith.constant 1.000000e+00 : f32
    %1287 = vector.broadcast %cst_169 : f32 to vector<2x32xf32>
    %1288 = arith.addf %1287, %1286 : vector<2x32xf32>
    %1289 = arith.divf %1287, %1288 : vector<2x32xf32>
    %1290 = arith.mulf %1281, %1232 : vector<2x32xf32>
    %1291 = arith.mulf %1275, %1283 : vector<2x32xf32>
    %1292 = arith.addf %1290, %1291 : vector<2x32xf32>
    %1293 = math.tanh %1292 : vector<2x32xf32>
    %1294 = arith.mulf %1289, %1293 : vector<2x32xf32>
    %1295 = tpu.concatenate %1268, %1294 in 1 : vector<2x32xf32>, vector<2x32xf32> -> vector<2x64xf32>
    %1296 = arith.truncf %1295 : vector<2x64xf32> to vector<2x64xbf16>
    %cst_170 = arith.constant dense<0.000000e+00> : vector<2x256xf32>
    %1297 = tpu.matmul %1296, %1079, %cst_170 {dimension_numbers = #tpu.dot_dimension_numbers<[1], [0], [0], [1], [0, 0, 1, 1], [], []>} : vector<2x64xbf16>, vector<64x256xbf16>, vector<2x256xf32> -> vector<2x256xf32>
    %1298 = vector.broadcast %1080 : vector<1x256xf32> to vector<2x256xf32>
    %1299 = arith.addf %1297, %1298 : vector<2x256xf32>
    %1300 = vector.extract_strided_slice %1078 {offsets = [0, 4, 0], sizes = [2, 1, 128], strides = [1, 1, 1]} : vector<2x8x128xf32> to vector<2x1x128xf32>
    %1301 = vector.shape_cast %1300 : vector<2x1x128xf32> to vector<2x128xf32>
    %1302 = vector.extract_strided_slice %1299 {offsets = [0, 0], sizes = [2, 128], strides = [1, 1]} : vector<2x256xf32> to vector<2x128xf32>
    %1303 = arith.addf %1301, %1302 : vector<2x128xf32>
    %1304 = vector.extract_strided_slice %1303 {offsets = [0, 0], sizes = [2, 32], strides = [1, 1]} : vector<2x128xf32> to vector<2x32xf32>
    %1305 = arith.negf %1304 : vector<2x32xf32>
    %1306 = math.exp %1305 : vector<2x32xf32>
    %cst_171 = arith.constant 1.000000e+00 : f32
    %1307 = vector.broadcast %cst_171 : f32 to vector<2x32xf32>
    %1308 = arith.addf %1307, %1306 : vector<2x32xf32>
    %1309 = arith.divf %1307, %1308 : vector<2x32xf32>
    %1310 = vector.extract_strided_slice %1303 {offsets = [0, 32], sizes = [2, 32], strides = [1, 1]} : vector<2x128xf32> to vector<2x32xf32>
    %1311 = arith.negf %1310 : vector<2x32xf32>
    %1312 = math.exp %1311 : vector<2x32xf32>
    %cst_172 = arith.constant 1.000000e+00 : f32
    %1313 = vector.broadcast %cst_172 : f32 to vector<2x32xf32>
    %1314 = arith.addf %1313, %1312 : vector<2x32xf32>
    %1315 = arith.divf %1313, %1314 : vector<2x32xf32>
    %1316 = vector.extract_strided_slice %1303 {offsets = [0, 64], sizes = [2, 32], strides = [1, 1]} : vector<2x128xf32> to vector<2x32xf32>
    %1317 = math.tanh %1316 : vector<2x32xf32>
    %1318 = vector.extract_strided_slice %1303 {offsets = [0, 96], sizes = [2, 32], strides = [1, 1]} : vector<2x128xf32> to vector<2x32xf32>
    %1319 = arith.negf %1318 : vector<2x32xf32>
    %1320 = math.exp %1319 : vector<2x32xf32>
    %cst_173 = arith.constant 1.000000e+00 : f32
    %1321 = vector.broadcast %cst_173 : f32 to vector<2x32xf32>
    %1322 = arith.addf %1321, %1320 : vector<2x32xf32>
    %1323 = arith.divf %1321, %1322 : vector<2x32xf32>
    %1324 = arith.mulf %1315, %1266 : vector<2x32xf32>
    %1325 = arith.mulf %1309, %1317 : vector<2x32xf32>
    %1326 = arith.addf %1324, %1325 : vector<2x32xf32>
    %1327 = math.tanh %1326 : vector<2x32xf32>
    %1328 = arith.mulf %1323, %1327 : vector<2x32xf32>
    %1329 = vector.extract_strided_slice %1299 {offsets = [0, 128], sizes = [2, 128], strides = [1, 1]} : vector<2x256xf32> to vector<2x128xf32>
    %1330 = vector.extract_strided_slice %1329 {offsets = [0, 0], sizes = [2, 32], strides = [1, 1]} : vector<2x128xf32> to vector<2x32xf32>
    %1331 = arith.negf %1330 : vector<2x32xf32>
    %1332 = math.exp %1331 : vector<2x32xf32>
    %cst_174 = arith.constant 1.000000e+00 : f32
    %1333 = vector.broadcast %cst_174 : f32 to vector<2x32xf32>
    %1334 = arith.addf %1333, %1332 : vector<2x32xf32>
    %1335 = arith.divf %1333, %1334 : vector<2x32xf32>
    %1336 = vector.extract_strided_slice %1329 {offsets = [0, 32], sizes = [2, 32], strides = [1, 1]} : vector<2x128xf32> to vector<2x32xf32>
    %1337 = arith.negf %1336 : vector<2x32xf32>
    %1338 = math.exp %1337 : vector<2x32xf32>
    %cst_175 = arith.constant 1.000000e+00 : f32
    %1339 = vector.broadcast %cst_175 : f32 to vector<2x32xf32>
    %1340 = arith.addf %1339, %1338 : vector<2x32xf32>
    %1341 = arith.divf %1339, %1340 : vector<2x32xf32>
    %1342 = vector.extract_strided_slice %1329 {offsets = [0, 64], sizes = [2, 32], strides = [1, 1]} : vector<2x128xf32> to vector<2x32xf32>
    %1343 = math.tanh %1342 : vector<2x32xf32>
    %1344 = vector.extract_strided_slice %1329 {offsets = [0, 96], sizes = [2, 32], strides = [1, 1]} : vector<2x128xf32> to vector<2x32xf32>
    %1345 = arith.negf %1344 : vector<2x32xf32>
    %1346 = math.exp %1345 : vector<2x32xf32>
    %cst_176 = arith.constant 1.000000e+00 : f32
    %1347 = vector.broadcast %cst_176 : f32 to vector<2x32xf32>
    %1348 = arith.addf %1347, %1346 : vector<2x32xf32>
    %1349 = arith.divf %1347, %1348 : vector<2x32xf32>
    %1350 = arith.mulf %1341, %1292 : vector<2x32xf32>
    %1351 = arith.mulf %1335, %1343 : vector<2x32xf32>
    %1352 = arith.addf %1350, %1351 : vector<2x32xf32>
    %1353 = math.tanh %1352 : vector<2x32xf32>
    %1354 = arith.mulf %1349, %1353 : vector<2x32xf32>
    %1355 = tpu.concatenate %1328, %1354 in 1 : vector<2x32xf32>, vector<2x32xf32> -> vector<2x64xf32>
    %1356 = arith.truncf %1355 : vector<2x64xf32> to vector<2x64xbf16>
    %cst_177 = arith.constant dense<0.000000e+00> : vector<2x256xf32>
    %1357 = tpu.matmul %1356, %1079, %cst_177 {dimension_numbers = #tpu.dot_dimension_numbers<[1], [0], [0], [1], [0, 0, 1, 1], [], []>} : vector<2x64xbf16>, vector<64x256xbf16>, vector<2x256xf32> -> vector<2x256xf32>
    %1358 = vector.broadcast %1080 : vector<1x256xf32> to vector<2x256xf32>
    %1359 = arith.addf %1357, %1358 : vector<2x256xf32>
    %1360 = vector.extract_strided_slice %1078 {offsets = [0, 5, 0], sizes = [2, 1, 128], strides = [1, 1, 1]} : vector<2x8x128xf32> to vector<2x1x128xf32>
    %1361 = vector.shape_cast %1360 : vector<2x1x128xf32> to vector<2x128xf32>
    %1362 = vector.extract_strided_slice %1359 {offsets = [0, 0], sizes = [2, 128], strides = [1, 1]} : vector<2x256xf32> to vector<2x128xf32>
    %1363 = arith.addf %1361, %1362 : vector<2x128xf32>
    %1364 = vector.extract_strided_slice %1363 {offsets = [0, 0], sizes = [2, 32], strides = [1, 1]} : vector<2x128xf32> to vector<2x32xf32>
    %1365 = arith.negf %1364 : vector<2x32xf32>
    %1366 = math.exp %1365 : vector<2x32xf32>
    %cst_178 = arith.constant 1.000000e+00 : f32
    %1367 = vector.broadcast %cst_178 : f32 to vector<2x32xf32>
    %1368 = arith.addf %1367, %1366 : vector<2x32xf32>
    %1369 = arith.divf %1367, %1368 : vector<2x32xf32>
    %1370 = vector.extract_strided_slice %1363 {offsets = [0, 32], sizes = [2, 32], strides = [1, 1]} : vector<2x128xf32> to vector<2x32xf32>
    %1371 = arith.negf %1370 : vector<2x32xf32>
    %1372 = math.exp %1371 : vector<2x32xf32>
    %cst_179 = arith.constant 1.000000e+00 : f32
    %1373 = vector.broadcast %cst_179 : f32 to vector<2x32xf32>
    %1374 = arith.addf %1373, %1372 : vector<2x32xf32>
    %1375 = arith.divf %1373, %1374 : vector<2x32xf32>
    %1376 = vector.extract_strided_slice %1363 {offsets = [0, 64], sizes = [2, 32], strides = [1, 1]} : vector<2x128xf32> to vector<2x32xf32>
    %1377 = math.tanh %1376 : vector<2x32xf32>
    %1378 = vector.extract_strided_slice %1363 {offsets = [0, 96], sizes = [2, 32], strides = [1, 1]} : vector<2x128xf32> to vector<2x32xf32>
    %1379 = arith.negf %1378 : vector<2x32xf32>
    %1380 = math.exp %1379 : vector<2x32xf32>
    %cst_180 = arith.constant 1.000000e+00 : f32
    %1381 = vector.broadcast %cst_180 : f32 to vector<2x32xf32>
    %1382 = arith.addf %1381, %1380 : vector<2x32xf32>
    %1383 = arith.divf %1381, %1382 : vector<2x32xf32>
    %1384 = arith.mulf %1375, %1326 : vector<2x32xf32>
    %1385 = arith.mulf %1369, %1377 : vector<2x32xf32>
    %1386 = arith.addf %1384, %1385 : vector<2x32xf32>
    %1387 = math.tanh %1386 : vector<2x32xf32>
    %1388 = arith.mulf %1383, %1387 : vector<2x32xf32>
    %1389 = vector.extract_strided_slice %1359 {offsets = [0, 128], sizes = [2, 128], strides = [1, 1]} : vector<2x256xf32> to vector<2x128xf32>
    %1390 = vector.extract_strided_slice %1389 {offsets = [0, 0], sizes = [2, 32], strides = [1, 1]} : vector<2x128xf32> to vector<2x32xf32>
    %1391 = arith.negf %1390 : vector<2x32xf32>
    %1392 = math.exp %1391 : vector<2x32xf32>
    %cst_181 = arith.constant 1.000000e+00 : f32
    %1393 = vector.broadcast %cst_181 : f32 to vector<2x32xf32>
    %1394 = arith.addf %1393, %1392 : vector<2x32xf32>
    %1395 = arith.divf %1393, %1394 : vector<2x32xf32>
    %1396 = vector.extract_strided_slice %1389 {offsets = [0, 32], sizes = [2, 32], strides = [1, 1]} : vector<2x128xf32> to vector<2x32xf32>
    %1397 = arith.negf %1396 : vector<2x32xf32>
    %1398 = math.exp %1397 : vector<2x32xf32>
    %cst_182 = arith.constant 1.000000e+00 : f32
    %1399 = vector.broadcast %cst_182 : f32 to vector<2x32xf32>
    %1400 = arith.addf %1399, %1398 : vector<2x32xf32>
    %1401 = arith.divf %1399, %1400 : vector<2x32xf32>
    %1402 = vector.extract_strided_slice %1389 {offsets = [0, 64], sizes = [2, 32], strides = [1, 1]} : vector<2x128xf32> to vector<2x32xf32>
    %1403 = math.tanh %1402 : vector<2x32xf32>
    %1404 = vector.extract_strided_slice %1389 {offsets = [0, 96], sizes = [2, 32], strides = [1, 1]} : vector<2x128xf32> to vector<2x32xf32>
    %1405 = arith.negf %1404 : vector<2x32xf32>
    %1406 = math.exp %1405 : vector<2x32xf32>
    %cst_183 = arith.constant 1.000000e+00 : f32
    %1407 = vector.broadcast %cst_183 : f32 to vector<2x32xf32>
    %1408 = arith.addf %1407, %1406 : vector<2x32xf32>
    %1409 = arith.divf %1407, %1408 : vector<2x32xf32>
    %1410 = arith.mulf %1401, %1352 : vector<2x32xf32>
    %1411 = arith.mulf %1395, %1403 : vector<2x32xf32>
    %1412 = arith.addf %1410, %1411 : vector<2x32xf32>
    %1413 = math.tanh %1412 : vector<2x32xf32>
    %1414 = arith.mulf %1409, %1413 : vector<2x32xf32>
    %1415 = tpu.concatenate %1388, %1414 in 1 : vector<2x32xf32>, vector<2x32xf32> -> vector<2x64xf32>
    %1416 = arith.truncf %1415 : vector<2x64xf32> to vector<2x64xbf16>
    %cst_184 = arith.constant dense<0.000000e+00> : vector<2x256xf32>
    %1417 = tpu.matmul %1416, %1079, %cst_184 {dimension_numbers = #tpu.dot_dimension_numbers<[1], [0], [0], [1], [0, 0, 1, 1], [], []>} : vector<2x64xbf16>, vector<64x256xbf16>, vector<2x256xf32> -> vector<2x256xf32>
    %1418 = vector.broadcast %1080 : vector<1x256xf32> to vector<2x256xf32>
    %1419 = arith.addf %1417, %1418 : vector<2x256xf32>
    %1420 = vector.extract_strided_slice %1078 {offsets = [0, 6, 0], sizes = [2, 1, 128], strides = [1, 1, 1]} : vector<2x8x128xf32> to vector<2x1x128xf32>
    %1421 = vector.shape_cast %1420 : vector<2x1x128xf32> to vector<2x128xf32>
    %1422 = vector.extract_strided_slice %1419 {offsets = [0, 0], sizes = [2, 128], strides = [1, 1]} : vector<2x256xf32> to vector<2x128xf32>
    %1423 = arith.addf %1421, %1422 : vector<2x128xf32>
    %1424 = vector.extract_strided_slice %1423 {offsets = [0, 0], sizes = [2, 32], strides = [1, 1]} : vector<2x128xf32> to vector<2x32xf32>
    %1425 = arith.negf %1424 : vector<2x32xf32>
    %1426 = math.exp %1425 : vector<2x32xf32>
    %cst_185 = arith.constant 1.000000e+00 : f32
    %1427 = vector.broadcast %cst_185 : f32 to vector<2x32xf32>
    %1428 = arith.addf %1427, %1426 : vector<2x32xf32>
    %1429 = arith.divf %1427, %1428 : vector<2x32xf32>
    %1430 = vector.extract_strided_slice %1423 {offsets = [0, 32], sizes = [2, 32], strides = [1, 1]} : vector<2x128xf32> to vector<2x32xf32>
    %1431 = arith.negf %1430 : vector<2x32xf32>
    %1432 = math.exp %1431 : vector<2x32xf32>
    %cst_186 = arith.constant 1.000000e+00 : f32
    %1433 = vector.broadcast %cst_186 : f32 to vector<2x32xf32>
    %1434 = arith.addf %1433, %1432 : vector<2x32xf32>
    %1435 = arith.divf %1433, %1434 : vector<2x32xf32>
    %1436 = vector.extract_strided_slice %1423 {offsets = [0, 64], sizes = [2, 32], strides = [1, 1]} : vector<2x128xf32> to vector<2x32xf32>
    %1437 = math.tanh %1436 : vector<2x32xf32>
    %1438 = vector.extract_strided_slice %1423 {offsets = [0, 96], sizes = [2, 32], strides = [1, 1]} : vector<2x128xf32> to vector<2x32xf32>
    %1439 = arith.negf %1438 : vector<2x32xf32>
    %1440 = math.exp %1439 : vector<2x32xf32>
    %cst_187 = arith.constant 1.000000e+00 : f32
    %1441 = vector.broadcast %cst_187 : f32 to vector<2x32xf32>
    %1442 = arith.addf %1441, %1440 : vector<2x32xf32>
    %1443 = arith.divf %1441, %1442 : vector<2x32xf32>
    %1444 = arith.mulf %1435, %1386 : vector<2x32xf32>
    %1445 = arith.mulf %1429, %1437 : vector<2x32xf32>
    %1446 = arith.addf %1444, %1445 : vector<2x32xf32>
    %1447 = math.tanh %1446 : vector<2x32xf32>
    %1448 = arith.mulf %1443, %1447 : vector<2x32xf32>
    %1449 = vector.extract_strided_slice %1419 {offsets = [0, 128], sizes = [2, 128], strides = [1, 1]} : vector<2x256xf32> to vector<2x128xf32>
    %1450 = vector.extract_strided_slice %1449 {offsets = [0, 0], sizes = [2, 32], strides = [1, 1]} : vector<2x128xf32> to vector<2x32xf32>
    %1451 = arith.negf %1450 : vector<2x32xf32>
    %1452 = math.exp %1451 : vector<2x32xf32>
    %cst_188 = arith.constant 1.000000e+00 : f32
    %1453 = vector.broadcast %cst_188 : f32 to vector<2x32xf32>
    %1454 = arith.addf %1453, %1452 : vector<2x32xf32>
    %1455 = arith.divf %1453, %1454 : vector<2x32xf32>
    %1456 = vector.extract_strided_slice %1449 {offsets = [0, 32], sizes = [2, 32], strides = [1, 1]} : vector<2x128xf32> to vector<2x32xf32>
    %1457 = arith.negf %1456 : vector<2x32xf32>
    %1458 = math.exp %1457 : vector<2x32xf32>
    %cst_189 = arith.constant 1.000000e+00 : f32
    %1459 = vector.broadcast %cst_189 : f32 to vector<2x32xf32>
    %1460 = arith.addf %1459, %1458 : vector<2x32xf32>
    %1461 = arith.divf %1459, %1460 : vector<2x32xf32>
    %1462 = vector.extract_strided_slice %1449 {offsets = [0, 64], sizes = [2, 32], strides = [1, 1]} : vector<2x128xf32> to vector<2x32xf32>
    %1463 = math.tanh %1462 : vector<2x32xf32>
    %1464 = vector.extract_strided_slice %1449 {offsets = [0, 96], sizes = [2, 32], strides = [1, 1]} : vector<2x128xf32> to vector<2x32xf32>
    %1465 = arith.negf %1464 : vector<2x32xf32>
    %1466 = math.exp %1465 : vector<2x32xf32>
    %cst_190 = arith.constant 1.000000e+00 : f32
    %1467 = vector.broadcast %cst_190 : f32 to vector<2x32xf32>
    %1468 = arith.addf %1467, %1466 : vector<2x32xf32>
    %1469 = arith.divf %1467, %1468 : vector<2x32xf32>
    %1470 = arith.mulf %1461, %1412 : vector<2x32xf32>
    %1471 = arith.mulf %1455, %1463 : vector<2x32xf32>
    %1472 = arith.addf %1470, %1471 : vector<2x32xf32>
    %1473 = math.tanh %1472 : vector<2x32xf32>
    %1474 = arith.mulf %1469, %1473 : vector<2x32xf32>
    %1475 = tpu.concatenate %1448, %1474 in 1 : vector<2x32xf32>, vector<2x32xf32> -> vector<2x64xf32>
    %1476 = arith.truncf %1475 : vector<2x64xf32> to vector<2x64xbf16>
    %cst_191 = arith.constant dense<0.000000e+00> : vector<2x256xf32>
    %1477 = tpu.matmul %1476, %1079, %cst_191 {dimension_numbers = #tpu.dot_dimension_numbers<[1], [0], [0], [1], [0, 0, 1, 1], [], []>} : vector<2x64xbf16>, vector<64x256xbf16>, vector<2x256xf32> -> vector<2x256xf32>
    %1478 = vector.broadcast %1080 : vector<1x256xf32> to vector<2x256xf32>
    %1479 = arith.addf %1477, %1478 : vector<2x256xf32>
    %1480 = vector.extract_strided_slice %1078 {offsets = [0, 7, 0], sizes = [2, 1, 128], strides = [1, 1, 1]} : vector<2x8x128xf32> to vector<2x1x128xf32>
    %1481 = vector.shape_cast %1480 : vector<2x1x128xf32> to vector<2x128xf32>
    %1482 = vector.extract_strided_slice %1479 {offsets = [0, 0], sizes = [2, 128], strides = [1, 1]} : vector<2x256xf32> to vector<2x128xf32>
    %1483 = arith.addf %1481, %1482 : vector<2x128xf32>
    %1484 = vector.extract_strided_slice %1483 {offsets = [0, 0], sizes = [2, 32], strides = [1, 1]} : vector<2x128xf32> to vector<2x32xf32>
    %1485 = arith.negf %1484 : vector<2x32xf32>
    %1486 = math.exp %1485 : vector<2x32xf32>
    %cst_192 = arith.constant 1.000000e+00 : f32
    %1487 = vector.broadcast %cst_192 : f32 to vector<2x32xf32>
    %1488 = arith.addf %1487, %1486 : vector<2x32xf32>
    %1489 = arith.divf %1487, %1488 : vector<2x32xf32>
    %1490 = vector.extract_strided_slice %1483 {offsets = [0, 32], sizes = [2, 32], strides = [1, 1]} : vector<2x128xf32> to vector<2x32xf32>
    %1491 = arith.negf %1490 : vector<2x32xf32>
    %1492 = math.exp %1491 : vector<2x32xf32>
    %cst_193 = arith.constant 1.000000e+00 : f32
    %1493 = vector.broadcast %cst_193 : f32 to vector<2x32xf32>
    %1494 = arith.addf %1493, %1492 : vector<2x32xf32>
    %1495 = arith.divf %1493, %1494 : vector<2x32xf32>
    %1496 = vector.extract_strided_slice %1483 {offsets = [0, 64], sizes = [2, 32], strides = [1, 1]} : vector<2x128xf32> to vector<2x32xf32>
    %1497 = math.tanh %1496 : vector<2x32xf32>
    %1498 = vector.extract_strided_slice %1483 {offsets = [0, 96], sizes = [2, 32], strides = [1, 1]} : vector<2x128xf32> to vector<2x32xf32>
    %1499 = arith.negf %1498 : vector<2x32xf32>
    %1500 = math.exp %1499 : vector<2x32xf32>
    %cst_194 = arith.constant 1.000000e+00 : f32
    %1501 = vector.broadcast %cst_194 : f32 to vector<2x32xf32>
    %1502 = arith.addf %1501, %1500 : vector<2x32xf32>
    %1503 = arith.divf %1501, %1502 : vector<2x32xf32>
    %1504 = arith.mulf %1495, %1446 : vector<2x32xf32>
    %1505 = arith.mulf %1489, %1497 : vector<2x32xf32>
    %1506 = arith.addf %1504, %1505 : vector<2x32xf32>
    %1507 = math.tanh %1506 : vector<2x32xf32>
    %1508 = arith.mulf %1503, %1507 : vector<2x32xf32>
    %1509 = vector.extract_strided_slice %1479 {offsets = [0, 128], sizes = [2, 128], strides = [1, 1]} : vector<2x256xf32> to vector<2x128xf32>
    %1510 = vector.extract_strided_slice %1509 {offsets = [0, 0], sizes = [2, 32], strides = [1, 1]} : vector<2x128xf32> to vector<2x32xf32>
    %1511 = arith.negf %1510 : vector<2x32xf32>
    %1512 = math.exp %1511 : vector<2x32xf32>
    %cst_195 = arith.constant 1.000000e+00 : f32
    %1513 = vector.broadcast %cst_195 : f32 to vector<2x32xf32>
    %1514 = arith.addf %1513, %1512 : vector<2x32xf32>
    %1515 = arith.divf %1513, %1514 : vector<2x32xf32>
    %1516 = vector.extract_strided_slice %1509 {offsets = [0, 32], sizes = [2, 32], strides = [1, 1]} : vector<2x128xf32> to vector<2x32xf32>
    %1517 = arith.negf %1516 : vector<2x32xf32>
    %1518 = math.exp %1517 : vector<2x32xf32>
    %cst_196 = arith.constant 1.000000e+00 : f32
    %1519 = vector.broadcast %cst_196 : f32 to vector<2x32xf32>
    %1520 = arith.addf %1519, %1518 : vector<2x32xf32>
    %1521 = arith.divf %1519, %1520 : vector<2x32xf32>
    %1522 = vector.extract_strided_slice %1509 {offsets = [0, 64], sizes = [2, 32], strides = [1, 1]} : vector<2x128xf32> to vector<2x32xf32>
    %1523 = math.tanh %1522 : vector<2x32xf32>
    %1524 = vector.extract_strided_slice %1509 {offsets = [0, 96], sizes = [2, 32], strides = [1, 1]} : vector<2x128xf32> to vector<2x32xf32>
    %1525 = arith.negf %1524 : vector<2x32xf32>
    %1526 = math.exp %1525 : vector<2x32xf32>
    %cst_197 = arith.constant 1.000000e+00 : f32
    %1527 = vector.broadcast %cst_197 : f32 to vector<2x32xf32>
    %1528 = arith.addf %1527, %1526 : vector<2x32xf32>
    %1529 = arith.divf %1527, %1528 : vector<2x32xf32>
    %1530 = arith.mulf %1521, %1472 : vector<2x32xf32>
    %1531 = arith.mulf %1515, %1523 : vector<2x32xf32>
    %1532 = arith.addf %1530, %1531 : vector<2x32xf32>
    %1533 = math.tanh %1532 : vector<2x32xf32>
    %1534 = arith.mulf %1529, %1533 : vector<2x32xf32>
    %1535 = tpu.concatenate %1508, %1534 in 1 : vector<2x32xf32>, vector<2x32xf32> -> vector<2x64xf32>
    %1536 = arith.truncf %1535 : vector<2x64xf32> to vector<2x64xbf16>
    %cst_198 = arith.constant dense<0.000000e+00> : vector<2x256xf32>
    %1537 = tpu.matmul %1536, %1079, %cst_198 {dimension_numbers = #tpu.dot_dimension_numbers<[1], [0], [0], [1], [0, 0, 1, 1], [], []>} : vector<2x64xbf16>, vector<64x256xbf16>, vector<2x256xf32> -> vector<2x256xf32>
    %1538 = vector.broadcast %1080 : vector<1x256xf32> to vector<2x256xf32>
    %1539 = arith.addf %1537, %1538 : vector<2x256xf32>
    %1540 = vector.extract_strided_slice %1539 {offsets = [0, 128], sizes = [2, 128], strides = [1, 1]} : vector<2x256xf32> to vector<2x128xf32>
    %1541 = vector.extract_strided_slice %1540 {offsets = [0, 0], sizes = [2, 32], strides = [1, 1]} : vector<2x128xf32> to vector<2x32xf32>
    %1542 = arith.negf %1541 : vector<2x32xf32>
    %1543 = math.exp %1542 : vector<2x32xf32>
    %cst_199 = arith.constant 1.000000e+00 : f32
    %1544 = vector.broadcast %cst_199 : f32 to vector<2x32xf32>
    %1545 = arith.addf %1544, %1543 : vector<2x32xf32>
    %1546 = arith.divf %1544, %1545 : vector<2x32xf32>
    %1547 = vector.extract_strided_slice %1540 {offsets = [0, 32], sizes = [2, 32], strides = [1, 1]} : vector<2x128xf32> to vector<2x32xf32>
    %1548 = arith.negf %1547 : vector<2x32xf32>
    %1549 = math.exp %1548 : vector<2x32xf32>
    %cst_200 = arith.constant 1.000000e+00 : f32
    %1550 = vector.broadcast %cst_200 : f32 to vector<2x32xf32>
    %1551 = arith.addf %1550, %1549 : vector<2x32xf32>
    %1552 = arith.divf %1550, %1551 : vector<2x32xf32>
    %1553 = vector.extract_strided_slice %1540 {offsets = [0, 64], sizes = [2, 32], strides = [1, 1]} : vector<2x128xf32> to vector<2x32xf32>
    %1554 = math.tanh %1553 : vector<2x32xf32>
    %1555 = vector.extract_strided_slice %1540 {offsets = [0, 96], sizes = [2, 32], strides = [1, 1]} : vector<2x128xf32> to vector<2x32xf32>
    %1556 = arith.negf %1555 : vector<2x32xf32>
    %1557 = math.exp %1556 : vector<2x32xf32>
    %cst_201 = arith.constant 1.000000e+00 : f32
    %1558 = vector.broadcast %cst_201 : f32 to vector<2x32xf32>
    %1559 = arith.addf %1558, %1557 : vector<2x32xf32>
    %1560 = arith.divf %1558, %1559 : vector<2x32xf32>
    %1561 = arith.mulf %1552, %1532 : vector<2x32xf32>
    %1562 = arith.mulf %1546, %1554 : vector<2x32xf32>
    %1563 = arith.addf %1561, %1562 : vector<2x32xf32>
    %1564 = math.tanh %1563 : vector<2x32xf32>
    %1565 = arith.mulf %1560, %1564 : vector<2x32xf32>
    %1566 = vector.shape_cast %1174 : vector<2x32xf32> to vector<2x1x32xf32>
    %1567 = vector.shape_cast %1234 : vector<2x32xf32> to vector<2x1x32xf32>
    %1568 = vector.shape_cast %1294 : vector<2x32xf32> to vector<2x1x32xf32>
    %1569 = vector.shape_cast %1354 : vector<2x32xf32> to vector<2x1x32xf32>
    %1570 = vector.shape_cast %1414 : vector<2x32xf32> to vector<2x1x32xf32>
    %1571 = vector.shape_cast %1474 : vector<2x32xf32> to vector<2x1x32xf32>
    %1572 = vector.shape_cast %1534 : vector<2x32xf32> to vector<2x1x32xf32>
    %1573 = vector.shape_cast %1565 : vector<2x32xf32> to vector<2x1x32xf32>
    %1574 = tpu.concatenate %1566, %1567, %1568, %1569, %1570, %1571, %1572, %1573 in 1 : vector<2x1x32xf32>, vector<2x1x32xf32>, vector<2x1x32xf32>, vector<2x1x32xf32>, vector<2x1x32xf32>, vector<2x1x32xf32>, vector<2x1x32xf32>, vector<2x1x32xf32> -> vector<2x8x32xf32>
    %c0_202 = arith.constant 0 : index
    %c0_203 = arith.constant 0 : index
    %1575 = vector.load %arg11[%c0_202, %c0_203] : memref<32x64xbf16, #tpu.memory_space<vmem>>, vector<32x64xbf16>
    %1576 = vector.shape_cast %1574 : vector<2x8x32xf32> to vector<16x32xf32>
    %1577 = arith.truncf %1576 : vector<16x32xf32> to vector<16x32xbf16>
    %cst_204 = arith.constant dense<0.000000e+00> : vector<16x64xf32>
    %1578 = tpu.matmul %1577, %1575, %cst_204 {dimension_numbers = #tpu.dot_dimension_numbers<[1], [0], [0], [1], [0, 0, 1, 1], [], []>} : vector<16x32xbf16>, vector<32x64xbf16>, vector<16x64xf32> -> vector<16x64xf32>
    %1579 = vector.shape_cast %1578 : vector<16x64xf32> to vector<2x8x64xf32>
    %c0_205 = arith.constant 0 : index
    %c0_206 = arith.constant 0 : index
    %1580 = vector.load %arg12[%c0_205, %c0_206] : memref<1x64xf32, #tpu.memory_space<vmem>>, vector<1x64xf32>
    %1581 = vector.shape_cast %1580 : vector<1x64xf32> to vector<1x1x64xf32>
    %1582 = vector.broadcast %1581 : vector<1x1x64xf32> to vector<2x8x64xf32>
    %1583 = arith.addf %1579, %1582 : vector<2x8x64xf32>
    "tpu.trace_start"() <{level = 10 : i32, message = "btd,bsd->bts"}> : () -> ()
    %cst_207 = arith.constant dense<0.000000e+00> : vector<2x8x8xf32>
    %1584 = tpu.matmul %1583, %1068, %cst_207 {dimension_numbers = #tpu.dot_dimension_numbers<[2], [2], [1], [1], [0, 0, 0, 1, 1, 1], [0], [0]>} : vector<2x8x64xf32>, vector<2x8x64xf32>, vector<2x8x8xf32> -> vector<2x8x8xf32>
    "tpu.trace_stop"() : () -> ()
    %cst_208 = arith.constant dense<0xFF800000> : vector<2x8xf32>
    %1585 = vector.multi_reduction <maximumf>, %1584, %cst_208 [2] : vector<2x8x8xf32> to vector<2x8xf32>
    %1586 = vector.shape_cast %1585 : vector<2x8xf32> to vector<2x8x1xf32>
    %1587 = vector.broadcast %1586 : vector<2x8x1xf32> to vector<2x8x8xf32>
    %1588 = arith.subf %1584, %1587 : vector<2x8x8xf32>
    %1589 = math.exp %1588 : vector<2x8x8xf32>
    %cst_209 = arith.constant dense<0.000000e+00> : vector<2x8xf32>
    %1590 = vector.multi_reduction <add>, %1589, %cst_209 [2] : vector<2x8x8xf32> to vector<2x8xf32>
    %1591 = vector.shape_cast %1590 : vector<2x8xf32> to vector<2x8x1xf32>
    %1592 = tpu.reciprocal %1591 {approx = true} : vector<2x8x1xf32> -> vector<2x8x1xf32>
    %1593 = vector.broadcast %1592 : vector<2x8x1xf32> to vector<2x8x8xf32>
    %1594 = arith.mulf %1589, %1593 : vector<2x8x8xf32>
    "tpu.trace_start"() <{level = 10 : i32, message = "bts,bsd->btd"}> : () -> ()
    %cst_210 = arith.constant dense<0.000000e+00> : vector<2x8x64xf32>
    %1595 = tpu.matmul %1594, %1068, %cst_210 {dimension_numbers = #tpu.dot_dimension_numbers<[2], [1], [1], [2], [0, 0, 0, 1, 1, 2], [0], [0]>} : vector<2x8x8xf32>, vector<2x8x64xf32>, vector<2x8x64xf32> -> vector<2x8x64xf32>
    "tpu.trace_stop"() : () -> ()
    %1596 = tpu.concatenate %1574, %1595 in 2 : vector<2x8x32xf32>, vector<2x8x64xf32> -> vector<2x8x96xf32>
    %c0_211 = arith.constant 0 : index
    %c0_212 = arith.constant 0 : index
    %1597 = vector.load %arg13[%c0_211, %c0_212] : memref<96x96xbf16, #tpu.memory_space<vmem>>, vector<96x96xbf16>
    %1598 = vector.shape_cast %1596 : vector<2x8x96xf32> to vector<16x96xf32>
    %1599 = arith.truncf %1598 : vector<16x96xf32> to vector<16x96xbf16>
    %cst_213 = arith.constant dense<0.000000e+00> : vector<16x96xf32>
    %1600 = tpu.matmul %1599, %1597, %cst_213 {dimension_numbers = #tpu.dot_dimension_numbers<[1], [0], [0], [1], [0, 0, 1, 1], [], []>} : vector<16x96xbf16>, vector<96x96xbf16>, vector<16x96xf32> -> vector<16x96xf32>
    %1601 = vector.shape_cast %1600 : vector<16x96xf32> to vector<2x8x96xf32>
    %c0_214 = arith.constant 0 : index
    %c0_215 = arith.constant 0 : index
    %1602 = vector.load %arg14[%c0_214, %c0_215] : memref<1x96xf32, #tpu.memory_space<vmem>>, vector<1x96xf32>
    %1603 = vector.shape_cast %1602 : vector<1x96xf32> to vector<1x1x96xf32>
    %1604 = vector.broadcast %1603 : vector<1x1x96xf32> to vector<2x8x96xf32>
    %1605 = arith.addf %1601, %1604 : vector<2x8x96xf32>
    %1606 = math.tanh %1605 : vector<2x8x96xf32>
    %c0_216 = arith.constant 0 : index
    %c0_217 = arith.constant 0 : index
    %1607 = vector.load %arg15[%c0_216, %c0_217] : memref<96x256xbf16, #tpu.memory_space<vmem>>, vector<96x256xbf16>
    %1608 = vector.shape_cast %1606 : vector<2x8x96xf32> to vector<16x96xf32>
    %1609 = arith.truncf %1608 : vector<16x96xf32> to vector<16x96xbf16>
    %cst_218 = arith.constant dense<0.000000e+00> : vector<16x256xf32>
    %1610 = tpu.matmul %1609, %1607, %cst_218 {dimension_numbers = #tpu.dot_dimension_numbers<[1], [0], [0], [1], [0, 0, 1, 1], [], []>} : vector<16x96xbf16>, vector<96x256xbf16>, vector<16x256xf32> -> vector<16x256xf32>
    %1611 = vector.shape_cast %1610 : vector<16x256xf32> to vector<2x8x256xf32>
    %c0_219 = arith.constant 0 : index
    %c0_220 = arith.constant 0 : index
    %1612 = vector.load %arg16[%c0_219, %c0_220] : memref<1x256xf32, #tpu.memory_space<vmem>>, vector<1x256xf32>
    %1613 = vector.shape_cast %1612 : vector<1x256xf32> to vector<1x1x256xf32>
    %1614 = vector.broadcast %1613 : vector<1x1x256xf32> to vector<2x8x256xf32>
    %1615 = arith.addf %1611, %1614 : vector<2x8x256xf32>
    %c0_221 = arith.constant 0 : index
    %c0_222 = arith.constant 0 : index
    %c0_223 = arith.constant 0 : index
    %1616 = vector.load %arg17[%c0_221, %c0_222, %c0_223] : memref<2x8x256xf32, #tpu.memory_space<vmem>>, vector<2x8x256xf32>
    tpu.vector_store %arg17[%c0_221, %c0_222, %c0_223], %1615 {strides = array<i32>} : memref<2x8x256xf32, #tpu.memory_space<vmem>>, vector<2x8x256xf32>,
    return
  }
}

</mosaic_0001>

<llo_original>
// kernel: seq2seq_forward.1
$region0: #{seq2seq_forward.1}
  #allocation0 [shape = 'u32[]', space=smem, size = 0x4, offset = 0x4, fixed_abs, tag = 'smem constant byte address 0x4 - core index']
  #allocation1 [shape = 'u32[144,128]{1,0:T(1,128)}', space=vmem, size = 0x12000, scoped, tag = 'internal scratch']
  %s0 = inlined_call_operand.vmem [shape: f32[2,8,64], index: 0, kind: input, shape index: {}]
  %s1 = inlined_call_operand.vmem [shape: f32[2,8,64], index: 1, kind: input, shape index: {}]
  %s2 = inlined_call_operand.vmem [shape: bf16[64,256], index: 2, kind: input, shape index: {}]
  %s3 = inlined_call_operand.vmem [shape: bf16[64,256], index: 3, kind: input, shape index: {}]
  %s4 = inlined_call_operand.vmem [shape: f32[1,256], index: 4, kind: input, shape index: {}]
  %s5 = inlined_call_operand.vmem [shape: bf16[64,256], index: 5, kind: input, shape index: {}]
  %s6 = inlined_call_operand.vmem [shape: bf16[64,256], index: 6, kind: input, shape index: {}]
  %s7 = inlined_call_operand.vmem [shape: f32[1,256], index: 7, kind: input, shape index: {}]
  %s8 = inlined_call_operand.vmem [shape: bf16[64,128], index: 8, kind: input, shape index: {}]
  %s9 = inlined_call_operand.vmem [shape: bf16[64,256], index: 9, kind: input, shape index: {}]
  %s10 = inlined_call_operand.vmem [shape: f32[1,256], index: 10, kind: input, shape index: {}]
  %s11 = inlined_call_operand.vmem [shape: bf16[32,64], index: 11, kind: input, shape index: {}]
  %s12 = inlined_call_operand.vmem [shape: f32[1,64], index: 12, kind: input, shape index: {}]
  %s13 = inlined_call_operand.vmem [shape: bf16[96,96], index: 13, kind: input, shape index: {}]
  %s14 = inlined_call_operand.vmem [shape: f32[1,96], index: 14, kind: input, shape index: {}]
  %s15 = inlined_call_operand.vmem [shape: bf16[96,256], index: 15, kind: input, shape index: {}]
  %s16 = inlined_call_operand.vmem [shape: f32[1,256], index: 16, kind: input, shape index: {}]
  %s17 = inlined_call_operand.hbm [shape: f32[2,8,256], index: 17, kind: output, shape index: {}]
  %s18 = sld [smem:[#allocation0]]
  $region78: #{seq2seq_forward.1} parent=0
    _
  %s20 = ssub.s32 1, %s18
  %s21 = scalar_select 0, %s20, %s18
  $region1: #{seq2seq_forward.1} parent=0
    #allocation2 [shape = 'u8[16384]{0}', space=vmem, size = 0x4000, scoped, tag = 'output window, operand 0, single buffered']
    #allocation3 [shape = 's32[1]{0}', space=sflag, size = 0x4, scoped, tag = 'scoped memory for seq2seq_forward.1']
    %22 = vsyncpa [#allocation3], 0
    // Predicated region
    $region2: #{seq2seq_forward.1} parent=1 // pred_check
      _
    $region3: #{seq2seq_forward.1} parent=1 // pred_check_branch
      %24 = sbr.rel (0) target = $region5
    $region4: #{seq2seq_forward.1} parent=1 // pred_region
      _
    $region5: #{seq2seq_forward.1} parent=1 // pred_fallthru
      _
    // Predicated region
    $region6: #{seq2seq_forward.1} parent=1 // pred_check
      _
    $region7: #{seq2seq_forward.1} parent=1 // pred_check_branch
      %26 = sbr.rel (0) target = $region9
    $region8: #{seq2seq_forward.1} parent=1 // pred_region
      _
    $region9: #{seq2seq_forward.1} parent=1 // pred_fallthru
      _
    // Predicated region
    $region10: #{seq2seq_forward.1} parent=1 // pred_check
      _
    $region11: #{seq2seq_forward.1} parent=1 // pred_check_branch
      %28 = sbr.rel (0) target = $region13
    $region12: #{seq2seq_forward.1} parent=1 // pred_region
      _
    $region13: #{seq2seq_forward.1} parent=1 // pred_fallthru
      _
    // Predicated region
    $region14: #{seq2seq_forward.1} parent=1 // pred_check
      _
    $region15: #{seq2seq_forward.1} parent=1 // pred_check_branch
      %30 = sbr.rel (0) target = $region17
    $region16: #{seq2seq_forward.1} parent=1 // pred_region
      _
    $region17: #{seq2seq_forward.1} parent=1 // pred_fallthru
      _
    // Predicated region
    $region18: #{seq2seq_forward.1} parent=1 // pred_check
      _
    $region19: #{seq2seq_forward.1} parent=1 // pred_check_branch
      %32 = sbr.rel (0) target = $region21
    $region20: #{seq2seq_forward.1} parent=1 // pred_region
      _
    $region21: #{seq2seq_forward.1} parent=1 // pred_fallthru
      _
    // Predicated region
    $region22: #{seq2seq_forward.1} parent=1 // pred_check
      _
    $region23: #{seq2seq_forward.1} parent=1 // pred_check_branch
      %34 = sbr.rel (0) target = $region25
    $region24: #{seq2seq_forward.1} parent=1 // pred_region
      _
    $region25: #{seq2seq_forward.1} parent=1 // pred_fallthru
      _
    // Predicated region
    $region26: #{seq2seq_forward.1} parent=1 // pred_check
      _
    $region27: #{seq2seq_forward.1} parent=1 // pred_check_branch
      %36 = sbr.rel (0) target = $region29
    $region28: #{seq2seq_forward.1} parent=1 // pred_region
      _
    $region29: #{seq2seq_forward.1} parent=1 // pred_fallthru
      _
    // Predicated region
    $region30: #{seq2seq_forward.1} parent=1 // pred_check
      _
    $region31: #{seq2seq_forward.1} parent=1 // pred_check_branch
      %38 = sbr.rel (0) target = $region33
    $region32: #{seq2seq_forward.1} parent=1 // pred_region
      _
    $region33: #{seq2seq_forward.1} parent=1 // pred_fallthru
      _
    // Predicated region
    $region34: #{seq2seq_forward.1} parent=1 // pred_check
      _
    $region35: #{seq2seq_forward.1} parent=1 // pred_check_branch
      %40 = sbr.rel (0) target = $region37
    $region36: #{seq2seq_forward.1} parent=1 // pred_region
      _
    $region37: #{seq2seq_forward.1} parent=1 // pred_fallthru
      _
    // Predicated region
    $region38: #{seq2seq_forward.1} parent=1 // pred_check
      _
    $region39: #{seq2seq_forward.1} parent=1 // pred_check_branch
      %42 = sbr.rel (0) target = $region41
    $region40: #{seq2seq_forward.1} parent=1 // pred_region
      _
    $region41: #{seq2seq_forward.1} parent=1 // pred_fallthru
      _
    // Predicated region
    $region42: #{seq2seq_forward.1} parent=1 // pred_check
      _
    $region43: #{seq2seq_forward.1} parent=1 // pred_check_branch
      %44 = sbr.rel (0) target = $region45
    $region44: #{seq2seq_forward.1} parent=1 // pred_region
      _
    $region45: #{seq2seq_forward.1} parent=1 // pred_fallthru
      _
    // Predicated region
    $region46: #{seq2seq_forward.1} parent=1 // pred_check
      _
    $region47: #{seq2seq_forward.1} parent=1 // pred_check_branch
      %46 = sbr.rel (0) target = $region49
    $region48: #{seq2seq_forward.1} parent=1 // pred_region
      _
    $region49: #{seq2seq_forward.1} parent=1 // pred_fallthru
      _
    // Predicated region
    $region50: #{seq2seq_forward.1} parent=1 // pred_check
      _
    $region51: #{seq2seq_forward.1} parent=1 // pred_check_branch
      %48 = sbr.rel (0) target = $region53
    $region52: #{seq2seq_forward.1} parent=1 // pred_region
      _
    $region53: #{seq2seq_forward.1} parent=1 // pred_fallthru
      _
    // Predicated region
    $region54: #{seq2seq_forward.1} parent=1 // pred_check
      _
    $region55: #{seq2seq_forward.1} parent=1 // pred_check_branch
      %50 = sbr.rel (0) target = $region57
    $region56: #{seq2seq_forward.1} parent=1 // pred_region
      _
    $region57: #{seq2seq_forward.1} parent=1 // pred_fallthru
      _
    // Predicated region
    $region58: #{seq2seq_forward.1} parent=1 // pred_check
      _
    $region59: #{seq2seq_forward.1} parent=1 // pred_check_branch
      %52 = sbr.rel (0) target = $region61
    $region60: #{seq2seq_forward.1} parent=1 // pred_region
      _
    $region61: #{seq2seq_forward.1} parent=1 // pred_fallthru
      _
    // Predicated region
    $region62: #{seq2seq_forward.1} parent=1 // pred_check
      _
    $region63: #{seq2seq_forward.1} parent=1 // pred_check_branch
      %54 = sbr.rel (0) target = $region65
    $region64: #{seq2seq_forward.1} parent=1 // pred_region
      _
    $region65: #{seq2seq_forward.1} parent=1 // pred_fallthru
      _
    // Predicated region
    $region66: #{seq2seq_forward.1} parent=1 // pred_check
      _
    $region67: #{seq2seq_forward.1} parent=1 // pred_check_branch
      %56 = sbr.rel (0) target = $region69
    $region68: #{seq2seq_forward.1} parent=1 // pred_region
      _
    $region69: #{seq2seq_forward.1} parent=1 // pred_fallthru
      _
    %v58 = vld [vmem:[%s0] sm:$0xff]
    %v59 = vld [vmem:[%s0 + $0x8] sm:$0xff]
    %v60 = vld [vmem:[%s2] sm:$0xff]
    %v61 = vld [vmem:[%s2 + $0x8] sm:$0xff]
    %v62 = vld [vmem:[%s2 + $0x10] sm:$0xff]
    %v63 = vld [vmem:[%s2 + $0x18] sm:$0xff]
    %v64 = vld [vmem:[%s2 + $0x20] sm:$0xff]
    %v65 = vld [vmem:[%s2 + $0x28] sm:$0xff]
    %v66 = vld [vmem:[%s2 + $0x30] sm:$0xff]
    %v67 = vld [vmem:[%s2 + $0x38] sm:$0xff]
    %v68 = vld [vmem:[%s3] sm:$0xff]
    %v69 = vld [vmem:[%s3 + $0x8] sm:$0xff]
    %v70 = vld [vmem:[%s3 + $0x10] sm:$0xff]
    %v71 = vld [vmem:[%s3 + $0x18] sm:$0xff]
    %v72 = vld [vmem:[%s3 + $0x20] sm:$0xff]
    %v73 = vld [vmem:[%s3 + $0x28] sm:$0xff]
    %v74 = vld [vmem:[%s3 + $0x30] sm:$0xff]
    %v75 = vld [vmem:[%s3 + $0x38] sm:$0xff]
    %v76 = vld [vmem:[%s4] sm:$0x3]
    %v77 = vpack.c.bf16 %v59, %v58
    %v86 = vunpack.c.l.b16 %v60
    %v87 = vunpack.c.h.b16 %v60
    %v88 = vunpack.c.l.b16 %v61
    %v89 = vunpack.c.h.b16 %v61
    %v90 = vunpack.c.l.b16 %v62
    %v91 = vunpack.c.h.b16 %v62
    %v92 = vunpack.c.l.b16 %v63
    %v93 = vunpack.c.h.b16 %v63
    %v94 = vunpack.c.l.b16 %v64
    %v95 = vunpack.c.h.b16 %v64
    %v96 = vunpack.c.l.b16 %v65
    %v97 = vunpack.c.h.b16 %v65
    %v98 = vunpack.c.l.b16 %v66
    %v99 = vunpack.c.h.b16 %v66
    %v100 = vunpack.c.l.b16 %v67
    %v101 = vunpack.c.h.b16 %v67
    %v102 = vpack.c.b16 %v88, %v86
    %v103 = vpack.c.b16 %v89, %v87
    %v104 = vpack.c.b16 %v92, %v90
    %v105 = vpack.c.b16 %v93, %v91
    %v106 = vpack.c.b16 %v96, %v94
    %v107 = vpack.c.b16 %v97, %v95
    %v108 = vpack.c.b16 %v100, %v98
    %v109 = vpack.c.b16 %v101, %v99
    %vm118 = vcmask 523264
    %v120 = vsel %vm118, %v77, 0
    %122 = vmatprep.subr.bf16.mxu0 0
    %123 = vmatpush1.bf16.msra.mxu0 0
    %124 = vmatprep.subr.bf16.mxu0 0
    %125 = vmatpush1.bf16.msra.mxu0 0
    %126 = vmatprep.subr.bf16.mxu0 0
    %127 = vmatpush1.bf16.msra.mxu0 0
    %128 = vmatprep.subr.bf16.mxu0 0
    %129 = vmatpush1.bf16.msra.mxu0 0
    %130 = vmatprep.subr.bf16.mxu0 %v109
    %131 = vmatpush1.bf16.msra.mxu0 %v108
    %132 = vmatprep.subr.bf16.mxu0 %v107
    %133 = vmatpush1.bf16.msra.mxu0 %v106
    %134 = vmatprep.subr.bf16.mxu0 %v105
    %135 = vmatpush1.bf16.msra.mxu0 %v104
    %136 = vmatprep.subr.bf16.mxu0 %v103
    %137 = vmatpush1.bf16.msra.mxu0 %v102
    %138 = vmatprep.subr.bf16.mxu0 0
    %139 = vmatpush2.bf16.msra.mxu0 0
    %140 = vmatprep.subr.bf16.mxu0 0
    %141 = vmatpush2.bf16.msra.mxu0 0
    %142 = vmatprep.subr.bf16.mxu0 0
    %143 = vmatpush2.bf16.msra.mxu0 0
    %144 = vmatprep.subr.bf16.mxu0 0
    %145 = vmatpush2.bf16.msra.mxu0 0
    %146 = vmatprep.subr.bf16.mxu0 0
    %147 = vmatpush2.bf16.msra.mxu0 0
    %148 = vmatprep.subr.bf16.mxu0 0
    %149 = vmatpush2.bf16.msra.mxu0 0
    %150 = vmatprep.subr.bf16.mxu0 0
    %151 = vmatpush2.bf16.msra.mxu0 0
    %152 = vmatprep.subr.bf16.mxu0 0
    %153 = vmatpush2.bf16.msra.mxu0 0
    %154 = vmatprep.mubr.bf16.mxu0 0
    %155 = vmatmul.mubr.bf16.gmra.mxu0 %v120
    %v156 = vpop.f32.mrf.mxu0
    %v157 = vadd.f32 0.0, %v156
    %v158 = vpop.f32.mrf.mxu0
    %v159 = vadd.f32 0.0, %v158
    %v160 = vpop.f32.mrf.mxu0
    %v161 = vadd.f32 0.0, %v160
    %v162 = vpop.f32.mrf.mxu0
    %v163 = vadd.f32 0.0, %v162
    %164 = vdwg.mxu0
    %v165 = vpack.c.bf16 0.0, 0.0
    %v167 = vlaneseq
    %v168 = vshrl.u32 %v167, 7
    %v169 = vsub.s32 0, %v168
    %v170 = vrot.slane %v76, %v169
    %v171 = vlaneseq
    %v172 = vshrl.u32 %v171, 7
    %v173 = vsub.s32 1, %v172
    %v174 = vrot.slane %v76, %v173
    %v185 = vunpack.c.l.b16 %v68
    %v186 = vunpack.c.h.b16 %v68
    %v187 = vunpack.c.l.b16 %v69
    %v188 = vunpack.c.h.b16 %v69
    %v189 = vunpack.c.l.b16 %v70
    %v190 = vunpack.c.h.b16 %v70
    %v191 = vunpack.c.l.b16 %v71
    %v192 = vunpack.c.h.b16 %v71
    %v193 = vunpack.c.l.b16 %v72
    %v194 = vunpack.c.h.b16 %v72
    %v195 = vunpack.c.l.b16 %v73
    %v196 = vunpack.c.h.b16 %v73
    %v197 = vunpack.c.l.b16 %v74
    %v198 = vunpack.c.h.b16 %v74
    %v199 = vunpack.c.l.b16 %v75
    %v200 = vunpack.c.h.b16 %v75
    %v201 = vpack.c.b16 %v187, %v185
    %v202 = vpack.c.b16 %v188, %v186
    %v203 = vpack.c.b16 %v191, %v189
    %v204 = vpack.c.b16 %v192, %v190
    %v205 = vpack.c.b16 %v195, %v193
    %v206 = vpack.c.b16 %v196, %v194
    %v207 = vpack.c.b16 %v199, %v197
    %v208 = vpack.c.b16 %v200, %v198
    %v218 = vsel %vm118, %v165, 0
    %220 = vmatprep.subr.bf16.mxu0 0
    %221 = vmatpush1.bf16.msra.mxu0 0
    %222 = vmatprep.subr.bf16.mxu0 0
    %223 = vmatpush1.bf16.msra.mxu0 0
    %224 = vmatprep.subr.bf16.mxu0 0
    %225 = vmatpush1.bf16.msra.mxu0 0
    %226 = vmatprep.subr.bf16.mxu0 0
    %227 = vmatpush1.bf16.msra.mxu0 0
    %228 = vmatprep.subr.bf16.mxu0 %v208
    %229 = vmatpush1.bf16.msra.mxu0 %v207
    %230 = vmatprep.subr.bf16.mxu0 %v206
    %231 = vmatpush1.bf16.msra.mxu0 %v205
    %232 = vmatprep.subr.bf16.mxu0 %v204
    %233 = vmatpush1.bf16.msra.mxu0 %v203
    %234 = vmatprep.subr.bf16.mxu0 %v202
    %235 = vmatpush1.bf16.msra.mxu0 %v201
    %236 = vmatprep.subr.bf16.mxu0 0
    %237 = vmatpush2.bf16.msra.mxu0 0
    %238 = vmatprep.subr.bf16.mxu0 0
    %239 = vmatpush2.bf16.msra.mxu0 0
    %240 = vmatprep.subr.bf16.mxu0 0
    %241 = vmatpush2.bf16.msra.mxu0 0
    %242 = vmatprep.subr.bf16.mxu0 0
    %243 = vmatpush2.bf16.msra.mxu0 0
    %244 = vmatprep.subr.bf16.mxu0 0
    %245 = vmatpush2.bf16.msra.mxu0 0
    %246 = vmatprep.subr.bf16.mxu0 0
    %247 = vmatpush2.bf16.msra.mxu0 0
    %248 = vmatprep.subr.bf16.mxu0 0
    %249 = vmatpush2.bf16.msra.mxu0 0
    %250 = vmatprep.subr.bf16.mxu0 0
    %251 = vmatpush2.bf16.msra.mxu0 0
    %252 = vmatprep.mubr.bf16.mxu0 0
    %253 = vmatmul.mubr.bf16.gmra.mxu0 %v218
    %v254 = vpop.f32.mrf.mxu0
    %v255 = vadd.f32 %v170, %v254
    %v256 = vpop.f32.mrf.mxu0
    %v257 = vadd.f32 %v174, %v256
    %v258 = vpop.f32.mrf.mxu0
    %v259 = vpop.f32.mrf.mxu0
    %260 = vdwg.mxu0
    %v262 = vrot.slane %v255, 1
    %v265 = vadd.f32 %v157, %v255
    %v266 = vadd.f32 %v161, %v262
    %v267 = vxor.u32 %v265, 2147483648
    %v268 = vxor.u32 %v266, 2147483648
    %v269 = vmul.f32 %v267, 1.442695
    %v270 = vpow.pop %v269
    %v271 = vmul.f32 %v268, 1.442695
    %v272 = vpow.pop %v271
    %v273 = vadd.f32 %v270, 1.0
    %v274 = vadd.f32 %v272, 1.0
    %v275 = vrcp.pop %v273
    %v276 = vmul.f32 1.0, %v275
    %v277 = vrcp.pop %v274
    %v278 = vmul.f32 1.0, %v277
    %v279 = vtanh.pop %v265
    %v280 = vtanh.pop %v266
    %v281 = vmul.f32 %v276, 0.0
    %v282 = vmul.f32 %v278, 0.0
    %285 = vrot.lane.b32.xlu0 %v279, 64
    %v286 = vpop.permute.xlu0 %285
    %287 = vrot.lane.b32.xlu0 %v280, 64
    %v288 = vpop.permute.xlu0 %287
    %v291 = vmul.f32 %v276, %v286
    %v292 = vmul.f32 %v278, %v288
    %295 = vrot.lane.b32.xlu0 %v291, 32
    %v296 = vpop.permute.xlu0 %295
    %297 = vrot.lane.b32.xlu0 %v292, 32
    %v298 = vpop.permute.xlu0 %297
    %v301 = vadd.f32 %v281, %v296
    %v302 = vadd.f32 %v282, %v298
    %v303 = vtanh.pop %v301
    %v304 = vtanh.pop %v302
    %307 = vrot.lane.b32.xlu0 %v303, 64
    %v308 = vpop.permute.xlu0 %307
    %309 = vrot.lane.b32.xlu0 %v304, 64
    %v310 = vpop.permute.xlu0 %309
    %v313 = vmul.f32 %v276, %v308
    %v314 = vmul.f32 %v278, %v310
    %v316 = vrot.slane %v257, 1
    %v317 = vrot.slane %v257, 2
    %v320 = vadd.f32 %v159, %v316
    %v321 = vadd.f32 %v163, %v317
    %v322 = vxor.u32 %v320, 2147483648
    %v323 = vxor.u32 %v321, 2147483648
    %v324 = vmul.f32 %v322, 1.442695
    %v325 = vpow.pop %v324
    %v326 = vmul.f32 %v323, 1.442695
    %v327 = vpow.pop %v326
    %v328 = vadd.f32 %v325, 1.0
    %v329 = vadd.f32 %v327, 1.0
    %v330 = vrcp.pop %v328
    %v331 = vmul.f32 1.0, %v330
    %v332 = vrcp.pop %v329
    %v333 = vmul.f32 1.0, %v332
    %v334 = vtanh.pop %v320
    %v335 = vtanh.pop %v321
    %v336 = vmul.f32 %v331, 0.0
    %v337 = vmul.f32 %v333, 0.0
    %340 = vrot.lane.b32.xlu0 %v334, 64
    %v341 = vpop.permute.xlu0 %340
    %342 = vrot.lane.b32.xlu0 %v335, 64
    %v343 = vpop.permute.xlu0 %342
    %v346 = vmul.f32 %v331, %v341
    %v347 = vmul.f32 %v333, %v343
    %350 = vrot.lane.b32.xlu0 %v346, 32
    %v351 = vpop.permute.xlu0 %350
    %352 = vrot.lane.b32.xlu0 %v347, 32
    %v353 = vpop.permute.xlu0 %352
    %v356 = vadd.f32 %v336, %v351
    %v357 = vadd.f32 %v337, %v353
    %v358 = vtanh.pop %v356
    %v359 = vtanh.pop %v357
    %362 = vrot.lane.b32.xlu0 %v358, 64
    %v363 = vpop.permute.xlu0 %362
    %364 = vrot.lane.b32.xlu0 %v359, 64
    %v365 = vpop.permute.xlu0 %364
    %v368 = vmul.f32 %v331, %v363
    %v369 = vmul.f32 %v333, %v365
    %v372 = vrot.slane %v314, 7
    %vm373 = vcmask 1041409
    %v374 = vsel %vm373, %v372, %v313
    %375 = vrot.lane.b32.xlu0 %v374, 32
    %v376 = vpop.permute.xlu0 %375
    %v380 = vrot.slane %v368, 7
    %v381 = vrot.slane %v369, 6
    %v382 = vsel %vm373, %v381, %v380
    %383 = vrot.lane.b32.xlu0 %v382, 64
    %v384 = vpop.permute.xlu0 %383
    %vm386 = vcmask 261120
    %v387 = vsel %vm386, %v376, %v384
    %v388 = vpack.c.bf16 %v387, %v387
    %v390 = vsel %vm118, %v388, 0
    %392 = vmatprep.subr.bf16.mxu0 0
    %393 = vmatpush1.bf16.msra.mxu0 0
    %394 = vmatprep.subr.bf16.mxu0 0
    %395 = vmatpush1.bf16.msra.mxu0 0
    %396 = vmatprep.subr.bf16.mxu0 0
    %397 = vmatpush1.bf16.msra.mxu0 0
    %398 = vmatprep.subr.bf16.mxu0 0
    %399 = vmatpush1.bf16.msra.mxu0 0
    %400 = vmatprep.subr.bf16.mxu0 %v208
    %401 = vmatpush1.bf16.msra.mxu0 %v207
    %402 = vmatprep.subr.bf16.mxu0 %v206
    %403 = vmatpush1.bf16.msra.mxu0 %v205
    %404 = vmatprep.subr.bf16.mxu0 %v204
    %405 = vmatpush1.bf16.msra.mxu0 %v203
    %406 = vmatprep.subr.bf16.mxu0 %v202
    %407 = vmatpush1.bf16.msra.mxu0 %v201
    %408 = vmatprep.subr.bf16.mxu0 0
    %409 = vmatpush2.bf16.msra.mxu0 0
    %410 = vmatprep.subr.bf16.mxu0 0
    %411 = vmatpush2.bf16.msra.mxu0 0
    %412 = vmatprep.subr.bf16.mxu0 0
    %413 = vmatpush2.bf16.msra.mxu0 0
    %414 = vmatprep.subr.bf16.mxu0 0
    %415 = vmatpush2.bf16.msra.mxu0 0
    %416 = vmatprep.subr.bf16.mxu0 0
    %417 = vmatpush2.bf16.msra.mxu0 0
    %418 = vmatprep.subr.bf16.mxu0 0
    %419 = vmatpush2.bf16.msra.mxu0 0
    %420 = vmatprep.subr.bf16.mxu0 0
    %421 = vmatpush2.bf16.msra.mxu0 0
    %422 = vmatprep.subr.bf16.mxu0 0
    %423 = vmatpush2.bf16.msra.mxu0 0
    %424 = vmatprep.mubr.bf16.mxu0 0
    %425 = vmatmul.mubr.bf16.gmra.mxu0 %v390
    %v426 = vpop.f32.mrf.mxu0
    %v427 = vadd.f32 %v170, %v426
    %v428 = vpop.f32.mrf.mxu0
    %v429 = vadd.f32 %v174, %v428
    %v430 = vpop.f32.mrf.mxu0
    %v431 = vpop.f32.mrf.mxu0
    %432 = vdwg.mxu0
    %v434 = vrot.slane %v427, 7
    %v437 = vadd.f32 %v157, %v434
    %v438 = vadd.f32 %v161, %v427
    %v439 = vxor.u32 %v437, 2147483648
    %v440 = vxor.u32 %v438, 2147483648
    %v441 = vmul.f32 %v439, 1.442695
    %v442 = vpow.pop %v441
    %v443 = vmul.f32 %v440, 1.442695
    %v444 = vpow.pop %v443
    %v445 = vadd.f32 %v442, 1.0
    %v446 = vadd.f32 %v444, 1.0
    %v447 = vrcp.pop %v445
    %v448 = vmul.f32 1.0, %v447
    %v449 = vrcp.pop %v446
    %v450 = vmul.f32 1.0, %v449
    %v451 = vtanh.pop %v437
    %v452 = vtanh.pop %v438
    %v455 = vrot.slane %v301, 7
    %v456 = vrot.slane %v302, 7
    %v459 = vmul.f32 %v448, %v455
    %v460 = vmul.f32 %v450, %v456
    %463 = vrot.lane.b32.xlu0 %v451, 64
    %v464 = vpop.permute.xlu0 %463
    %465 = vrot.lane.b32.xlu0 %v452, 64
    %v466 = vpop.permute.xlu0 %465
    %v469 = vmul.f32 %v448, %v464
    %v470 = vmul.f32 %v450, %v466
    %473 = vrot.lane.b32.xlu0 %v469, 32
    %v474 = vpop.permute.xlu0 %473
    %475 = vrot.lane.b32.xlu0 %v470, 32
    %v476 = vpop.permute.xlu0 %475
    %v479 = vadd.f32 %v459, %v474
    %v480 = vadd.f32 %v460, %v476
    %v481 = vtanh.pop %v479
    %v482 = vtanh.pop %v480
    %485 = vrot.lane.b32.xlu0 %v481, 64
    %v486 = vpop.permute.xlu0 %485
    %487 = vrot.lane.b32.xlu0 %v482, 64
    %v488 = vpop.permute.xlu0 %487
    %v491 = vmul.f32 %v448, %v486
    %v492 = vmul.f32 %v450, %v488
    %v494 = vrot.slane %v429, 2
    %v495 = vrot.slane %v429, 3
    %v498 = vadd.f32 %v159, %v494
    %v499 = vadd.f32 %v163, %v495
    %v500 = vxor.u32 %v498, 2147483648
    %v501 = vxor.u32 %v499, 2147483648
    %v502 = vmul.f32 %v500, 1.442695
    %v503 = vpow.pop %v502
    %v504 = vmul.f32 %v501, 1.442695
    %v505 = vpow.pop %v504
    %v506 = vadd.f32 %v503, 1.0
    %v507 = vadd.f32 %v505, 1.0
    %v508 = vrcp.pop %v506
    %v509 = vmul.f32 1.0, %v508
    %v510 = vrcp.pop %v507
    %v511 = vmul.f32 1.0, %v510
    %v512 = vtanh.pop %v498
    %v513 = vtanh.pop %v499
    %v516 = vrot.slane %v356, 1
    %v517 = vrot.slane %v357, 1
    %v520 = vmul.f32 %v509, %v516
    %v521 = vmul.f32 %v511, %v517
    %524 = vrot.lane.b32.xlu0 %v512, 64
    %v525 = vpop.permute.xlu0 %524
    %526 = vrot.lane.b32.xlu0 %v513, 64
    %v527 = vpop.permute.xlu0 %526
    %v530 = vmul.f32 %v509, %v525
    %v531 = vmul.f32 %v511, %v527
    %534 = vrot.lane.b32.xlu0 %v530, 32
    %v535 = vpop.permute.xlu0 %534
    %536 = vrot.lane.b32.xlu0 %v531, 32
    %v537 = vpop.permute.xlu0 %536
    %v540 = vadd.f32 %v520, %v535
    %v541 = vadd.f32 %v521, %v537
    %v542 = vtanh.pop %v540
    %v543 = vtanh.pop %v541
    %546 = vrot.lane.b32.xlu0 %v542, 64
    %v547 = vpop.permute.xlu0 %546
    %548 = vrot.lane.b32.xlu0 %v543, 64
    %v549 = vpop.permute.xlu0 %548
    %v552 = vmul.f32 %v509, %v547
    %v553 = vmul.f32 %v511, %v549
    %v556 = vrot.slane %v492, 7
    %vm557 = vcmask 1042434
    %v558 = vsel %vm557, %v556, %v491
    %559 = vrot.lane.b32.xlu0 %v558, 32
    %v560 = vpop.permute.xlu0 %559
    %v564 = vrot.slane %v552, 5
    %v565 = vrot.slane %v553, 4
    %v566 = vsel %vm557, %v565, %v564
    %567 = vrot.lane.b32.xlu0 %v566, 64
    %v568 = vpop.permute.xlu0 %567
    %v570 = vsel %vm386, %v560, %v568
    %v571 = vpack.c.bf16 %v570, %v570
    %v573 = vshrl.u32 %v571, 16
    %v575 = vshll.u32 %v571, 16
    %v577 = vrot.slane %v575, 1
    %v578 = vor.u32 %v573, %v577
    %v580 = vsel %vm118, %v578, 0
    %582 = vmatprep.subr.bf16.mxu0 0
    %583 = vmatpush1.bf16.msra.mxu0 0
    %584 = vmatprep.subr.bf16.mxu0 0
    %585 = vmatpush1.bf16.msra.mxu0 0
    %586 = vmatprep.subr.bf16.mxu0 0
    %587 = vmatpush1.bf16.msra.mxu0 0
    %588 = vmatprep.subr.bf16.mxu0 0
    %589 = vmatpush1.bf16.msra.mxu0 0
    %590 = vmatprep.subr.bf16.mxu0 %v208
    %591 = vmatpush1.bf16.msra.mxu0 %v207
    %592 = vmatprep.subr.bf16.mxu0 %v206
    %593 = vmatpush1.bf16.msra.mxu0 %v205
    %594 = vmatprep.subr.bf16.mxu0 %v204
    %595 = vmatpush1.bf16.msra.mxu0 %v203
    %596 = vmatprep.subr.bf16.mxu0 %v202
    %597 = vmatpush1.bf16.msra.mxu0 %v201
    %598 = vmatprep.subr.bf16.mxu0 0
    %599 = vmatpush2.bf16.msra.mxu0 0
    %600 = vmatprep.subr.bf16.mxu0 0
    %601 = vmatpush2.bf16.msra.mxu0 0
    %602 = vmatprep.subr.bf16.mxu0 0
    %603 = vmatpush2.bf16.msra.mxu0 0
    %604 = vmatprep.subr.bf16.mxu0 0
    %605 = vmatpush2.bf16.msra.mxu0 0
    %606 = vmatprep.subr.bf16.mxu0 0
    %607 = vmatpush2.bf16.msra.mxu0 0
    %608 = vmatprep.subr.bf16.mxu0 0
    %609 = vmatpush2.bf16.msra.mxu0 0
    %610 = vmatprep.subr.bf16.mxu0 0
    %611 = vmatpush2.bf16.msra.mxu0 0
    %612 = vmatprep.subr.bf16.mxu0 0
    %613 = vmatpush2.bf16.msra.mxu0 0
    %614 = vmatprep.mubr.bf16.mxu0 0
    %615 = vmatmul.mubr.bf16.gmra.mxu0 %v580
    %v616 = vpop.f32.mrf.mxu0
    %v617 = vadd.f32 %v170, %v616
    %v618 = vpop.f32.mrf.mxu0
    %v619 = vadd.f32 %v174, %v618
    %v620 = vpop.f32.mrf.mxu0
    %v621 = vpop.f32.mrf.mxu0
    %622 = vdwg.mxu0
    %v624 = vrot.slane %v617, 6
    %v625 = vrot.slane %v617, 7
    %v628 = vadd.f32 %v157, %v624
    %v629 = vadd.f32 %v161, %v625
    %v630 = vxor.u32 %v628, 2147483648
    %v631 = vxor.u32 %v629, 2147483648
    %v632 = vmul.f32 %v630, 1.442695
    %v633 = vpow.pop %v632
    %v634 = vmul.f32 %v631, 1.442695
    %v635 = vpow.pop %v634
    %v636 = vadd.f32 %v633, 1.0
    %v637 = vadd.f32 %v635, 1.0
    %v638 = vrcp.pop %v636
    %v639 = vmul.f32 1.0, %v638
    %v640 = vrcp.pop %v637
    %v641 = vmul.f32 1.0, %v640
    %v642 = vtanh.pop %v628
    %v643 = vtanh.pop %v629
    %v646 = vrot.slane %v479, 7
    %v647 = vrot.slane %v480, 7
    %v650 = vmul.f32 %v639, %v646
    %v651 = vmul.f32 %v641, %v647
    %654 = vrot.lane.b32.xlu0 %v642, 64
    %v655 = vpop.permute.xlu0 %654
    %656 = vrot.lane.b32.xlu0 %v643, 64
    %v657 = vpop.permute.xlu0 %656
    %v660 = vmul.f32 %v639, %v655
    %v661 = vmul.f32 %v641, %v657
    %664 = vrot.lane.b32.xlu0 %v660, 32
    %v665 = vpop.permute.xlu0 %664
    %666 = vrot.lane.b32.xlu0 %v661, 32
    %v667 = vpop.permute.xlu0 %666
    %v670 = vadd.f32 %v650, %v665
    %v671 = vadd.f32 %v651, %v667
    %v672 = vtanh.pop %v670
    %v673 = vtanh.pop %v671
    %676 = vrot.lane.b32.xlu0 %v672, 64
    %v677 = vpop.permute.xlu0 %676
    %678 = vrot.lane.b32.xlu0 %v673, 64
    %v679 = vpop.permute.xlu0 %678
    %v682 = vmul.f32 %v639, %v677
    %v683 = vmul.f32 %v641, %v679
    %v685 = vrot.slane %v619, 3
    %v686 = vrot.slane %v619, 4
    %v689 = vadd.f32 %v159, %v685
    %v690 = vadd.f32 %v163, %v686
    %v691 = vxor.u32 %v689, 2147483648
    %v692 = vxor.u32 %v690, 2147483648
    %v693 = vmul.f32 %v691, 1.442695
    %v694 = vpow.pop %v693
    %v695 = vmul.f32 %v692, 1.442695
    %v696 = vpow.pop %v695
    %v697 = vadd.f32 %v694, 1.0
    %v698 = vadd.f32 %v696, 1.0
    %v699 = vrcp.pop %v697
    %v700 = vmul.f32 1.0, %v699
    %v701 = vrcp.pop %v698
    %v702 = vmul.f32 1.0, %v701
    %v703 = vtanh.pop %v689
    %v704 = vtanh.pop %v690
    %v707 = vrot.slane %v540, 1
    %v708 = vrot.slane %v541, 1
    %v711 = vmul.f32 %v700, %v707
    %v712 = vmul.f32 %v702, %v708
    %715 = vrot.lane.b32.xlu0 %v703, 64
    %v716 = vpop.permute.xlu0 %715
    %717 = vrot.lane.b32.xlu0 %v704, 64
    %v718 = vpop.permute.xlu0 %717
    %v721 = vmul.f32 %v700, %v716
    %v722 = vmul.f32 %v702, %v718
    %725 = vrot.lane.b32.xlu0 %v721, 32
    %v726 = vpop.permute.xlu0 %725
    %727 = vrot.lane.b32.xlu0 %v722, 32
    %v728 = vpop.permute.xlu0 %727
    %v731 = vadd.f32 %v711, %v726
    %v732 = vadd.f32 %v712, %v728
    %v733 = vtanh.pop %v731
    %v734 = vtanh.pop %v732
    %737 = vrot.lane.b32.xlu0 %v733, 64
    %v738 = vpop.permute.xlu0 %737
    %739 = vrot.lane.b32.xlu0 %v734, 64
    %v740 = vpop.permute.xlu0 %739
    %v743 = vmul.f32 %v700, %v738
    %v744 = vmul.f32 %v702, %v740
    %v747 = vrot.slane %v683, 7
    %vm748 = vcmask 1043459
    %v749 = vsel %vm748, %v747, %v682
    %750 = vrot.lane.b32.xlu0 %v749, 32
    %v751 = vpop.permute.xlu0 %750
    %v755 = vrot.slane %v743, 3
    %v756 = vrot.slane %v744, 2
    %v757 = vsel %vm748, %v756, %v755
    %758 = vrot.lane.b32.xlu0 %v757, 64
    %v759 = vpop.permute.xlu0 %758
    %v761 = vsel %vm386, %v751, %v759
    %v762 = vpack.c.bf16 %v761, %v761
    %v764 = vrot.slane %v762, 1
    %v766 = vsel %vm118, %v764, 0
    %768 = vmatprep.subr.bf16.mxu0 0
    %769 = vmatpush1.bf16.msra.mxu0 0
    %770 = vmatprep.subr.bf16.mxu0 0
    %771 = vmatpush1.bf16.msra.mxu0 0
    %772 = vmatprep.subr.bf16.mxu0 0
    %773 = vmatpush1.bf16.msra.mxu0 0
    %774 = vmatprep.subr.bf16.mxu0 0
    %775 = vmatpush1.bf16.msra.mxu0 0
    %776 = vmatprep.subr.bf16.mxu0 %v208
    %777 = vmatpush1.bf16.msra.mxu0 %v207
    %778 = vmatprep.subr.bf16.mxu0 %v206
    %779 = vmatpush1.bf16.msra.mxu0 %v205
    %780 = vmatprep.subr.bf16.mxu0 %v204
    %781 = vmatpush1.bf16.msra.mxu0 %v203
    %782 = vmatprep.subr.bf16.mxu0 %v202
    %783 = vmatpush1.bf16.msra.mxu0 %v201
    %784 = vmatprep.subr.bf16.mxu0 0
    %785 = vmatpush2.bf16.msra.mxu0 0
    %786 = vmatprep.subr.bf16.mxu0 0
    %787 = vmatpush2.bf16.msra.mxu0 0
    %788 = vmatprep.subr.bf16.mxu0 0
    %789 = vmatpush2.bf16.msra.mxu0 0
    %790 = vmatprep.subr.bf16.mxu0 0
    %791 = vmatpush2.bf16.msra.mxu0 0
    %792 = vmatprep.subr.bf16.mxu0 0
    %793 = vmatpush2.bf16.msra.mxu0 0
    %794 = vmatprep.subr.bf16.mxu0 0
    %795 = vmatpush2.bf16.msra.mxu0 0
    %796 = vmatprep.subr.bf16.mxu0 0
    %797 = vmatpush2.bf16.msra.mxu0 0
    %798 = vmatprep.subr.bf16.mxu0 0
    %799 = vmatpush2.bf16.msra.mxu0 0
    %800 = vmatprep.mubr.bf16.mxu0 0
    %801 = vmatmul.mubr.bf16.gmra.mxu0 %v766
    %v802 = vpop.f32.mrf.mxu0
    %v803 = vadd.f32 %v170, %v802
    %v804 = vpop.f32.mrf.mxu0
    %v805 = vadd.f32 %v174, %v804
    %v806 = vpop.f32.mrf.mxu0
    %v807 = vpop.f32.mrf.mxu0
    %808 = vdwg.mxu0
    %v810 = vrot.slane %v803, 5
    %v811 = vrot.slane %v803, 6
    %v814 = vadd.f32 %v157, %v810
    %v815 = vadd.f32 %v161, %v811
    %v816 = vxor.u32 %v814, 2147483648
    %v817 = vxor.u32 %v815, 2147483648
    %v818 = vmul.f32 %v816, 1.442695
    %v819 = vpow.pop %v818
    %v820 = vmul.f32 %v817, 1.442695
    %v821 = vpow.pop %v820
    %v822 = vadd.f32 %v819, 1.0
    %v823 = vadd.f32 %v821, 1.0
    %v824 = vrcp.pop %v822
    %v825 = vmul.f32 1.0, %v824
    %v826 = vrcp.pop %v823
    %v827 = vmul.f32 1.0, %v826
    %v828 = vtanh.pop %v814
    %v829 = vtanh.pop %v815
    %v832 = vrot.slane %v670, 7
    %v833 = vrot.slane %v671, 7
    %v836 = vmul.f32 %v825, %v832
    %v837 = vmul.f32 %v827, %v833
    %840 = vrot.lane.b32.xlu0 %v828, 64
    %v841 = vpop.permute.xlu0 %840
    %842 = vrot.lane.b32.xlu0 %v829, 64
    %v843 = vpop.permute.xlu0 %842
    %v846 = vmul.f32 %v825, %v841
    %v847 = vmul.f32 %v827, %v843
    %850 = vrot.lane.b32.xlu0 %v846, 32
    %v851 = vpop.permute.xlu0 %850
    %852 = vrot.lane.b32.xlu0 %v847, 32
    %v853 = vpop.permute.xlu0 %852
    %v856 = vadd.f32 %v836, %v851
    %v857 = vadd.f32 %v837, %v853
    %v858 = vtanh.pop %v856
    %v859 = vtanh.pop %v857
    %862 = vrot.lane.b32.xlu0 %v858, 64
    %v863 = vpop.permute.xlu0 %862
    %864 = vrot.lane.b32.xlu0 %v859, 64
    %v865 = vpop.permute.xlu0 %864
    %v868 = vmul.f32 %v825, %v863
    %v869 = vmul.f32 %v827, %v865
    %v871 = vrot.slane %v805, 4
    %v872 = vrot.slane %v805, 5
    %v875 = vadd.f32 %v159, %v871
    %v876 = vadd.f32 %v163, %v872
    %v877 = vxor.u32 %v875, 2147483648
    %v878 = vxor.u32 %v876, 2147483648
    %v879 = vmul.f32 %v877, 1.442695
    %v880 = vpow.pop %v879
    %v881 = vmul.f32 %v878, 1.442695
    %v882 = vpow.pop %v881
    %v883 = vadd.f32 %v880, 1.0
    %v884 = vadd.f32 %v882, 1.0
    %v885 = vrcp.pop %v883
    %v886 = vmul.f32 1.0, %v885
    %v887 = vrcp.pop %v884
    %v888 = vmul.f32 1.0, %v887
    %v889 = vtanh.pop %v875
    %v890 = vtanh.pop %v876
    %v893 = vrot.slane %v731, 1
    %v894 = vrot.slane %v732, 1
    %v897 = vmul.f32 %v886, %v893
    %v898 = vmul.f32 %v888, %v894
    %901 = vrot.lane.b32.xlu0 %v889, 64
    %v902 = vpop.permute.xlu0 %901
    %903 = vrot.lane.b32.xlu0 %v890, 64
    %v904 = vpop.permute.xlu0 %903
    %v907 = vmul.f32 %v886, %v902
    %v908 = vmul.f32 %v888, %v904
    %911 = vrot.lane.b32.xlu0 %v907, 32
    %v912 = vpop.permute.xlu0 %911
    %913 = vrot.lane.b32.xlu0 %v908, 32
    %v914 = vpop.permute.xlu0 %913
    %v917 = vadd.f32 %v897, %v912
    %v918 = vadd.f32 %v898, %v914
    %v919 = vtanh.pop %v917
    %v920 = vtanh.pop %v918
    %923 = vrot.lane.b32.xlu0 %v919, 64
    %v924 = vpop.permute.xlu0 %923
    %925 = vrot.lane.b32.xlu0 %v920, 64
    %v926 = vpop.permute.xlu0 %925
    %v929 = vmul.f32 %v886, %v924
    %v930 = vmul.f32 %v888, %v926
    %v933 = vrot.slane %v869, 7
    %vm934 = vcmask 1044484
    %v935 = vsel %vm934, %v933, %v868
    %936 = vrot.lane.b32.xlu0 %v935, 32
    %v937 = vpop.permute.xlu0 %936
    %v941 = vrot.slane %v929, 1
    %v942 = vsel %vm934, %v930, %v941
    %943 = vrot.lane.b32.xlu0 %v942, 64
    %v944 = vpop.permute.xlu0 %943
    %v946 = vsel %vm386, %v937, %v944
    %v947 = vpack.c.bf16 %v946, %v946
    %v949 = vshrl.u32 %v947, 16
    %v951 = vrot.slane %v949, 1
    %v952 = vshll.u32 %v947, 16
    %v954 = vrot.slane %v952, 2
    %v955 = vor.u32 %v951, %v954
    %v957 = vsel %vm118, %v955, 0
    %959 = vmatprep.subr.bf16.mxu0 0
    %960 = vmatpush1.bf16.msra.mxu0 0
    %961 = vmatprep.subr.bf16.mxu0 0
    %962 = vmatpush1.bf16.msra.mxu0 0
    %963 = vmatprep.subr.bf16.mxu0 0
    %964 = vmatpush1.bf16.msra.mxu0 0
    %965 = vmatprep.subr.bf16.mxu0 0
    %966 = vmatpush1.bf16.msra.mxu0 0
    %967 = vmatprep.subr.bf16.mxu0 %v208
    %968 = vmatpush1.bf16.msra.mxu0 %v207
    %969 = vmatprep.subr.bf16.mxu0 %v206
    %970 = vmatpush1.bf16.msra.mxu0 %v205
    %971 = vmatprep.subr.bf16.mxu0 %v204
    %972 = vmatpush1.bf16.msra.mxu0 %v203
    %973 = vmatprep.subr.bf16.mxu0 %v202
    %974 = vmatpush1.bf16.msra.mxu0 %v201
    %975 = vmatprep.subr.bf16.mxu0 0
    %976 = vmatpush2.bf16.msra.mxu0 0
    %977 = vmatprep.subr.bf16.mxu0 0
    %978 = vmatpush2.bf16.msra.mxu0 0
    %979 = vmatprep.subr.bf16.mxu0 0
    %980 = vmatpush2.bf16.msra.mxu0 0
    %981 = vmatprep.subr.bf16.mxu0 0
    %982 = vmatpush2.bf16.msra.mxu0 0
    %983 = vmatprep.subr.bf16.mxu0 0
    %984 = vmatpush2.bf16.msra.mxu0 0
    %985 = vmatprep.subr.bf16.mxu0 0
    %986 = vmatpush2.bf16.msra.mxu0 0
    %987 = vmatprep.subr.bf16.mxu0 0
    %988 = vmatpush2.bf16.msra.mxu0 0
    %989 = vmatprep.subr.bf16.mxu0 0
    %990 = vmatpush2.bf16.msra.mxu0 0
    %991 = vmatprep.mubr.bf16.mxu0 0
    %992 = vmatmul.mubr.bf16.gmra.mxu0 %v957
    %v993 = vpop.f32.mrf.mxu0
    %v994 = vadd.f32 %v170, %v993
    %v995 = vpop.f32.mrf.mxu0
    %v996 = vadd.f32 %v174, %v995
    %v997 = vpop.f32.mrf.mxu0
    %v998 = vpop.f32.mrf.mxu0
    %999 = vdwg.mxu0
    %v1001 = vrot.slane %v994, 4
    %v1002 = vrot.slane %v994, 5
    %v1005 = vadd.f32 %v157, %v1001
    %v1006 = vadd.f32 %v161, %v1002
    %v1007 = vxor.u32 %v1005, 2147483648
    %v1008 = vxor.u32 %v1006, 2147483648
    %v1009 = vmul.f32 %v1007, 1.442695
    %v1010 = vpow.pop %v1009
    %v1011 = vmul.f32 %v1008, 1.442695
    %v1012 = vpow.pop %v1011
    %v1013 = vadd.f32 %v1010, 1.0
    %v1014 = vadd.f32 %v1012, 1.0
    %v1015 = vrcp.pop %v1013
    %v1016 = vmul.f32 1.0, %v1015
    %v1017 = vrcp.pop %v1014
    %v1018 = vmul.f32 1.0, %v1017
    %v1019 = vtanh.pop %v1005
    %v1020 = vtanh.pop %v1006
    %v1023 = vrot.slane %v856, 7
    %v1024 = vrot.slane %v857, 7
    %v1027 = vmul.f32 %v1016, %v1023
    %v1028 = vmul.f32 %v1018, %v1024
    %1031 = vrot.lane.b32.xlu0 %v1019, 64
    %v1032 = vpop.permute.xlu0 %1031
    %1033 = vrot.lane.b32.xlu0 %v1020, 64
    %v1034 = vpop.permute.xlu0 %1033
    %v1037 = vmul.f32 %v1016, %v1032
    %v1038 = vmul.f32 %v1018, %v1034
    %1041 = vrot.lane.b32.xlu0 %v1037, 32
    %v1042 = vpop.permute.xlu0 %1041
    %1043 = vrot.lane.b32.xlu0 %v1038, 32
    %v1044 = vpop.permute.xlu0 %1043
    %v1047 = vadd.f32 %v1027, %v1042
    %v1048 = vadd.f32 %v1028, %v1044
    %v1049 = vtanh.pop %v1047
    %v1050 = vtanh.pop %v1048
    %1053 = vrot.lane.b32.xlu0 %v1049, 64
    %v1054 = vpop.permute.xlu0 %1053
    %1055 = vrot.lane.b32.xlu0 %v1050, 64
    %v1056 = vpop.permute.xlu0 %1055
    %v1059 = vmul.f32 %v1016, %v1054
    %v1060 = vmul.f32 %v1018, %v1056
    %v1062 = vrot.slane %v996, 5
    %v1063 = vrot.slane %v996, 6
    %v1066 = vadd.f32 %v159, %v1062
    %v1067 = vadd.f32 %v163, %v1063
    %v1068 = vxor.u32 %v1066, 2147483648
    %v1069 = vxor.u32 %v1067, 2147483648
    %v1070 = vmul.f32 %v1068, 1.442695
    %v1071 = vpow.pop %v1070
    %v1072 = vmul.f32 %v1069, 1.442695
    %v1073 = vpow.pop %v1072
    %v1074 = vadd.f32 %v1071, 1.0
    %v1075 = vadd.f32 %v1073, 1.0
    %v1076 = vrcp.pop %v1074
    %v1077 = vmul.f32 1.0, %v1076
    %v1078 = vrcp.pop %v1075
    %v1079 = vmul.f32 1.0, %v1078
    %v1080 = vtanh.pop %v1066
    %v1081 = vtanh.pop %v1067
    %v1084 = vrot.slane %v917, 1
    %v1085 = vrot.slane %v918, 1
    %v1088 = vmul.f32 %v1077, %v1084
    %v1089 = vmul.f32 %v1079, %v1085
    %1092 = vrot.lane.b32.xlu0 %v1080, 64
    %v1093 = vpop.permute.xlu0 %1092
    %1094 = vrot.lane.b32.xlu0 %v1081, 64
    %v1095 = vpop.permute.xlu0 %1094
    %v1098 = vmul.f32 %v1077, %v1093
    %v1099 = vmul.f32 %v1079, %v1095
    %1102 = vrot.lane.b32.xlu0 %v1098, 32
    %v1103 = vpop.permute.xlu0 %1102
    %1104 = vrot.lane.b32.xlu0 %v1099, 32
    %v1105 = vpop.permute.xlu0 %1104
    %v1108 = vadd.f32 %v1088, %v1103
    %v1109 = vadd.f32 %v1089, %v1105
    %v1110 = vtanh.pop %v1108
    %v1111 = vtanh.pop %v1109
    %1114 = vrot.lane.b32.xlu0 %v1110, 64
    %v1115 = vpop.permute.xlu0 %1114
    %1116 = vrot.lane.b32.xlu0 %v1111, 64
    %v1117 = vpop.permute.xlu0 %1116
    %v1120 = vmul.f32 %v1077, %v1115
    %v1121 = vmul.f32 %v1079, %v1117
    %v1124 = vrot.slane %v1060, 7
    %vm1125 = vcmask 1045509
    %v1126 = vsel %vm1125, %v1124, %v1059
    %1127 = vrot.lane.b32.xlu0 %v1126, 32
    %v1128 = vpop.permute.xlu0 %1127
    %v1132 = vrot.slane %v1120, 7
    %v1133 = vrot.slane %v1121, 6
    %v1134 = vsel %vm1125, %v1133, %v1132
    %1135 = vrot.lane.b32.xlu0 %v1134, 64
    %v1136 = vpop.permute.xlu0 %1135
    %v1138 = vsel %vm386, %v1128, %v1136
    %v1139 = vpack.c.bf16 %v1138, %v1138
    %v1141 = vrot.slane %v1139, 2
    %v1143 = vsel %vm118, %v1141, 0
    %1145 = vmatprep.subr.bf16.mxu0 0
    %1146 = vmatpush1.bf16.msra.mxu0 0
    %1147 = vmatprep.subr.bf16.mxu0 0
    %1148 = vmatpush1.bf16.msra.mxu0 0
    %1149 = vmatprep.subr.bf16.mxu0 0
    %1150 = vmatpush1.bf16.msra.mxu0 0
    %1151 = vmatprep.subr.bf16.mxu0 0
    %1152 = vmatpush1.bf16.msra.mxu0 0
    %1153 = vmatprep.subr.bf16.mxu0 %v208
    %1154 = vmatpush1.bf16.msra.mxu0 %v207
    %1155 = vmatprep.subr.bf16.mxu0 %v206
    %1156 = vmatpush1.bf16.msra.mxu0 %v205
    %1157 = vmatprep.subr.bf16.mxu0 %v204
    %1158 = vmatpush1.bf16.msra.mxu0 %v203
    %1159 = vmatprep.subr.bf16.mxu0 %v202
    %1160 = vmatpush1.bf16.msra.mxu0 %v201
    %1161 = vmatprep.subr.bf16.mxu0 0
    %1162 = vmatpush2.bf16.msra.mxu0 0
    %1163 = vmatprep.subr.bf16.mxu0 0
    %1164 = vmatpush2.bf16.msra.mxu0 0
    %1165 = vmatprep.subr.bf16.mxu0 0
    %1166 = vmatpush2.bf16.msra.mxu0 0
    %1167 = vmatprep.subr.bf16.mxu0 0
    %1168 = vmatpush2.bf16.msra.mxu0 0
    %1169 = vmatprep.subr.bf16.mxu0 0
    %1170 = vmatpush2.bf16.msra.mxu0 0
    %1171 = vmatprep.subr.bf16.mxu0 0
    %1172 = vmatpush2.bf16.msra.mxu0 0
    %1173 = vmatprep.subr.bf16.mxu0 0
    %1174 = vmatpush2.bf16.msra.mxu0 0
    %1175 = vmatprep.subr.bf16.mxu0 0
    %1176 = vmatpush2.bf16.msra.mxu0 0
    %1177 = vmatprep.mubr.bf16.mxu0 0
    %1178 = vmatmul.mubr.bf16.gmra.mxu0 %v1143
    %v1179 = vpop.f32.mrf.mxu0
    %v1180 = vadd.f32 %v170, %v1179
    %v1181 = vpop.f32.mrf.mxu0
    %v1182 = vadd.f32 %v174, %v1181
    %v1183 = vpop.f32.mrf.mxu0
    %v1184 = vpop.f32.mrf.mxu0
    %1185 = vdwg.mxu0
    %v1187 = vrot.slane %v1180, 3
    %v1188 = vrot.slane %v1180, 4
    %v1191 = vadd.f32 %v157, %v1187
    %v1192 = vadd.f32 %v161, %v1188
    %v1193 = vxor.u32 %v1191, 2147483648
    %v1194 = vxor.u32 %v1192, 2147483648
    %v1195 = vmul.f32 %v1193, 1.442695
    %v1196 = vpow.pop %v1195
    %v1197 = vmul.f32 %v1194, 1.442695
    %v1198 = vpow.pop %v1197
    %v1199 = vadd.f32 %v1196, 1.0
    %v1200 = vadd.f32 %v1198, 1.0
    %v1201 = vrcp.pop %v1199
    %v1202 = vmul.f32 1.0, %v1201
    %v1203 = vrcp.pop %v1200
    %v1204 = vmul.f32 1.0, %v1203
    %v1205 = vtanh.pop %v1191
    %v1206 = vtanh.pop %v1192
    %v1209 = vrot.slane %v1047, 7
    %v1210 = vrot.slane %v1048, 7
    %v1213 = vmul.f32 %v1202, %v1209
    %v1214 = vmul.f32 %v1204, %v1210
    %1217 = vrot.lane.b32.xlu0 %v1205, 64
    %v1218 = vpop.permute.xlu0 %1217
    %1219 = vrot.lane.b32.xlu0 %v1206, 64
    %v1220 = vpop.permute.xlu0 %1219
    %v1223 = vmul.f32 %v1202, %v1218
    %v1224 = vmul.f32 %v1204, %v1220
    %1227 = vrot.lane.b32.xlu0 %v1223, 32
    %v1228 = vpop.permute.xlu0 %1227
    %1229 = vrot.lane.b32.xlu0 %v1224, 32
    %v1230 = vpop.permute.xlu0 %1229
    %v1233 = vadd.f32 %v1213, %v1228
    %v1234 = vadd.f32 %v1214, %v1230
    %v1235 = vtanh.pop %v1233
    %v1236 = vtanh.pop %v1234
    %1239 = vrot.lane.b32.xlu0 %v1235, 64
    %v1240 = vpop.permute.xlu0 %1239
    %1241 = vrot.lane.b32.xlu0 %v1236, 64
    %v1242 = vpop.permute.xlu0 %1241
    %v1245 = vmul.f32 %v1202, %v1240
    %v1246 = vmul.f32 %v1204, %v1242
    %v1248 = vrot.slane %v1182, 6
    %v1249 = vrot.slane %v1182, 7
    %v1252 = vadd.f32 %v159, %v1248
    %v1253 = vadd.f32 %v163, %v1249
    %v1254 = vxor.u32 %v1252, 2147483648
    %v1255 = vxor.u32 %v1253, 2147483648
    %v1256 = vmul.f32 %v1254, 1.442695
    %v1257 = vpow.pop %v1256
    %v1258 = vmul.f32 %v1255, 1.442695
    %v1259 = vpow.pop %v1258
    %v1260 = vadd.f32 %v1257, 1.0
    %v1261 = vadd.f32 %v1259, 1.0
    %v1262 = vrcp.pop %v1260
    %v1263 = vmul.f32 1.0, %v1262
    %v1264 = vrcp.pop %v1261
    %v1265 = vmul.f32 1.0, %v1264
    %v1266 = vtanh.pop %v1252
    %v1267 = vtanh.pop %v1253
    %v1270 = vrot.slane %v1108, 1
    %v1271 = vrot.slane %v1109, 1
    %v1274 = vmul.f32 %v1263, %v1270
    %v1275 = vmul.f32 %v1265, %v1271
    %1278 = vrot.lane.b32.xlu0 %v1266, 64
    %v1279 = vpop.permute.xlu0 %1278
    %1280 = vrot.lane.b32.xlu0 %v1267, 64
    %v1281 = vpop.permute.xlu0 %1280
    %v1284 = vmul.f32 %v1263, %v1279
    %v1285 = vmul.f32 %v1265, %v1281
    %1288 = vrot.lane.b32.xlu0 %v1284, 32
    %v1289 = vpop.permute.xlu0 %1288
    %1290 = vrot.lane.b32.xlu0 %v1285, 32
    %v1291 = vpop.permute.xlu0 %1290
    %v1294 = vadd.f32 %v1274, %v1289
    %v1295 = vadd.f32 %v1275, %v1291
    %v1296 = vtanh.pop %v1294
    %v1297 = vtanh.pop %v1295
    %1300 = vrot.lane.b32.xlu0 %v1296, 64
    %v1301 = vpop.permute.xlu0 %1300
    %1302 = vrot.lane.b32.xlu0 %v1297, 64
    %v1303 = vpop.permute.xlu0 %1302
    %v1306 = vmul.f32 %v1263, %v1301
    %v1307 = vmul.f32 %v1265, %v1303
    %v1310 = vrot.slane %v1246, 7
    %vm1311 = vcmask 1046534
    %v1312 = vsel %vm1311, %v1310, %v1245
    %1313 = vrot.lane.b32.xlu0 %v1312, 32
    %v1314 = vpop.permute.xlu0 %1313
    %v1318 = vrot.slane %v1306, 5
    %v1319 = vrot.slane %v1307, 4
    %v1320 = vsel %vm1311, %v1319, %v1318
    %1321 = vrot.lane.b32.xlu0 %v1320, 64
    %v1322 = vpop.permute.xlu0 %1321
    %v1324 = vsel %vm386, %v1314, %v1322
    %v1325 = vpack.c.bf16 %v1324, %v1324
    %v1327 = vshrl.u32 %v1325, 16
    %v1329 = vrot.slane %v1327, 2
    %v1330 = vshll.u32 %v1325, 16
    %v1332 = vrot.slane %v1330, 3
    %v1333 = vor.u32 %v1329, %v1332
    %v1335 = vsel %vm118, %v1333, 0
    %1337 = vmatprep.subr.bf16.mxu0 0
    %1338 = vmatpush1.bf16.msra.mxu0 0
    %1339 = vmatprep.subr.bf16.mxu0 0
    %1340 = vmatpush1.bf16.msra.mxu0 0
    %1341 = vmatprep.subr.bf16.mxu0 0
    %1342 = vmatpush1.bf16.msra.mxu0 0
    %1343 = vmatprep.subr.bf16.mxu0 0
    %1344 = vmatpush1.bf16.msra.mxu0 0
    %1345 = vmatprep.subr.bf16.mxu0 %v208
    %1346 = vmatpush1.bf16.msra.mxu0 %v207
    %1347 = vmatprep.subr.bf16.mxu0 %v206
    %1348 = vmatpush1.bf16.msra.mxu0 %v205
    %1349 = vmatprep.subr.bf16.mxu0 %v204
    %1350 = vmatpush1.bf16.msra.mxu0 %v203
    %1351 = vmatprep.subr.bf16.mxu0 %v202
    %1352 = vmatpush1.bf16.msra.mxu0 %v201
    %1353 = vmatprep.subr.bf16.mxu0 0
    %1354 = vmatpush2.bf16.msra.mxu0 0
    %1355 = vmatprep.subr.bf16.mxu0 0
    %1356 = vmatpush2.bf16.msra.mxu0 0
    %1357 = vmatprep.subr.bf16.mxu0 0
    %1358 = vmatpush2.bf16.msra.mxu0 0
    %1359 = vmatprep.subr.bf16.mxu0 0
    %1360 = vmatpush2.bf16.msra.mxu0 0
    %1361 = vmatprep.subr.bf16.mxu0 0
    %1362 = vmatpush2.bf16.msra.mxu0 0
    %1363 = vmatprep.subr.bf16.mxu0 0
    %1364 = vmatpush2.bf16.msra.mxu0 0
    %1365 = vmatprep.subr.bf16.mxu0 0
    %1366 = vmatpush2.bf16.msra.mxu0 0
    %1367 = vmatprep.subr.bf16.mxu0 0
    %1368 = vmatpush2.bf16.msra.mxu0 0
    %1369 = vmatprep.mubr.bf16.mxu0 0
    %1370 = vmatmul.mubr.bf16.gmra.mxu0 %v1335
    %v1371 = vpop.f32.mrf.mxu0
    %v1372 = vadd.f32 %v170, %v1371
    %v1373 = vpop.f32.mrf.mxu0
    %v1374 = vadd.f32 %v174, %v1373
    %v1375 = vpop.f32.mrf.mxu0
    %v1376 = vpop.f32.mrf.mxu0
    %1377 = vdwg.mxu0
    %v1379 = vrot.slane %v1372, 2
    %v1380 = vrot.slane %v1372, 3
    %v1383 = vadd.f32 %v157, %v1379
    %v1384 = vadd.f32 %v161, %v1380
    %v1385 = vxor.u32 %v1383, 2147483648
    %v1386 = vxor.u32 %v1384, 2147483648
    %v1387 = vmul.f32 %v1385, 1.442695
    %v1388 = vpow.pop %v1387
    %v1389 = vmul.f32 %v1386, 1.442695
    %v1390 = vpow.pop %v1389
    %v1391 = vadd.f32 %v1388, 1.0
    %v1392 = vadd.f32 %v1390, 1.0
    %v1393 = vrcp.pop %v1391
    %v1394 = vmul.f32 1.0, %v1393
    %v1395 = vrcp.pop %v1392
    %v1396 = vmul.f32 1.0, %v1395
    %v1397 = vtanh.pop %v1383
    %v1398 = vtanh.pop %v1384
    %v1401 = vrot.slane %v1233, 7
    %v1402 = vrot.slane %v1234, 7
    %v1405 = vmul.f32 %v1394, %v1401
    %v1406 = vmul.f32 %v1396, %v1402
    %1409 = vrot.lane.b32.xlu0 %v1397, 64
    %v1410 = vpop.permute.xlu0 %1409
    %1411 = vrot.lane.b32.xlu0 %v1398, 64
    %v1412 = vpop.permute.xlu0 %1411
    %v1415 = vmul.f32 %v1394, %v1410
    %v1416 = vmul.f32 %v1396, %v1412
    %1419 = vrot.lane.b32.xlu0 %v1415, 32
    %v1420 = vpop.permute.xlu0 %1419
    %1421 = vrot.lane.b32.xlu0 %v1416, 32
    %v1422 = vpop.permute.xlu0 %1421
    %v1425 = vadd.f32 %v1405, %v1420
    %v1426 = vadd.f32 %v1406, %v1422
    %v1427 = vtanh.pop %v1425
    %v1428 = vtanh.pop %v1426
    %1431 = vrot.lane.b32.xlu0 %v1427, 64
    %v1432 = vpop.permute.xlu0 %1431
    %1433 = vrot.lane.b32.xlu0 %v1428, 64
    %v1434 = vpop.permute.xlu0 %1433
    %v1437 = vmul.f32 %v1394, %v1432
    %v1438 = vmul.f32 %v1396, %v1434
    %v1440 = vrot.slane %v1374, 7
    %v1443 = vadd.f32 %v159, %v1440
    %v1444 = vadd.f32 %v163, %v1374
    %v1445 = vxor.u32 %v1443, 2147483648
    %v1446 = vxor.u32 %v1444, 2147483648
    %v1447 = vmul.f32 %v1445, 1.442695
    %v1448 = vpow.pop %v1447
    %v1449 = vmul.f32 %v1446, 1.442695
    %v1450 = vpow.pop %v1449
    %v1451 = vadd.f32 %v1448, 1.0
    %v1452 = vadd.f32 %v1450, 1.0
    %v1453 = vrcp.pop %v1451
    %v1454 = vmul.f32 1.0, %v1453
    %v1455 = vrcp.pop %v1452
    %v1456 = vmul.f32 1.0, %v1455
    %v1457 = vtanh.pop %v1443
    %v1458 = vtanh.pop %v1444
    %v1461 = vrot.slane %v1294, 1
    %v1462 = vrot.slane %v1295, 1
    %v1465 = vmul.f32 %v1454, %v1461
    %v1466 = vmul.f32 %v1456, %v1462
    %1469 = vrot.lane.b32.xlu0 %v1457, 64
    %v1470 = vpop.permute.xlu0 %1469
    %1471 = vrot.lane.b32.xlu0 %v1458, 64
    %v1472 = vpop.permute.xlu0 %1471
    %v1475 = vmul.f32 %v1454, %v1470
    %v1476 = vmul.f32 %v1456, %v1472
    %1479 = vrot.lane.b32.xlu0 %v1475, 32
    %v1480 = vpop.permute.xlu0 %1479
    %1481 = vrot.lane.b32.xlu0 %v1476, 32
    %v1482 = vpop.permute.xlu0 %1481
    %v1485 = vadd.f32 %v1465, %v1480
    %v1486 = vadd.f32 %v1466, %v1482
    %v1487 = vtanh.pop %v1485
    %v1488 = vtanh.pop %v1486
    %1491 = vrot.lane.b32.xlu0 %v1487, 64
    %v1492 = vpop.permute.xlu0 %1491
    %1493 = vrot.lane.b32.xlu0 %v1488, 64
    %v1494 = vpop.permute.xlu0 %1493
    %v1497 = vmul.f32 %v1454, %v1492
    %v1498 = vmul.f32 %v1456, %v1494
    %v1501 = vrot.slane %v1438, 7
    %vm1502 = vcmask 1047559
    %v1503 = vsel %vm1502, %v1501, %v1437
    %1504 = vrot.lane.b32.xlu0 %v1503, 32
    %v1505 = vpop.permute.xlu0 %1504
    %v1509 = vrot.slane %v1497, 3
    %v1510 = vrot.slane %v1498, 2
    %v1511 = vsel %vm1502, %v1510, %v1509
    %1512 = vrot.lane.b32.xlu0 %v1511, 64
    %v1513 = vpop.permute.xlu0 %1512
    %v1515 = vsel %vm386, %v1505, %v1513
    %v1516 = vpack.c.bf16 %v1515, %v1515
    %v1518 = vrot.slane %v1516, 3
    %v1520 = vsel %vm118, %v1518, 0
    %1522 = vmatprep.subr.bf16.mxu0 0
    %1523 = vmatpush1.bf16.msra.mxu0 0
    %1524 = vmatprep.subr.bf16.mxu0 0
    %1525 = vmatpush1.bf16.msra.mxu0 0
    %1526 = vmatprep.subr.bf16.mxu0 0
    %1527 = vmatpush1.bf16.msra.mxu0 0
    %1528 = vmatprep.subr.bf16.mxu0 0
    %1529 = vmatpush1.bf16.msra.mxu0 0
    %1530 = vmatprep.subr.bf16.mxu0 %v208
    %1531 = vmatpush1.bf16.msra.mxu0 %v207
    %1532 = vmatprep.subr.bf16.mxu0 %v206
    %1533 = vmatpush1.bf16.msra.mxu0 %v205
    %1534 = vmatprep.subr.bf16.mxu0 %v204
    %1535 = vmatpush1.bf16.msra.mxu0 %v203
    %1536 = vmatprep.subr.bf16.mxu0 %v202
    %1537 = vmatpush1.bf16.msra.mxu0 %v201
    %1538 = vmatprep.subr.bf16.mxu0 0
    %1539 = vmatpush2.bf16.msra.mxu0 0
    %1540 = vmatprep.subr.bf16.mxu0 0
    %1541 = vmatpush2.bf16.msra.mxu0 0
    %1542 = vmatprep.subr.bf16.mxu0 0
    %1543 = vmatpush2.bf16.msra.mxu0 0
    %1544 = vmatprep.subr.bf16.mxu0 0
    %1545 = vmatpush2.bf16.msra.mxu0 0
    %1546 = vmatprep.subr.bf16.mxu0 0
    %1547 = vmatpush2.bf16.msra.mxu0 0
    %1548 = vmatprep.subr.bf16.mxu0 0
    %1549 = vmatpush2.bf16.msra.mxu0 0
    %1550 = vmatprep.subr.bf16.mxu0 0
    %1551 = vmatpush2.bf16.msra.mxu0 0
    %1552 = vmatprep.subr.bf16.mxu0 0
    %1553 = vmatpush2.bf16.msra.mxu0 0
    %1554 = vmatprep.mubr.bf16.mxu0 0
    %1555 = vmatmul.mubr.bf16.gmra.mxu0 %v1520
    %v1556 = vpop.f32.mrf.mxu0
    %v1557 = vadd.f32 %v170, %v1556
    %v1558 = vpop.f32.mrf.mxu0
    %v1559 = vadd.f32 %v174, %v1558
    %v1560 = vpop.f32.mrf.mxu0
    %v1561 = vpop.f32.mrf.mxu0
    %1562 = vdwg.mxu0
    %v1564 = vrot.slane %v1557, 1
    %v1565 = vrot.slane %v1557, 2
    %v1568 = vadd.f32 %v157, %v1564
    %v1569 = vadd.f32 %v161, %v1565
    %v1570 = vxor.u32 %v1568, 2147483648
    %v1571 = vxor.u32 %v1569, 2147483648
    %v1572 = vmul.f32 %v1570, 1.442695
    %v1573 = vpow.pop %v1572
    %v1574 = vmul.f32 %v1571, 1.442695
    %v1575 = vpow.pop %v1574
    %v1576 = vadd.f32 %v1573, 1.0
    %v1577 = vadd.f32 %v1575, 1.0
    %v1578 = vrcp.pop %v1576
    %v1579 = vmul.f32 1.0, %v1578
    %v1580 = vrcp.pop %v1577
    %v1581 = vmul.f32 1.0, %v1580
    %v1582 = vtanh.pop %v1568
    %v1583 = vtanh.pop %v1569
    %v1586 = vrot.slane %v1425, 7
    %v1587 = vrot.slane %v1426, 7
    %v1590 = vmul.f32 %v1579, %v1586
    %v1591 = vmul.f32 %v1581, %v1587
    %1594 = vrot.lane.b32.xlu0 %v1582, 64
    %v1595 = vpop.permute.xlu0 %1594
    %1596 = vrot.lane.b32.xlu0 %v1583, 64
    %v1597 = vpop.permute.xlu0 %1596
    %v1600 = vmul.f32 %v1579, %v1595
    %v1601 = vmul.f32 %v1581, %v1597
    %1604 = vrot.lane.b32.xlu0 %v1600, 32
    %v1605 = vpop.permute.xlu0 %1604
    %1606 = vrot.lane.b32.xlu0 %v1601, 32
    %v1607 = vpop.permute.xlu0 %1606
    %v1610 = vadd.f32 %v1590, %v1605
    %v1611 = vadd.f32 %v1591, %v1607
    %v1612 = vtanh.pop %v1610
    %v1613 = vtanh.pop %v1611
    %1616 = vrot.lane.b32.xlu0 %v1612, 64
    %v1617 = vpop.permute.xlu0 %1616
    %1618 = vrot.lane.b32.xlu0 %v1613, 64
    %v1619 = vpop.permute.xlu0 %1618
    %v1622 = vmul.f32 %v1579, %v1617
    %v1623 = vmul.f32 %v1581, %v1619
    %v1625 = vrot.slane %v1559, 1
    %v1628 = vadd.f32 %v159, %v1559
    %v1629 = vadd.f32 %v163, %v1625
    %v1630 = vxor.u32 %v1628, 2147483648
    %v1631 = vxor.u32 %v1629, 2147483648
    %v1632 = vmul.f32 %v1630, 1.442695
    %v1633 = vpow.pop %v1632
    %v1634 = vmul.f32 %v1631, 1.442695
    %v1635 = vpow.pop %v1634
    %v1636 = vadd.f32 %v1633, 1.0
    %v1637 = vadd.f32 %v1635, 1.0
    %v1638 = vrcp.pop %v1636
    %v1639 = vmul.f32 1.0, %v1638
    %v1640 = vrcp.pop %v1637
    %v1641 = vmul.f32 1.0, %v1640
    %v1642 = vtanh.pop %v1628
    %v1643 = vtanh.pop %v1629
    %v1646 = vrot.slane %v1485, 1
    %v1647 = vrot.slane %v1486, 1
    %v1650 = vmul.f32 %v1639, %v1646
    %v1651 = vmul.f32 %v1641, %v1647
    %1654 = vrot.lane.b32.xlu0 %v1642, 64
    %v1655 = vpop.permute.xlu0 %1654
    %1656 = vrot.lane.b32.xlu0 %v1643, 64
    %v1657 = vpop.permute.xlu0 %1656
    %v1660 = vmul.f32 %v1639, %v1655
    %v1661 = vmul.f32 %v1641, %v1657
    %1664 = vrot.lane.b32.xlu0 %v1660, 32
    %v1665 = vpop.permute.xlu0 %1664
    %1666 = vrot.lane.b32.xlu0 %v1661, 32
    %v1667 = vpop.permute.xlu0 %1666
    %v1670 = vadd.f32 %v1650, %v1665
    %v1671 = vadd.f32 %v1651, %v1667
    %v1672 = vtanh.pop %v1670
    %v1673 = vtanh.pop %v1671
    %1676 = vrot.lane.b32.xlu0 %v1672, 64
    %v1677 = vpop.permute.xlu0 %1676
    %1678 = vrot.lane.b32.xlu0 %v1673, 64
    %v1679 = vpop.permute.xlu0 %1678
    %v1682 = vmul.f32 %v1639, %v1677
    %v1683 = vmul.f32 %v1641, %v1679
    %vm1684 = vcmask 1040384
    %v1685 = vsel %vm1684, %v313, %v491
    %v1686 = vsel %vm1684, %v314, %v492
    %vm1687 = vcmask 1041408
    %v1688 = vsel %vm1687, %v1685, %v682
    %v1689 = vsel %vm1687, %v1686, %v683
    %vm1690 = vcmask 1042432
    %v1691 = vsel %vm1690, %v1688, %v868
    %v1692 = vsel %vm1690, %v1689, %v869
    %vm1693 = vcmask 1043456
    %v1694 = vsel %vm1693, %v1691, %v1059
    %v1695 = vsel %vm1693, %v1692, %v1060
    %vm1696 = vcmask 1044480
    %v1697 = vsel %vm1696, %v1694, %v1245
    %v1698 = vsel %vm1696, %v1695, %v1246
    %vm1699 = vcmask 1045504
    %v1700 = vsel %vm1699, %v1697, %v1437
    %v1701 = vsel %vm1699, %v1698, %v1438
    %vm1702 = vcmask 1046528
    %v1703 = vsel %vm1702, %v1700, %v1622
    %v1704 = vsel %vm1702, %v1701, %v1623
    %v1705 = vsel %vm1684, %v1682, %v1497
    %v1706 = vsel %vm1684, %v1683, %v1498
    %v1707 = vsel %vm1687, %v1705, %v1306
    %v1708 = vsel %vm1687, %v1706, %v1307
    %v1709 = vsel %vm1690, %v1707, %v1120
    %v1710 = vsel %vm1690, %v1708, %v1121
    %v1711 = vsel %vm1693, %v1709, %v929
    %v1712 = vsel %vm1693, %v1710, %v930
    %v1713 = vsel %vm1696, %v1711, %v743
    %v1714 = vsel %vm1696, %v1712, %v744
    %v1715 = vsel %vm1699, %v1713, %v552
    %v1716 = vsel %vm1699, %v1714, %v553
    %v1717 = vsel %vm1702, %v1715, %v368
    %v1718 = vsel %vm1702, %v1716, %v369
    %1721 = vrot.lane.b32.xlu0 %v1703, 32
    %v1722 = vpop.permute.xlu0 %1721
    %1723 = vrot.lane.b32.xlu0 %v1704, 32
    %v1724 = vpop.permute.xlu0 %1723
    %1729 = vrot.lane.b32.xlu0 %v1717, 64
    %v1730 = vpop.permute.xlu0 %1729
    %1731 = vrot.lane.b32.xlu0 %v1718, 64
    %v1732 = vpop.permute.xlu0 %1731
    %v1735 = vsel %vm386, %v1722, %v1730
    %v1736 = vsel %vm386, %v1724, %v1732
    %v1737 = vld [vmem:[%s5] sm:$0xff]
    %v1738 = vld [vmem:[%s5 + $0x8] sm:$0xff]
    %v1739 = vld [vmem:[%s5 + $0x10] sm:$0xff]
    %v1740 = vld [vmem:[%s5 + $0x18] sm:$0xff]
    %v1741 = vld [vmem:[%s5 + $0x20] sm:$0xff]
    %v1742 = vld [vmem:[%s5 + $0x28] sm:$0xff]
    %v1743 = vld [vmem:[%s5 + $0x30] sm:$0xff]
    %v1744 = vld [vmem:[%s5 + $0x38] sm:$0xff]
    %v1745 = vld [vmem:[%s6] sm:$0xff]
    %v1746 = vld [vmem:[%s6 + $0x8] sm:$0xff]
    %v1747 = vld [vmem:[%s6 + $0x10] sm:$0xff]
    %v1748 = vld [vmem:[%s6 + $0x18] sm:$0xff]
    %v1749 = vld [vmem:[%s6 + $0x20] sm:$0xff]
    %v1750 = vld [vmem:[%s6 + $0x28] sm:$0xff]
    %v1751 = vld [vmem:[%s6 + $0x30] sm:$0xff]
    %v1752 = vld [vmem:[%s6 + $0x38] sm:$0xff]
    %v1753 = vld [vmem:[%s7] sm:$0x3]
    %v1754 = vpack.c.bf16 %v1736, %v1735
    %v1763 = vunpack.c.l.b16 %v1737
    %v1764 = vunpack.c.h.b16 %v1737
    %v1765 = vunpack.c.l.b16 %v1738
    %v1766 = vunpack.c.h.b16 %v1738
    %v1767 = vunpack.c.l.b16 %v1739
    %v1768 = vunpack.c.h.b16 %v1739
    %v1769 = vunpack.c.l.b16 %v1740
    %v1770 = vunpack.c.h.b16 %v1740
    %v1771 = vunpack.c.l.b16 %v1741
    %v1772 = vunpack.c.h.b16 %v1741
    %v1773 = vunpack.c.l.b16 %v1742
    %v1774 = vunpack.c.h.b16 %v1742
    %v1775 = vunpack.c.l.b16 %v1743
    %v1776 = vunpack.c.h.b16 %v1743
    %v1777 = vunpack.c.l.b16 %v1744
    %v1778 = vunpack.c.h.b16 %v1744
    %v1779 = vpack.c.b16 %v1765, %v1763
    %v1780 = vpack.c.b16 %v1766, %v1764
    %v1781 = vpack.c.b16 %v1769, %v1767
    %v1782 = vpack.c.b16 %v1770, %v1768
    %v1783 = vpack.c.b16 %v1773, %v1771
    %v1784 = vpack.c.b16 %v1774, %v1772
    %v1785 = vpack.c.b16 %v1777, %v1775
    %v1786 = vpack.c.b16 %v1778, %v1776
    %v1796 = vsel %vm118, %v1754, 0
    %1798 = vmatprep.subr.bf16.mxu0 0
    %1799 = vmatpush1.bf16.msra.mxu0 0
    %1800 = vmatprep.subr.bf16.mxu0 0
    %1801 = vmatpush1.bf16.msra.mxu0 0
    %1802 = vmatprep.subr.bf16.mxu0 0
    %1803 = vmatpush1.bf16.msra.mxu0 0
    %1804 = vmatprep.subr.bf16.mxu0 0
    %1805 = vmatpush1.bf16.msra.mxu0 0
    %1806 = vmatprep.subr.bf16.mxu0 %v1786
    %1807 = vmatpush1.bf16.msra.mxu0 %v1785
    %1808 = vmatprep.subr.bf16.mxu0 %v1784
    %1809 = vmatpush1.bf16.msra.mxu0 %v1783
    %1810 = vmatprep.subr.bf16.mxu0 %v1782
    %1811 = vmatpush1.bf16.msra.mxu0 %v1781
    %1812 = vmatprep.subr.bf16.mxu0 %v1780
    %1813 = vmatpush1.bf16.msra.mxu0 %v1779
    %1814 = vmatprep.subr.bf16.mxu0 0
    %1815 = vmatpush2.bf16.msra.mxu0 0
    %1816 = vmatprep.subr.bf16.mxu0 0
    %1817 = vmatpush2.bf16.msra.mxu0 0
    %1818 = vmatprep.subr.bf16.mxu0 0
    %1819 = vmatpush2.bf16.msra.mxu0 0
    %1820 = vmatprep.subr.bf16.mxu0 0
    %1821 = vmatpush2.bf16.msra.mxu0 0
    %1822 = vmatprep.subr.bf16.mxu0 0
    %1823 = vmatpush2.bf16.msra.mxu0 0
    %1824 = vmatprep.subr.bf16.mxu0 0
    %1825 = vmatpush2.bf16.msra.mxu0 0
    %1826 = vmatprep.subr.bf16.mxu0 0
    %1827 = vmatpush2.bf16.msra.mxu0 0
    %1828 = vmatprep.subr.bf16.mxu0 0
    %1829 = vmatpush2.bf16.msra.mxu0 0
    %1830 = vmatprep.mubr.bf16.mxu0 0
    %1831 = vmatmul.mubr.bf16.gmra.mxu0 %v1796
    %v1832 = vpop.f32.mrf.mxu0
    %v1833 = vadd.f32 0.0, %v1832
    %v1834 = vpop.f32.mrf.mxu0
    %v1835 = vadd.f32 0.0, %v1834
    %v1836 = vpop.f32.mrf.mxu0
    %v1837 = vadd.f32 0.0, %v1836
    %v1838 = vpop.f32.mrf.mxu0
    %v1839 = vadd.f32 0.0, %v1838
    %1840 = vdwg.mxu0
    %v1842 = vlaneseq
    %v1843 = vshrl.u32 %v1842, 7
    %v1844 = vsub.s32 0, %v1843
    %v1845 = vrot.slane %v1753, %v1844
    %v1846 = vlaneseq
    %v1847 = vshrl.u32 %v1846, 7
    %v1848 = vsub.s32 1, %v1847
    %v1849 = vrot.slane %v1753, %v1848
    %v1860 = vunpack.c.l.b16 %v1745
    %v1861 = vunpack.c.h.b16 %v1745
    %v1862 = vunpack.c.l.b16 %v1746
    %v1863 = vunpack.c.h.b16 %v1746
    %v1864 = vunpack.c.l.b16 %v1747
    %v1865 = vunpack.c.h.b16 %v1747
    %v1866 = vunpack.c.l.b16 %v1748
    %v1867 = vunpack.c.h.b16 %v1748
    %v1868 = vunpack.c.l.b16 %v1749
    %v1869 = vunpack.c.h.b16 %v1749
    %v1870 = vunpack.c.l.b16 %v1750
    %v1871 = vunpack.c.h.b16 %v1750
    %v1872 = vunpack.c.l.b16 %v1751
    %v1873 = vunpack.c.h.b16 %v1751
    %v1874 = vunpack.c.l.b16 %v1752
    %v1875 = vunpack.c.h.b16 %v1752
    %v1876 = vpack.c.b16 %v1862, %v1860
    %v1877 = vpack.c.b16 %v1863, %v1861
    %v1878 = vpack.c.b16 %v1866, %v1864
    %v1879 = vpack.c.b16 %v1867, %v1865
    %v1880 = vpack.c.b16 %v1870, %v1868
    %v1881 = vpack.c.b16 %v1871, %v1869
    %v1882 = vpack.c.b16 %v1874, %v1872
    %v1883 = vpack.c.b16 %v1875, %v1873
    %1892 = vmatprep.subr.bf16.mxu0 0
    %1893 = vmatpush1.bf16.msra.mxu0 0
    %1894 = vmatprep.subr.bf16.mxu0 0
    %1895 = vmatpush1.bf16.msra.mxu0 0
    %1896 = vmatprep.subr.bf16.mxu0 0
    %1897 = vmatpush1.bf16.msra.mxu0 0
    %1898 = vmatprep.subr.bf16.mxu0 0
    %1899 = vmatpush1.bf16.msra.mxu0 0
    %1900 = vmatprep.subr.bf16.mxu0 %v1883
    %1901 = vmatpush1.bf16.msra.mxu0 %v1882
    %1902 = vmatprep.subr.bf16.mxu0 %v1881
    %1903 = vmatpush1.bf16.msra.mxu0 %v1880
    %1904 = vmatprep.subr.bf16.mxu0 %v1879
    %1905 = vmatpush1.bf16.msra.mxu0 %v1878
    %1906 = vmatprep.subr.bf16.mxu0 %v1877
    %1907 = vmatpush1.bf16.msra.mxu0 %v1876
    %1908 = vmatprep.subr.bf16.mxu0 0
    %1909 = vmatpush2.bf16.msra.mxu0 0
    %1910 = vmatprep.subr.bf16.mxu0 0
    %1911 = vmatpush2.bf16.msra.mxu0 0
    %1912 = vmatprep.subr.bf16.mxu0 0
    %1913 = vmatpush2.bf16.msra.mxu0 0
    %1914 = vmatprep.subr.bf16.mxu0 0
    %1915 = vmatpush2.bf16.msra.mxu0 0
    %1916 = vmatprep.subr.bf16.mxu0 0
    %1917 = vmatpush2.bf16.msra.mxu0 0
    %1918 = vmatprep.subr.bf16.mxu0 0
    %1919 = vmatpush2.bf16.msra.mxu0 0
    %1920 = vmatprep.subr.bf16.mxu0 0
    %1921 = vmatpush2.bf16.msra.mxu0 0
    %1922 = vmatprep.subr.bf16.mxu0 0
    %1923 = vmatpush2.bf16.msra.mxu0 0
    %1924 = vmatprep.mubr.bf16.mxu0 0
    %1925 = vmatmul.mubr.bf16.gmra.mxu0 %v218
    %v1926 = vpop.f32.mrf.mxu0
    %v1927 = vadd.f32 %v1845, %v1926
    %v1928 = vpop.f32.mrf.mxu0
    %v1929 = vadd.f32 %v1849, %v1928
    %v1930 = vpop.f32.mrf.mxu0
    %v1931 = vpop.f32.mrf.mxu0
    %1932 = vdwg.mxu0
    %v1934 = vrot.slane %v1927, 1
    %v1937 = vadd.f32 %v1833, %v1927
    %v1938 = vadd.f32 %v1837, %v1934
    %v1939 = vxor.u32 %v1937, 2147483648
    %v1940 = vxor.u32 %v1938, 2147483648
    %v1941 = vmul.f32 %v1939, 1.442695
    %v1942 = vpow.pop %v1941
    %v1943 = vmul.f32 %v1940, 1.442695
    %v1944 = vpow.pop %v1943
    %v1945 = vadd.f32 %v1942, 1.0
    %v1946 = vadd.f32 %v1944, 1.0
    %v1947 = vrcp.pop %v1945
    %v1948 = vmul.f32 1.0, %v1947
    %v1949 = vrcp.pop %v1946
    %v1950 = vmul.f32 1.0, %v1949
    %v1951 = vtanh.pop %v1937
    %v1952 = vtanh.pop %v1938
    %v1953 = vmul.f32 %v1948, 0.0
    %v1954 = vmul.f32 %v1950, 0.0
    %1957 = vrot.lane.b32.xlu0 %v1951, 64
    %v1958 = vpop.permute.xlu0 %1957
    %1959 = vrot.lane.b32.xlu0 %v1952, 64
    %v1960 = vpop.permute.xlu0 %1959
    %v1963 = vmul.f32 %v1948, %v1958
    %v1964 = vmul.f32 %v1950, %v1960
    %1967 = vrot.lane.b32.xlu0 %v1963, 32
    %v1968 = vpop.permute.xlu0 %1967
    %1969 = vrot.lane.b32.xlu0 %v1964, 32
    %v1970 = vpop.permute.xlu0 %1969
    %v1973 = vadd.f32 %v1953, %v1968
    %v1974 = vadd.f32 %v1954, %v1970
    %v1975 = vtanh.pop %v1973
    %v1976 = vtanh.pop %v1974
    %1979 = vrot.lane.b32.xlu0 %v1975, 64
    %v1980 = vpop.permute.xlu0 %1979
    %1981 = vrot.lane.b32.xlu0 %v1976, 64
    %v1982 = vpop.permute.xlu0 %1981
    %v1985 = vmul.f32 %v1948, %v1980
    %v1986 = vmul.f32 %v1950, %v1982
    %v1988 = vrot.slane %v1929, 1
    %v1989 = vrot.slane %v1929, 2
    %v1992 = vadd.f32 %v1835, %v1988
    %v1993 = vadd.f32 %v1839, %v1989
    %v1994 = vxor.u32 %v1992, 2147483648
    %v1995 = vxor.u32 %v1993, 2147483648
    %v1996 = vmul.f32 %v1994, 1.442695
    %v1997 = vpow.pop %v1996
    %v1998 = vmul.f32 %v1995, 1.442695
    %v1999 = vpow.pop %v1998
    %v2000 = vadd.f32 %v1997, 1.0
    %v2001 = vadd.f32 %v1999, 1.0
    %v2002 = vrcp.pop %v2000
    %v2003 = vmul.f32 1.0, %v2002
    %v2004 = vrcp.pop %v2001
    %v2005 = vmul.f32 1.0, %v2004
    %v2006 = vtanh.pop %v1992
    %v2007 = vtanh.pop %v1993
    %v2008 = vmul.f32 %v2003, 0.0
    %v2009 = vmul.f32 %v2005, 0.0
    %2012 = vrot.lane.b32.xlu0 %v2006, 64
    %v2013 = vpop.permute.xlu0 %2012
    %2014 = vrot.lane.b32.xlu0 %v2007, 64
    %v2015 = vpop.permute.xlu0 %2014
    %v2018 = vmul.f32 %v2003, %v2013
    %v2019 = vmul.f32 %v2005, %v2015
    %2022 = vrot.lane.b32.xlu0 %v2018, 32
    %v2023 = vpop.permute.xlu0 %2022
    %2024 = vrot.lane.b32.xlu0 %v2019, 32
    %v2025 = vpop.permute.xlu0 %2024
    %v2028 = vadd.f32 %v2008, %v2023
    %v2029 = vadd.f32 %v2009, %v2025
    %v2030 = vtanh.pop %v2028
    %v2031 = vtanh.pop %v2029
    %2034 = vrot.lane.b32.xlu0 %v2030, 64
    %v2035 = vpop.permute.xlu0 %2034
    %2036 = vrot.lane.b32.xlu0 %v2031, 64
    %v2037 = vpop.permute.xlu0 %2036
    %v2040 = vmul.f32 %v2003, %v2035
    %v2041 = vmul.f32 %v2005, %v2037
    %v2044 = vrot.slane %v1986, 7
    %v2045 = vsel %vm373, %v2044, %v1985
    %2046 = vrot.lane.b32.xlu0 %v2045, 32
    %v2047 = vpop.permute.xlu0 %2046
    %v2051 = vrot.slane %v2040, 7
    %v2052 = vrot.slane %v2041, 6
    %v2053 = vsel %vm373, %v2052, %v2051
    %2054 = vrot.lane.b32.xlu0 %v2053, 64
    %v2055 = vpop.permute.xlu0 %2054
    %v2057 = vsel %vm386, %v2047, %v2055
    %v2058 = vpack.c.bf16 %v2057, %v2057
    %v2060 = vsel %vm118, %v2058, 0
    %2062 = vmatprep.subr.bf16.mxu0 0
    %2063 = vmatpush1.bf16.msra.mxu0 0
    %2064 = vmatprep.subr.bf16.mxu0 0
    %2065 = vmatpush1.bf16.msra.mxu0 0
    %2066 = vmatprep.subr.bf16.mxu0 0
    %2067 = vmatpush1.bf16.msra.mxu0 0
    %2068 = vmatprep.subr.bf16.mxu0 0
    %2069 = vmatpush1.bf16.msra.mxu0 0
    %2070 = vmatprep.subr.bf16.mxu0 %v1883
    %2071 = vmatpush1.bf16.msra.mxu0 %v1882
    %2072 = vmatprep.subr.bf16.mxu0 %v1881
    %2073 = vmatpush1.bf16.msra.mxu0 %v1880
    %2074 = vmatprep.subr.bf16.mxu0 %v1879
    %2075 = vmatpush1.bf16.msra.mxu0 %v1878
    %2076 = vmatprep.subr.bf16.mxu0 %v1877
    %2077 = vmatpush1.bf16.msra.mxu0 %v1876
    %2078 = vmatprep.subr.bf16.mxu0 0
    %2079 = vmatpush2.bf16.msra.mxu0 0
    %2080 = vmatprep.subr.bf16.mxu0 0
    %2081 = vmatpush2.bf16.msra.mxu0 0
    %2082 = vmatprep.subr.bf16.mxu0 0
    %2083 = vmatpush2.bf16.msra.mxu0 0
    %2084 = vmatprep.subr.bf16.mxu0 0
    %2085 = vmatpush2.bf16.msra.mxu0 0
    %2086 = vmatprep.subr.bf16.mxu0 0
    %2087 = vmatpush2.bf16.msra.mxu0 0
    %2088 = vmatprep.subr.bf16.mxu0 0
    %2089 = vmatpush2.bf16.msra.mxu0 0
    %2090 = vmatprep.subr.bf16.mxu0 0
    %2091 = vmatpush2.bf16.msra.mxu0 0
    %2092 = vmatprep.subr.bf16.mxu0 0
    %2093 = vmatpush2.bf16.msra.mxu0 0
    %2094 = vmatprep.mubr.bf16.mxu0 0
    %2095 = vmatmul.mubr.bf16.gmra.mxu0 %v2060
    %v2096 = vpop.f32.mrf.mxu0
    %v2097 = vadd.f32 %v1845, %v2096
    %v2098 = vpop.f32.mrf.mxu0
    %v2099 = vadd.f32 %v1849, %v2098
    %v2100 = vpop.f32.mrf.mxu0
    %v2101 = vpop.f32.mrf.mxu0
    %2102 = vdwg.mxu0
    %v2104 = vrot.slane %v2097, 7
    %v2107 = vadd.f32 %v1833, %v2104
    %v2108 = vadd.f32 %v1837, %v2097
    %v2109 = vxor.u32 %v2107, 2147483648
    %v2110 = vxor.u32 %v2108, 2147483648
    %v2111 = vmul.f32 %v2109, 1.442695
    %v2112 = vpow.pop %v2111
    %v2113 = vmul.f32 %v2110, 1.442695
    %v2114 = vpow.pop %v2113
    %v2115 = vadd.f32 %v2112, 1.0
    %v2116 = vadd.f32 %v2114, 1.0
    %v2117 = vrcp.pop %v2115
    %v2118 = vmul.f32 1.0, %v2117
    %v2119 = vrcp.pop %v2116
    %v2120 = vmul.f32 1.0, %v2119
    %v2121 = vtanh.pop %v2107
    %v2122 = vtanh.pop %v2108
    %v2125 = vrot.slane %v1973, 7
    %v2126 = vrot.slane %v1974, 7
    %v2129 = vmul.f32 %v2118, %v2125
    %v2130 = vmul.f32 %v2120, %v2126
    %2133 = vrot.lane.b32.xlu0 %v2121, 64
    %v2134 = vpop.permute.xlu0 %2133
    %2135 = vrot.lane.b32.xlu0 %v2122, 64
    %v2136 = vpop.permute.xlu0 %2135
    %v2139 = vmul.f32 %v2118, %v2134
    %v2140 = vmul.f32 %v2120, %v2136
    %2143 = vrot.lane.b32.xlu0 %v2139, 32
    %v2144 = vpop.permute.xlu0 %2143
    %2145 = vrot.lane.b32.xlu0 %v2140, 32
    %v2146 = vpop.permute.xlu0 %2145
    %v2149 = vadd.f32 %v2129, %v2144
    %v2150 = vadd.f32 %v2130, %v2146
    %v2151 = vtanh.pop %v2149
    %v2152 = vtanh.pop %v2150
    %2155 = vrot.lane.b32.xlu0 %v2151, 64
    %v2156 = vpop.permute.xlu0 %2155
    %2157 = vrot.lane.b32.xlu0 %v2152, 64
    %v2158 = vpop.permute.xlu0 %2157
    %v2161 = vmul.f32 %v2118, %v2156
    %v2162 = vmul.f32 %v2120, %v2158
    %v2164 = vrot.slane %v2099, 2
    %v2165 = vrot.slane %v2099, 3
    %v2168 = vadd.f32 %v1835, %v2164
    %v2169 = vadd.f32 %v1839, %v2165
    %v2170 = vxor.u32 %v2168, 2147483648
    %v2171 = vxor.u32 %v2169, 2147483648
    %v2172 = vmul.f32 %v2170, 1.442695
    %v2173 = vpow.pop %v2172
    %v2174 = vmul.f32 %v2171, 1.442695
    %v2175 = vpow.pop %v2174
    %v2176 = vadd.f32 %v2173, 1.0
    %v2177 = vadd.f32 %v2175, 1.0
    %v2178 = vrcp.pop %v2176
    %v2179 = vmul.f32 1.0, %v2178
    %v2180 = vrcp.pop %v2177
    %v2181 = vmul.f32 1.0, %v2180
    %v2182 = vtanh.pop %v2168
    %v2183 = vtanh.pop %v2169
    %v2186 = vrot.slane %v2028, 1
    %v2187 = vrot.slane %v2029, 1
    %v2190 = vmul.f32 %v2179, %v2186
    %v2191 = vmul.f32 %v2181, %v2187
    %2194 = vrot.lane.b32.xlu0 %v2182, 64
    %v2195 = vpop.permute.xlu0 %2194
    %2196 = vrot.lane.b32.xlu0 %v2183, 64
    %v2197 = vpop.permute.xlu0 %2196
    %v2200 = vmul.f32 %v2179, %v2195
    %v2201 = vmul.f32 %v2181, %v2197
    %2204 = vrot.lane.b32.xlu0 %v2200, 32
    %v2205 = vpop.permute.xlu0 %2204
    %2206 = vrot.lane.b32.xlu0 %v2201, 32
    %v2207 = vpop.permute.xlu0 %2206
    %v2210 = vadd.f32 %v2190, %v2205
    %v2211 = vadd.f32 %v2191, %v2207
    %v2212 = vtanh.pop %v2210
    %v2213 = vtanh.pop %v2211
    %2216 = vrot.lane.b32.xlu0 %v2212, 64
    %v2217 = vpop.permute.xlu0 %2216
    %2218 = vrot.lane.b32.xlu0 %v2213, 64
    %v2219 = vpop.permute.xlu0 %2218
    %v2222 = vmul.f32 %v2179, %v2217
    %v2223 = vmul.f32 %v2181, %v2219
    %v2226 = vrot.slane %v2162, 7
    %v2227 = vsel %vm557, %v2226, %v2161
    %2228 = vrot.lane.b32.xlu0 %v2227, 32
    %v2229 = vpop.permute.xlu0 %2228
    %v2233 = vrot.slane %v2222, 5
    %v2234 = vrot.slane %v2223, 4
    %v2235 = vsel %vm557, %v2234, %v2233
    %2236 = vrot.lane.b32.xlu0 %v2235, 64
    %v2237 = vpop.permute.xlu0 %2236
    %v2239 = vsel %vm386, %v2229, %v2237
    %v2240 = vpack.c.bf16 %v2239, %v2239
    %v2242 = vshrl.u32 %v2240, 16
    %v2244 = vshll.u32 %v2240, 16
    %v2246 = vrot.slane %v2244, 1
    %v2247 = vor.u32 %v2242, %v2246
    %v2249 = vsel %vm118, %v2247, 0
    %2251 = vmatprep.subr.bf16.mxu0 0
    %2252 = vmatpush1.bf16.msra.mxu0 0
    %2253 = vmatprep.subr.bf16.mxu0 0
    %2254 = vmatpush1.bf16.msra.mxu0 0
    %2255 = vmatprep.subr.bf16.mxu0 0
    %2256 = vmatpush1.bf16.msra.mxu0 0
    %2257 = vmatprep.subr.bf16.mxu0 0
    %2258 = vmatpush1.bf16.msra.mxu0 0
    %2259 = vmatprep.subr.bf16.mxu0 %v1883
    %2260 = vmatpush1.bf16.msra.mxu0 %v1882
    %2261 = vmatprep.subr.bf16.mxu0 %v1881
    %2262 = vmatpush1.bf16.msra.mxu0 %v1880
    %2263 = vmatprep.subr.bf16.mxu0 %v1879
    %2264 = vmatpush1.bf16.msra.mxu0 %v1878
    %2265 = vmatprep.subr.bf16.mxu0 %v1877
    %2266 = vmatpush1.bf16.msra.mxu0 %v1876
    %2267 = vmatprep.subr.bf16.mxu0 0
    %2268 = vmatpush2.bf16.msra.mxu0 0
    %2269 = vmatprep.subr.bf16.mxu0 0
    %2270 = vmatpush2.bf16.msra.mxu0 0
    %2271 = vmatprep.subr.bf16.mxu0 0
    %2272 = vmatpush2.bf16.msra.mxu0 0
    %2273 = vmatprep.subr.bf16.mxu0 0
    %2274 = vmatpush2.bf16.msra.mxu0 0
    %2275 = vmatprep.subr.bf16.mxu0 0
    %2276 = vmatpush2.bf16.msra.mxu0 0
    %2277 = vmatprep.subr.bf16.mxu0 0
    %2278 = vmatpush2.bf16.msra.mxu0 0
    %2279 = vmatprep.subr.bf16.mxu0 0
    %2280 = vmatpush2.bf16.msra.mxu0 0
    %2281 = vmatprep.subr.bf16.mxu0 0
    %2282 = vmatpush2.bf16.msra.mxu0 0
    %2283 = vmatprep.mubr.bf16.mxu0 0
    %2284 = vmatmul.mubr.bf16.gmra.mxu0 %v2249
    %v2285 = vpop.f32.mrf.mxu0
    %v2286 = vadd.f32 %v1845, %v2285
    %v2287 = vpop.f32.mrf.mxu0
    %v2288 = vadd.f32 %v1849, %v2287
    %v2289 = vpop.f32.mrf.mxu0
    %v2290 = vpop.f32.mrf.mxu0
    %2291 = vdwg.mxu0
    %v2293 = vrot.slane %v2286, 6
    %v2294 = vrot.slane %v2286, 7
    %v2297 = vadd.f32 %v1833, %v2293
    %v2298 = vadd.f32 %v1837, %v2294
    %v2299 = vxor.u32 %v2297, 2147483648
    %v2300 = vxor.u32 %v2298, 2147483648
    %v2301 = vmul.f32 %v2299, 1.442695
    %v2302 = vpow.pop %v2301
    %v2303 = vmul.f32 %v2300, 1.442695
    %v2304 = vpow.pop %v2303
    %v2305 = vadd.f32 %v2302, 1.0
    %v2306 = vadd.f32 %v2304, 1.0
    %v2307 = vrcp.pop %v2305
    %v2308 = vmul.f32 1.0, %v2307
    %v2309 = vrcp.pop %v2306
    %v2310 = vmul.f32 1.0, %v2309
    %v2311 = vtanh.pop %v2297
    %v2312 = vtanh.pop %v2298
    %v2315 = vrot.slane %v2149, 7
    %v2316 = vrot.slane %v2150, 7
    %v2319 = vmul.f32 %v2308, %v2315
    %v2320 = vmul.f32 %v2310, %v2316
    %2323 = vrot.lane.b32.xlu0 %v2311, 64
    %v2324 = vpop.permute.xlu0 %2323
    %2325 = vrot.lane.b32.xlu0 %v2312, 64
    %v2326 = vpop.permute.xlu0 %2325
    %v2329 = vmul.f32 %v2308, %v2324
    %v2330 = vmul.f32 %v2310, %v2326
    %2333 = vrot.lane.b32.xlu0 %v2329, 32
    %v2334 = vpop.permute.xlu0 %2333
    %2335 = vrot.lane.b32.xlu0 %v2330, 32
    %v2336 = vpop.permute.xlu0 %2335
    %v2339 = vadd.f32 %v2319, %v2334
    %v2340 = vadd.f32 %v2320, %v2336
    %v2341 = vtanh.pop %v2339
    %v2342 = vtanh.pop %v2340
    %2345 = vrot.lane.b32.xlu0 %v2341, 64
    %v2346 = vpop.permute.xlu0 %2345
    %2347 = vrot.lane.b32.xlu0 %v2342, 64
    %v2348 = vpop.permute.xlu0 %2347
    %v2351 = vmul.f32 %v2308, %v2346
    %v2352 = vmul.f32 %v2310, %v2348
    %v2354 = vrot.slane %v2288, 3
    %v2355 = vrot.slane %v2288, 4
    %v2358 = vadd.f32 %v1835, %v2354
    %v2359 = vadd.f32 %v1839, %v2355
    %v2360 = vxor.u32 %v2358, 2147483648
    %v2361 = vxor.u32 %v2359, 2147483648
    %v2362 = vmul.f32 %v2360, 1.442695
    %v2363 = vpow.pop %v2362
    %v2364 = vmul.f32 %v2361, 1.442695
    %v2365 = vpow.pop %v2364
    %v2366 = vadd.f32 %v2363, 1.0
    %v2367 = vadd.f32 %v2365, 1.0
    %v2368 = vrcp.pop %v2366
    %v2369 = vmul.f32 1.0, %v2368
    %v2370 = vrcp.pop %v2367
    %v2371 = vmul.f32 1.0, %v2370
    %v2372 = vtanh.pop %v2358
    %v2373 = vtanh.pop %v2359
    %v2376 = vrot.slane %v2210, 1
    %v2377 = vrot.slane %v2211, 1
    %v2380 = vmul.f32 %v2369, %v2376
    %v2381 = vmul.f32 %v2371, %v2377
    %2384 = vrot.lane.b32.xlu0 %v2372, 64
    %v2385 = vpop.permute.xlu0 %2384
    %2386 = vrot.lane.b32.xlu0 %v2373, 64
    %v2387 = vpop.permute.xlu0 %2386
    %v2390 = vmul.f32 %v2369, %v2385
    %v2391 = vmul.f32 %v2371, %v2387
    %2394 = vrot.lane.b32.xlu0 %v2390, 32
    %v2395 = vpop.permute.xlu0 %2394
    %2396 = vrot.lane.b32.xlu0 %v2391, 32
    %v2397 = vpop.permute.xlu0 %2396
    %v2400 = vadd.f32 %v2380, %v2395
    %v2401 = vadd.f32 %v2381, %v2397
    %v2402 = vtanh.pop %v2400
    %v2403 = vtanh.pop %v2401
    %2406 = vrot.lane.b32.xlu0 %v2402, 64
    %v2407 = vpop.permute.xlu0 %2406
    %2408 = vrot.lane.b32.xlu0 %v2403, 64
    %v2409 = vpop.permute.xlu0 %2408
    %v2412 = vmul.f32 %v2369, %v2407
    %v2413 = vmul.f32 %v2371, %v2409
    %v2416 = vrot.slane %v2352, 7
    %v2417 = vsel %vm748, %v2416, %v2351
    %2418 = vrot.lane.b32.xlu0 %v2417, 32
    %v2419 = vpop.permute.xlu0 %2418
    %v2423 = vrot.slane %v2412, 3
    %v2424 = vrot.slane %v2413, 2
    %v2425 = vsel %vm748, %v2424, %v2423
    %2426 = vrot.lane.b32.xlu0 %v2425, 64
    %v2427 = vpop.permute.xlu0 %2426
    %v2429 = vsel %vm386, %v2419, %v2427
    %v2430 = vpack.c.bf16 %v2429, %v2429
    %v2432 = vrot.slane %v2430, 1
    %v2434 = vsel %vm118, %v2432, 0
    %2436 = vmatprep.subr.bf16.mxu0 0
    %2437 = vmatpush1.bf16.msra.mxu0 0
    %2438 = vmatprep.subr.bf16.mxu0 0
    %2439 = vmatpush1.bf16.msra.mxu0 0
    %2440 = vmatprep.subr.bf16.mxu0 0
    %2441 = vmatpush1.bf16.msra.mxu0 0
    %2442 = vmatprep.subr.bf16.mxu0 0
    %2443 = vmatpush1.bf16.msra.mxu0 0
    %2444 = vmatprep.subr.bf16.mxu0 %v1883
    %2445 = vmatpush1.bf16.msra.mxu0 %v1882
    %2446 = vmatprep.subr.bf16.mxu0 %v1881
    %2447 = vmatpush1.bf16.msra.mxu0 %v1880
    %2448 = vmatprep.subr.bf16.mxu0 %v1879
    %2449 = vmatpush1.bf16.msra.mxu0 %v1878
    %2450 = vmatprep.subr.bf16.mxu0 %v1877
    %2451 = vmatpush1.bf16.msra.mxu0 %v1876
    %2452 = vmatprep.subr.bf16.mxu0 0
    %2453 = vmatpush2.bf16.msra.mxu0 0
    %2454 = vmatprep.subr.bf16.mxu0 0
    %2455 = vmatpush2.bf16.msra.mxu0 0
    %2456 = vmatprep.subr.bf16.mxu0 0
    %2457 = vmatpush2.bf16.msra.mxu0 0
    %2458 = vmatprep.subr.bf16.mxu0 0
    %2459 = vmatpush2.bf16.msra.mxu0 0
    %2460 = vmatprep.subr.bf16.mxu0 0
    %2461 = vmatpush2.bf16.msra.mxu0 0
    %2462 = vmatprep.subr.bf16.mxu0 0
    %2463 = vmatpush2.bf16.msra.mxu0 0
    %2464 = vmatprep.subr.bf16.mxu0 0
    %2465 = vmatpush2.bf16.msra.mxu0 0
    %2466 = vmatprep.subr.bf16.mxu0 0
    %2467 = vmatpush2.bf16.msra.mxu0 0
    %2468 = vmatprep.mubr.bf16.mxu0 0
    %2469 = vmatmul.mubr.bf16.gmra.mxu0 %v2434
    %v2470 = vpop.f32.mrf.mxu0
    %v2471 = vadd.f32 %v1845, %v2470
    %v2472 = vpop.f32.mrf.mxu0
    %v2473 = vadd.f32 %v1849, %v2472
    %v2474 = vpop.f32.mrf.mxu0
    %v2475 = vpop.f32.mrf.mxu0
    %2476 = vdwg.mxu0
    %v2478 = vrot.slane %v2471, 5
    %v2479 = vrot.slane %v2471, 6
    %v2482 = vadd.f32 %v1833, %v2478
    %v2483 = vadd.f32 %v1837, %v2479
    %v2484 = vxor.u32 %v2482, 2147483648
    %v2485 = vxor.u32 %v2483, 2147483648
    %v2486 = vmul.f32 %v2484, 1.442695
    %v2487 = vpow.pop %v2486
    %v2488 = vmul.f32 %v2485, 1.442695
    %v2489 = vpow.pop %v2488
    %v2490 = vadd.f32 %v2487, 1.0
    %v2491 = vadd.f32 %v2489, 1.0
    %v2492 = vrcp.pop %v2490
    %v2493 = vmul.f32 1.0, %v2492
    %v2494 = vrcp.pop %v2491
    %v2495 = vmul.f32 1.0, %v2494
    %v2496 = vtanh.pop %v2482
    %v2497 = vtanh.pop %v2483
    %v2500 = vrot.slane %v2339, 7
    %v2501 = vrot.slane %v2340, 7
    %v2504 = vmul.f32 %v2493, %v2500
    %v2505 = vmul.f32 %v2495, %v2501
    %2508 = vrot.lane.b32.xlu0 %v2496, 64
    %v2509 = vpop.permute.xlu0 %2508
    %2510 = vrot.lane.b32.xlu0 %v2497, 64
    %v2511 = vpop.permute.xlu0 %2510
    %v2514 = vmul.f32 %v2493, %v2509
    %v2515 = vmul.f32 %v2495, %v2511
    %2518 = vrot.lane.b32.xlu0 %v2514, 32
    %v2519 = vpop.permute.xlu0 %2518
    %2520 = vrot.lane.b32.xlu0 %v2515, 32
    %v2521 = vpop.permute.xlu0 %2520
    %v2524 = vadd.f32 %v2504, %v2519
    %v2525 = vadd.f32 %v2505, %v2521
    %v2526 = vtanh.pop %v2524
    %v2527 = vtanh.pop %v2525
    %2530 = vrot.lane.b32.xlu0 %v2526, 64
    %v2531 = vpop.permute.xlu0 %2530
    %2532 = vrot.lane.b32.xlu0 %v2527, 64
    %v2533 = vpop.permute.xlu0 %2532
    %v2536 = vmul.f32 %v2493, %v2531
    %v2537 = vmul.f32 %v2495, %v2533
    %v2539 = vrot.slane %v2473, 4
    %v2540 = vrot.slane %v2473, 5
    %v2543 = vadd.f32 %v1835, %v2539
    %v2544 = vadd.f32 %v1839, %v2540
    %v2545 = vxor.u32 %v2543, 2147483648
    %v2546 = vxor.u32 %v2544, 2147483648
    %v2547 = vmul.f32 %v2545, 1.442695
    %v2548 = vpow.pop %v2547
    %v2549 = vmul.f32 %v2546, 1.442695
    %v2550 = vpow.pop %v2549
    %v2551 = vadd.f32 %v2548, 1.0
    %v2552 = vadd.f32 %v2550, 1.0
    %v2553 = vrcp.pop %v2551
    %v2554 = vmul.f32 1.0, %v2553
    %v2555 = vrcp.pop %v2552
    %v2556 = vmul.f32 1.0, %v2555
    %v2557 = vtanh.pop %v2543
    %v2558 = vtanh.pop %v2544
    %v2561 = vrot.slane %v2400, 1
    %v2562 = vrot.slane %v2401, 1
    %v2565 = vmul.f32 %v2554, %v2561
    %v2566 = vmul.f32 %v2556, %v2562
    %2569 = vrot.lane.b32.xlu0 %v2557, 64
    %v2570 = vpop.permute.xlu0 %2569
    %2571 = vrot.lane.b32.xlu0 %v2558, 64
    %v2572 = vpop.permute.xlu0 %2571
    %v2575 = vmul.f32 %v2554, %v2570
    %v2576 = vmul.f32 %v2556, %v2572
    %2579 = vrot.lane.b32.xlu0 %v2575, 32
    %v2580 = vpop.permute.xlu0 %2579
    %2581 = vrot.lane.b32.xlu0 %v2576, 32
    %v2582 = vpop.permute.xlu0 %2581
    %v2585 = vadd.f32 %v2565, %v2580
    %v2586 = vadd.f32 %v2566, %v2582
    %v2587 = vtanh.pop %v2585
    %v2588 = vtanh.pop %v2586
    %2591 = vrot.lane.b32.xlu0 %v2587, 64
    %v2592 = vpop.permute.xlu0 %2591
    %2593 = vrot.lane.b32.xlu0 %v2588, 64
    %v2594 = vpop.permute.xlu0 %2593
    %v2597 = vmul.f32 %v2554, %v2592
    %v2598 = vmul.f32 %v2556, %v2594
    %v2601 = vrot.slane %v2537, 7
    %v2602 = vsel %vm934, %v2601, %v2536
    %2603 = vrot.lane.b32.xlu0 %v2602, 32
    %v2604 = vpop.permute.xlu0 %2603
    %v2608 = vrot.slane %v2597, 1
    %v2609 = vsel %vm934, %v2598, %v2608
    %2610 = vrot.lane.b32.xlu0 %v2609, 64
    %v2611 = vpop.permute.xlu0 %2610
    %v2613 = vsel %vm386, %v2604, %v2611
    %v2614 = vpack.c.bf16 %v2613, %v2613
    %v2616 = vshrl.u32 %v2614, 16
    %v2618 = vrot.slane %v2616, 1
    %v2619 = vshll.u32 %v2614, 16
    %v2621 = vrot.slane %v2619, 2
    %v2622 = vor.u32 %v2618, %v2621
    %v2624 = vsel %vm118, %v2622, 0
    %2626 = vmatprep.subr.bf16.mxu0 0
    %2627 = vmatpush1.bf16.msra.mxu0 0
    %2628 = vmatprep.subr.bf16.mxu0 0
    %2629 = vmatpush1.bf16.msra.mxu0 0
    %2630 = vmatprep.subr.bf16.mxu0 0
    %2631 = vmatpush1.bf16.msra.mxu0 0
    %2632 = vmatprep.subr.bf16.mxu0 0
    %2633 = vmatpush1.bf16.msra.mxu0 0
    %2634 = vmatprep.subr.bf16.mxu0 %v1883
    %2635 = vmatpush1.bf16.msra.mxu0 %v1882
    %2636 = vmatprep.subr.bf16.mxu0 %v1881
    %2637 = vmatpush1.bf16.msra.mxu0 %v1880
    %2638 = vmatprep.subr.bf16.mxu0 %v1879
    %2639 = vmatpush1.bf16.msra.mxu0 %v1878
    %2640 = vmatprep.subr.bf16.mxu0 %v1877
    %2641 = vmatpush1.bf16.msra.mxu0 %v1876
    %2642 = vmatprep.subr.bf16.mxu0 0
    %2643 = vmatpush2.bf16.msra.mxu0 0
    %2644 = vmatprep.subr.bf16.mxu0 0
    %2645 = vmatpush2.bf16.msra.mxu0 0
    %2646 = vmatprep.subr.bf16.mxu0 0
    %2647 = vmatpush2.bf16.msra.mxu0 0
    %2648 = vmatprep.subr.bf16.mxu0 0
    %2649 = vmatpush2.bf16.msra.mxu0 0
    %2650 = vmatprep.subr.bf16.mxu0 0
    %2651 = vmatpush2.bf16.msra.mxu0 0
    %2652 = vmatprep.subr.bf16.mxu0 0
    %2653 = vmatpush2.bf16.msra.mxu0 0
    %2654 = vmatprep.subr.bf16.mxu0 0
    %2655 = vmatpush2.bf16.msra.mxu0 0
    %2656 = vmatprep.subr.bf16.mxu0 0
    %2657 = vmatpush2.bf16.msra.mxu0 0
    %2658 = vmatprep.mubr.bf16.mxu0 0
    %2659 = vmatmul.mubr.bf16.gmra.mxu0 %v2624
    %v2660 = vpop.f32.mrf.mxu0
    %v2661 = vadd.f32 %v1845, %v2660
    %v2662 = vpop.f32.mrf.mxu0
    %v2663 = vadd.f32 %v1849, %v2662
    %v2664 = vpop.f32.mrf.mxu0
    %v2665 = vpop.f32.mrf.mxu0
    %2666 = vdwg.mxu0
    %v2668 = vrot.slane %v2661, 4
    %v2669 = vrot.slane %v2661, 5
    %v2672 = vadd.f32 %v1833, %v2668
    %v2673 = vadd.f32 %v1837, %v2669
    %v2674 = vxor.u32 %v2672, 2147483648
    %v2675 = vxor.u32 %v2673, 2147483648
    %v2676 = vmul.f32 %v2674, 1.442695
    %v2677 = vpow.pop %v2676
    %v2678 = vmul.f32 %v2675, 1.442695
    %v2679 = vpow.pop %v2678
    %v2680 = vadd.f32 %v2677, 1.0
    %v2681 = vadd.f32 %v2679, 1.0
    %v2682 = vrcp.pop %v2680
    %v2683 = vmul.f32 1.0, %v2682
    %v2684 = vrcp.pop %v2681
    %v2685 = vmul.f32 1.0, %v2684
    %v2686 = vtanh.pop %v2672
    %v2687 = vtanh.pop %v2673
    %v2690 = vrot.slane %v2524, 7
    %v2691 = vrot.slane %v2525, 7
    %v2694 = vmul.f32 %v2683, %v2690
    %v2695 = vmul.f32 %v2685, %v2691
    %2698 = vrot.lane.b32.xlu0 %v2686, 64
    %v2699 = vpop.permute.xlu0 %2698
    %2700 = vrot.lane.b32.xlu0 %v2687, 64
    %v2701 = vpop.permute.xlu0 %2700
    %v2704 = vmul.f32 %v2683, %v2699
    %v2705 = vmul.f32 %v2685, %v2701
    %2708 = vrot.lane.b32.xlu0 %v2704, 32
    %v2709 = vpop.permute.xlu0 %2708
    %2710 = vrot.lane.b32.xlu0 %v2705, 32
    %v2711 = vpop.permute.xlu0 %2710
    %v2714 = vadd.f32 %v2694, %v2709
    %v2715 = vadd.f32 %v2695, %v2711
    %v2716 = vtanh.pop %v2714
    %v2717 = vtanh.pop %v2715
    %2720 = vrot.lane.b32.xlu0 %v2716, 64
    %v2721 = vpop.permute.xlu0 %2720
    %2722 = vrot.lane.b32.xlu0 %v2717, 64
    %v2723 = vpop.permute.xlu0 %2722
    %v2726 = vmul.f32 %v2683, %v2721
    %v2727 = vmul.f32 %v2685, %v2723
    %v2729 = vrot.slane %v2663, 5
    %v2730 = vrot.slane %v2663, 6
    %v2733 = vadd.f32 %v1835, %v2729
    %v2734 = vadd.f32 %v1839, %v2730
    %v2735 = vxor.u32 %v2733, 2147483648
    %v2736 = vxor.u32 %v2734, 2147483648
    %v2737 = vmul.f32 %v2735, 1.442695
    %v2738 = vpow.pop %v2737
    %v2739 = vmul.f32 %v2736, 1.442695
    %v2740 = vpow.pop %v2739
    %v2741 = vadd.f32 %v2738, 1.0
    %v2742 = vadd.f32 %v2740, 1.0
    %v2743 = vrcp.pop %v2741
    %v2744 = vmul.f32 1.0, %v2743
    %v2745 = vrcp.pop %v2742
    %v2746 = vmul.f32 1.0, %v2745
    %v2747 = vtanh.pop %v2733
    %v2748 = vtanh.pop %v2734
    %v2751 = vrot.slane %v2585, 1
    %v2752 = vrot.slane %v2586, 1
    %v2755 = vmul.f32 %v2744, %v2751
    %v2756 = vmul.f32 %v2746, %v2752
    %2759 = vrot.lane.b32.xlu0 %v2747, 64
    %v2760 = vpop.permute.xlu0 %2759
    %2761 = vrot.lane.b32.xlu0 %v2748, 64
    %v2762 = vpop.permute.xlu0 %2761
    %v2765 = vmul.f32 %v2744, %v2760
    %v2766 = vmul.f32 %v2746, %v2762
    %2769 = vrot.lane.b32.xlu0 %v2765, 32
    %v2770 = vpop.permute.xlu0 %2769
    %2771 = vrot.lane.b32.xlu0 %v2766, 32
    %v2772 = vpop.permute.xlu0 %2771
    %v2775 = vadd.f32 %v2755, %v2770
    %v2776 = vadd.f32 %v2756, %v2772
    %v2777 = vtanh.pop %v2775
    %v2778 = vtanh.pop %v2776
    %2781 = vrot.lane.b32.xlu0 %v2777, 64
    %v2782 = vpop.permute.xlu0 %2781
    %2783 = vrot.lane.b32.xlu0 %v2778, 64
    %v2784 = vpop.permute.xlu0 %2783
    %v2787 = vmul.f32 %v2744, %v2782
    %v2788 = vmul.f32 %v2746, %v2784
    %v2791 = vrot.slane %v2727, 7
    %v2792 = vsel %vm1125, %v2791, %v2726
    %2793 = vrot.lane.b32.xlu0 %v2792, 32
    %v2794 = vpop.permute.xlu0 %2793
    %v2798 = vrot.slane %v2787, 7
    %v2799 = vrot.slane %v2788, 6
    %v2800 = vsel %vm1125, %v2799, %v2798
    %2801 = vrot.lane.b32.xlu0 %v2800, 64
    %v2802 = vpop.permute.xlu0 %2801
    %v2804 = vsel %vm386, %v2794, %v2802
    %v2805 = vpack.c.bf16 %v2804, %v2804
    %v2807 = vrot.slane %v2805, 2
    %v2809 = vsel %vm118, %v2807, 0
    %2811 = vmatprep.subr.bf16.mxu0 0
    %2812 = vmatpush1.bf16.msra.mxu0 0
    %2813 = vmatprep.subr.bf16.mxu0 0
    %2814 = vmatpush1.bf16.msra.mxu0 0
    %2815 = vmatprep.subr.bf16.mxu0 0
    %2816 = vmatpush1.bf16.msra.mxu0 0
    %2817 = vmatprep.subr.bf16.mxu0 0
    %2818 = vmatpush1.bf16.msra.mxu0 0
    %2819 = vmatprep.subr.bf16.mxu0 %v1883
    %2820 = vmatpush1.bf16.msra.mxu0 %v1882
    %2821 = vmatprep.subr.bf16.mxu0 %v1881
    %2822 = vmatpush1.bf16.msra.mxu0 %v1880
    %2823 = vmatprep.subr.bf16.mxu0 %v1879
    %2824 = vmatpush1.bf16.msra.mxu0 %v1878
    %2825 = vmatprep.subr.bf16.mxu0 %v1877
    %2826 = vmatpush1.bf16.msra.mxu0 %v1876
    %2827 = vmatprep.subr.bf16.mxu0 0
    %2828 = vmatpush2.bf16.msra.mxu0 0
    %2829 = vmatprep.subr.bf16.mxu0 0
    %2830 = vmatpush2.bf16.msra.mxu0 0
    %2831 = vmatprep.subr.bf16.mxu0 0
    %2832 = vmatpush2.bf16.msra.mxu0 0
    %2833 = vmatprep.subr.bf16.mxu0 0
    %2834 = vmatpush2.bf16.msra.mxu0 0
    %2835 = vmatprep.subr.bf16.mxu0 0
    %2836 = vmatpush2.bf16.msra.mxu0 0
    %2837 = vmatprep.subr.bf16.mxu0 0
    %2838 = vmatpush2.bf16.msra.mxu0 0
    %2839 = vmatprep.subr.bf16.mxu0 0
    %2840 = vmatpush2.bf16.msra.mxu0 0
    %2841 = vmatprep.subr.bf16.mxu0 0
    %2842 = vmatpush2.bf16.msra.mxu0 0
    %2843 = vmatprep.mubr.bf16.mxu0 0
    %2844 = vmatmul.mubr.bf16.gmra.mxu0 %v2809
    %v2845 = vpop.f32.mrf.mxu0
    %v2846 = vadd.f32 %v1845, %v2845
    %v2847 = vpop.f32.mrf.mxu0
    %v2848 = vadd.f32 %v1849, %v2847
    %v2849 = vpop.f32.mrf.mxu0
    %v2850 = vpop.f32.mrf.mxu0
    %2851 = vdwg.mxu0
    %v2853 = vrot.slane %v2846, 3
    %v2854 = vrot.slane %v2846, 4
    %v2857 = vadd.f32 %v1833, %v2853
    %v2858 = vadd.f32 %v1837, %v2854
    %v2859 = vxor.u32 %v2857, 2147483648
    %v2860 = vxor.u32 %v2858, 2147483648
    %v2861 = vmul.f32 %v2859, 1.442695
    %v2862 = vpow.pop %v2861
    %v2863 = vmul.f32 %v2860, 1.442695
    %v2864 = vpow.pop %v2863
    %v2865 = vadd.f32 %v2862, 1.0
    %v2866 = vadd.f32 %v2864, 1.0
    %v2867 = vrcp.pop %v2865
    %v2868 = vmul.f32 1.0, %v2867
    %v2869 = vrcp.pop %v2866
    %v2870 = vmul.f32 1.0, %v2869
    %v2871 = vtanh.pop %v2857
    %v2872 = vtanh.pop %v2858
    %v2875 = vrot.slane %v2714, 7
    %v2876 = vrot.slane %v2715, 7
    %v2879 = vmul.f32 %v2868, %v2875
    %v2880 = vmul.f32 %v2870, %v2876
    %2883 = vrot.lane.b32.xlu0 %v2871, 64
    %v2884 = vpop.permute.xlu0 %2883
    %2885 = vrot.lane.b32.xlu0 %v2872, 64
    %v2886 = vpop.permute.xlu0 %2885
    %v2889 = vmul.f32 %v2868, %v2884
    %v2890 = vmul.f32 %v2870, %v2886
    %2893 = vrot.lane.b32.xlu0 %v2889, 32
    %v2894 = vpop.permute.xlu0 %2893
    %2895 = vrot.lane.b32.xlu0 %v2890, 32
    %v2896 = vpop.permute.xlu0 %2895
    %v2899 = vadd.f32 %v2879, %v2894
    %v2900 = vadd.f32 %v2880, %v2896
    %v2901 = vtanh.pop %v2899
    %v2902 = vtanh.pop %v2900
    %2905 = vrot.lane.b32.xlu0 %v2901, 64
    %v2906 = vpop.permute.xlu0 %2905
    %2907 = vrot.lane.b32.xlu0 %v2902, 64
    %v2908 = vpop.permute.xlu0 %2907
    %v2911 = vmul.f32 %v2868, %v2906
    %v2912 = vmul.f32 %v2870, %v2908
    %v2914 = vrot.slane %v2848, 6
    %v2915 = vrot.slane %v2848, 7
    %v2918 = vadd.f32 %v1835, %v2914
    %v2919 = vadd.f32 %v1839, %v2915
    %v2920 = vxor.u32 %v2918, 2147483648
    %v2921 = vxor.u32 %v2919, 2147483648
    %v2922 = vmul.f32 %v2920, 1.442695
    %v2923 = vpow.pop %v2922
    %v2924 = vmul.f32 %v2921, 1.442695
    %v2925 = vpow.pop %v2924
    %v2926 = vadd.f32 %v2923, 1.0
    %v2927 = vadd.f32 %v2925, 1.0
    %v2928 = vrcp.pop %v2926
    %v2929 = vmul.f32 1.0, %v2928
    %v2930 = vrcp.pop %v2927
    %v2931 = vmul.f32 1.0, %v2930
    %v2932 = vtanh.pop %v2918
    %v2933 = vtanh.pop %v2919
    %v2936 = vrot.slane %v2775, 1
    %v2937 = vrot.slane %v2776, 1
    %v2940 = vmul.f32 %v2929, %v2936
    %v2941 = vmul.f32 %v2931, %v2937
    %2944 = vrot.lane.b32.xlu0 %v2932, 64
    %v2945 = vpop.permute.xlu0 %2944
    %2946 = vrot.lane.b32.xlu0 %v2933, 64
    %v2947 = vpop.permute.xlu0 %2946
    %v2950 = vmul.f32 %v2929, %v2945
    %v2951 = vmul.f32 %v2931, %v2947
    %2954 = vrot.lane.b32.xlu0 %v2950, 32
    %v2955 = vpop.permute.xlu0 %2954
    %2956 = vrot.lane.b32.xlu0 %v2951, 32
    %v2957 = vpop.permute.xlu0 %2956
    %v2960 = vadd.f32 %v2940, %v2955
    %v2961 = vadd.f32 %v2941, %v2957
    %v2962 = vtanh.pop %v2960
    %v2963 = vtanh.pop %v2961
    %2966 = vrot.lane.b32.xlu0 %v2962, 64
    %v2967 = vpop.permute.xlu0 %2966
    %2968 = vrot.lane.b32.xlu0 %v2963, 64
    %v2969 = vpop.permute.xlu0 %2968
    %v2972 = vmul.f32 %v2929, %v2967
    %v2973 = vmul.f32 %v2931, %v2969
    %v2976 = vrot.slane %v2912, 7
    %v2977 = vsel %vm1311, %v2976, %v2911
    %2978 = vrot.lane.b32.xlu0 %v2977, 32
    %v2979 = vpop.permute.xlu0 %2978
    %v2983 = vrot.slane %v2972, 5
    %v2984 = vrot.slane %v2973, 4
    %v2985 = vsel %vm1311, %v2984, %v2983
    %2986 = vrot.lane.b32.xlu0 %v2985, 64
    %v2987 = vpop.permute.xlu0 %2986
    %v2989 = vsel %vm386, %v2979, %v2987
    %v2990 = vpack.c.bf16 %v2989, %v2989
    %v2992 = vshrl.u32 %v2990, 16
    %v2994 = vrot.slane %v2992, 2
    %v2995 = vshll.u32 %v2990, 16
    %v2997 = vrot.slane %v2995, 3
    %v2998 = vor.u32 %v2994, %v2997
    %v3000 = vsel %vm118, %v2998, 0
    %3002 = vmatprep.subr.bf16.mxu0 0
    %3003 = vmatpush1.bf16.msra.mxu0 0
    %3004 = vmatprep.subr.bf16.mxu0 0
    %3005 = vmatpush1.bf16.msra.mxu0 0
    %3006 = vmatprep.subr.bf16.mxu0 0
    %3007 = vmatpush1.bf16.msra.mxu0 0
    %3008 = vmatprep.subr.bf16.mxu0 0
    %3009 = vmatpush1.bf16.msra.mxu0 0
    %3010 = vmatprep.subr.bf16.mxu0 %v1883
    %3011 = vmatpush1.bf16.msra.mxu0 %v1882
    %3012 = vmatprep.subr.bf16.mxu0 %v1881
    %3013 = vmatpush1.bf16.msra.mxu0 %v1880
    %3014 = vmatprep.subr.bf16.mxu0 %v1879
    %3015 = vmatpush1.bf16.msra.mxu0 %v1878
    %3016 = vmatprep.subr.bf16.mxu0 %v1877
    %3017 = vmatpush1.bf16.msra.mxu0 %v1876
    %3018 = vmatprep.subr.bf16.mxu0 0
    %3019 = vmatpush2.bf16.msra.mxu0 0
    %3020 = vmatprep.subr.bf16.mxu0 0
    %3021 = vmatpush2.bf16.msra.mxu0 0
    %3022 = vmatprep.subr.bf16.mxu0 0
    %3023 = vmatpush2.bf16.msra.mxu0 0
    %3024 = vmatprep.subr.bf16.mxu0 0
    %3025 = vmatpush2.bf16.msra.mxu0 0
    %3026 = vmatprep.subr.bf16.mxu0 0
    %3027 = vmatpush2.bf16.msra.mxu0 0
    %3028 = vmatprep.subr.bf16.mxu0 0
    %3029 = vmatpush2.bf16.msra.mxu0 0
    %3030 = vmatprep.subr.bf16.mxu0 0
    %3031 = vmatpush2.bf16.msra.mxu0 0
    %3032 = vmatprep.subr.bf16.mxu0 0
    %3033 = vmatpush2.bf16.msra.mxu0 0
    %3034 = vmatprep.mubr.bf16.mxu0 0
    %3035 = vmatmul.mubr.bf16.gmra.mxu0 %v3000
    %v3036 = vpop.f32.mrf.mxu0
    %v3037 = vadd.f32 %v1845, %v3036
    %v3038 = vpop.f32.mrf.mxu0
    %v3039 = vadd.f32 %v1849, %v3038
    %v3040 = vpop.f32.mrf.mxu0
    %v3041 = vpop.f32.mrf.mxu0
    %3042 = vdwg.mxu0
    %v3044 = vrot.slane %v3037, 2
    %v3045 = vrot.slane %v3037, 3
    %v3048 = vadd.f32 %v1833, %v3044
    %v3049 = vadd.f32 %v1837, %v3045
    %v3050 = vxor.u32 %v3048, 2147483648
    %v3051 = vxor.u32 %v3049, 2147483648
    %v3052 = vmul.f32 %v3050, 1.442695
    %v3053 = vpow.pop %v3052
    %v3054 = vmul.f32 %v3051, 1.442695
    %v3055 = vpow.pop %v3054
    %v3056 = vadd.f32 %v3053, 1.0
    %v3057 = vadd.f32 %v3055, 1.0
    %v3058 = vrcp.pop %v3056
    %v3059 = vmul.f32 1.0, %v3058
    %v3060 = vrcp.pop %v3057
    %v3061 = vmul.f32 1.0, %v3060
    %v3062 = vtanh.pop %v3048
    %v3063 = vtanh.pop %v3049
    %v3066 = vrot.slane %v2899, 7
    %v3067 = vrot.slane %v2900, 7
    %v3070 = vmul.f32 %v3059, %v3066
    %v3071 = vmul.f32 %v3061, %v3067
    %3074 = vrot.lane.b32.xlu0 %v3062, 64
    %v3075 = vpop.permute.xlu0 %3074
    %3076 = vrot.lane.b32.xlu0 %v3063, 64
    %v3077 = vpop.permute.xlu0 %3076
    %v3080 = vmul.f32 %v3059, %v3075
    %v3081 = vmul.f32 %v3061, %v3077
    %3084 = vrot.lane.b32.xlu0 %v3080, 32
    %v3085 = vpop.permute.xlu0 %3084
    %3086 = vrot.lane.b32.xlu0 %v3081, 32
    %v3087 = vpop.permute.xlu0 %3086
    %v3090 = vadd.f32 %v3070, %v3085
    %v3091 = vadd.f32 %v3071, %v3087
    %v3092 = vtanh.pop %v3090
    %v3093 = vtanh.pop %v3091
    %3096 = vrot.lane.b32.xlu0 %v3092, 64
    %v3097 = vpop.permute.xlu0 %3096
    %3098 = vrot.lane.b32.xlu0 %v3093, 64
    %v3099 = vpop.permute.xlu0 %3098
    %v3102 = vmul.f32 %v3059, %v3097
    %v3103 = vmul.f32 %v3061, %v3099
    %v3105 = vrot.slane %v3039, 7
    %v3108 = vadd.f32 %v1835, %v3105
    %v3109 = vadd.f32 %v1839, %v3039
    %v3110 = vxor.u32 %v3108, 2147483648
    %v3111 = vxor.u32 %v3109, 2147483648
    %v3112 = vmul.f32 %v3110, 1.442695
    %v3113 = vpow.pop %v3112
    %v3114 = vmul.f32 %v3111, 1.442695
    %v3115 = vpow.pop %v3114
    %v3116 = vadd.f32 %v3113, 1.0
    %v3117 = vadd.f32 %v3115, 1.0
    %v3118 = vrcp.pop %v3116
    %v3119 = vmul.f32 1.0, %v3118
    %v3120 = vrcp.pop %v3117
    %v3121 = vmul.f32 1.0, %v3120
    %v3122 = vtanh.pop %v3108
    %v3123 = vtanh.pop %v3109
    %v3126 = vrot.slane %v2960, 1
    %v3127 = vrot.slane %v2961, 1
    %v3130 = vmul.f32 %v3119, %v3126
    %v3131 = vmul.f32 %v3121, %v3127
    %3134 = vrot.lane.b32.xlu0 %v3122, 64
    %v3135 = vpop.permute.xlu0 %3134
    %3136 = vrot.lane.b32.xlu0 %v3123, 64
    %v3137 = vpop.permute.xlu0 %3136
    %v3140 = vmul.f32 %v3119, %v3135
    %v3141 = vmul.f32 %v3121, %v3137
    %3144 = vrot.lane.b32.xlu0 %v3140, 32
    %v3145 = vpop.permute.xlu0 %3144
    %3146 = vrot.lane.b32.xlu0 %v3141, 32
    %v3147 = vpop.permute.xlu0 %3146
    %v3150 = vadd.f32 %v3130, %v3145
    %v3151 = vadd.f32 %v3131, %v3147
    %v3152 = vtanh.pop %v3150
    %v3153 = vtanh.pop %v3151
    %3156 = vrot.lane.b32.xlu0 %v3152, 64
    %v3157 = vpop.permute.xlu0 %3156
    %3158 = vrot.lane.b32.xlu0 %v3153, 64
    %v3159 = vpop.permute.xlu0 %3158
    %v3162 = vmul.f32 %v3119, %v3157
    %v3163 = vmul.f32 %v3121, %v3159
    %v3166 = vrot.slane %v3103, 7
    %v3167 = vsel %vm1502, %v3166, %v3102
    %3168 = vrot.lane.b32.xlu0 %v3167, 32
    %v3169 = vpop.permute.xlu0 %3168
    %v3173 = vrot.slane %v3162, 3
    %v3174 = vrot.slane %v3163, 2
    %v3175 = vsel %vm1502, %v3174, %v3173
    %3176 = vrot.lane.b32.xlu0 %v3175, 64
    %v3177 = vpop.permute.xlu0 %3176
    %v3179 = vsel %vm386, %v3169, %v3177
    %v3180 = vpack.c.bf16 %v3179, %v3179
    %v3182 = vrot.slane %v3180, 3
    %v3184 = vsel %vm118, %v3182, 0
    %3186 = vmatprep.subr.bf16.mxu0 0
    %3187 = vmatpush1.bf16.msra.mxu0 0
    %3188 = vmatprep.subr.bf16.mxu0 0
    %3189 = vmatpush1.bf16.msra.mxu0 0
    %3190 = vmatprep.subr.bf16.mxu0 0
    %3191 = vmatpush1.bf16.msra.mxu0 0
    %3192 = vmatprep.subr.bf16.mxu0 0
    %3193 = vmatpush1.bf16.msra.mxu0 0
    %3194 = vmatprep.subr.bf16.mxu0 %v1883
    %3195 = vmatpush1.bf16.msra.mxu0 %v1882
    %3196 = vmatprep.subr.bf16.mxu0 %v1881
    %3197 = vmatpush1.bf16.msra.mxu0 %v1880
    %3198 = vmatprep.subr.bf16.mxu0 %v1879
    %3199 = vmatpush1.bf16.msra.mxu0 %v1878
    %3200 = vmatprep.subr.bf16.mxu0 %v1877
    %3201 = vmatpush1.bf16.msra.mxu0 %v1876
    %3202 = vmatprep.subr.bf16.mxu0 0
    %3203 = vmatpush2.bf16.msra.mxu0 0
    %3204 = vmatprep.subr.bf16.mxu0 0
    %3205 = vmatpush2.bf16.msra.mxu0 0
    %3206 = vmatprep.subr.bf16.mxu0 0
    %3207 = vmatpush2.bf16.msra.mxu0 0
    %3208 = vmatprep.subr.bf16.mxu0 0
    %3209 = vmatpush2.bf16.msra.mxu0 0
    %3210 = vmatprep.subr.bf16.mxu0 0
    %3211 = vmatpush2.bf16.msra.mxu0 0
    %3212 = vmatprep.subr.bf16.mxu0 0
    %3213 = vmatpush2.bf16.msra.mxu0 0
    %3214 = vmatprep.subr.bf16.mxu0 0
    %3215 = vmatpush2.bf16.msra.mxu0 0
    %3216 = vmatprep.subr.bf16.mxu0 0
    %3217 = vmatpush2.bf16.msra.mxu0 0
    %3218 = vmatprep.mubr.bf16.mxu0 0
    %3219 = vmatmul.mubr.bf16.gmra.mxu0 %v3184
    %v3220 = vpop.f32.mrf.mxu0
    %v3221 = vadd.f32 %v1845, %v3220
    %v3222 = vpop.f32.mrf.mxu0
    %v3223 = vadd.f32 %v1849, %v3222
    %v3224 = vpop.f32.mrf.mxu0
    %v3225 = vpop.f32.mrf.mxu0
    %3226 = vdwg.mxu0
    %v3228 = vrot.slane %v3221, 1
    %v3229 = vrot.slane %v3221, 2
    %v3232 = vadd.f32 %v1833, %v3228
    %v3233 = vadd.f32 %v1837, %v3229
    %v3234 = vxor.u32 %v3232, 2147483648
    %v3235 = vxor.u32 %v3233, 2147483648
    %v3236 = vmul.f32 %v3234, 1.442695
    %v3237 = vpow.pop %v3236
    %v3238 = vmul.f32 %v3235, 1.442695
    %v3239 = vpow.pop %v3238
    %v3240 = vadd.f32 %v3237, 1.0
    %v3241 = vadd.f32 %v3239, 1.0
    %v3242 = vrcp.pop %v3240
    %v3243 = vmul.f32 1.0, %v3242
    %v3244 = vrcp.pop %v3241
    %v3245 = vmul.f32 1.0, %v3244
    %v3246 = vtanh.pop %v3232
    %v3247 = vtanh.pop %v3233
    %v3250 = vrot.slane %v3090, 7
    %v3251 = vrot.slane %v3091, 7
    %v3254 = vmul.f32 %v3243, %v3250
    %v3255 = vmul.f32 %v3245, %v3251
    %3258 = vrot.lane.b32.xlu0 %v3246, 64
    %v3259 = vpop.permute.xlu0 %3258
    %3260 = vrot.lane.b32.xlu0 %v3247, 64
    %v3261 = vpop.permute.xlu0 %3260
    %v3264 = vmul.f32 %v3243, %v3259
    %v3265 = vmul.f32 %v3245, %v3261
    %3268 = vrot.lane.b32.xlu0 %v3264, 32
    %v3269 = vpop.permute.xlu0 %3268
    %3270 = vrot.lane.b32.xlu0 %v3265, 32
    %v3271 = vpop.permute.xlu0 %3270
    %v3274 = vadd.f32 %v3254, %v3269
    %v3275 = vadd.f32 %v3255, %v3271
    %v3276 = vtanh.pop %v3274
    %v3277 = vtanh.pop %v3275
    %3280 = vrot.lane.b32.xlu0 %v3276, 64
    %v3281 = vpop.permute.xlu0 %3280
    %3282 = vrot.lane.b32.xlu0 %v3277, 64
    %v3283 = vpop.permute.xlu0 %3282
    %v3286 = vmul.f32 %v3243, %v3281
    %v3287 = vmul.f32 %v3245, %v3283
    %v3289 = vrot.slane %v3223, 1
    %v3292 = vadd.f32 %v1835, %v3223
    %v3293 = vadd.f32 %v1839, %v3289
    %v3294 = vxor.u32 %v3292, 2147483648
    %v3295 = vxor.u32 %v3293, 2147483648
    %v3296 = vmul.f32 %v3294, 1.442695
    %v3297 = vpow.pop %v3296
    %v3298 = vmul.f32 %v3295, 1.442695
    %v3299 = vpow.pop %v3298
    %v3300 = vadd.f32 %v3297, 1.0
    %v3301 = vadd.f32 %v3299, 1.0
    %v3302 = vrcp.pop %v3300
    %v3303 = vmul.f32 1.0, %v3302
    %v3304 = vrcp.pop %v3301
    %v3305 = vmul.f32 1.0, %v3304
    %v3306 = vtanh.pop %v3292
    %v3307 = vtanh.pop %v3293
    %v3310 = vrot.slane %v3150, 1
    %v3311 = vrot.slane %v3151, 1
    %v3314 = vmul.f32 %v3303, %v3310
    %v3315 = vmul.f32 %v3305, %v3311
    %3318 = vrot.lane.b32.xlu0 %v3306, 64
    %v3319 = vpop.permute.xlu0 %3318
    %3320 = vrot.lane.b32.xlu0 %v3307, 64
    %v3321 = vpop.permute.xlu0 %3320
    %v3324 = vmul.f32 %v3303, %v3319
    %v3325 = vmul.f32 %v3305, %v3321
    %3328 = vrot.lane.b32.xlu0 %v3324, 32
    %v3329 = vpop.permute.xlu0 %3328
    %3330 = vrot.lane.b32.xlu0 %v3325, 32
    %v3331 = vpop.permute.xlu0 %3330
    %v3334 = vadd.f32 %v3314, %v3329
    %v3335 = vadd.f32 %v3315, %v3331
    %v3336 = vtanh.pop %v3334
    %v3337 = vtanh.pop %v3335
    %3340 = vrot.lane.b32.xlu0 %v3336, 64
    %v3341 = vpop.permute.xlu0 %3340
    %3342 = vrot.lane.b32.xlu0 %v3337, 64
    %v3343 = vpop.permute.xlu0 %3342
    %v3346 = vmul.f32 %v3303, %v3341
    %v3347 = vmul.f32 %v3305, %v3343
    %v3348 = vsel %vm1684, %v1985, %v2161
    %v3349 = vsel %vm1684, %v1986, %v2162
    %v3350 = vsel %vm1687, %v3348, %v2351
    %v3351 = vsel %vm1687, %v3349, %v2352
    %v3352 = vsel %vm1690, %v3350, %v2536
    %v3353 = vsel %vm1690, %v3351, %v2537
    %v3354 = vsel %vm1693, %v3352, %v2726
    %v3355 = vsel %vm1693, %v3353, %v2727
    %v3356 = vsel %vm1696, %v3354, %v2911
    %v3357 = vsel %vm1696, %v3355, %v2912
    %v3358 = vsel %vm1699, %v3356, %v3102
    %v3359 = vsel %vm1699, %v3357, %v3103
    %v3360 = vsel %vm1702, %v3358, %v3286
    %v3361 = vsel %vm1702, %v3359, %v3287
    %v3362 = vsel %vm1684, %v3346, %v3162
    %v3363 = vsel %vm1684, %v3347, %v3163
    %v3364 = vsel %vm1687, %v3362, %v2972
    %v3365 = vsel %vm1687, %v3363, %v2973
    %v3366 = vsel %vm1690, %v3364, %v2787
    %v3367 = vsel %vm1690, %v3365, %v2788
    %v3368 = vsel %vm1693, %v3366, %v2597
    %v3369 = vsel %vm1693, %v3367, %v2598
    %v3370 = vsel %vm1696, %v3368, %v2412
    %v3371 = vsel %vm1696, %v3369, %v2413
    %v3372 = vsel %vm1699, %v3370, %v2222
    %v3373 = vsel %vm1699, %v3371, %v2223
    %v3374 = vsel %vm1702, %v3372, %v2040
    %v3375 = vsel %vm1702, %v3373, %v2041
    %3378 = vrot.lane.b32.xlu0 %v3360, 32
    %v3379 = vpop.permute.xlu0 %3378
    %3380 = vrot.lane.b32.xlu0 %v3361, 32
    %v3381 = vpop.permute.xlu0 %3380
    %3386 = vrot.lane.b32.xlu0 %v3374, 64
    %v3387 = vpop.permute.xlu0 %3386
    %3388 = vrot.lane.b32.xlu0 %v3375, 64
    %v3389 = vpop.permute.xlu0 %3388
    %v3392 = vsel %vm386, %v3379, %v3387
    %v3393 = vsel %vm386, %v3381, %v3389
    %v3394 = vadd.f32 %v1622, %v3286
    %v3395 = vadd.f32 %v1623, %v3287
    %v3396 = vadd.f32 %v1610, %v3274
    %v3397 = vadd.f32 %v1611, %v3275
    %v3398 = vadd.f32 %v1682, %v3346
    %v3399 = vadd.f32 %v1683, %v3347
    %v3400 = vadd.f32 %v1670, %v3334
    %v3401 = vadd.f32 %v1671, %v3335
    %v3402 = vld [vmem:[%s1] sm:$0xff]
    %v3403 = vld [vmem:[%s1 + $0x8] sm:$0xff]
    %v3404 = vld [vmem:[%s8] sm:$0xf]
    %v3405 = vld [vmem:[%s8 + $0x4] sm:$0xf]
    %v3406 = vld [vmem:[%s8 + $0x8] sm:$0xf]
    %v3407 = vld [vmem:[%s8 + $0xc] sm:$0xf]
    %v3408 = vld [vmem:[%s8 + $0x10] sm:$0xf]
    %v3409 = vld [vmem:[%s8 + $0x14] sm:$0xf]
    %v3410 = vld [vmem:[%s8 + $0x18] sm:$0xf]
    %v3411 = vld [vmem:[%s8 + $0x1c] sm:$0xf]
    %v3412 = vpack.c.bf16 %v3403, %v3402
    %v3421 = vunpack.c.l.b16 %v3404
    %v3422 = vunpack.c.l.b16 %v3405
    %v3423 = vunpack.c.l.b16 %v3406
    %v3424 = vunpack.c.l.b16 %v3407
    %v3425 = vunpack.c.l.b16 %v3408
    %v3426 = vunpack.c.l.b16 %v3409
    %v3427 = vunpack.c.l.b16 %v3410
    %v3428 = vunpack.c.l.b16 %v3411
    %v3429 = vpack.c.b16 %v3422, %v3421
    %v3430 = vpack.c.b16 %v3424, %v3423
    %v3431 = vpack.c.b16 %v3426, %v3425
    %v3432 = vpack.c.b16 %v3428, %v3427
    %v3438 = vsel %vm118, %v3412, 0
    %3440 = vmatprep.subr.bf16.mxu0 0
    %3441 = vmatpush1.bf16.msra.mxu0 0
    %3442 = vmatprep.subr.bf16.mxu0 0
    %3443 = vmatpush1.bf16.msra.mxu0 0
    %3444 = vmatprep.subr.bf16.mxu0 0
    %3445 = vmatpush1.bf16.msra.mxu0 0
    %3446 = vmatprep.subr.bf16.mxu0 0
    %3447 = vmatpush1.bf16.msra.mxu0 0
    %3448 = vmatprep.subr.bf16.mxu0 0
    %3449 = vmatpush1.bf16.msra.mxu0 %v3432
    %3450 = vmatprep.subr.bf16.mxu0 0
    %3451 = vmatpush1.bf16.msra.mxu0 %v3431
    %3452 = vmatprep.subr.bf16.mxu0 0
    %3453 = vmatpush1.bf16.msra.mxu0 %v3430
    %3454 = vmatprep.subr.bf16.mxu0 0
    %3455 = vmatpush1.bf16.msra.mxu0 %v3429
    %3456 = vmatprep.subr.bf16.mxu0 0
    %3457 = vmatpush2.bf16.msra.mxu0 0
    %3458 = vmatprep.subr.bf16.mxu0 0
    %3459 = vmatpush2.bf16.msra.mxu0 0
    %3460 = vmatprep.subr.bf16.mxu0 0
    %3461 = vmatpush2.bf16.msra.mxu0 0
    %3462 = vmatprep.subr.bf16.mxu0 0
    %3463 = vmatpush2.bf16.msra.mxu0 0
    %3464 = vmatprep.subr.bf16.mxu0 0
    %3465 = vmatpush2.bf16.msra.mxu0 0
    %3466 = vmatprep.subr.bf16.mxu0 0
    %3467 = vmatpush2.bf16.msra.mxu0 0
    %3468 = vmatprep.subr.bf16.mxu0 0
    %3469 = vmatpush2.bf16.msra.mxu0 0
    %3470 = vmatprep.subr.bf16.mxu0 0
    %3471 = vmatpush2.bf16.msra.mxu0 0
    %3472 = vmatprep.mubr.bf16.mxu0 0
    %3473 = vmatmul.mubr.bf16.gmra.mxu0 %v3438
    %v3474 = vpop.f32.mrf.mxu0
    %v3475 = vadd.f32 0.0, %v3474
    %v3476 = vpop.f32.mrf.mxu0
    %v3477 = vpop.f32.mrf.mxu0
    %v3478 = vadd.f32 0.0, %v3477
    %v3479 = vpop.f32.mrf.mxu0
    %3480 = vdwg.mxu0
    %v3481 = vld [vmem:[%s9] sm:$0xff]
    %v3482 = vld [vmem:[%s9 + $0x8] sm:$0xff]
    %v3483 = vld [vmem:[%s9 + $0x10] sm:$0xff]
    %v3484 = vld [vmem:[%s9 + $0x18] sm:$0xff]
    %v3485 = vld [vmem:[%s9 + $0x20] sm:$0xff]
    %v3486 = vld [vmem:[%s9 + $0x28] sm:$0xff]
    %v3487 = vld [vmem:[%s9 + $0x30] sm:$0xff]
    %v3488 = vld [vmem:[%s9 + $0x38] sm:$0xff]
    %v3489 = vld [vmem:[%s10] sm:$0x3]
    %v3492 = vrot.slane %v3395, 7
    %3493 = vrot.lane.b32.xlu0 %v3394, 32
    %v3494 = vpop.permute.xlu0 %3493
    %3495 = vrot.lane.b32.xlu0 %v3492, 32
    %v3496 = vpop.permute.xlu0 %3495
    %v3501 = vrot.slane %v3398, 1
    %3502 = vrot.lane.b32.xlu0 %v3501, 64
    %v3503 = vpop.permute.xlu0 %3502
    %3504 = vrot.lane.b32.xlu0 %v3399, 64
    %v3505 = vpop.permute.xlu0 %3504
    %v3508 = vsel %vm386, %v3494, %v3503
    %v3509 = vsel %vm386, %v3496, %v3505
    %v3510 = vpack.c.bf16 %v3509, %v3508
    %v3512 = vlaneseq
    %v3513 = vshrl.u32 %v3512, 7
    %v3514 = vsub.s32 0, %v3513
    %v3515 = vrot.slane %v3489, %v3514
    %v3516 = vlaneseq
    %v3517 = vshrl.u32 %v3516, 7
    %v3518 = vsub.s32 1, %v3517
    %v3519 = vrot.slane %v3489, %v3518
    %v3523 = vshrl.u32 %v3510, 16
    %v3525 = vrot.slane %v3523, 3
    %v3526 = vshll.u32 %v3510, 16
    %v3528 = vrot.slane %v3526, 4
    %v3529 = vor.u32 %v3525, %v3528
    %v3538 = vunpack.c.l.b16 %v3481
    %v3539 = vunpack.c.h.b16 %v3481
    %v3540 = vunpack.c.l.b16 %v3482
    %v3541 = vunpack.c.h.b16 %v3482
    %v3542 = vunpack.c.l.b16 %v3483
    %v3543 = vunpack.c.h.b16 %v3483
    %v3544 = vunpack.c.l.b16 %v3484
    %v3545 = vunpack.c.h.b16 %v3484
    %v3546 = vunpack.c.l.b16 %v3485
    %v3547 = vunpack.c.h.b16 %v3485
    %v3548 = vunpack.c.l.b16 %v3486
    %v3549 = vunpack.c.h.b16 %v3486
    %v3550 = vunpack.c.l.b16 %v3487
    %v3551 = vunpack.c.h.b16 %v3487
    %v3552 = vunpack.c.l.b16 %v3488
    %v3553 = vunpack.c.h.b16 %v3488
    %v3554 = vpack.c.b16 %v3540, %v3538
    %v3555 = vpack.c.b16 %v3541, %v3539
    %v3556 = vpack.c.b16 %v3544, %v3542
    %v3557 = vpack.c.b16 %v3545, %v3543
    %v3558 = vpack.c.b16 %v3548, %v3546
    %v3559 = vpack.c.b16 %v3549, %v3547
    %v3560 = vpack.c.b16 %v3552, %v3550
    %v3561 = vpack.c.b16 %v3553, %v3551
    %v3571 = vsel %vm118, %v3529, 0
    %3573 = vmatprep.subr.bf16.mxu0 0
    %3574 = vmatpush1.bf16.msra.mxu0 0
    %3575 = vmatprep.subr.bf16.mxu0 0
    %3576 = vmatpush1.bf16.msra.mxu0 0
    %3577 = vmatprep.subr.bf16.mxu0 0
    %3578 = vmatpush1.bf16.msra.mxu0 0
    %3579 = vmatprep.subr.bf16.mxu0 0
    %3580 = vmatpush1.bf16.msra.mxu0 0
    %3581 = vmatprep.subr.bf16.mxu0 %v3561
    %3582 = vmatpush1.bf16.msra.mxu0 %v3560
    %3583 = vmatprep.subr.bf16.mxu0 %v3559
    %3584 = vmatpush1.bf16.msra.mxu0 %v3558
    %3585 = vmatprep.subr.bf16.mxu0 %v3557
    %3586 = vmatpush1.bf16.msra.mxu0 %v3556
    %3587 = vmatprep.subr.bf16.mxu0 %v3555
    %3588 = vmatpush1.bf16.msra.mxu0 %v3554
    %3589 = vmatprep.subr.bf16.mxu0 0
    %3590 = vmatpush2.bf16.msra.mxu0 0
    %3591 = vmatprep.subr.bf16.mxu0 0
    %3592 = vmatpush2.bf16.msra.mxu0 0
    %3593 = vmatprep.subr.bf16.mxu0 0
    %3594 = vmatpush2.bf16.msra.mxu0 0
    %3595 = vmatprep.subr.bf16.mxu0 0
    %3596 = vmatpush2.bf16.msra.mxu0 0
    %3597 = vmatprep.subr.bf16.mxu0 0
    %3598 = vmatpush2.bf16.msra.mxu0 0
    %3599 = vmatprep.subr.bf16.mxu0 0
    %3600 = vmatpush2.bf16.msra.mxu0 0
    %3601 = vmatprep.subr.bf16.mxu0 0
    %3602 = vmatpush2.bf16.msra.mxu0 0
    %3603 = vmatprep.subr.bf16.mxu0 0
    %3604 = vmatpush2.bf16.msra.mxu0 0
    %3605 = vmatprep.mubr.bf16.mxu0 0
    %3606 = vmatmul.mubr.bf16.gmra.mxu0 %v3571
    %v3607 = vpop.f32.mrf.mxu0
    %v3608 = vadd.f32 %v3515, %v3607
    %v3609 = vpop.f32.mrf.mxu0
    %v3610 = vpop.f32.mrf.mxu0
    %v3611 = vpop.f32.mrf.mxu0
    %3612 = vdwg.mxu0
    %v3614 = vrot.slane %v3608, 1
    %v3617 = vadd.f32 %v3475, %v3608
    %v3618 = vadd.f32 %v3478, %v3614
    %v3619 = vxor.u32 %v3617, 2147483648
    %v3620 = vxor.u32 %v3618, 2147483648
    %v3621 = vmul.f32 %v3619, 1.442695
    %v3622 = vpow.pop %v3621
    %v3623 = vmul.f32 %v3620, 1.442695
    %v3624 = vpow.pop %v3623
    %v3625 = vadd.f32 %v3622, 1.0
    %v3626 = vadd.f32 %v3624, 1.0
    %v3627 = vrcp.pop %v3625
    %v3628 = vmul.f32 1.0, %v3627
    %v3629 = vrcp.pop %v3626
    %v3630 = vmul.f32 1.0, %v3629
    %v3631 = vtanh.pop %v3617
    %v3632 = vtanh.pop %v3618
    %v3635 = vrot.slane %v3396, 7
    %v3636 = vrot.slane %v3397, 7
    %v3639 = vmul.f32 %v3628, %v3635
    %v3640 = vmul.f32 %v3630, %v3636
    %3643 = vrot.lane.b32.xlu0 %v3631, 64
    %v3644 = vpop.permute.xlu0 %3643
    %3645 = vrot.lane.b32.xlu0 %v3632, 64
    %v3646 = vpop.permute.xlu0 %3645
    %v3649 = vmul.f32 %v3628, %v3644
    %v3650 = vmul.f32 %v3630, %v3646
    %3653 = vrot.lane.b32.xlu0 %v3649, 32
    %v3654 = vpop.permute.xlu0 %3653
    %3655 = vrot.lane.b32.xlu0 %v3650, 32
    %v3656 = vpop.permute.xlu0 %3655
    %v3659 = vadd.f32 %v3639, %v3654
    %v3660 = vadd.f32 %v3640, %v3656
    %v3661 = vtanh.pop %v3659
    %v3662 = vtanh.pop %v3660
    %3665 = vrot.lane.b32.xlu0 %v3661, 64
    %v3666 = vpop.permute.xlu0 %3665
    %3667 = vrot.lane.b32.xlu0 %v3662, 64
    %v3668 = vpop.permute.xlu0 %3667
    %v3671 = vmul.f32 %v3628, %v3666
    %v3672 = vmul.f32 %v3630, %v3668
    %v3675 = vrot.slane %v3672, 7
    %v3676 = vsel %vm373, %v3675, %v3671
    %3677 = vrot.lane.b32.xlu0 %v3676, 32
    %v3678 = vpop.permute.xlu0 %3677
    %v3680 = vrot.slane %v3399, 7
    %v3681 = vsel %vm373, %v3680, %v3398
    %3682 = vrot.lane.b32.xlu0 %v3681, 64
    %v3683 = vpop.permute.xlu0 %3682
    %v3685 = vsel %vm386, %v3678, %v3683
    %v3686 = vpack.c.bf16 %v3685, %v3685
    %v3688 = vsel %vm118, %v3686, 0
    %3690 = vmatprep.subr.bf16.mxu0 0
    %3691 = vmatpush1.bf16.msra.mxu0 0
    %3692 = vmatprep.subr.bf16.mxu0 0
    %3693 = vmatpush1.bf16.msra.mxu0 0
    %3694 = vmatprep.subr.bf16.mxu0 0
    %3695 = vmatpush1.bf16.msra.mxu0 0
    %3696 = vmatprep.subr.bf16.mxu0 0
    %3697 = vmatpush1.bf16.msra.mxu0 0
    %3698 = vmatprep.subr.bf16.mxu0 %v3561
    %3699 = vmatpush1.bf16.msra.mxu0 %v3560
    %3700 = vmatprep.subr.bf16.mxu0 %v3559
    %3701 = vmatpush1.bf16.msra.mxu0 %v3558
    %3702 = vmatprep.subr.bf16.mxu0 %v3557
    %3703 = vmatpush1.bf16.msra.mxu0 %v3556
    %3704 = vmatprep.subr.bf16.mxu0 %v3555
    %3705 = vmatpush1.bf16.msra.mxu0 %v3554
    %3706 = vmatprep.subr.bf16.mxu0 0
    %3707 = vmatpush2.bf16.msra.mxu0 0
    %3708 = vmatprep.subr.bf16.mxu0 0
    %3709 = vmatpush2.bf16.msra.mxu0 0
    %3710 = vmatprep.subr.bf16.mxu0 0
    %3711 = vmatpush2.bf16.msra.mxu0 0
    %3712 = vmatprep.subr.bf16.mxu0 0
    %3713 = vmatpush2.bf16.msra.mxu0 0
    %3714 = vmatprep.subr.bf16.mxu0 0
    %3715 = vmatpush2.bf16.msra.mxu0 0
    %3716 = vmatprep.subr.bf16.mxu0 0
    %3717 = vmatpush2.bf16.msra.mxu0 0
    %3718 = vmatprep.subr.bf16.mxu0 0
    %3719 = vmatpush2.bf16.msra.mxu0 0
    %3720 = vmatprep.subr.bf16.mxu0 0
    %3721 = vmatpush2.bf16.msra.mxu0 0
    %3722 = vmatprep.mubr.bf16.mxu0 0
    %3723 = vmatmul.mubr.bf16.gmra.mxu0 %v3688
    %v3724 = vpop.f32.mrf.mxu0
    %v3725 = vadd.f32 %v3515, %v3724
    %v3726 = vpop.f32.mrf.mxu0
    %v3727 = vadd.f32 %v3519, %v3726
    %v3728 = vpop.f32.mrf.mxu0
    %v3729 = vpop.f32.mrf.mxu0
    %3730 = vdwg.mxu0
    %v3732 = vrot.slane %v3725, 7
    %v3735 = vadd.f32 %v3475, %v3732
    %v3736 = vadd.f32 %v3478, %v3725
    %v3737 = vxor.u32 %v3735, 2147483648
    %v3738 = vxor.u32 %v3736, 2147483648
    %v3739 = vmul.f32 %v3737, 1.442695
    %v3740 = vpow.pop %v3739
    %v3741 = vmul.f32 %v3738, 1.442695
    %v3742 = vpow.pop %v3741
    %v3743 = vadd.f32 %v3740, 1.0
    %v3744 = vadd.f32 %v3742, 1.0
    %v3745 = vrcp.pop %v3743
    %v3746 = vmul.f32 1.0, %v3745
    %v3747 = vrcp.pop %v3744
    %v3748 = vmul.f32 1.0, %v3747
    %v3749 = vtanh.pop %v3735
    %v3750 = vtanh.pop %v3736
    %v3753 = vrot.slane %v3659, 7
    %v3754 = vrot.slane %v3660, 7
    %v3757 = vmul.f32 %v3746, %v3753
    %v3758 = vmul.f32 %v3748, %v3754
    %3761 = vrot.lane.b32.xlu0 %v3749, 64
    %v3762 = vpop.permute.xlu0 %3761
    %3763 = vrot.lane.b32.xlu0 %v3750, 64
    %v3764 = vpop.permute.xlu0 %3763
    %v3767 = vmul.f32 %v3746, %v3762
    %v3768 = vmul.f32 %v3748, %v3764
    %3771 = vrot.lane.b32.xlu0 %v3767, 32
    %v3772 = vpop.permute.xlu0 %3771
    %3773 = vrot.lane.b32.xlu0 %v3768, 32
    %v3774 = vpop.permute.xlu0 %3773
    %v3777 = vadd.f32 %v3757, %v3772
    %v3778 = vadd.f32 %v3758, %v3774
    %v3779 = vtanh.pop %v3777
    %v3780 = vtanh.pop %v3778
    %3783 = vrot.lane.b32.xlu0 %v3779, 64
    %v3784 = vpop.permute.xlu0 %3783
    %3785 = vrot.lane.b32.xlu0 %v3780, 64
    %v3786 = vpop.permute.xlu0 %3785
    %v3789 = vmul.f32 %v3746, %v3784
    %v3790 = vmul.f32 %v3748, %v3786
    %v3791 = vxor.u32 %v3727, 2147483648
    %v3792 = vmul.f32 %v3791, 1.442695
    %v3793 = vpow.pop %v3792
    %v3794 = vadd.f32 %v3793, 1.0
    %v3795 = vrcp.pop %v3794
    %v3796 = vmul.f32 1.0, %v3795
    %v3797 = vtanh.pop %v3727
    %v3800 = vrot.slane %v3401, 7
    %v3801 = vsel %vm373, %v3800, %v3400
    %v3803 = vmul.f32 %v3796, %v3801
    %3805 = vrot.lane.b32.xlu0 %v3797, 64
    %v3806 = vpop.permute.xlu0 %3805
    %v3808 = vmul.f32 %v3796, %v3806
    %3810 = vrot.lane.b32.xlu0 %v3808, 32
    %v3811 = vpop.permute.xlu0 %3810
    %v3813 = vadd.f32 %v3803, %v3811
    %v3814 = vtanh.pop %v3813
    %3816 = vrot.lane.b32.xlu0 %v3814, 64
    %v3817 = vpop.permute.xlu0 %3816
    %v3819 = vmul.f32 %v3796, %v3817
    %v3822 = vrot.slane %v3790, 7
    %v3823 = vsel %vm557, %v3822, %v3789
    %3824 = vrot.lane.b32.xlu0 %v3823, 32
    %v3825 = vpop.permute.xlu0 %3824
    %v3828 = vrot.slane %v3819, 7
    %3829 = vrot.lane.b32.xlu0 %v3828, 64
    %v3830 = vpop.permute.xlu0 %3829
    %v3832 = vsel %vm386, %v3825, %v3830
    %v3833 = vpack.c.bf16 %v3832, %v3832
    %v3835 = vshrl.u32 %v3833, 16
    %v3837 = vshll.u32 %v3833, 16
    %v3839 = vrot.slane %v3837, 1
    %v3840 = vor.u32 %v3835, %v3839
    %v3842 = vsel %vm118, %v3840, 0
    %3844 = vmatprep.subr.bf16.mxu0 0
    %3845 = vmatpush1.bf16.msra.mxu0 0
    %3846 = vmatprep.subr.bf16.mxu0 0
    %3847 = vmatpush1.bf16.msra.mxu0 0
    %3848 = vmatprep.subr.bf16.mxu0 0
    %3849 = vmatpush1.bf16.msra.mxu0 0
    %3850 = vmatprep.subr.bf16.mxu0 0
    %3851 = vmatpush1.bf16.msra.mxu0 0
    %3852 = vmatprep.subr.bf16.mxu0 %v3561
    %3853 = vmatpush1.bf16.msra.mxu0 %v3560
    %3854 = vmatprep.subr.bf16.mxu0 %v3559
    %3855 = vmatpush1.bf16.msra.mxu0 %v3558
    %3856 = vmatprep.subr.bf16.mxu0 %v3557
    %3857 = vmatpush1.bf16.msra.mxu0 %v3556
    %3858 = vmatprep.subr.bf16.mxu0 %v3555
    %3859 = vmatpush1.bf16.msra.mxu0 %v3554
    %3860 = vmatprep.subr.bf16.mxu0 0
    %3861 = vmatpush2.bf16.msra.mxu0 0
    %3862 = vmatprep.subr.bf16.mxu0 0
    %3863 = vmatpush2.bf16.msra.mxu0 0
    %3864 = vmatprep.subr.bf16.mxu0 0
    %3865 = vmatpush2.bf16.msra.mxu0 0
    %3866 = vmatprep.subr.bf16.mxu0 0
    %3867 = vmatpush2.bf16.msra.mxu0 0
    %3868 = vmatprep.subr.bf16.mxu0 0
    %3869 = vmatpush2.bf16.msra.mxu0 0
    %3870 = vmatprep.subr.bf16.mxu0 0
    %3871 = vmatpush2.bf16.msra.mxu0 0
    %3872 = vmatprep.subr.bf16.mxu0 0
    %3873 = vmatpush2.bf16.msra.mxu0 0
    %3874 = vmatprep.subr.bf16.mxu0 0
    %3875 = vmatpush2.bf16.msra.mxu0 0
    %3876 = vmatprep.mubr.bf16.mxu0 0
    %3877 = vmatmul.mubr.bf16.gmra.mxu0 %v3842
    %v3878 = vpop.f32.mrf.mxu0
    %v3879 = vadd.f32 %v3515, %v3878
    %v3880 = vpop.f32.mrf.mxu0
    %v3881 = vadd.f32 %v3519, %v3880
    %v3882 = vpop.f32.mrf.mxu0
    %v3883 = vpop.f32.mrf.mxu0
    %3884 = vdwg.mxu0
    %v3886 = vrot.slane %v3879, 6
    %v3887 = vrot.slane %v3879, 7
    %v3890 = vadd.f32 %v3475, %v3886
    %v3891 = vadd.f32 %v3478, %v3887
    %v3892 = vxor.u32 %v3890, 2147483648
    %v3893 = vxor.u32 %v3891, 2147483648
    %v3894 = vmul.f32 %v3892, 1.442695
    %v3895 = vpow.pop %v3894
    %v3896 = vmul.f32 %v3893, 1.442695
    %v3897 = vpow.pop %v3896
    %v3898 = vadd.f32 %v3895, 1.0
    %v3899 = vadd.f32 %v3897, 1.0
    %v3900 = vrcp.pop %v3898
    %v3901 = vmul.f32 1.0, %v3900
    %v3902 = vrcp.pop %v3899
    %v3903 = vmul.f32 1.0, %v3902
    %v3904 = vtanh.pop %v3890
    %v3905 = vtanh.pop %v3891
    %v3908 = vrot.slane %v3777, 7
    %v3909 = vrot.slane %v3778, 7
    %v3912 = vmul.f32 %v3901, %v3908
    %v3913 = vmul.f32 %v3903, %v3909
    %3916 = vrot.lane.b32.xlu0 %v3904, 64
    %v3917 = vpop.permute.xlu0 %3916
    %3918 = vrot.lane.b32.xlu0 %v3905, 64
    %v3919 = vpop.permute.xlu0 %3918
    %v3922 = vmul.f32 %v3901, %v3917
    %v3923 = vmul.f32 %v3903, %v3919
    %3926 = vrot.lane.b32.xlu0 %v3922, 32
    %v3927 = vpop.permute.xlu0 %3926
    %3928 = vrot.lane.b32.xlu0 %v3923, 32
    %v3929 = vpop.permute.xlu0 %3928
    %v3932 = vadd.f32 %v3912, %v3927
    %v3933 = vadd.f32 %v3913, %v3929
    %v3934 = vtanh.pop %v3932
    %v3935 = vtanh.pop %v3933
    %3938 = vrot.lane.b32.xlu0 %v3934, 64
    %v3939 = vpop.permute.xlu0 %3938
    %3940 = vrot.lane.b32.xlu0 %v3935, 64
    %v3941 = vpop.permute.xlu0 %3940
    %v3944 = vmul.f32 %v3901, %v3939
    %v3945 = vmul.f32 %v3903, %v3941
    %v3946 = vxor.u32 %v3881, 2147483648
    %v3947 = vmul.f32 %v3946, 1.442695
    %v3948 = vpow.pop %v3947
    %v3949 = vadd.f32 %v3948, 1.0
    %v3950 = vrcp.pop %v3949
    %v3951 = vmul.f32 1.0, %v3950
    %v3952 = vtanh.pop %v3881
    %v3953 = vmul.f32 %v3951, %v3813
    %3955 = vrot.lane.b32.xlu0 %v3952, 64
    %v3956 = vpop.permute.xlu0 %3955
    %v3958 = vmul.f32 %v3951, %v3956
    %3960 = vrot.lane.b32.xlu0 %v3958, 32
    %v3961 = vpop.permute.xlu0 %3960
    %v3963 = vadd.f32 %v3953, %v3961
    %v3964 = vtanh.pop %v3963
    %3966 = vrot.lane.b32.xlu0 %v3964, 64
    %v3967 = vpop.permute.xlu0 %3966
    %v3969 = vmul.f32 %v3951, %v3967
    %v3972 = vrot.slane %v3945, 7
    %v3973 = vsel %vm748, %v3972, %v3944
    %3974 = vrot.lane.b32.xlu0 %v3973, 32
    %v3975 = vpop.permute.xlu0 %3974
    %v3978 = vrot.slane %v3969, 6
    %3979 = vrot.lane.b32.xlu0 %v3978, 64
    %v3980 = vpop.permute.xlu0 %3979
    %v3982 = vsel %vm386, %v3975, %v3980
    %v3983 = vpack.c.bf16 %v3982, %v3982
    %v3985 = vrot.slane %v3983, 1
    %v3987 = vsel %vm118, %v3985, 0
    %3989 = vmatprep.subr.bf16.mxu0 0
    %3990 = vmatpush1.bf16.msra.mxu0 0
    %3991 = vmatprep.subr.bf16.mxu0 0
    %3992 = vmatpush1.bf16.msra.mxu0 0
    %3993 = vmatprep.subr.bf16.mxu0 0
    %3994 = vmatpush1.bf16.msra.mxu0 0
    %3995 = vmatprep.subr.bf16.mxu0 0
    %3996 = vmatpush1.bf16.msra.mxu0 0
    %3997 = vmatprep.subr.bf16.mxu0 %v3561
    %3998 = vmatpush1.bf16.msra.mxu0 %v3560
    %3999 = vmatprep.subr.bf16.mxu0 %v3559
    %4000 = vmatpush1.bf16.msra.mxu0 %v3558
    %4001 = vmatprep.subr.bf16.mxu0 %v3557
    %4002 = vmatpush1.bf16.msra.mxu0 %v3556
    %4003 = vmatprep.subr.bf16.mxu0 %v3555
    %4004 = vmatpush1.bf16.msra.mxu0 %v3554
    %4005 = vmatprep.subr.bf16.mxu0 0
    %4006 = vmatpush2.bf16.msra.mxu0 0
    %4007 = vmatprep.subr.bf16.mxu0 0
    %4008 = vmatpush2.bf16.msra.mxu0 0
    %4009 = vmatprep.subr.bf16.mxu0 0
    %4010 = vmatpush2.bf16.msra.mxu0 0
    %4011 = vmatprep.subr.bf16.mxu0 0
    %4012 = vmatpush2.bf16.msra.mxu0 0
    %4013 = vmatprep.subr.bf16.mxu0 0
    %4014 = vmatpush2.bf16.msra.mxu0 0
    %4015 = vmatprep.subr.bf16.mxu0 0
    %4016 = vmatpush2.bf16.msra.mxu0 0
    %4017 = vmatprep.subr.bf16.mxu0 0
    %4018 = vmatpush2.bf16.msra.mxu0 0
    %4019 = vmatprep.subr.bf16.mxu0 0
    %4020 = vmatpush2.bf16.msra.mxu0 0
    %4021 = vmatprep.mubr.bf16.mxu0 0
    %4022 = vmatmul.mubr.bf16.gmra.mxu0 %v3987
    %v4023 = vpop.f32.mrf.mxu0
    %v4024 = vadd.f32 %v3515, %v4023
    %v4025 = vpop.f32.mrf.mxu0
    %v4026 = vadd.f32 %v3519, %v4025
    %v4027 = vpop.f32.mrf.mxu0
    %v4028 = vpop.f32.mrf.mxu0
    %4029 = vdwg.mxu0
    %v4031 = vrot.slane %v4024, 5
    %v4032 = vrot.slane %v4024, 6
    %v4035 = vadd.f32 %v3475, %v4031
    %v4036 = vadd.f32 %v3478, %v4032
    %v4037 = vxor.u32 %v4035, 2147483648
    %v4038 = vxor.u32 %v4036, 2147483648
    %v4039 = vmul.f32 %v4037, 1.442695
    %v4040 = vpow.pop %v4039
    %v4041 = vmul.f32 %v4038, 1.442695
    %v4042 = vpow.pop %v4041
    %v4043 = vadd.f32 %v4040, 1.0
    %v4044 = vadd.f32 %v4042, 1.0
    %v4045 = vrcp.pop %v4043
    %v4046 = vmul.f32 1.0, %v4045
    %v4047 = vrcp.pop %v4044
    %v4048 = vmul.f32 1.0, %v4047
    %v4049 = vtanh.pop %v4035
    %v4050 = vtanh.pop %v4036
    %v4053 = vrot.slane %v3932, 7
    %v4054 = vrot.slane %v3933, 7
    %v4057 = vmul.f32 %v4046, %v4053
    %v4058 = vmul.f32 %v4048, %v4054
    %4061 = vrot.lane.b32.xlu0 %v4049, 64
    %v4062 = vpop.permute.xlu0 %4061
    %4063 = vrot.lane.b32.xlu0 %v4050, 64
    %v4064 = vpop.permute.xlu0 %4063
    %v4067 = vmul.f32 %v4046, %v4062
    %v4068 = vmul.f32 %v4048, %v4064
    %4071 = vrot.lane.b32.xlu0 %v4067, 32
    %v4072 = vpop.permute.xlu0 %4071
    %4073 = vrot.lane.b32.xlu0 %v4068, 32
    %v4074 = vpop.permute.xlu0 %4073
    %v4077 = vadd.f32 %v4057, %v4072
    %v4078 = vadd.f32 %v4058, %v4074
    %v4079 = vtanh.pop %v4077
    %v4080 = vtanh.pop %v4078
    %4083 = vrot.lane.b32.xlu0 %v4079, 64
    %v4084 = vpop.permute.xlu0 %4083
    %4085 = vrot.lane.b32.xlu0 %v4080, 64
    %v4086 = vpop.permute.xlu0 %4085
    %v4089 = vmul.f32 %v4046, %v4084
    %v4090 = vmul.f32 %v4048, %v4086
    %v4091 = vxor.u32 %v4026, 2147483648
    %v4092 = vmul.f32 %v4091, 1.442695
    %v4093 = vpow.pop %v4092
    %v4094 = vadd.f32 %v4093, 1.0
    %v4095 = vrcp.pop %v4094
    %v4096 = vmul.f32 1.0, %v4095
    %v4097 = vtanh.pop %v4026
    %v4098 = vmul.f32 %v4096, %v3963
    %4100 = vrot.lane.b32.xlu0 %v4097, 64
    %v4101 = vpop.permute.xlu0 %4100
    %v4103 = vmul.f32 %v4096, %v4101
    %4105 = vrot.lane.b32.xlu0 %v4103, 32
    %v4106 = vpop.permute.xlu0 %4105
    %v4108 = vadd.f32 %v4098, %v4106
    %v4109 = vtanh.pop %v4108
    %4111 = vrot.lane.b32.xlu0 %v4109, 64
    %v4112 = vpop.permute.xlu0 %4111
    %v4114 = vmul.f32 %v4096, %v4112
    %v4117 = vrot.slane %v4090, 7
    %v4118 = vsel %vm934, %v4117, %v4089
    %4119 = vrot.lane.b32.xlu0 %v4118, 32
    %v4120 = vpop.permute.xlu0 %4119
    %v4123 = vrot.slane %v4114, 5
    %4124 = vrot.lane.b32.xlu0 %v4123, 64
    %v4125 = vpop.permute.xlu0 %4124
    %v4127 = vsel %vm386, %v4120, %v4125
    %v4128 = vpack.c.bf16 %v4127, %v4127
    %v4130 = vshrl.u32 %v4128, 16
    %v4132 = vrot.slane %v4130, 1
    %v4133 = vshll.u32 %v4128, 16
    %v4135 = vrot.slane %v4133, 2
    %v4136 = vor.u32 %v4132, %v4135
    %v4138 = vsel %vm118, %v4136, 0
    %4140 = vmatprep.subr.bf16.mxu0 0
    %4141 = vmatpush1.bf16.msra.mxu0 0
    %4142 = vmatprep.subr.bf16.mxu0 0
    %4143 = vmatpush1.bf16.msra.mxu0 0
    %4144 = vmatprep.subr.bf16.mxu0 0
    %4145 = vmatpush1.bf16.msra.mxu0 0
    %4146 = vmatprep.subr.bf16.mxu0 0
    %4147 = vmatpush1.bf16.msra.mxu0 0
    %4148 = vmatprep.subr.bf16.mxu0 %v3561
    %4149 = vmatpush1.bf16.msra.mxu0 %v3560
    %4150 = vmatprep.subr.bf16.mxu0 %v3559
    %4151 = vmatpush1.bf16.msra.mxu0 %v3558
    %4152 = vmatprep.subr.bf16.mxu0 %v3557
    %4153 = vmatpush1.bf16.msra.mxu0 %v3556
    %4154 = vmatprep.subr.bf16.mxu0 %v3555
    %4155 = vmatpush1.bf16.msra.mxu0 %v3554
    %4156 = vmatprep.subr.bf16.mxu0 0
    %4157 = vmatpush2.bf16.msra.mxu0 0
    %4158 = vmatprep.subr.bf16.mxu0 0
    %4159 = vmatpush2.bf16.msra.mxu0 0
    %4160 = vmatprep.subr.bf16.mxu0 0
    %4161 = vmatpush2.bf16.msra.mxu0 0
    %4162 = vmatprep.subr.bf16.mxu0 0
    %4163 = vmatpush2.bf16.msra.mxu0 0
    %4164 = vmatprep.subr.bf16.mxu0 0
    %4165 = vmatpush2.bf16.msra.mxu0 0
    %4166 = vmatprep.subr.bf16.mxu0 0
    %4167 = vmatpush2.bf16.msra.mxu0 0
    %4168 = vmatprep.subr.bf16.mxu0 0
    %4169 = vmatpush2.bf16.msra.mxu0 0
    %4170 = vmatprep.subr.bf16.mxu0 0
    %4171 = vmatpush2.bf16.msra.mxu0 0
    %4172 = vmatprep.mubr.bf16.mxu0 0
    %4173 = vmatmul.mubr.bf16.gmra.mxu0 %v4138
    %v4174 = vpop.f32.mrf.mxu0
    %v4175 = vadd.f32 %v3515, %v4174
    %v4176 = vpop.f32.mrf.mxu0
    %v4177 = vadd.f32 %v3519, %v4176
    %v4178 = vpop.f32.mrf.mxu0
    %v4179 = vpop.f32.mrf.mxu0
    %4180 = vdwg.mxu0
    %v4182 = vrot.slane %v4175, 4
    %v4183 = vrot.slane %v4175, 5
    %v4186 = vadd.f32 %v3475, %v4182
    %v4187 = vadd.f32 %v3478, %v4183
    %v4188 = vxor.u32 %v4186, 2147483648
    %v4189 = vxor.u32 %v4187, 2147483648
    %v4190 = vmul.f32 %v4188, 1.442695
    %v4191 = vpow.pop %v4190
    %v4192 = vmul.f32 %v4189, 1.442695
    %v4193 = vpow.pop %v4192
    %v4194 = vadd.f32 %v4191, 1.0
    %v4195 = vadd.f32 %v4193, 1.0
    %v4196 = vrcp.pop %v4194
    %v4197 = vmul.f32 1.0, %v4196
    %v4198 = vrcp.pop %v4195
    %v4199 = vmul.f32 1.0, %v4198
    %v4200 = vtanh.pop %v4186
    %v4201 = vtanh.pop %v4187
    %v4204 = vrot.slane %v4077, 7
    %v4205 = vrot.slane %v4078, 7
    %v4208 = vmul.f32 %v4197, %v4204
    %v4209 = vmul.f32 %v4199, %v4205
    %4212 = vrot.lane.b32.xlu0 %v4200, 64
    %v4213 = vpop.permute.xlu0 %4212
    %4214 = vrot.lane.b32.xlu0 %v4201, 64
    %v4215 = vpop.permute.xlu0 %4214
    %v4218 = vmul.f32 %v4197, %v4213
    %v4219 = vmul.f32 %v4199, %v4215
    %4222 = vrot.lane.b32.xlu0 %v4218, 32
    %v4223 = vpop.permute.xlu0 %4222
    %4224 = vrot.lane.b32.xlu0 %v4219, 32
    %v4225 = vpop.permute.xlu0 %4224
    %v4228 = vadd.f32 %v4208, %v4223
    %v4229 = vadd.f32 %v4209, %v4225
    %v4230 = vtanh.pop %v4228
    %v4231 = vtanh.pop %v4229
    %4234 = vrot.lane.b32.xlu0 %v4230, 64
    %v4235 = vpop.permute.xlu0 %4234
    %4236 = vrot.lane.b32.xlu0 %v4231, 64
    %v4237 = vpop.permute.xlu0 %4236
    %v4240 = vmul.f32 %v4197, %v4235
    %v4241 = vmul.f32 %v4199, %v4237
    %v4242 = vxor.u32 %v4177, 2147483648
    %v4243 = vmul.f32 %v4242, 1.442695
    %v4244 = vpow.pop %v4243
    %v4245 = vadd.f32 %v4244, 1.0
    %v4246 = vrcp.pop %v4245
    %v4247 = vmul.f32 1.0, %v4246
    %v4248 = vtanh.pop %v4177
    %v4249 = vmul.f32 %v4247, %v4108
    %4251 = vrot.lane.b32.xlu0 %v4248, 64
    %v4252 = vpop.permute.xlu0 %4251
    %v4254 = vmul.f32 %v4247, %v4252
    %4256 = vrot.lane.b32.xlu0 %v4254, 32
    %v4257 = vpop.permute.xlu0 %4256
    %v4259 = vadd.f32 %v4249, %v4257
    %v4260 = vtanh.pop %v4259
    %4262 = vrot.lane.b32.xlu0 %v4260, 64
    %v4263 = vpop.permute.xlu0 %4262
    %v4265 = vmul.f32 %v4247, %v4263
    %v4268 = vrot.slane %v4241, 7
    %v4269 = vsel %vm1125, %v4268, %v4240
    %4270 = vrot.lane.b32.xlu0 %v4269, 32
    %v4271 = vpop.permute.xlu0 %4270
    %v4274 = vrot.slane %v4265, 4
    %4275 = vrot.lane.b32.xlu0 %v4274, 64
    %v4276 = vpop.permute.xlu0 %4275
    %v4278 = vsel %vm386, %v4271, %v4276
    %v4279 = vpack.c.bf16 %v4278, %v4278
    %v4281 = vrot.slane %v4279, 2
    %v4283 = vsel %vm118, %v4281, 0
    %4285 = vmatprep.subr.bf16.mxu0 0
    %4286 = vmatpush1.bf16.msra.mxu0 0
    %4287 = vmatprep.subr.bf16.mxu0 0
    %4288 = vmatpush1.bf16.msra.mxu0 0
    %4289 = vmatprep.subr.bf16.mxu0 0
    %4290 = vmatpush1.bf16.msra.mxu0 0
    %4291 = vmatprep.subr.bf16.mxu0 0
    %4292 = vmatpush1.bf16.msra.mxu0 0
    %4293 = vmatprep.subr.bf16.mxu0 %v3561
    %4294 = vmatpush1.bf16.msra.mxu0 %v3560
    %4295 = vmatprep.subr.bf16.mxu0 %v3559
    %4296 = vmatpush1.bf16.msra.mxu0 %v3558
    %4297 = vmatprep.subr.bf16.mxu0 %v3557
    %4298 = vmatpush1.bf16.msra.mxu0 %v3556
    %4299 = vmatprep.subr.bf16.mxu0 %v3555
    %4300 = vmatpush1.bf16.msra.mxu0 %v3554
    %4301 = vmatprep.subr.bf16.mxu0 0
    %4302 = vmatpush2.bf16.msra.mxu0 0
    %4303 = vmatprep.subr.bf16.mxu0 0
    %4304 = vmatpush2.bf16.msra.mxu0 0
    %4305 = vmatprep.subr.bf16.mxu0 0
    %4306 = vmatpush2.bf16.msra.mxu0 0
    %4307 = vmatprep.subr.bf16.mxu0 0
    %4308 = vmatpush2.bf16.msra.mxu0 0
    %4309 = vmatprep.subr.bf16.mxu0 0
    %4310 = vmatpush2.bf16.msra.mxu0 0
    %4311 = vmatprep.subr.bf16.mxu0 0
    %4312 = vmatpush2.bf16.msra.mxu0 0
    %4313 = vmatprep.subr.bf16.mxu0 0
    %4314 = vmatpush2.bf16.msra.mxu0 0
    %4315 = vmatprep.subr.bf16.mxu0 0
    %4316 = vmatpush2.bf16.msra.mxu0 0
    %4317 = vmatprep.mubr.bf16.mxu0 0
    %4318 = vmatmul.mubr.bf16.gmra.mxu0 %v4283
    %v4319 = vpop.f32.mrf.mxu0
    %v4320 = vadd.f32 %v3515, %v4319
    %v4321 = vpop.f32.mrf.mxu0
    %v4322 = vadd.f32 %v3519, %v4321
    %v4323 = vpop.f32.mrf.mxu0
    %v4324 = vpop.f32.mrf.mxu0
    %4325 = vdwg.mxu0
    %v4327 = vrot.slane %v4320, 3
    %v4328 = vrot.slane %v4320, 4
    %v4331 = vadd.f32 %v3475, %v4327
    %v4332 = vadd.f32 %v3478, %v4328
    %v4333 = vxor.u32 %v4331, 2147483648
    %v4334 = vxor.u32 %v4332, 2147483648
    %v4335 = vmul.f32 %v4333, 1.442695
    %v4336 = vpow.pop %v4335
    %v4337 = vmul.f32 %v4334, 1.442695
    %v4338 = vpow.pop %v4337
    %v4339 = vadd.f32 %v4336, 1.0
    %v4340 = vadd.f32 %v4338, 1.0
    %v4341 = vrcp.pop %v4339
    %v4342 = vmul.f32 1.0, %v4341
    %v4343 = vrcp.pop %v4340
    %v4344 = vmul.f32 1.0, %v4343
    %v4345 = vtanh.pop %v4331
    %v4346 = vtanh.pop %v4332
    %v4349 = vrot.slane %v4228, 7
    %v4350 = vrot.slane %v4229, 7
    %v4353 = vmul.f32 %v4342, %v4349
    %v4354 = vmul.f32 %v4344, %v4350
    %4357 = vrot.lane.b32.xlu0 %v4345, 64
    %v4358 = vpop.permute.xlu0 %4357
    %4359 = vrot.lane.b32.xlu0 %v4346, 64
    %v4360 = vpop.permute.xlu0 %4359
    %v4363 = vmul.f32 %v4342, %v4358
    %v4364 = vmul.f32 %v4344, %v4360
    %4367 = vrot.lane.b32.xlu0 %v4363, 32
    %v4368 = vpop.permute.xlu0 %4367
    %4369 = vrot.lane.b32.xlu0 %v4364, 32
    %v4370 = vpop.permute.xlu0 %4369
    %v4373 = vadd.f32 %v4353, %v4368
    %v4374 = vadd.f32 %v4354, %v4370
    %v4375 = vtanh.pop %v4373
    %v4376 = vtanh.pop %v4374
    %4379 = vrot.lane.b32.xlu0 %v4375, 64
    %v4380 = vpop.permute.xlu0 %4379
    %4381 = vrot.lane.b32.xlu0 %v4376, 64
    %v4382 = vpop.permute.xlu0 %4381
    %v4385 = vmul.f32 %v4342, %v4380
    %v4386 = vmul.f32 %v4344, %v4382
    %v4387 = vxor.u32 %v4322, 2147483648
    %v4388 = vmul.f32 %v4387, 1.442695
    %v4389 = vpow.pop %v4388
    %v4390 = vadd.f32 %v4389, 1.0
    %v4391 = vrcp.pop %v4390
    %v4392 = vmul.f32 1.0, %v4391
    %v4393 = vtanh.pop %v4322
    %v4394 = vmul.f32 %v4392, %v4259
    %4396 = vrot.lane.b32.xlu0 %v4393, 64
    %v4397 = vpop.permute.xlu0 %4396
    %v4399 = vmul.f32 %v4392, %v4397
    %4401 = vrot.lane.b32.xlu0 %v4399, 32
    %v4402 = vpop.permute.xlu0 %4401
    %v4404 = vadd.f32 %v4394, %v4402
    %v4405 = vtanh.pop %v4404
    %4407 = vrot.lane.b32.xlu0 %v4405, 64
    %v4408 = vpop.permute.xlu0 %4407
    %v4410 = vmul.f32 %v4392, %v4408
    %v4413 = vrot.slane %v4386, 7
    %v4414 = vsel %vm1311, %v4413, %v4385
    %4415 = vrot.lane.b32.xlu0 %v4414, 32
    %v4416 = vpop.permute.xlu0 %4415
    %v4419 = vrot.slane %v4410, 3
    %4420 = vrot.lane.b32.xlu0 %v4419, 64
    %v4421 = vpop.permute.xlu0 %4420
    %v4423 = vsel %vm386, %v4416, %v4421
    %v4424 = vpack.c.bf16 %v4423, %v4423
    %v4426 = vshrl.u32 %v4424, 16
    %v4428 = vrot.slane %v4426, 2
    %v4429 = vshll.u32 %v4424, 16
    %v4431 = vrot.slane %v4429, 3
    %v4432 = vor.u32 %v4428, %v4431
    %v4434 = vsel %vm118, %v4432, 0
    %4436 = vmatprep.subr.bf16.mxu0 0
    %4437 = vmatpush1.bf16.msra.mxu0 0
    %4438 = vmatprep.subr.bf16.mxu0 0
    %4439 = vmatpush1.bf16.msra.mxu0 0
    %4440 = vmatprep.subr.bf16.mxu0 0
    %4441 = vmatpush1.bf16.msra.mxu0 0
    %4442 = vmatprep.subr.bf16.mxu0 0
    %4443 = vmatpush1.bf16.msra.mxu0 0
    %4444 = vmatprep.subr.bf16.mxu0 %v3561
    %4445 = vmatpush1.bf16.msra.mxu0 %v3560
    %4446 = vmatprep.subr.bf16.mxu0 %v3559
    %4447 = vmatpush1.bf16.msra.mxu0 %v3558
    %4448 = vmatprep.subr.bf16.mxu0 %v3557
    %4449 = vmatpush1.bf16.msra.mxu0 %v3556
    %4450 = vmatprep.subr.bf16.mxu0 %v3555
    %4451 = vmatpush1.bf16.msra.mxu0 %v3554
    %4452 = vmatprep.subr.bf16.mxu0 0
    %4453 = vmatpush2.bf16.msra.mxu0 0
    %4454 = vmatprep.subr.bf16.mxu0 0
    %4455 = vmatpush2.bf16.msra.mxu0 0
    %4456 = vmatprep.subr.bf16.mxu0 0
    %4457 = vmatpush2.bf16.msra.mxu0 0
    %4458 = vmatprep.subr.bf16.mxu0 0
    %4459 = vmatpush2.bf16.msra.mxu0 0
    %4460 = vmatprep.subr.bf16.mxu0 0
    %4461 = vmatpush2.bf16.msra.mxu0 0
    %4462 = vmatprep.subr.bf16.mxu0 0
    %4463 = vmatpush2.bf16.msra.mxu0 0
    %4464 = vmatprep.subr.bf16.mxu0 0
    %4465 = vmatpush2.bf16.msra.mxu0 0
    %4466 = vmatprep.subr.bf16.mxu0 0
    %4467 = vmatpush2.bf16.msra.mxu0 0
    %4468 = vmatprep.mubr.bf16.mxu0 0
    %4469 = vmatmul.mubr.bf16.gmra.mxu0 %v4434
    %v4470 = vpop.f32.mrf.mxu0
    %v4471 = vadd.f32 %v3515, %v4470
    %v4472 = vpop.f32.mrf.mxu0
    %v4473 = vadd.f32 %v3519, %v4472
    %v4474 = vpop.f32.mrf.mxu0
    %v4475 = vpop.f32.mrf.mxu0
    %4476 = vdwg.mxu0
    %v4478 = vrot.slane %v4471, 2
    %v4479 = vrot.slane %v4471, 3
    %v4482 = vadd.f32 %v3475, %v4478
    %v4483 = vadd.f32 %v3478, %v4479
    %v4484 = vxor.u32 %v4482, 2147483648
    %v4485 = vxor.u32 %v4483, 2147483648
    %v4486 = vmul.f32 %v4484, 1.442695
    %v4487 = vpow.pop %v4486
    %v4488 = vmul.f32 %v4485, 1.442695
    %v4489 = vpow.pop %v4488
    %v4490 = vadd.f32 %v4487, 1.0
    %v4491 = vadd.f32 %v4489, 1.0
    %v4492 = vrcp.pop %v4490
    %v4493 = vmul.f32 1.0, %v4492
    %v4494 = vrcp.pop %v4491
    %v4495 = vmul.f32 1.0, %v4494
    %v4496 = vtanh.pop %v4482
    %v4497 = vtanh.pop %v4483
    %v4500 = vrot.slane %v4373, 7
    %v4501 = vrot.slane %v4374, 7
    %v4504 = vmul.f32 %v4493, %v4500
    %v4505 = vmul.f32 %v4495, %v4501
    %4508 = vrot.lane.b32.xlu0 %v4496, 64
    %v4509 = vpop.permute.xlu0 %4508
    %4510 = vrot.lane.b32.xlu0 %v4497, 64
    %v4511 = vpop.permute.xlu0 %4510
    %v4514 = vmul.f32 %v4493, %v4509
    %v4515 = vmul.f32 %v4495, %v4511
    %4518 = vrot.lane.b32.xlu0 %v4514, 32
    %v4519 = vpop.permute.xlu0 %4518
    %4520 = vrot.lane.b32.xlu0 %v4515, 32
    %v4521 = vpop.permute.xlu0 %4520
    %v4524 = vadd.f32 %v4504, %v4519
    %v4525 = vadd.f32 %v4505, %v4521
    %v4526 = vtanh.pop %v4524
    %v4527 = vtanh.pop %v4525
    %4530 = vrot.lane.b32.xlu0 %v4526, 64
    %v4531 = vpop.permute.xlu0 %4530
    %4532 = vrot.lane.b32.xlu0 %v4527, 64
    %v4533 = vpop.permute.xlu0 %4532
    %v4536 = vmul.f32 %v4493, %v4531
    %v4537 = vmul.f32 %v4495, %v4533
    %v4538 = vxor.u32 %v4473, 2147483648
    %v4539 = vmul.f32 %v4538, 1.442695
    %v4540 = vpow.pop %v4539
    %v4541 = vadd.f32 %v4540, 1.0
    %v4542 = vrcp.pop %v4541
    %v4543 = vmul.f32 1.0, %v4542
    %v4544 = vtanh.pop %v4473
    %v4545 = vmul.f32 %v4543, %v4404
    %4547 = vrot.lane.b32.xlu0 %v4544, 64
    %v4548 = vpop.permute.xlu0 %4547
    %v4550 = vmul.f32 %v4543, %v4548
    %4552 = vrot.lane.b32.xlu0 %v4550, 32
    %v4553 = vpop.permute.xlu0 %4552
    %v4555 = vadd.f32 %v4545, %v4553
    %v4556 = vtanh.pop %v4555
    %4558 = vrot.lane.b32.xlu0 %v4556, 64
    %v4559 = vpop.permute.xlu0 %4558
    %v4561 = vmul.f32 %v4543, %v4559
    %v4564 = vrot.slane %v4537, 7
    %v4565 = vsel %vm1502, %v4564, %v4536
    %4566 = vrot.lane.b32.xlu0 %v4565, 32
    %v4567 = vpop.permute.xlu0 %4566
    %v4570 = vrot.slane %v4561, 2
    %4571 = vrot.lane.b32.xlu0 %v4570, 64
    %v4572 = vpop.permute.xlu0 %4571
    %v4574 = vsel %vm386, %v4567, %v4572
    %v4575 = vpack.c.bf16 %v4574, %v4574
    %v4577 = vrot.slane %v4575, 3
    %v4579 = vsel %vm118, %v4577, 0
    %4581 = vmatprep.subr.bf16.mxu0 0
    %4582 = vmatpush1.bf16.msra.mxu0 0
    %4583 = vmatprep.subr.bf16.mxu0 0
    %4584 = vmatpush1.bf16.msra.mxu0 0
    %4585 = vmatprep.subr.bf16.mxu0 0
    %4586 = vmatpush1.bf16.msra.mxu0 0
    %4587 = vmatprep.subr.bf16.mxu0 0
    %4588 = vmatpush1.bf16.msra.mxu0 0
    %4589 = vmatprep.subr.bf16.mxu0 %v3561
    %4590 = vmatpush1.bf16.msra.mxu0 %v3560
    %4591 = vmatprep.subr.bf16.mxu0 %v3559
    %4592 = vmatpush1.bf16.msra.mxu0 %v3558
    %4593 = vmatprep.subr.bf16.mxu0 %v3557
    %4594 = vmatpush1.bf16.msra.mxu0 %v3556
    %4595 = vmatprep.subr.bf16.mxu0 %v3555
    %4596 = vmatpush1.bf16.msra.mxu0 %v3554
    %4597 = vmatprep.subr.bf16.mxu0 0
    %4598 = vmatpush2.bf16.msra.mxu0 0
    %4599 = vmatprep.subr.bf16.mxu0 0
    %4600 = vmatpush2.bf16.msra.mxu0 0
    %4601 = vmatprep.subr.bf16.mxu0 0
    %4602 = vmatpush2.bf16.msra.mxu0 0
    %4603 = vmatprep.subr.bf16.mxu0 0
    %4604 = vmatpush2.bf16.msra.mxu0 0
    %4605 = vmatprep.subr.bf16.mxu0 0
    %4606 = vmatpush2.bf16.msra.mxu0 0
    %4607 = vmatprep.subr.bf16.mxu0 0
    %4608 = vmatpush2.bf16.msra.mxu0 0
    %4609 = vmatprep.subr.bf16.mxu0 0
    %4610 = vmatpush2.bf16.msra.mxu0 0
    %4611 = vmatprep.subr.bf16.mxu0 0
    %4612 = vmatpush2.bf16.msra.mxu0 0
    %4613 = vmatprep.mubr.bf16.mxu0 0
    %4614 = vmatmul.mubr.bf16.gmra.mxu0 %v4579
    %v4615 = vpop.f32.mrf.mxu0
    %v4616 = vadd.f32 %v3515, %v4615
    %v4617 = vpop.f32.mrf.mxu0
    %v4618 = vadd.f32 %v3519, %v4617
    %v4619 = vpop.f32.mrf.mxu0
    %v4620 = vpop.f32.mrf.mxu0
    %4621 = vdwg.mxu0
    %v4623 = vrot.slane %v4616, 1
    %v4624 = vrot.slane %v4616, 2
    %v4627 = vadd.f32 %v3475, %v4623
    %v4628 = vadd.f32 %v3478, %v4624
    %v4629 = vxor.u32 %v4627, 2147483648
    %v4630 = vxor.u32 %v4628, 2147483648
    %v4631 = vmul.f32 %v4629, 1.442695
    %v4632 = vpow.pop %v4631
    %v4633 = vmul.f32 %v4630, 1.442695
    %v4634 = vpow.pop %v4633
    %v4635 = vadd.f32 %v4632, 1.0
    %v4636 = vadd.f32 %v4634, 1.0
    %v4637 = vrcp.pop %v4635
    %v4638 = vmul.f32 1.0, %v4637
    %v4639 = vrcp.pop %v4636
    %v4640 = vmul.f32 1.0, %v4639
    %v4641 = vtanh.pop %v4627
    %v4642 = vtanh.pop %v4628
    %v4645 = vrot.slane %v4524, 7
    %v4646 = vrot.slane %v4525, 7
    %v4649 = vmul.f32 %v4638, %v4645
    %v4650 = vmul.f32 %v4640, %v4646
    %4653 = vrot.lane.b32.xlu0 %v4641, 64
    %v4654 = vpop.permute.xlu0 %4653
    %4655 = vrot.lane.b32.xlu0 %v4642, 64
    %v4656 = vpop.permute.xlu0 %4655
    %v4659 = vmul.f32 %v4638, %v4654
    %v4660 = vmul.f32 %v4640, %v4656
    %4663 = vrot.lane.b32.xlu0 %v4659, 32
    %v4664 = vpop.permute.xlu0 %4663
    %4665 = vrot.lane.b32.xlu0 %v4660, 32
    %v4666 = vpop.permute.xlu0 %4665
    %v4669 = vadd.f32 %v4649, %v4664
    %v4670 = vadd.f32 %v4650, %v4666
    %v4671 = vtanh.pop %v4669
    %v4672 = vtanh.pop %v4670
    %4675 = vrot.lane.b32.xlu0 %v4671, 64
    %v4676 = vpop.permute.xlu0 %4675
    %4677 = vrot.lane.b32.xlu0 %v4672, 64
    %v4678 = vpop.permute.xlu0 %4677
    %v4681 = vmul.f32 %v4638, %v4676
    %v4682 = vmul.f32 %v4640, %v4678
    %v4683 = vxor.u32 %v4618, 2147483648
    %v4684 = vmul.f32 %v4683, 1.442695
    %v4685 = vpow.pop %v4684
    %v4686 = vadd.f32 %v4685, 1.0
    %v4687 = vrcp.pop %v4686
    %v4688 = vmul.f32 1.0, %v4687
    %v4689 = vtanh.pop %v4618
    %v4690 = vmul.f32 %v4688, %v4555
    %4692 = vrot.lane.b32.xlu0 %v4689, 64
    %v4693 = vpop.permute.xlu0 %4692
    %v4695 = vmul.f32 %v4688, %v4693
    %4697 = vrot.lane.b32.xlu0 %v4695, 32
    %v4698 = vpop.permute.xlu0 %4697
    %v4700 = vadd.f32 %v4690, %v4698
    %v4701 = vtanh.pop %v4700
    %4703 = vrot.lane.b32.xlu0 %v4701, 64
    %v4704 = vpop.permute.xlu0 %4703
    %v4706 = vmul.f32 %v4688, %v4704
    %v4709 = vrot.slane %v4682, 7
    %4710 = vrot.lane.b32.xlu0 %v4681, 32
    %v4711 = vpop.permute.xlu0 %4710
    %4712 = vrot.lane.b32.xlu0 %v4709, 32
    %v4713 = vpop.permute.xlu0 %4712
    %v4717 = vrot.slane %v4706, 1
    %4718 = vrot.lane.b32.xlu0 %v4717, 64
    %v4719 = vpop.permute.xlu0 %4718
    %v4721 = vsel %vm386, %v4711, %v4719
    %v4722 = vsel %vm386, %v4713, %v4719
    %v4723 = vpack.c.bf16 %v4722, %v4721
    %v4725 = vshrl.u32 %v4723, 16
    %v4727 = vrot.slane %v4725, 3
    %v4728 = vshll.u32 %v4723, 16
    %v4730 = vrot.slane %v4728, 4
    %v4731 = vor.u32 %v4727, %v4730
    %v4733 = vsel %vm118, %v4731, 0
    %4735 = vmatprep.subr.bf16.mxu0 0
    %4736 = vmatpush1.bf16.msra.mxu0 0
    %4737 = vmatprep.subr.bf16.mxu0 0
    %4738 = vmatpush1.bf16.msra.mxu0 0
    %4739 = vmatprep.subr.bf16.mxu0 0
    %4740 = vmatpush1.bf16.msra.mxu0 0
    %4741 = vmatprep.subr.bf16.mxu0 0
    %4742 = vmatpush1.bf16.msra.mxu0 0
    %4743 = vmatprep.subr.bf16.mxu0 %v3561
    %4744 = vmatpush1.bf16.msra.mxu0 %v3560
    %4745 = vmatprep.subr.bf16.mxu0 %v3559
    %4746 = vmatpush1.bf16.msra.mxu0 %v3558
    %4747 = vmatprep.subr.bf16.mxu0 %v3557
    %4748 = vmatpush1.bf16.msra.mxu0 %v3556
    %4749 = vmatprep.subr.bf16.mxu0 %v3555
    %4750 = vmatpush1.bf16.msra.mxu0 %v3554
    %4751 = vmatprep.subr.bf16.mxu0 0
    %4752 = vmatpush2.bf16.msra.mxu0 0
    %4753 = vmatprep.subr.bf16.mxu0 0
    %4754 = vmatpush2.bf16.msra.mxu0 0
    %4755 = vmatprep.subr.bf16.mxu0 0
    %4756 = vmatpush2.bf16.msra.mxu0 0
    %4757 = vmatprep.subr.bf16.mxu0 0
    %4758 = vmatpush2.bf16.msra.mxu0 0
    %4759 = vmatprep.subr.bf16.mxu0 0
    %4760 = vmatpush2.bf16.msra.mxu0 0
    %4761 = vmatprep.subr.bf16.mxu0 0
    %4762 = vmatpush2.bf16.msra.mxu0 0
    %4763 = vmatprep.subr.bf16.mxu0 0
    %4764 = vmatpush2.bf16.msra.mxu0 0
    %4765 = vmatprep.subr.bf16.mxu0 0
    %4766 = vmatpush2.bf16.msra.mxu0 0
    %4767 = vmatprep.mubr.bf16.mxu0 0
    %4768 = vmatmul.mubr.bf16.gmra.mxu0 %v4733
    %v4769 = vpop.f32.mrf.mxu0
    %v4770 = vpop.f32.mrf.mxu0
    %v4771 = vadd.f32 %v3519, %v4770
    %v4772 = vpop.f32.mrf.mxu0
    %v4773 = vpop.f32.mrf.mxu0
    %4774 = vdwg.mxu0
    %v4775 = vxor.u32 %v4771, 2147483648
    %v4776 = vmul.f32 %v4775, 1.442695
    %v4777 = vpow.pop %v4776
    %v4778 = vadd.f32 %v4777, 1.0
    %v4779 = vrcp.pop %v4778
    %v4780 = vmul.f32 1.0, %v4779
    %v4781 = vtanh.pop %v4771
    %v4782 = vmul.f32 %v4780, %v4700
    %4784 = vrot.lane.b32.xlu0 %v4781, 64
    %v4785 = vpop.permute.xlu0 %4784
    %v4787 = vmul.f32 %v4780, %v4785
    %4789 = vrot.lane.b32.xlu0 %v4787, 32
    %v4790 = vpop.permute.xlu0 %4789
    %v4792 = vadd.f32 %v4782, %v4790
    %v4793 = vtanh.pop %v4792
    %4795 = vrot.lane.b32.xlu0 %v4793, 64
    %v4796 = vpop.permute.xlu0 %4795
    %v4798 = vmul.f32 %v4780, %v4796
    %v4800 = vunpack.c.l.s4 1966171168
    %v4801 = vunpack.c.0.s8 %v4800
    %v4802 = vlaneseq
    %v4803 = vshrl.u32 %v4802, 7
    %v4804 = vsub.s32 %v4801, %v4803
    %v4805 = vrot.slane %v3819, %v4804
    %v4806 = vcombine.high %v4805, %v4805
    %v4808 = vunpack.c.l.s4 1966171168
    %v4809 = vunpack.c.0.s8 %v4808
    %v4810 = vlaneseq
    %v4811 = vshrl.u32 %v4810, 7
    %v4812 = vsub.s32 %v4809, %v4811
    %v4813 = vrot.slane %v4805, %v4812
    %v4815 = vunpack.c.l.s4 1966171168
    %v4816 = vunpack.c.0.s8 %v4815
    %v4817 = vlaneseq
    %v4818 = vshrl.u32 %v4817, 7
    %v4819 = vsub.s32 %v4816, %v4818
    %v4820 = vrot.slane %v4806, %v4819
    %v4824 = vunpack.c.l.s4 1966171168
    %v4825 = vunpack.c.0.s8 %v4824
    %v4826 = vlaneseq
    %v4827 = vshrl.u32 %v4826, 7
    %v4828 = vsub.s32 %v4825, %v4827
    %v4829 = vrot.slane %v3969, %v4828
    %v4830 = vcombine.high %v4829, %v4829
    %v4832 = vunpack.c.l.s4 1966171168
    %v4833 = vunpack.c.0.s8 %v4832
    %v4834 = vlaneseq
    %v4835 = vshrl.u32 %v4834, 7
    %v4836 = vsub.s32 %v4833, %v4835
    %v4837 = vrot.slane %v4829, %v4836
    %v4839 = vunpack.c.l.s4 1966171168
    %v4840 = vunpack.c.0.s8 %v4839
    %v4841 = vlaneseq
    %v4842 = vshrl.u32 %v4841, 7
    %v4843 = vsub.s32 %v4840, %v4842
    %v4844 = vrot.slane %v4830, %v4843
    %v4846 = vunpack.c.l.s4 1966171168
    %v4847 = vunpack.c.0.s8 %v4846
    %v4848 = vlaneseq
    %v4849 = vshrl.u32 %v4848, 7
    %v4850 = vsub.s32 %v4847, %v4849
    %v4851 = vrot.slane %v4114, %v4850
    %v4852 = vcombine.high %v4851, %v4851
    %v4854 = vunpack.c.l.s4 1966171168
    %v4855 = vunpack.c.0.s8 %v4854
    %v4856 = vlaneseq
    %v4857 = vshrl.u32 %v4856, 7
    %v4858 = vsub.s32 %v4855, %v4857
    %v4859 = vrot.slane %v4851, %v4858
    %v4861 = vunpack.c.l.s4 1966171168
    %v4862 = vunpack.c.0.s8 %v4861
    %v4863 = vlaneseq
    %v4864 = vshrl.u32 %v4863, 7
    %v4865 = vsub.s32 %v4862, %v4864
    %v4866 = vrot.slane %v4852, %v4865
    %v4868 = vunpack.c.l.s4 1966171168
    %v4869 = vunpack.c.0.s8 %v4868
    %v4870 = vlaneseq
    %v4871 = vshrl.u32 %v4870, 7
    %v4872 = vsub.s32 %v4869, %v4871
    %v4873 = vrot.slane %v4265, %v4872
    %v4874 = vcombine.high %v4873, %v4873
    %v4876 = vunpack.c.l.s4 1966171168
    %v4877 = vunpack.c.0.s8 %v4876
    %v4878 = vlaneseq
    %v4879 = vshrl.u32 %v4878, 7
    %v4880 = vsub.s32 %v4877, %v4879
    %v4881 = vrot.slane %v4873, %v4880
    %v4883 = vunpack.c.l.s4 1966171168
    %v4884 = vunpack.c.0.s8 %v4883
    %v4885 = vlaneseq
    %v4886 = vshrl.u32 %v4885, 7
    %v4887 = vsub.s32 %v4884, %v4886
    %v4888 = vrot.slane %v4874, %v4887
    %v4890 = vunpack.c.l.s4 1966171168
    %v4891 = vunpack.c.0.s8 %v4890
    %v4892 = vlaneseq
    %v4893 = vshrl.u32 %v4892, 7
    %v4894 = vsub.s32 %v4891, %v4893
    %v4895 = vrot.slane %v4410, %v4894
    %v4896 = vcombine.high %v4895, %v4895
    %v4898 = vunpack.c.l.s4 1966171168
    %v4899 = vunpack.c.0.s8 %v4898
    %v4900 = vlaneseq
    %v4901 = vshrl.u32 %v4900, 7
    %v4902 = vsub.s32 %v4899, %v4901
    %v4903 = vrot.slane %v4895, %v4902
    %v4905 = vunpack.c.l.s4 1966171168
    %v4906 = vunpack.c.0.s8 %v4905
    %v4907 = vlaneseq
    %v4908 = vshrl.u32 %v4907, 7
    %v4909 = vsub.s32 %v4906, %v4908
    %v4910 = vrot.slane %v4896, %v4909
    %v4912 = vunpack.c.l.s4 1966171168
    %v4913 = vunpack.c.0.s8 %v4912
    %v4914 = vlaneseq
    %v4915 = vshrl.u32 %v4914, 7
    %v4916 = vsub.s32 %v4913, %v4915
    %v4917 = vrot.slane %v4561, %v4916
    %v4918 = vcombine.high %v4917, %v4917
    %v4920 = vunpack.c.l.s4 1966171168
    %v4921 = vunpack.c.0.s8 %v4920
    %v4922 = vlaneseq
    %v4923 = vshrl.u32 %v4922, 7
    %v4924 = vsub.s32 %v4921, %v4923
    %v4925 = vrot.slane %v4917, %v4924
    %v4927 = vunpack.c.l.s4 1966171168
    %v4928 = vunpack.c.0.s8 %v4927
    %v4929 = vlaneseq
    %v4930 = vshrl.u32 %v4929, 7
    %v4931 = vsub.s32 %v4928, %v4930
    %v4932 = vrot.slane %v4918, %v4931
    %v4934 = vunpack.c.l.s4 1966171168
    %v4935 = vunpack.c.0.s8 %v4934
    %v4936 = vlaneseq
    %v4937 = vshrl.u32 %v4936, 7
    %v4938 = vsub.s32 %v4935, %v4937
    %v4939 = vrot.slane %v4706, %v4938
    %v4940 = vcombine.high %v4939, %v4939
    %v4942 = vunpack.c.l.s4 1966171168
    %v4943 = vunpack.c.0.s8 %v4942
    %v4944 = vlaneseq
    %v4945 = vshrl.u32 %v4944, 7
    %v4946 = vsub.s32 %v4943, %v4945
    %v4947 = vrot.slane %v4939, %v4946
    %v4949 = vunpack.c.l.s4 1966171168
    %v4950 = vunpack.c.0.s8 %v4949
    %v4951 = vlaneseq
    %v4952 = vshrl.u32 %v4951, 7
    %v4953 = vsub.s32 %v4950, %v4952
    %v4954 = vrot.slane %v4940, %v4953
    %v4957 = vunpack.c.l.s4 1966171168
    %v4958 = vunpack.c.0.s8 %v4957
    %v4959 = vlaneseq
    %v4960 = vshrl.u32 %v4959, 7
    %v4961 = vsub.s32 %v4958, %v4960
    %v4962 = vrot.slane %v4798, %v4961
    %v4963 = vcombine.high %v4962, %v4962
    %v4965 = vunpack.c.l.s4 1966171168
    %v4966 = vunpack.c.0.s8 %v4965
    %v4967 = vlaneseq
    %v4968 = vshrl.u32 %v4967, 7
    %v4969 = vsub.s32 %v4966, %v4968
    %v4970 = vrot.slane %v4962, %v4969
    %v4972 = vunpack.c.l.s4 1966171168
    %v4973 = vunpack.c.0.s8 %v4972
    %v4974 = vlaneseq
    %v4975 = vshrl.u32 %v4974, 7
    %v4976 = vsub.s32 %v4973, %v4975
    %v4977 = vrot.slane %v4963, %v4976
    %v4978 = vlaneseq
    %v4979 = vshrl.u32 %v4978, 7
    %v4980 = vsub.s32 0, %v4979
    %v4981 = vrot.slane %v4837, %v4980
    %v4982 = vlaneseq
    %v4983 = vshrl.u32 %v4982, 7
    %v4984 = vsub.s32 0, %v4983
    %v4985 = vrot.slane %v4844, %v4984
    %v4988 = vlaneseq
    %v4989 = vshrl.u32 %v4988, 7
    %v4990 = vsub.s32 0, %v4989
    %v4991 = vrot.slane %v4859, %v4990
    %v4992 = vlaneseq
    %v4993 = vshrl.u32 %v4992, 7
    %v4994 = vsub.s32 0, %v4993
    %v4995 = vrot.slane %v4866, %v4994
    %v4998 = vlaneseq
    %v4999 = vshrl.u32 %v4998, 7
    %v5000 = vsub.s32 0, %v4999
    %v5001 = vrot.slane %v4881, %v5000
    %v5002 = vlaneseq
    %v5003 = vshrl.u32 %v5002, 7
    %v5004 = vsub.s32 0, %v5003
    %v5005 = vrot.slane %v4888, %v5004
    %v5008 = vlaneseq
    %v5009 = vshrl.u32 %v5008, 7
    %v5010 = vsub.s32 0, %v5009
    %v5011 = vrot.slane %v4903, %v5010
    %v5012 = vlaneseq
    %v5013 = vshrl.u32 %v5012, 7
    %v5014 = vsub.s32 0, %v5013
    %v5015 = vrot.slane %v4910, %v5014
    %v5018 = vlaneseq
    %v5019 = vshrl.u32 %v5018, 7
    %v5020 = vsub.s32 0, %v5019
    %v5021 = vrot.slane %v4925, %v5020
    %v5022 = vlaneseq
    %v5023 = vshrl.u32 %v5022, 7
    %v5024 = vsub.s32 0, %v5023
    %v5025 = vrot.slane %v4932, %v5024
    %v5028 = vlaneseq
    %v5029 = vshrl.u32 %v5028, 7
    %v5030 = vsub.s32 0, %v5029
    %v5031 = vrot.slane %v4947, %v5030
    %v5032 = vlaneseq
    %v5033 = vshrl.u32 %v5032, 7
    %v5034 = vsub.s32 0, %v5033
    %v5035 = vrot.slane %v4954, %v5034
    %v5038 = vlaneseq
    %v5039 = vshrl.u32 %v5038, 7
    %v5040 = vsub.s32 0, %v5039
    %v5041 = vrot.slane %v4970, %v5040
    %v5042 = vlaneseq
    %v5043 = vshrl.u32 %v5042, 7
    %v5044 = vsub.s32 0, %v5043
    %v5045 = vrot.slane %v4977, %v5044
    %v5048 = vsel %vm1684, %v4813, %v4981
    %v5049 = vsel %vm1684, %v4820, %v4985
    %v5050 = vsel %vm1687, %v5048, %v4991
    %v5051 = vsel %vm1687, %v5049, %v4995
    %v5052 = vsel %vm1690, %v5050, %v5001
    %v5053 = vsel %vm1690, %v5051, %v5005
    %v5054 = vsel %vm1693, %v5052, %v5011
    %v5055 = vsel %vm1693, %v5053, %v5015
    %v5056 = vsel %vm1696, %v5054, %v5021
    %v5057 = vsel %vm1696, %v5055, %v5025
    %v5058 = vsel %vm1699, %v5056, %v5031
    %v5059 = vsel %vm1699, %v5057, %v5035
    %v5060 = vsel %vm1702, %v5058, %v5041
    %v5061 = vsel %vm1702, %v5059, %v5045
    %v5062 = vld [vmem:[%s11] sm:$0xf]
    %v5063 = vld [vmem:[%s11 + $0x4] sm:$0xf]
    %v5064 = vld [vmem:[%s11 + $0x8] sm:$0xf]
    %v5065 = vld [vmem:[%s11 + $0xc] sm:$0xf]
    %v5066 = vpack.c.bf16 %v5061, %v5060
    %5068 = vrot.lane.b32.xlu0 %v5066, 32
    %v5069 = vpop.permute.xlu0 %5068
    %v5074 = vunpack.c.l.b16 %v5062
    %v5075 = vunpack.c.l.b16 %v5063
    %v5076 = vunpack.c.l.b16 %v5064
    %v5077 = vunpack.c.l.b16 %v5065
    %v5078 = vpack.c.b16 %v5075, %v5074
    %v5079 = vpack.c.b16 %v5077, %v5076
    %v5083 = vsel %vm386, %v5069, 0
    %5085 = vmatprep.subr.bf16.mxu0 0
    %5086 = vmatpush1.bf16.msra.mxu0 0
    %5087 = vmatprep.subr.bf16.mxu0 0
    %5088 = vmatpush1.bf16.msra.mxu0 0
    %5089 = vmatprep.subr.bf16.mxu0 0
    %5090 = vmatpush1.bf16.msra.mxu0 0
    %5091 = vmatprep.subr.bf16.mxu0 0
    %5092 = vmatpush1.bf16.msra.mxu0 0
    %5093 = vmatprep.subr.bf16.mxu0 0
    %5094 = vmatpush1.bf16.msra.mxu0 0
    %5095 = vmatprep.subr.bf16.mxu0 0
    %5096 = vmatpush1.bf16.msra.mxu0 0
    %5097 = vmatprep.subr.bf16.mxu0 0
    %5098 = vmatpush1.bf16.msra.mxu0 %v5079
    %5099 = vmatprep.subr.bf16.mxu0 0
    %5100 = vmatpush1.bf16.msra.mxu0 %v5078
    %5101 = vmatprep.subr.bf16.mxu0 0
    %5102 = vmatpush2.bf16.msra.mxu0 0
    %5103 = vmatprep.subr.bf16.mxu0 0
    %5104 = vmatpush2.bf16.msra.mxu0 0
    %5105 = vmatprep.subr.bf16.mxu0 0
    %5106 = vmatpush2.bf16.msra.mxu0 0
    %5107 = vmatprep.subr.bf16.mxu0 0
    %5108 = vmatpush2.bf16.msra.mxu0 0
    %5109 = vmatprep.subr.bf16.mxu0 0
    %5110 = vmatpush2.bf16.msra.mxu0 0
    %5111 = vmatprep.subr.bf16.mxu0 0
    %5112 = vmatpush2.bf16.msra.mxu0 0
    %5113 = vmatprep.subr.bf16.mxu0 0
    %5114 = vmatpush2.bf16.msra.mxu0 0
    %5115 = vmatprep.subr.bf16.mxu0 0
    %5116 = vmatpush2.bf16.msra.mxu0 0
    %5117 = vmatprep.mubr.bf16.mxu0 0
    %5118 = vmatmul.mubr.bf16.gmra.mxu0 %v5083
    %v5119 = vpop.f32.mrf.mxu0
    %v5120 = vadd.f32 0.0, %v5119
    %v5121 = vpop.f32.mrf.mxu0
    %v5122 = vpop.f32.mrf.mxu0
    %v5123 = vadd.f32 0.0, %v5122
    %v5124 = vpop.f32.mrf.mxu0
    %5125 = vdwg.mxu0
    %v5126 = vld [vmem:[%s12] sm:$0x1]
    %v5128 = vlaneseq
    %v5129 = vshrl.u32 %v5128, 7
    %v5130 = vsub.s32 0, %v5129
    %v5131 = vrot.slane %v5126, %v5130
    %v5133 = vadd.f32 %v5120, %v5131
    %v5134 = vadd.f32 %v5123, %v5131
    %v5136 = vsel %vm118, %v5133, 0
    %v5139 = vsel %vm118, %v3392, 0
    %5141 = vmatprep.subr.mxu0 0.0
    %5142 = vmatpush1.xpose.msra.mxu0 0.0
    %5143 = vmatprep.subr.mxu0 0.0
    %5144 = vmatpush1.xpose.msra.mxu0 0.0
    %5145 = vmatprep.subr.mxu0 0.0
    %5146 = vmatpush1.xpose.msra.mxu0 0.0
    %5147 = vmatprep.subr.mxu0 0.0
    %5148 = vmatpush1.xpose.msra.mxu0 0.0
    %5149 = vmatprep.subr.mxu0 0.0
    %5150 = vmatpush1.xpose.msra.mxu0 0.0
    %5151 = vmatprep.subr.mxu0 0.0
    %5152 = vmatpush1.xpose.msra.mxu0 0.0
    %5153 = vmatprep.subr.mxu0 0.0
    %5154 = vmatpush1.xpose.msra.mxu0 0.0
    %5155 = vmatprep.subr.mxu0 0.0
    %5156 = vmatpush1.xpose.msra.mxu0 0.0
    %5157 = vmatprep.subr.mxu0 0.0
    %5158 = vmatpush1.xpose.msra.mxu0 0.0
    %5159 = vmatprep.subr.mxu0 0.0
    %5160 = vmatpush1.xpose.msra.mxu0 0.0
    %5161 = vmatprep.subr.mxu0 0.0
    %5162 = vmatpush1.xpose.msra.mxu0 0.0
    %5163 = vmatprep.subr.mxu0 0.0
    %5164 = vmatpush1.xpose.msra.mxu0 0.0
    %5165 = vmatprep.subr.mxu0 0.0
    %5166 = vmatpush1.xpose.msra.mxu0 0.0
    %5167 = vmatprep.subr.mxu0 0.0
    %5168 = vmatpush1.xpose.msra.mxu0 0.0
    %5169 = vmatprep.subr.mxu0 0.0
    %5170 = vmatpush1.xpose.msra.mxu0 0.0
    %5171 = vmatprep.subr.mxu0 0.0
    %5172 = vmatpush1.xpose.msra.mxu0 %v5139
    %5173 = vmatprep.subr.mxu0 0.0
    %5174 = vmatpush2.xpose.msra.mxu0 0.0
    %5175 = vmatprep.subr.mxu0 0.0
    %5176 = vmatpush2.xpose.msra.mxu0 0.0
    %5177 = vmatprep.subr.mxu0 0.0
    %5178 = vmatpush2.xpose.msra.mxu0 0.0
    %5179 = vmatprep.subr.mxu0 0.0
    %5180 = vmatpush2.xpose.msra.mxu0 0.0
    %5181 = vmatprep.subr.mxu0 0.0
    %5182 = vmatpush2.xpose.msra.mxu0 0.0
    %5183 = vmatprep.subr.mxu0 0.0
    %5184 = vmatpush2.xpose.msra.mxu0 0.0
    %5185 = vmatprep.subr.mxu0 0.0
    %5186 = vmatpush2.xpose.msra.mxu0 0.0
    %5187 = vmatprep.subr.mxu0 0.0
    %5188 = vmatpush2.xpose.msra.mxu0 0.0
    %5189 = vmatprep.subr.mxu0 0.0
    %5190 = vmatpush2.xpose.msra.mxu0 0.0
    %5191 = vmatprep.subr.mxu0 0.0
    %5192 = vmatpush2.xpose.msra.mxu0 0.0
    %5193 = vmatprep.subr.mxu0 0.0
    %5194 = vmatpush2.xpose.msra.mxu0 0.0
    %5195 = vmatprep.subr.mxu0 0.0
    %5196 = vmatpush2.xpose.msra.mxu0 0.0
    %5197 = vmatprep.subr.mxu0 0.0
    %5198 = vmatpush2.xpose.msra.mxu0 0.0
    %5199 = vmatprep.subr.mxu0 0.0
    %5200 = vmatpush2.xpose.msra.mxu0 0.0
    %5201 = vmatprep.subr.mxu0 0.0
    %5202 = vmatpush2.xpose.msra.mxu0 0.0
    %5203 = vmatprep.subr.mxu0 0.0
    %5204 = vmatpush2.xpose.msra.mxu0 0.0
    %5205 = vmatprep.mubr.f32.mxu0 0.0
    %5206 = vmatmul.mubr.f32.gmra.mxu0 %v5136
    %v5207 = vpop.f32.mrf.mxu0
    %v5208 = vadd.f32 0.0, %v5207
    %v5209 = vpop.f32.mrf.mxu0
    %5210 = vdwg.mxu0
    %v5212 = vsel %vm118, %v5134, 0
    %v5215 = vsel %vm118, %v3393, 0
    %5217 = vmatprep.subr.mxu0 0.0
    %5218 = vmatpush1.xpose.msra.mxu0 0.0
    %5219 = vmatprep.subr.mxu0 0.0
    %5220 = vmatpush1.xpose.msra.mxu0 0.0
    %5221 = vmatprep.subr.mxu0 0.0
    %5222 = vmatpush1.xpose.msra.mxu0 0.0
    %5223 = vmatprep.subr.mxu0 0.0
    %5224 = vmatpush1.xpose.msra.mxu0 0.0
    %5225 = vmatprep.subr.mxu0 0.0
    %5226 = vmatpush1.xpose.msra.mxu0 0.0
    %5227 = vmatprep.subr.mxu0 0.0
    %5228 = vmatpush1.xpose.msra.mxu0 0.0
    %5229 = vmatprep.subr.mxu0 0.0
    %5230 = vmatpush1.xpose.msra.mxu0 0.0
    %5231 = vmatprep.subr.mxu0 0.0
    %5232 = vmatpush1.xpose.msra.mxu0 0.0
    %5233 = vmatprep.subr.mxu0 0.0
    %5234 = vmatpush1.xpose.msra.mxu0 0.0
    %5235 = vmatprep.subr.mxu0 0.0
    %5236 = vmatpush1.xpose.msra.mxu0 0.0
    %5237 = vmatprep.subr.mxu0 0.0
    %5238 = vmatpush1.xpose.msra.mxu0 0.0
    %5239 = vmatprep.subr.mxu0 0.0
    %5240 = vmatpush1.xpose.msra.mxu0 0.0
    %5241 = vmatprep.subr.mxu0 0.0
    %5242 = vmatpush1.xpose.msra.mxu0 0.0
    %5243 = vmatprep.subr.mxu0 0.0
    %5244 = vmatpush1.xpose.msra.mxu0 0.0
    %5245 = vmatprep.subr.mxu0 0.0
    %5246 = vmatpush1.xpose.msra.mxu0 0.0
    %5247 = vmatprep.subr.mxu0 0.0
    %5248 = vmatpush1.xpose.msra.mxu0 %v5215
    %5249 = vmatprep.subr.mxu0 0.0
    %5250 = vmatpush2.xpose.msra.mxu0 0.0
    %5251 = vmatprep.subr.mxu0 0.0
    %5252 = vmatpush2.xpose.msra.mxu0 0.0
    %5253 = vmatprep.subr.mxu0 0.0
    %5254 = vmatpush2.xpose.msra.mxu0 0.0
    %5255 = vmatprep.subr.mxu0 0.0
    %5256 = vmatpush2.xpose.msra.mxu0 0.0
    %5257 = vmatprep.subr.mxu0 0.0
    %5258 = vmatpush2.xpose.msra.mxu0 0.0
    %5259 = vmatprep.subr.mxu0 0.0
    %5260 = vmatpush2.xpose.msra.mxu0 0.0
    %5261 = vmatprep.subr.mxu0 0.0
    %5262 = vmatpush2.xpose.msra.mxu0 0.0
    %5263 = vmatprep.subr.mxu0 0.0
    %5264 = vmatpush2.xpose.msra.mxu0 0.0
    %5265 = vmatprep.subr.mxu0 0.0
    %5266 = vmatpush2.xpose.msra.mxu0 0.0
    %5267 = vmatprep.subr.mxu0 0.0
    %5268 = vmatpush2.xpose.msra.mxu0 0.0
    %5269 = vmatprep.subr.mxu0 0.0
    %5270 = vmatpush2.xpose.msra.mxu0 0.0
    %5271 = vmatprep.subr.mxu0 0.0
    %5272 = vmatpush2.xpose.msra.mxu0 0.0
    %5273 = vmatprep.subr.mxu0 0.0
    %5274 = vmatpush2.xpose.msra.mxu0 0.0
    %5275 = vmatprep.subr.mxu0 0.0
    %5276 = vmatpush2.xpose.msra.mxu0 0.0
    %5277 = vmatprep.subr.mxu0 0.0
    %5278 = vmatpush2.xpose.msra.mxu0 0.0
    %5279 = vmatprep.subr.mxu0 0.0
    %5280 = vmatpush2.xpose.msra.mxu0 0.0
    %5281 = vmatprep.mubr.f32.mxu0 0.0
    %5282 = vmatmul.mubr.f32.gmra.mxu0 %v5212
    %v5283 = vpop.f32.mrf.mxu0
    %v5284 = vadd.f32 0.0, %v5283
    %v5285 = vpop.f32.mrf.mxu0
    %5286 = vdwg.mxu0
    %vm5287 = vcmask 64512
    %v5288 = vsel %vm5287, %v5208, -inf
    %5289 = vmax.xlane.f32.xlu0 %v5288
    %v5290 = vpop.xlane.xlu0 %5289
    %v5291 = vsel %vm5287, %v5284, -inf
    %5292 = vmax.xlane.f32.xlu0 %v5291
    %v5293 = vpop.xlane.xlu0 %5292
    %v5294 = vsub.f32 %v5208, %v5290
    %v5295 = vsub.f32 %v5284, %v5293
    %v5296 = vmul.f32 %v5294, 1.442695
    %v5297 = vpow.pop %v5296
    %v5298 = vmul.f32 %v5295, 1.442695
    %v5299 = vpow.pop %v5298
    %v5300 = vsel %vm5287, %v5297, 0.0
    %5301 = vadd.xlane.f32.xlu0 %v5300
    %v5302 = vpop.xlane.xlu0 %5301
    %v5303 = vsel %vm5287, %v5299, 0.0
    %5304 = vadd.xlane.f32.xlu0 %v5303
    %v5305 = vpop.xlane.xlu0 %5304
    %v5306 = vrcp.pop %v5302
    %v5307 = vrcp.pop %v5305
    %v5308 = vmul.f32 %v5297, %v5306
    %v5309 = vmul.f32 %v5299, %v5307
    %v5311 = vsel %vm5287, %v5308, 0
    %5313 = vmatprep.subr.mxu0 0.0
    %5314 = vmatpush1.msra.mxu0 0.0
    %5315 = vmatprep.subr.mxu0 0.0
    %5316 = vmatpush1.msra.mxu0 0.0
    %5317 = vmatprep.subr.mxu0 0.0
    %5318 = vmatpush1.msra.mxu0 0.0
    %5319 = vmatprep.subr.mxu0 0.0
    %5320 = vmatpush1.msra.mxu0 0.0
    %5321 = vmatprep.subr.mxu0 0.0
    %5322 = vmatpush1.msra.mxu0 0.0
    %5323 = vmatprep.subr.mxu0 0.0
    %5324 = vmatpush1.msra.mxu0 0.0
    %5325 = vmatprep.subr.mxu0 0.0
    %5326 = vmatpush1.msra.mxu0 0.0
    %5327 = vmatprep.subr.mxu0 0.0
    %5328 = vmatpush1.msra.mxu0 0.0
    %5329 = vmatprep.subr.mxu0 0.0
    %5330 = vmatpush1.msra.mxu0 0.0
    %5331 = vmatprep.subr.mxu0 0.0
    %5332 = vmatpush1.msra.mxu0 0.0
    %5333 = vmatprep.subr.mxu0 0.0
    %5334 = vmatpush1.msra.mxu0 0.0
    %5335 = vmatprep.subr.mxu0 0.0
    %5336 = vmatpush1.msra.mxu0 0.0
    %5337 = vmatprep.subr.mxu0 0.0
    %5338 = vmatpush1.msra.mxu0 0.0
    %5339 = vmatprep.subr.mxu0 0.0
    %5340 = vmatpush1.msra.mxu0 0.0
    %5341 = vmatprep.subr.mxu0 0.0
    %5342 = vmatpush1.msra.mxu0 0.0
    %5343 = vmatprep.subr.mxu0 0.0
    %5344 = vmatpush1.msra.mxu0 %v3392
    %5345 = vmatprep.subr.mxu0 0.0
    %5346 = vmatpush2.msra.mxu0 0.0
    %5347 = vmatprep.subr.mxu0 0.0
    %5348 = vmatpush2.msra.mxu0 0.0
    %5349 = vmatprep.subr.mxu0 0.0
    %5350 = vmatpush2.msra.mxu0 0.0
    %5351 = vmatprep.subr.mxu0 0.0
    %5352 = vmatpush2.msra.mxu0 0.0
    %5353 = vmatprep.subr.mxu0 0.0
    %5354 = vmatpush2.msra.mxu0 0.0
    %5355 = vmatprep.subr.mxu0 0.0
    %5356 = vmatpush2.msra.mxu0 0.0
    %5357 = vmatprep.subr.mxu0 0.0
    %5358 = vmatpush2.msra.mxu0 0.0
    %5359 = vmatprep.subr.mxu0 0.0
    %5360 = vmatpush2.msra.mxu0 0.0
    %5361 = vmatprep.subr.mxu0 0.0
    %5362 = vmatpush2.msra.mxu0 0.0
    %5363 = vmatprep.subr.mxu0 0.0
    %5364 = vmatpush2.msra.mxu0 0.0
    %5365 = vmatprep.subr.mxu0 0.0
    %5366 = vmatpush2.msra.mxu0 0.0
    %5367 = vmatprep.subr.mxu0 0.0
    %5368 = vmatpush2.msra.mxu0 0.0
    %5369 = vmatprep.subr.mxu0 0.0
    %5370 = vmatpush2.msra.mxu0 0.0
    %5371 = vmatprep.subr.mxu0 0.0
    %5372 = vmatpush2.msra.mxu0 0.0
    %5373 = vmatprep.subr.mxu0 0.0
    %5374 = vmatpush2.msra.mxu0 0.0
    %5375 = vmatprep.subr.mxu0 0.0
    %5376 = vmatpush2.msra.mxu0 0.0
    %5377 = vmatprep.mubr.f32.mxu0 0.0
    %5378 = vmatmul.mubr.f32.gmra.mxu0 %v5311
    %v5379 = vpop.f32.mrf.mxu0
    %v5380 = vadd.f32 0.0, %v5379
    %v5381 = vpop.f32.mrf.mxu0
    %5382 = vdwg.mxu0
    %v5384 = vsel %vm5287, %v5309, 0
    %5386 = vmatprep.subr.mxu0 0.0
    %5387 = vmatpush1.msra.mxu0 0.0
    %5388 = vmatprep.subr.mxu0 0.0
    %5389 = vmatpush1.msra.mxu0 0.0
    %5390 = vmatprep.subr.mxu0 0.0
    %5391 = vmatpush1.msra.mxu0 0.0
    %5392 = vmatprep.subr.mxu0 0.0
    %5393 = vmatpush1.msra.mxu0 0.0
    %5394 = vmatprep.subr.mxu0 0.0
    %5395 = vmatpush1.msra.mxu0 0.0
    %5396 = vmatprep.subr.mxu0 0.0
    %5397 = vmatpush1.msra.mxu0 0.0
    %5398 = vmatprep.subr.mxu0 0.0
    %5399 = vmatpush1.msra.mxu0 0.0
    %5400 = vmatprep.subr.mxu0 0.0
    %5401 = vmatpush1.msra.mxu0 0.0
    %5402 = vmatprep.subr.mxu0 0.0
    %5403 = vmatpush1.msra.mxu0 0.0
    %5404 = vmatprep.subr.mxu0 0.0
    %5405 = vmatpush1.msra.mxu0 0.0
    %5406 = vmatprep.subr.mxu0 0.0
    %5407 = vmatpush1.msra.mxu0 0.0
    %5408 = vmatprep.subr.mxu0 0.0
    %5409 = vmatpush1.msra.mxu0 0.0
    %5410 = vmatprep.subr.mxu0 0.0
    %5411 = vmatpush1.msra.mxu0 0.0
    %5412 = vmatprep.subr.mxu0 0.0
    %5413 = vmatpush1.msra.mxu0 0.0
    %5414 = vmatprep.subr.mxu0 0.0
    %5415 = vmatpush1.msra.mxu0 0.0
    %5416 = vmatprep.subr.mxu0 0.0
    %5417 = vmatpush1.msra.mxu0 %v3393
    %5418 = vmatprep.subr.mxu0 0.0
    %5419 = vmatpush2.msra.mxu0 0.0
    %5420 = vmatprep.subr.mxu0 0.0
    %5421 = vmatpush2.msra.mxu0 0.0
    %5422 = vmatprep.subr.mxu0 0.0
    %5423 = vmatpush2.msra.mxu0 0.0
    %5424 = vmatprep.subr.mxu0 0.0
    %5425 = vmatpush2.msra.mxu0 0.0
    %5426 = vmatprep.subr.mxu0 0.0
    %5427 = vmatpush2.msra.mxu0 0.0
    %5428 = vmatprep.subr.mxu0 0.0
    %5429 = vmatpush2.msra.mxu0 0.0
    %5430 = vmatprep.subr.mxu0 0.0
    %5431 = vmatpush2.msra.mxu0 0.0
    %5432 = vmatprep.subr.mxu0 0.0
    %5433 = vmatpush2.msra.mxu0 0.0
    %5434 = vmatprep.subr.mxu0 0.0
    %5435 = vmatpush2.msra.mxu0 0.0
    %5436 = vmatprep.subr.mxu0 0.0
    %5437 = vmatpush2.msra.mxu0 0.0
    %5438 = vmatprep.subr.mxu0 0.0
    %5439 = vmatpush2.msra.mxu0 0.0
    %5440 = vmatprep.subr.mxu0 0.0
    %5441 = vmatpush2.msra.mxu0 0.0
    %5442 = vmatprep.subr.mxu0 0.0
    %5443 = vmatpush2.msra.mxu0 0.0
    %5444 = vmatprep.subr.mxu0 0.0
    %5445 = vmatpush2.msra.mxu0 0.0
    %5446 = vmatprep.subr.mxu0 0.0
    %5447 = vmatpush2.msra.mxu0 0.0
    %5448 = vmatprep.subr.mxu0 0.0
    %5449 = vmatpush2.msra.mxu0 0.0
    %5450 = vmatprep.mubr.f32.mxu0 0.0
    %5451 = vmatmul.mubr.f32.gmra.mxu0 %v5384
    %v5452 = vpop.f32.mrf.mxu0
    %v5453 = vadd.f32 0.0, %v5452
    %v5454 = vpop.f32.mrf.mxu0
    %5455 = vdwg.mxu0
    %5458 = vrot.lane.b32.xlu0 %v5060, 32
    %v5459 = vpop.permute.xlu0 %5458
    %5460 = vrot.lane.b32.xlu0 %v5061, 32
    %v5461 = vpop.permute.xlu0 %5460
    %5466 = vrot.lane.b32.xlu0 %v5380, 32
    %v5467 = vpop.permute.xlu0 %5466
    %5468 = vrot.lane.b32.xlu0 %v5453, 32
    %v5469 = vpop.permute.xlu0 %5468
    %v5472 = vsel %vm386, %v5459, %v5467
    %v5473 = vsel %vm386, %v5461, %v5469
    %v5474 = vld [vmem:[%s13] sm:$0xf]
    %v5475 = vld [vmem:[%s13 + $0x4] sm:$0xf]
    %v5476 = vld [vmem:[%s13 + $0x8] sm:$0xf]
    %v5477 = vld [vmem:[%s13 + $0xc] sm:$0xf]
    %v5478 = vld [vmem:[%s13 + $0x10] sm:$0xf]
    %v5479 = vld [vmem:[%s13 + $0x14] sm:$0xf]
    %v5480 = vld [vmem:[%s13 + $0x18] sm:$0xf]
    %v5481 = vld [vmem:[%s13 + $0x1c] sm:$0xf]
    %v5482 = vld [vmem:[%s13 + $0x20] sm:$0xf]
    %v5483 = vld [vmem:[%s13 + $0x24] sm:$0xf]
    %v5484 = vld [vmem:[%s13 + $0x28] sm:$0xf]
    %v5485 = vld [vmem:[%s13 + $0x2c] sm:$0xf]
    %v5486 = vpack.c.bf16 %v5473, %v5472
    %v5499 = vunpack.c.l.b16 %v5474
    %v5500 = vunpack.c.l.b16 %v5475
    %v5501 = vunpack.c.l.b16 %v5476
    %v5502 = vunpack.c.l.b16 %v5477
    %v5503 = vunpack.c.l.b16 %v5478
    %v5504 = vunpack.c.l.b16 %v5479
    %v5505 = vunpack.c.l.b16 %v5480
    %v5506 = vunpack.c.l.b16 %v5481
    %v5507 = vunpack.c.l.b16 %v5482
    %v5508 = vunpack.c.l.b16 %v5483
    %v5509 = vunpack.c.l.b16 %v5484
    %v5510 = vunpack.c.l.b16 %v5485
    %v5511 = vpack.c.b16 %v5500, %v5499
    %v5512 = vpack.c.b16 %v5502, %v5501
    %v5513 = vpack.c.b16 %v5504, %v5503
    %v5514 = vpack.c.b16 %v5506, %v5505
    %v5515 = vpack.c.b16 %v5508, %v5507
    %v5516 = vpack.c.b16 %v5510, %v5509
    %vm5523 = vcmask 785408
    %v5525 = vsel %vm5523, %v5486, 0
    %5527 = vmatprep.subr.bf16.mxu0 0
    %5528 = vmatpush1.bf16.msra.mxu0 0
    %5529 = vmatprep.subr.bf16.mxu0 0
    %5530 = vmatpush1.bf16.msra.mxu0 0
    %5531 = vmatprep.subr.bf16.mxu0 0
    %5532 = vmatpush1.bf16.msra.mxu0 %v5516
    %5533 = vmatprep.subr.bf16.mxu0 0
    %5534 = vmatpush1.bf16.msra.mxu0 %v5515
    %5535 = vmatprep.subr.bf16.mxu0 0
    %5536 = vmatpush1.bf16.msra.mxu0 %v5514
    %5537 = vmatprep.subr.bf16.mxu0 0
    %5538 = vmatpush1.bf16.msra.mxu0 %v5513
    %5539 = vmatprep.subr.bf16.mxu0 0
    %5540 = vmatpush1.bf16.msra.mxu0 %v5512
    %5541 = vmatprep.subr.bf16.mxu0 0
    %5542 = vmatpush1.bf16.msra.mxu0 %v5511
    %5543 = vmatprep.subr.bf16.mxu0 0
    %5544 = vmatpush2.bf16.msra.mxu0 0
    %5545 = vmatprep.subr.bf16.mxu0 0
    %5546 = vmatpush2.bf16.msra.mxu0 0
    %5547 = vmatprep.subr.bf16.mxu0 0
    %5548 = vmatpush2.bf16.msra.mxu0 0
    %5549 = vmatprep.subr.bf16.mxu0 0
    %5550 = vmatpush2.bf16.msra.mxu0 0
    %5551 = vmatprep.subr.bf16.mxu0 0
    %5552 = vmatpush2.bf16.msra.mxu0 0
    %5553 = vmatprep.subr.bf16.mxu0 0
    %5554 = vmatpush2.bf16.msra.mxu0 0
    %5555 = vmatprep.subr.bf16.mxu0 0
    %5556 = vmatpush2.bf16.msra.mxu0 0
    %5557 = vmatprep.subr.bf16.mxu0 0
    %5558 = vmatpush2.bf16.msra.mxu0 0
    %5559 = vmatprep.mubr.bf16.mxu0 0
    %5560 = vmatmul.mubr.bf16.gmra.mxu0 %v5525
    %v5561 = vpop.f32.mrf.mxu0
    %v5562 = vadd.f32 0.0, %v5561
    %v5563 = vpop.f32.mrf.mxu0
    %v5564 = vpop.f32.mrf.mxu0
    %v5565 = vadd.f32 0.0, %v5564
    %v5566 = vpop.f32.mrf.mxu0
    %5567 = vdwg.mxu0
    %v5568 = vld [vmem:[%s14] sm:$0x1]
    %v5570 = vlaneseq
    %v5571 = vshrl.u32 %v5570, 7
    %v5572 = vsub.s32 0, %v5571
    %v5573 = vrot.slane %v5568, %v5572
    %v5575 = vadd.f32 %v5562, %v5573
    %v5576 = vadd.f32 %v5565, %v5573
    %v5577 = vtanh.pop %v5575
    %v5578 = vtanh.pop %v5576
    %v5579 = vld [vmem:[%s15] sm:$0xff]
    %v5580 = vld [vmem:[%s15 + $0x8] sm:$0xff]
    %v5581 = vld [vmem:[%s15 + $0x10] sm:$0xff]
    %v5582 = vld [vmem:[%s15 + $0x18] sm:$0xff]
    %v5583 = vld [vmem:[%s15 + $0x20] sm:$0xff]
    %v5584 = vld [vmem:[%s15 + $0x28] sm:$0xff]
    %v5585 = vld [vmem:[%s15 + $0x30] sm:$0xff]
    %v5586 = vld [vmem:[%s15 + $0x38] sm:$0xff]
    %v5587 = vld [vmem:[%s15 + $0x40] sm:$0xff]
    %v5588 = vld [vmem:[%s15 + $0x48] sm:$0xff]
    %v5589 = vld [vmem:[%s15 + $0x50] sm:$0xff]
    %v5590 = vld [vmem:[%s15 + $0x58] sm:$0xff]
    %v5591 = vpack.c.bf16 %v5578, %v5577
    %v5604 = vunpack.c.l.b16 %v5579
    %v5605 = vunpack.c.h.b16 %v5579
    %v5606 = vunpack.c.l.b16 %v5580
    %v5607 = vunpack.c.h.b16 %v5580
    %v5608 = vunpack.c.l.b16 %v5581
    %v5609 = vunpack.c.h.b16 %v5581
    %v5610 = vunpack.c.l.b16 %v5582
    %v5611 = vunpack.c.h.b16 %v5582
    %v5612 = vunpack.c.l.b16 %v5583
    %v5613 = vunpack.c.h.b16 %v5583
    %v5614 = vunpack.c.l.b16 %v5584
    %v5615 = vunpack.c.h.b16 %v5584
    %v5616 = vunpack.c.l.b16 %v5585
    %v5617 = vunpack.c.h.b16 %v5585
    %v5618 = vunpack.c.l.b16 %v5586
    %v5619 = vunpack.c.h.b16 %v5586
    %v5620 = vunpack.c.l.b16 %v5587
    %v5621 = vunpack.c.h.b16 %v5587
    %v5622 = vunpack.c.l.b16 %v5588
    %v5623 = vunpack.c.h.b16 %v5588
    %v5624 = vunpack.c.l.b16 %v5589
    %v5625 = vunpack.c.h.b16 %v5589
    %v5626 = vunpack.c.l.b16 %v5590
    %v5627 = vunpack.c.h.b16 %v5590
    %v5628 = vpack.c.b16 %v5606, %v5604
    %v5629 = vpack.c.b16 %v5607, %v5605
    %v5630 = vpack.c.b16 %v5610, %v5608
    %v5631 = vpack.c.b16 %v5611, %v5609
    %v5632 = vpack.c.b16 %v5614, %v5612
    %v5633 = vpack.c.b16 %v5615, %v5613
    %v5634 = vpack.c.b16 %v5618, %v5616
    %v5635 = vpack.c.b16 %v5619, %v5617
    %v5636 = vpack.c.b16 %v5622, %v5620
    %v5637 = vpack.c.b16 %v5623, %v5621
    %v5638 = vpack.c.b16 %v5626, %v5624
    %v5639 = vpack.c.b16 %v5627, %v5625
    %v5653 = vsel %vm5523, %v5591, 0
    %5655 = vmatprep.subr.bf16.mxu0 0
    %5656 = vmatpush1.bf16.msra.mxu0 0
    %5657 = vmatprep.subr.bf16.mxu0 0
    %5658 = vmatpush1.bf16.msra.mxu0 0
    %5659 = vmatprep.subr.bf16.mxu0 %v5639
    %5660 = vmatpush1.bf16.msra.mxu0 %v5638
    %5661 = vmatprep.subr.bf16.mxu0 %v5637
    %5662 = vmatpush1.bf16.msra.mxu0 %v5636
    %5663 = vmatprep.subr.bf16.mxu0 %v5635
    %5664 = vmatpush1.bf16.msra.mxu0 %v5634
    %5665 = vmatprep.subr.bf16.mxu0 %v5633
    %5666 = vmatpush1.bf16.msra.mxu0 %v5632
    %5667 = vmatprep.subr.bf16.mxu0 %v5631
    %5668 = vmatpush1.bf16.msra.mxu0 %v5630
    %5669 = vmatprep.subr.bf16.mxu0 %v5629
    %5670 = vmatpush1.bf16.msra.mxu0 %v5628
    %5671 = vmatprep.subr.bf16.mxu0 0
    %5672 = vmatpush2.bf16.msra.mxu0 0
    %5673 = vmatprep.subr.bf16.mxu0 0
    %5674 = vmatpush2.bf16.msra.mxu0 0
    %5675 = vmatprep.subr.bf16.mxu0 0
    %5676 = vmatpush2.bf16.msra.mxu0 0
    %5677 = vmatprep.subr.bf16.mxu0 0
    %5678 = vmatpush2.bf16.msra.mxu0 0
    %5679 = vmatprep.subr.bf16.mxu0 0
    %5680 = vmatpush2.bf16.msra.mxu0 0
    %5681 = vmatprep.subr.bf16.mxu0 0
    %5682 = vmatpush2.bf16.msra.mxu0 0
    %5683 = vmatprep.subr.bf16.mxu0 0
    %5684 = vmatpush2.bf16.msra.mxu0 0
    %5685 = vmatprep.subr.bf16.mxu0 0
    %5686 = vmatpush2.bf16.msra.mxu0 0
    %5687 = vmatprep.mubr.bf16.mxu0 0
    %5688 = vmatmul.mubr.bf16.gmra.mxu0 %v5653
    %v5689 = vpop.f32.mrf.mxu0
    %v5690 = vadd.f32 0.0, %v5689
    %v5691 = vpop.f32.mrf.mxu0
    %v5692 = vadd.f32 0.0, %v5691
    %v5693 = vpop.f32.mrf.mxu0
    %v5694 = vadd.f32 0.0, %v5693
    %v5695 = vpop.f32.mrf.mxu0
    %v5696 = vadd.f32 0.0, %v5695
    %5697 = vdwg.mxu0
    %v5698 = vld [vmem:[%s16] sm:$0x3]
    %v5700 = vlaneseq
    %v5701 = vshrl.u32 %v5700, 7
    %v5702 = vsub.s32 0, %v5701
    %v5703 = vrot.slane %v5698, %v5702
    %v5704 = vlaneseq
    %v5705 = vshrl.u32 %v5704, 7
    %v5706 = vsub.s32 1, %v5705
    %v5707 = vrot.slane %v5698, %v5706
    %v5710 = vadd.f32 %v5690, %v5703
    %v5711 = vadd.f32 %v5692, %v5707
    %v5712 = vadd.f32 %v5694, %v5703
    %v5713 = vadd.f32 %v5696, %v5707
    %5714 = vst [vmem:[#allocation2] sm:$0xff] %v5710
    %5715 = vst [vmem:[#allocation2 + $0x8] sm:$0xff] %v5711
    %5716 = vst [vmem:[#allocation2 + $0x10] sm:$0xff] %v5712
    %5717 = vst [vmem:[#allocation2 + $0x18] sm:$0xff] %v5713
    // Predicated region
    $region70: #{seq2seq_forward.1} parent=1 // pred_check
      _
    $region71: #{seq2seq_forward.1} parent=1 // pred_check_branch
      %5719 = sbr.rel (0) target = $region73
    $region72: #{seq2seq_forward.1} parent=1 // pred_region
      %s5721 = ssub.s32 512, 512
      %5722 = vsyncadd [#allocation3], %s5721
      %s5723 = sshll.u32 [#allocation2], 4
      %s5724 = int_to_ptr.vmem [resolvable:$true] %s5723
      %5729 = dma.vmem_to_hbm [thread:$0]  %s5724, 512, %s17, [#allocation3], 256, 256, 16
    $region73: #{seq2seq_forward.1} parent=1 // pred_fallthru
      _
    // Predicated region
    $region74: #{seq2seq_forward.1} parent=1 // pred_check
      _
    $region75: #{seq2seq_forward.1} parent=1 // pred_check_branch
      %5731 = sbr.rel (0) target = $region77
    $region76: #{seq2seq_forward.1} parent=1 // pred_region
      %5732 = dma.done [#allocation3], 512
    $region77: #{seq2seq_forward.1} parent=1 // pred_fallthru
      _
    %5733 = vsyncpa [#allocation3], 1

</llo_original>
